<compile_context>
chip_gen: v5e
topology: v5e:2x2
jax: 0.10.0
libtpu: 0.0.40
codegen_flags: <defaults>
</compile_context>

<pallas_src>
import functools
import math

import jax
import jax.numpy as jnp
import numpy as np
from jax.experimental import pallas as pl
from jax.experimental.pallas import tpu as pltpu


# ----------------------------- Pallas kernel ------------------------------ #
def _nice_kernel(*refs, n_layers, bf16_residual=False):
    """refs = [e, o, (W,b)*n_layers for 4 nets, exp_scale, log_det_j(SMEM), out]."""
    e_ref, o_ref = refs[0], refs[1]
    idx = 2
    nets = []
    for _ in range(4):
        layers = []
        for _ in range(n_layers):
            layers.append((refs[idx], refs[idx + 1]))
            idx += 2
        nets.append(layers)
    exp_s_ref = refs[idx]
    ldj_ref = refs[idx + 1]          # (1,1) scalar in SMEM
    out_ref = refs[idx + 2]

    # Residual / pointwise dtype: f32 by default (safe on v5e, tight numerics);
    # bf16 optionally on v6e/v7x (bf16 VALU) to halve vreg pressure.
    res_dt = jnp.bfloat16 if bf16_residual else jnp.float32

    def mlp(h, layers):
        # Linear -> ReLU repeated, final Linear (no activation).
        # bf16 operands on the MXU, f32 accumulation; bias/ReLU in res_dt.
        n = len(layers)
        for li, (w_ref, b_ref) in enumerate(layers):
            h = jnp.dot(h.astype(jnp.bfloat16), w_ref[...],
                        preferred_element_type=jnp.float32) + b_ref[...]
            h = h.astype(res_dt)
            if li < n - 1:
                h = jnp.maximum(h, 0)
        return h

    e = e_ref[...].astype(res_dt)    # even columns of x
    o = o_ref[...].astype(res_dt)    # odd  columns of x

    # AdditiveCoupling layers (mask_config 1,0,1,0; forward, reverse=False)
    e = e + mlp(o, nets[0])          # layer1: even += net1(odd)
    o = o + mlp(e, nets[1])          # layer2: odd  += net2(even)
    e = e + mlp(o, nets[2])          # layer3: even += net3(odd)
    o = o + mlp(e, nets[3])          # layer4: odd  += net4(even)

    # Lane-dense epilogue: one (block_m, D) slab instead of two (block_m, D/2)
    y = jnp.concatenate([e.astype(jnp.float32), o.astype(jnp.float32)],
                        axis=-1)
    z = y * exp_s_ref[...]           # Scaling layer: z = y * exp(scale)

    # Standard-logistic log-prob: -(|z| + 2*log1p(exp(-|z|)))
    az = jnp.abs(z)
    logp = -(az + 2.0 * jnp.log1p(jnp.exp(-az)))

    out_ref[...] = jnp.sum(logp, axis=1, keepdims=True) + ldj_ref[0, 0]


# ------------------------------ JAX wrapper -------------------------------- #
def _num_tensorcores():
    """Best-effort TensorCore-per-chip count (1 on v5e/v6e, 2 on v4/v5p/v7x)."""
    try:
        d = jax.devices()[0]
        nc = getattr(d, "num_cores", None)
        if nc:
            return max(1, int(nc))
        kind = str(getattr(d, "device_kind", "")).lower()
        if any(t in kind for t in ("v4", "v5p", "v7")):
            return 2
    except Exception:
        pass
    return 1


def _choose_block_m(B, num_tc, max_block=1024):
    """One grid step per TensorCore when possible; cap block size for large B."""
    bm = min(pl.cdiv(B, num_tc), max_block)
    return max(8, ((bm + 7) // 8) * 8)   # sublane multiple


def nice_log_prob(x, net_params, scale, hidden_layers, block_m=None,
                  bf16_residual=False):
    """NICE.forward(x): per-sample log-likelihood, shape (B,)."""
    B, D = x.shape
    half = D // 2
    n_layers = hidden_layers + 2

    num_tc = _num_tensorcores()
    if block_m is None:
        block_m = _choose_block_m(B, num_tc)
    block_m = max(8, ((int(block_m) + 7) // 8) * 8)

    grid_m = pl.cdiv(B, block_m)
    B_pad = grid_m * block_m

    # even/odd column split (layout glue; pre-split upstream for huge x).
    e = x[:, 0::2]
    o = x[:, 1::2]
    if B_pad != B:
        e = jnp.pad(e, ((0, B_pad - B), (0, 0)))
        o = jnp.pad(o, ((0, B_pad - B), (0, 0)))

    # Scaling-layer constants hoisted out of the kernel.  exp_scale is laid
    # out [even | odd] to match the kernel's concatenated epilogue slab.
    exp_scale = jnp.exp(
        jnp.concatenate([scale[:, 0::2], scale[:, 1::2]], axis=1)
    ).astype(jnp.float32)                                       # (1, D)
    log_det_j = (jnp.sum(scale) + 1e-5
                 - jnp.log(256.0) * D).reshape(1, 1).astype(jnp.float32)

    # Pack parameters: bf16 weights (MXU operands, half the DMA), f32 biases.
    flat = []
    for net in net_params:
        for (w, b) in net:
            flat.append(w.astype(jnp.bfloat16))                 # (fan_in, fan_out)
            flat.append(b.reshape(1, -1).astype(jnp.float32))   # (1, fan_out)

    inputs = [e, o] + flat + [exp_scale, log_det_j]

    # Cost estimate (advisory for XLA scheduling around the custom call).
    mm_flops = sum(2 * w.shape[0] * w.shape[1]
                   for net in net_params for (w, _) in net)
    flops = int(B_pad * mm_flops)
    transcendentals = int(2 * B_pad * D)                        # exp + log1p per elem
    param_bytes = int(sum(int(p.size) * p.dtype.itemsize for p in flat)) + D * 4
    bytes_accessed = int(B_pad * D * 4 + param_bytes + B_pad * 4)
    act_bytes = 2 * block_m * half * 4 + block_m * 4            # e + o tiles + out

    kernel = functools.partial(_nice_kernel, n_layers=n_layers,
                               bf16_residual=bf16_residual)

    def build_and_call(single_buffer_params):
        # Constant-index operands (weights/biases/exp_scale) are single-buffered
        # when supported: they map to block (0,0) forever, so extra buffers are
        # pure VMEM waste (important headroom when scaled up on v7x).
        param_kwargs = ({"pipeline_mode": pl.Buffered(1)}
                        if single_buffer_params else {})

        in_specs = [
            pl.BlockSpec((block_m, half), lambda i: (i, 0)),    # e tile
            pl.BlockSpec((block_m, half), lambda i: (i, 0)),    # o tile
        ]
        for p in flat:                                          # resident params
            in_specs.append(pl.BlockSpec(p.shape, lambda i: (0, 0),
                                         **param_kwargs))
        in_specs.append(pl.BlockSpec((1, D), lambda i: (0, 0),
                                     **param_kwargs))           # exp(scale)
        in_specs.append(pl.BlockSpec(memory_space=pltpu.MemorySpace.SMEM))
        out_spec = pl.BlockSpec((block_m, 1), lambda i: (i, 0))

        param_bufs = 1 if single_buffer_params else 2
        vmem_limit = int(2 * act_bytes + param_bufs * param_bytes) + (16 << 20)

        call = pl.pallas_call(
            kernel,
            out_shape=jax.ShapeDtypeStruct((B_pad, 1), jnp.float32),
            grid=(grid_m,),
            in_specs=in_specs,
            out_specs=out_spec,
            compiler_params=pltpu.CompilerParams(
                dimension_semantics=("parallel",),
                vmem_limit_bytes=vmem_limit),
            cost_estimate=pl.CostEstimate(flops=flops,
                                          transcendentals=transcendentals,
                                          bytes_accessed=bytes_accessed),
        )
        return call(*inputs)

    try:
        out = build_and_call(single_buffer_params=True)
    except Exception:
        # Pallas versions that reject pipeline_mode=Buffered(1): fall back to
        # default double-buffering (correct, just wastes some VMEM).
        out = build_and_call(single_buffer_params=False)

    return out[:B, 0]


# ---------------------- deterministic parameter init ----------------------- #
def init_nice_params(key, half_dim, hidden_dim, hidden_layers):
    """4 coupling MLPs (kaiming-uniform weights, N(0, 1e-3) biases)."""
    nets = []
    dims = [half_dim] + [hidden_dim] * (hidden_layers + 1) + [half_dim]
    for _ in range(4):
        layers = []
        for i in range(len(dims) - 1):
            fan_in, fan_out = dims[i], dims[i + 1]
            key, kw, kb = jax.random.split(key, 3)
            bound = math.sqrt(6.0 / fan_in)  # kaiming_uniform, relu gain
            w = jax.random.uniform(kw, (fan_in, fan_out), jnp.float32,
                                   -bound, bound)
            b = jax.random.normal(kb, (fan_out,), jnp.float32) * 1e-3
            layers.append((w, b))
        nets.append(layers)
    return nets


# ---------------------------- pure-JAX reference --------------------------- #
def nice_log_prob_ref(x, net_params, scale):
    """Mirrors the kernel's mixed precision (bf16 matmul operands, f32 acc)."""
    e, o = x[:, 0::2], x[:, 1::2]

    def mlp(h, net):
        n = len(net)
        for li, (w, b) in enumerate(net):
            h = jnp.dot(h.astype(jnp.bfloat16), w.astype(jnp.bfloat16),
                        preferred_element_type=jnp.float32) + b
            if li < n - 1:
                h = jnp.maximum(h, 0.0)
        return h

    e = e + mlp(o, net_params[0])
    o = o + mlp(e, net_params[1])
    e = e + mlp(o, net_params[2])
    o = o + mlp(e, net_params[3])
    z_e = e * jnp.exp(scale[:, 0::2])
    z_o = o * jnp.exp(scale[:, 1::2])

    def logp(z):
        az = jnp.abs(z)
        return -(az + 2.0 * jnp.log1p(jnp.exp(-az)))

    log_ll = jnp.sum(logp(z_e), axis=1) + jnp.sum(logp(z_o), axis=1)
    log_det_j = jnp.sum(scale) + 1e-5 - jnp.log(256.0) * x.shape[1]
    return log_ll + log_det_j


# ----------------------------------- main ----------------------------------- #
if __name__ == "__main__":
    B = 256            # batch
    in_out_dim = 64    # D (even)
    hidden_dim = 64
    hidden_layers = 2
    half_dim = in_out_dim // 2

    key = jax.random.PRNGKey(0)
    key, kx, kp, ks = jax.random.split(key, 4)
    x = jax.random.normal(kx, (B, in_out_dim), jnp.float32)

    net_params = init_nice_params(kp, half_dim, hidden_dim, hidden_layers)
    # Scaling-layer param (zeros at init in the module; perturb to exercise it)
    scale = 0.01 * jax.random.normal(ks, (1, in_out_dim), jnp.float32)

    out = nice_log_prob(x, net_params, scale, hidden_layers)
    out = jax.block_until_ready(out)

    ref = nice_log_prob_ref(x, net_params, scale)
    np.testing.assert_allclose(np.asarray(out), np.asarray(ref),
                               rtol=1e-3, atol=1e-3)

    print("KERNEL_OK")
</pallas_src>

<mosaic_0001>
module attributes {stable_mosaic.version = 11 : i64} {
  func.func @_nice_kernel(%arg0: i32, %arg1: memref<256x32xf32, #tpu.memory_space<vmem>>, %arg2: memref<256x32xf32, #tpu.memory_space<vmem>>, %arg3: memref<32x64xbf16, #tpu.memory_space<vmem>>, %arg4: memref<1x64xf32, #tpu.memory_space<vmem>>, %arg5: memref<64x64xbf16, #tpu.memory_space<vmem>>, %arg6: memref<1x64xf32, #tpu.memory_space<vmem>>, %arg7: memref<64x64xbf16, #tpu.memory_space<vmem>>, %arg8: memref<1x64xf32, #tpu.memory_space<vmem>>, %arg9: memref<64x32xbf16, #tpu.memory_space<vmem>>, %arg10: memref<1x32xf32, #tpu.memory_space<vmem>>, %arg11: memref<32x64xbf16, #tpu.memory_space<vmem>>, %arg12: memref<1x64xf32, #tpu.memory_space<vmem>>, %arg13: memref<64x64xbf16, #tpu.memory_space<vmem>>, %arg14: memref<1x64xf32, #tpu.memory_space<vmem>>, %arg15: memref<64x64xbf16, #tpu.memory_space<vmem>>, %arg16: memref<1x64xf32, #tpu.memory_space<vmem>>, %arg17: memref<64x32xbf16, #tpu.memory_space<vmem>>, %arg18: memref<1x32xf32, #tpu.memory_space<vmem>>, %arg19: memref<32x64xbf16, #tpu.memory_space<vmem>>, %arg20: memref<1x64xf32, #tpu.memory_space<vmem>>, %arg21: memref<64x64xbf16, #tpu.memory_space<vmem>>, %arg22: memref<1x64xf32, #tpu.memory_space<vmem>>, %arg23: memref<64x64xbf16, #tpu.memory_space<vmem>>, %arg24: memref<1x64xf32, #tpu.memory_space<vmem>>, %arg25: memref<64x32xbf16, #tpu.memory_space<vmem>>, %arg26: memref<1x32xf32, #tpu.memory_space<vmem>>, %arg27: memref<32x64xbf16, #tpu.memory_space<vmem>>, %arg28: memref<1x64xf32, #tpu.memory_space<vmem>>, %arg29: memref<64x64xbf16, #tpu.memory_space<vmem>>, %arg30: memref<1x64xf32, #tpu.memory_space<vmem>>, %arg31: memref<64x64xbf16, #tpu.memory_space<vmem>>, %arg32: memref<1x64xf32, #tpu.memory_space<vmem>>, %arg33: memref<64x32xbf16, #tpu.memory_space<vmem>>, %arg34: memref<1x32xf32, #tpu.memory_space<vmem>>, %arg35: memref<1x64xf32, #tpu.memory_space<vmem>>, %arg36: memref<1x1xf32, #tpu.memory_space<smem>>, %arg37: memref<256x1xf32, #tpu.memory_space<vmem>>) attributes {dimension_semantics = [#tpu.dimension_semantics<parallel>], iteration_bounds = array<i64: 1>, scalar_prefetch = 0 : i64, scratch_operands = 0 : i64, tpu.core_type = #tpu.core_type<tc>, window_params = [{transform_indices = @transform_0, window_bounds = array<i64: 256, 32>}, {transform_indices = @transform_1, window_bounds = array<i64: 256, 32>}, {pipeline_mode = #tpu.pipeline_mode<synchronous>, transform_indices = @transform_2, window_bounds = array<i64: 32, 64>}, {pipeline_mode = #tpu.pipeline_mode<synchronous>, transform_indices = @transform_3, window_bounds = array<i64: 1, 64>}, {pipeline_mode = #tpu.pipeline_mode<synchronous>, transform_indices = @transform_4, window_bounds = array<i64: 64, 64>}, {pipeline_mode = #tpu.pipeline_mode<synchronous>, transform_indices = @transform_5, window_bounds = array<i64: 1, 64>}, {pipeline_mode = #tpu.pipeline_mode<synchronous>, transform_indices = @transform_6, window_bounds = array<i64: 64, 64>}, {pipeline_mode = #tpu.pipeline_mode<synchronous>, transform_indices = @transform_7, window_bounds = array<i64: 1, 64>}, {pipeline_mode = #tpu.pipeline_mode<synchronous>, transform_indices = @transform_8, window_bounds = array<i64: 64, 32>}, {pipeline_mode = #tpu.pipeline_mode<synchronous>, transform_indices = @transform_9, window_bounds = array<i64: 1, 32>}, {pipeline_mode = #tpu.pipeline_mode<synchronous>, transform_indices = @transform_10, window_bounds = array<i64: 32, 64>}, {pipeline_mode = #tpu.pipeline_mode<synchronous>, transform_indices = @transform_11, window_bounds = array<i64: 1, 64>}, {pipeline_mode = #tpu.pipeline_mode<synchronous>, transform_indices = @transform_12, window_bounds = array<i64: 64, 64>}, {pipeline_mode = #tpu.pipeline_mode<synchronous>, transform_indices = @transform_13, window_bounds = array<i64: 1, 64>}, {pipeline_mode = #tpu.pipeline_mode<synchronous>, transform_indices = @transform_14, window_bounds = array<i64: 64, 64>}, {pipeline_mode = #tpu.pipeline_mode<synchronous>, transform_indices = @transform_15, window_bounds = array<i64: 1, 64>}, {pipeline_mode = #tpu.pipeline_mode<synchronous>, transform_indices = @transform_16, window_bounds = array<i64: 64, 32>}, {pipeline_mode = #tpu.pipeline_mode<synchronous>, transform_indices = @transform_17, window_bounds = array<i64: 1, 32>}, {pipeline_mode = #tpu.pipeline_mode<synchronous>, transform_indices = @transform_18, window_bounds = array<i64: 32, 64>}, {pipeline_mode = #tpu.pipeline_mode<synchronous>, transform_indices = @transform_19, window_bounds = array<i64: 1, 64>}, {pipeline_mode = #tpu.pipeline_mode<synchronous>, transform_indices = @transform_20, window_bounds = array<i64: 64, 64>}, {pipeline_mode = #tpu.pipeline_mode<synchronous>, transform_indices = @transform_21, window_bounds = array<i64: 1, 64>}, {pipeline_mode = #tpu.pipeline_mode<synchronous>, transform_indices = @transform_22, window_bounds = array<i64: 64, 64>}, {pipeline_mode = #tpu.pipeline_mode<synchronous>, transform_indices = @transform_23, window_bounds = array<i64: 1, 64>}, {pipeline_mode = #tpu.pipeline_mode<synchronous>, transform_indices = @transform_24, window_bounds = array<i64: 64, 32>}, {pipeline_mode = #tpu.pipeline_mode<synchronous>, transform_indices = @transform_25, window_bounds = array<i64: 1, 32>}, {pipeline_mode = #tpu.pipeline_mode<synchronous>, transform_indices = @transform_26, window_bounds = array<i64: 32, 64>}, {pipeline_mode = #tpu.pipeline_mode<synchronous>, transform_indices = @transform_27, window_bounds = array<i64: 1, 64>}, {pipeline_mode = #tpu.pipeline_mode<synchronous>, transform_indices = @transform_28, window_bounds = array<i64: 64, 64>}, {pipeline_mode = #tpu.pipeline_mode<synchronous>, transform_indices = @transform_29, window_bounds = array<i64: 1, 64>}, {pipeline_mode = #tpu.pipeline_mode<synchronous>, transform_indices = @transform_30, window_bounds = array<i64: 64, 64>}, {pipeline_mode = #tpu.pipeline_mode<synchronous>, transform_indices = @transform_31, window_bounds = array<i64: 1, 64>}, {pipeline_mode = #tpu.pipeline_mode<synchronous>, transform_indices = @transform_32, window_bounds = array<i64: 64, 32>}, {pipeline_mode = #tpu.pipeline_mode<synchronous>, transform_indices = @transform_33, window_bounds = array<i64: 1, 32>}, {pipeline_mode = #tpu.pipeline_mode<synchronous>, transform_indices = @transform_34, window_bounds = array<i64: 1, 64>}, {transform_indices = @transform_35, window_bounds = array<i64: 1, 1>}, {transform_indices = @transform_36, window_bounds = array<i64: 256, 1>}]} {
    %c0 = arith.constant 0 : index
    %c0_0 = arith.constant 0 : index
    %0 = vector.load %arg1[%c0, %c0_0] : memref<256x32xf32, #tpu.memory_space<vmem>>, vector<256x32xf32>
    %c0_1 = arith.constant 0 : index
    %c0_2 = arith.constant 0 : index
    %1 = vector.load %arg2[%c0_1, %c0_2] : memref<256x32xf32, #tpu.memory_space<vmem>>, vector<256x32xf32>
    %2 = arith.truncf %1 : vector<256x32xf32> to vector<256x32xbf16>
    %c0_3 = arith.constant 0 : index
    %c0_4 = arith.constant 0 : index
    %3 = vector.load %arg3[%c0_3, %c0_4] : memref<32x64xbf16, #tpu.memory_space<vmem>>, vector<32x64xbf16>
    %cst = arith.constant dense<0.000000e+00> : vector<256x64xf32>
    %4 = tpu.matmul %2, %3, %cst {dimension_numbers = #tpu.dot_dimension_numbers<[1], [0], [0], [1], [0, 0, 1, 1], [], []>} : vector<256x32xbf16>, vector<32x64xbf16>, vector<256x64xf32> -> vector<256x64xf32>
    %c0_5 = arith.constant 0 : index
    %c0_6 = arith.constant 0 : index
    %5 = vector.load %arg4[%c0_5, %c0_6] : memref<1x64xf32, #tpu.memory_space<vmem>>, vector<1x64xf32>
    %6 = vector.broadcast %5 : vector<1x64xf32> to vector<256x64xf32>
    %7 = arith.addf %4, %6 : vector<256x64xf32>
    %cst_7 = arith.constant 0.000000e+00 : f32
    %8 = vector.broadcast %cst_7 : f32 to vector<256x64xf32>
    %9 = arith.maximumf %7, %8 : vector<256x64xf32>
    %10 = arith.truncf %9 : vector<256x64xf32> to vector<256x64xbf16>
    %c0_8 = arith.constant 0 : index
    %c0_9 = arith.constant 0 : index
    %11 = vector.load %arg5[%c0_8, %c0_9] : memref<64x64xbf16, #tpu.memory_space<vmem>>, vector<64x64xbf16>
    %cst_10 = arith.constant dense<0.000000e+00> : vector<256x64xf32>
    %12 = tpu.matmul %10, %11, %cst_10 {dimension_numbers = #tpu.dot_dimension_numbers<[1], [0], [0], [1], [0, 0, 1, 1], [], []>} : vector<256x64xbf16>, vector<64x64xbf16>, vector<256x64xf32> -> vector<256x64xf32>
    %c0_11 = arith.constant 0 : index
    %c0_12 = arith.constant 0 : index
    %13 = vector.load %arg6[%c0_11, %c0_12] : memref<1x64xf32, #tpu.memory_space<vmem>>, vector<1x64xf32>
    %14 = vector.broadcast %13 : vector<1x64xf32> to vector<256x64xf32>
    %15 = arith.addf %12, %14 : vector<256x64xf32>
    %cst_13 = arith.constant 0.000000e+00 : f32
    %16 = vector.broadcast %cst_13 : f32 to vector<256x64xf32>
    %17 = arith.maximumf %15, %16 : vector<256x64xf32>
    %18 = arith.truncf %17 : vector<256x64xf32> to vector<256x64xbf16>
    %c0_14 = arith.constant 0 : index
    %c0_15 = arith.constant 0 : index
    %19 = vector.load %arg7[%c0_14, %c0_15] : memref<64x64xbf16, #tpu.memory_space<vmem>>, vector<64x64xbf16>
    %cst_16 = arith.constant dense<0.000000e+00> : vector<256x64xf32>
    %20 = tpu.matmul %18, %19, %cst_16 {dimension_numbers = #tpu.dot_dimension_numbers<[1], [0], [0], [1], [0, 0, 1, 1], [], []>} : vector<256x64xbf16>, vector<64x64xbf16>, vector<256x64xf32> -> vector<256x64xf32>
    %c0_17 = arith.constant 0 : index
    %c0_18 = arith.constant 0 : index
    %21 = vector.load %arg8[%c0_17, %c0_18] : memref<1x64xf32, #tpu.memory_space<vmem>>, vector<1x64xf32>
    %22 = vector.broadcast %21 : vector<1x64xf32> to vector<256x64xf32>
    %23 = arith.addf %20, %22 : vector<256x64xf32>
    %cst_19 = arith.constant 0.000000e+00 : f32
    %24 = vector.broadcast %cst_19 : f32 to vector<256x64xf32>
    %25 = arith.maximumf %23, %24 : vector<256x64xf32>
    %26 = arith.truncf %25 : vector<256x64xf32> to vector<256x64xbf16>
    %c0_20 = arith.constant 0 : index
    %c0_21 = arith.constant 0 : index
    %27 = vector.load %arg9[%c0_20, %c0_21] : memref<64x32xbf16, #tpu.memory_space<vmem>>, vector<64x32xbf16>
    %cst_22 = arith.constant dense<0.000000e+00> : vector<256x32xf32>
    %28 = tpu.matmul %26, %27, %cst_22 {dimension_numbers = #tpu.dot_dimension_numbers<[1], [0], [0], [1], [0, 0, 1, 1], [], []>} : vector<256x64xbf16>, vector<64x32xbf16>, vector<256x32xf32> -> vector<256x32xf32>
    %c0_23 = arith.constant 0 : index
    %c0_24 = arith.constant 0 : index
    %29 = vector.load %arg10[%c0_23, %c0_24] : memref<1x32xf32, #tpu.memory_space<vmem>>, vector<1x32xf32>
    %30 = vector.broadcast %29 : vector<1x32xf32> to vector<256x32xf32>
    %31 = arith.addf %28, %30 : vector<256x32xf32>
    %32 = arith.addf %0, %31 : vector<256x32xf32>
    %33 = arith.truncf %32 : vector<256x32xf32> to vector<256x32xbf16>
    %c0_25 = arith.constant 0 : index
    %c0_26 = arith.constant 0 : index
    %34 = vector.load %arg11[%c0_25, %c0_26] : memref<32x64xbf16, #tpu.memory_space<vmem>>, vector<32x64xbf16>
    %cst_27 = arith.constant dense<0.000000e+00> : vector<256x64xf32>
    %35 = tpu.matmul %33, %34, %cst_27 {dimension_numbers = #tpu.dot_dimension_numbers<[1], [0], [0], [1], [0, 0, 1, 1], [], []>} : vector<256x32xbf16>, vector<32x64xbf16>, vector<256x64xf32> -> vector<256x64xf32>
    %c0_28 = arith.constant 0 : index
    %c0_29 = arith.constant 0 : index
    %36 = vector.load %arg12[%c0_28, %c0_29] : memref<1x64xf32, #tpu.memory_space<vmem>>, vector<1x64xf32>
    %37 = vector.broadcast %36 : vector<1x64xf32> to vector<256x64xf32>
    %38 = arith.addf %35, %37 : vector<256x64xf32>
    %cst_30 = arith.constant 0.000000e+00 : f32
    %39 = vector.broadcast %cst_30 : f32 to vector<256x64xf32>
    %40 = arith.maximumf %38, %39 : vector<256x64xf32>
    %41 = arith.truncf %40 : vector<256x64xf32> to vector<256x64xbf16>
    %c0_31 = arith.constant 0 : index
    %c0_32 = arith.constant 0 : index
    %42 = vector.load %arg13[%c0_31, %c0_32] : memref<64x64xbf16, #tpu.memory_space<vmem>>, vector<64x64xbf16>
    %cst_33 = arith.constant dense<0.000000e+00> : vector<256x64xf32>
    %43 = tpu.matmul %41, %42, %cst_33 {dimension_numbers = #tpu.dot_dimension_numbers<[1], [0], [0], [1], [0, 0, 1, 1], [], []>} : vector<256x64xbf16>, vector<64x64xbf16>, vector<256x64xf32> -> vector<256x64xf32>
    %c0_34 = arith.constant 0 : index
    %c0_35 = arith.constant 0 : index
    %44 = vector.load %arg14[%c0_34, %c0_35] : memref<1x64xf32, #tpu.memory_space<vmem>>, vector<1x64xf32>
    %45 = vector.broadcast %44 : vector<1x64xf32> to vector<256x64xf32>
    %46 = arith.addf %43, %45 : vector<256x64xf32>
    %cst_36 = arith.constant 0.000000e+00 : f32
    %47 = vector.broadcast %cst_36 : f32 to vector<256x64xf32>
    %48 = arith.maximumf %46, %47 : vector<256x64xf32>
    %49 = arith.truncf %48 : vector<256x64xf32> to vector<256x64xbf16>
    %c0_37 = arith.constant 0 : index
    %c0_38 = arith.constant 0 : index
    %50 = vector.load %arg15[%c0_37, %c0_38] : memref<64x64xbf16, #tpu.memory_space<vmem>>, vector<64x64xbf16>
    %cst_39 = arith.constant dense<0.000000e+00> : vector<256x64xf32>
    %51 = tpu.matmul %49, %50, %cst_39 {dimension_numbers = #tpu.dot_dimension_numbers<[1], [0], [0], [1], [0, 0, 1, 1], [], []>} : vector<256x64xbf16>, vector<64x64xbf16>, vector<256x64xf32> -> vector<256x64xf32>
    %c0_40 = arith.constant 0 : index
    %c0_41 = arith.constant 0 : index
    %52 = vector.load %arg16[%c0_40, %c0_41] : memref<1x64xf32, #tpu.memory_space<vmem>>, vector<1x64xf32>
    %53 = vector.broadcast %52 : vector<1x64xf32> to vector<256x64xf32>
    %54 = arith.addf %51, %53 : vector<256x64xf32>
    %cst_42 = arith.constant 0.000000e+00 : f32
    %55 = vector.broadcast %cst_42 : f32 to vector<256x64xf32>
    %56 = arith.maximumf %54, %55 : vector<256x64xf32>
    %57 = arith.truncf %56 : vector<256x64xf32> to vector<256x64xbf16>
    %c0_43 = arith.constant 0 : index
    %c0_44 = arith.constant 0 : index
    %58 = vector.load %arg17[%c0_43, %c0_44] : memref<64x32xbf16, #tpu.memory_space<vmem>>, vector<64x32xbf16>
    %cst_45 = arith.constant dense<0.000000e+00> : vector<256x32xf32>
    %59 = tpu.matmul %57, %58, %cst_45 {dimension_numbers = #tpu.dot_dimension_numbers<[1], [0], [0], [1], [0, 0, 1, 1], [], []>} : vector<256x64xbf16>, vector<64x32xbf16>, vector<256x32xf32> -> vector<256x32xf32>
    %c0_46 = arith.constant 0 : index
    %c0_47 = arith.constant 0 : index
    %60 = vector.load %arg18[%c0_46, %c0_47] : memref<1x32xf32, #tpu.memory_space<vmem>>, vector<1x32xf32>
    %61 = vector.broadcast %60 : vector<1x32xf32> to vector<256x32xf32>
    %62 = arith.addf %59, %61 : vector<256x32xf32>
    %63 = arith.addf %1, %62 : vector<256x32xf32>
    %64 = arith.truncf %63 : vector<256x32xf32> to vector<256x32xbf16>
    %c0_48 = arith.constant 0 : index
    %c0_49 = arith.constant 0 : index
    %65 = vector.load %arg19[%c0_48, %c0_49] : memref<32x64xbf16, #tpu.memory_space<vmem>>, vector<32x64xbf16>
    %cst_50 = arith.constant dense<0.000000e+00> : vector<256x64xf32>
    %66 = tpu.matmul %64, %65, %cst_50 {dimension_numbers = #tpu.dot_dimension_numbers<[1], [0], [0], [1], [0, 0, 1, 1], [], []>} : vector<256x32xbf16>, vector<32x64xbf16>, vector<256x64xf32> -> vector<256x64xf32>
    %c0_51 = arith.constant 0 : index
    %c0_52 = arith.constant 0 : index
    %67 = vector.load %arg20[%c0_51, %c0_52] : memref<1x64xf32, #tpu.memory_space<vmem>>, vector<1x64xf32>
    %68 = vector.broadcast %67 : vector<1x64xf32> to vector<256x64xf32>
    %69 = arith.addf %66, %68 : vector<256x64xf32>
    %cst_53 = arith.constant 0.000000e+00 : f32
    %70 = vector.broadcast %cst_53 : f32 to vector<256x64xf32>
    %71 = arith.maximumf %69, %70 : vector<256x64xf32>
    %72 = arith.truncf %71 : vector<256x64xf32> to vector<256x64xbf16>
    %c0_54 = arith.constant 0 : index
    %c0_55 = arith.constant 0 : index
    %73 = vector.load %arg21[%c0_54, %c0_55] : memref<64x64xbf16, #tpu.memory_space<vmem>>, vector<64x64xbf16>
    %cst_56 = arith.constant dense<0.000000e+00> : vector<256x64xf32>
    %74 = tpu.matmul %72, %73, %cst_56 {dimension_numbers = #tpu.dot_dimension_numbers<[1], [0], [0], [1], [0, 0, 1, 1], [], []>} : vector<256x64xbf16>, vector<64x64xbf16>, vector<256x64xf32> -> vector<256x64xf32>
    %c0_57 = arith.constant 0 : index
    %c0_58 = arith.constant 0 : index
    %75 = vector.load %arg22[%c0_57, %c0_58] : memref<1x64xf32, #tpu.memory_space<vmem>>, vector<1x64xf32>
    %76 = vector.broadcast %75 : vector<1x64xf32> to vector<256x64xf32>
    %77 = arith.addf %74, %76 : vector<256x64xf32>
    %cst_59 = arith.constant 0.000000e+00 : f32
    %78 = vector.broadcast %cst_59 : f32 to vector<256x64xf32>
    %79 = arith.maximumf %77, %78 : vector<256x64xf32>
    %80 = arith.truncf %79 : vector<256x64xf32> to vector<256x64xbf16>
    %c0_60 = arith.constant 0 : index
    %c0_61 = arith.constant 0 : index
    %81 = vector.load %arg23[%c0_60, %c0_61] : memref<64x64xbf16, #tpu.memory_space<vmem>>, vector<64x64xbf16>
    %cst_62 = arith.constant dense<0.000000e+00> : vector<256x64xf32>
    %82 = tpu.matmul %80, %81, %cst_62 {dimension_numbers = #tpu.dot_dimension_numbers<[1], [0], [0], [1], [0, 0, 1, 1], [], []>} : vector<256x64xbf16>, vector<64x64xbf16>, vector<256x64xf32> -> vector<256x64xf32>
    %c0_63 = arith.constant 0 : index
    %c0_64 = arith.constant 0 : index
    %83 = vector.load %arg24[%c0_63, %c0_64] : memref<1x64xf32, #tpu.memory_space<vmem>>, vector<1x64xf32>
    %84 = vector.broadcast %83 : vector<1x64xf32> to vector<256x64xf32>
    %85 = arith.addf %82, %84 : vector<256x64xf32>
    %cst_65 = arith.constant 0.000000e+00 : f32
    %86 = vector.broadcast %cst_65 : f32 to vector<256x64xf32>
    %87 = arith.maximumf %85, %86 : vector<256x64xf32>
    %88 = arith.truncf %87 : vector<256x64xf32> to vector<256x64xbf16>
    %c0_66 = arith.constant 0 : index
    %c0_67 = arith.constant 0 : index
    %89 = vector.load %arg25[%c0_66, %c0_67] : memref<64x32xbf16, #tpu.memory_space<vmem>>, vector<64x32xbf16>
    %cst_68 = arith.constant dense<0.000000e+00> : vector<256x32xf32>
    %90 = tpu.matmul %88, %89, %cst_68 {dimension_numbers = #tpu.dot_dimension_numbers<[1], [0], [0], [1], [0, 0, 1, 1], [], []>} : vector<256x64xbf16>, vector<64x32xbf16>, vector<256x32xf32> -> vector<256x32xf32>
    %c0_69 = arith.constant 0 : index
    %c0_70 = arith.constant 0 : index
    %91 = vector.load %arg26[%c0_69, %c0_70] : memref<1x32xf32, #tpu.memory_space<vmem>>, vector<1x32xf32>
    %92 = vector.broadcast %91 : vector<1x32xf32> to vector<256x32xf32>
    %93 = arith.addf %90, %92 : vector<256x32xf32>
    %94 = arith.addf %32, %93 : vector<256x32xf32>
    %95 = arith.truncf %94 : vector<256x32xf32> to vector<256x32xbf16>
    %c0_71 = arith.constant 0 : index
    %c0_72 = arith.constant 0 : index
    %96 = vector.load %arg27[%c0_71, %c0_72] : memref<32x64xbf16, #tpu.memory_space<vmem>>, vector<32x64xbf16>
    %cst_73 = arith.constant dense<0.000000e+00> : vector<256x64xf32>
    %97 = tpu.matmul %95, %96, %cst_73 {dimension_numbers = #tpu.dot_dimension_numbers<[1], [0], [0], [1], [0, 0, 1, 1], [], []>} : vector<256x32xbf16>, vector<32x64xbf16>, vector<256x64xf32> -> vector<256x64xf32>
    %c0_74 = arith.constant 0 : index
    %c0_75 = arith.constant 0 : index
    %98 = vector.load %arg28[%c0_74, %c0_75] : memref<1x64xf32, #tpu.memory_space<vmem>>, vector<1x64xf32>
    %99 = vector.broadcast %98 : vector<1x64xf32> to vector<256x64xf32>
    %100 = arith.addf %97, %99 : vector<256x64xf32>
    %cst_76 = arith.constant 0.000000e+00 : f32
    %101 = vector.broadcast %cst_76 : f32 to vector<256x64xf32>
    %102 = arith.maximumf %100, %101 : vector<256x64xf32>
    %103 = arith.truncf %102 : vector<256x64xf32> to vector<256x64xbf16>
    %c0_77 = arith.constant 0 : index
    %c0_78 = arith.constant 0 : index
    %104 = vector.load %arg29[%c0_77, %c0_78] : memref<64x64xbf16, #tpu.memory_space<vmem>>, vector<64x64xbf16>
    %cst_79 = arith.constant dense<0.000000e+00> : vector<256x64xf32>
    %105 = tpu.matmul %103, %104, %cst_79 {dimension_numbers = #tpu.dot_dimension_numbers<[1], [0], [0], [1], [0, 0, 1, 1], [], []>} : vector<256x64xbf16>, vector<64x64xbf16>, vector<256x64xf32> -> vector<256x64xf32>
    %c0_80 = arith.constant 0 : index
    %c0_81 = arith.constant 0 : index
    %106 = vector.load %arg30[%c0_80, %c0_81] : memref<1x64xf32, #tpu.memory_space<vmem>>, vector<1x64xf32>
    %107 = vector.broadcast %106 : vector<1x64xf32> to vector<256x64xf32>
    %108 = arith.addf %105, %107 : vector<256x64xf32>
    %cst_82 = arith.constant 0.000000e+00 : f32
    %109 = vector.broadcast %cst_82 : f32 to vector<256x64xf32>
    %110 = arith.maximumf %108, %109 : vector<256x64xf32>
    %111 = arith.truncf %110 : vector<256x64xf32> to vector<256x64xbf16>
    %c0_83 = arith.constant 0 : index
    %c0_84 = arith.constant 0 : index
    %112 = vector.load %arg31[%c0_83, %c0_84] : memref<64x64xbf16, #tpu.memory_space<vmem>>, vector<64x64xbf16>
    %cst_85 = arith.constant dense<0.000000e+00> : vector<256x64xf32>
    %113 = tpu.matmul %111, %112, %cst_85 {dimension_numbers = #tpu.dot_dimension_numbers<[1], [0], [0], [1], [0, 0, 1, 1], [], []>} : vector<256x64xbf16>, vector<64x64xbf16>, vector<256x64xf32> -> vector<256x64xf32>
    %c0_86 = arith.constant 0 : index
    %c0_87 = arith.constant 0 : index
    %114 = vector.load %arg32[%c0_86, %c0_87] : memref<1x64xf32, #tpu.memory_space<vmem>>, vector<1x64xf32>
    %115 = vector.broadcast %114 : vector<1x64xf32> to vector<256x64xf32>
    %116 = arith.addf %113, %115 : vector<256x64xf32>
    %cst_88 = arith.constant 0.000000e+00 : f32
    %117 = vector.broadcast %cst_88 : f32 to vector<256x64xf32>
    %118 = arith.maximumf %116, %117 : vector<256x64xf32>
    %119 = arith.truncf %118 : vector<256x64xf32> to vector<256x64xbf16>
    %c0_89 = arith.constant 0 : index
    %c0_90 = arith.constant 0 : index
    %120 = vector.load %arg33[%c0_89, %c0_90] : memref<64x32xbf16, #tpu.memory_space<vmem>>, vector<64x32xbf16>
    %cst_91 = arith.constant dense<0.000000e+00> : vector<256x32xf32>
    %121 = tpu.matmul %119, %120, %cst_91 {dimension_numbers = #tpu.dot_dimension_numbers<[1], [0], [0], [1], [0, 0, 1, 1], [], []>} : vector<256x64xbf16>, vector<64x32xbf16>, vector<256x32xf32> -> vector<256x32xf32>
    %c0_92 = arith.constant 0 : index
    %c0_93 = arith.constant 0 : index
    %122 = vector.load %arg34[%c0_92, %c0_93] : memref<1x32xf32, #tpu.memory_space<vmem>>, vector<1x32xf32>
    %123 = vector.broadcast %122 : vector<1x32xf32> to vector<256x32xf32>
    %124 = arith.addf %121, %123 : vector<256x32xf32>
    %125 = arith.addf %63, %124 : vector<256x32xf32>
    %126 = tpu.concatenate %94, %125 in 1 : vector<256x32xf32>, vector<256x32xf32> -> vector<256x64xf32>
    %c0_94 = arith.constant 0 : index
    %c0_95 = arith.constant 0 : index
    %127 = vector.load %arg35[%c0_94, %c0_95] : memref<1x64xf32, #tpu.memory_space<vmem>>, vector<1x64xf32>
    %128 = vector.broadcast %127 : vector<1x64xf32> to vector<256x64xf32>
    %129 = arith.mulf %126, %128 : vector<256x64xf32>
    %130 = math.absf %129 : vector<256x64xf32>
    %cst_96 = arith.constant 0.000000e+00 : f32
    %131 = vector.broadcast %cst_96 : f32 to vector<256x64xf32>
    %132 = arith.subf %131, %130 : vector<256x64xf32>
    %133 = math.exp %132 : vector<256x64xf32>
    %134 = math.log1p %133 : vector<256x64xf32>
    %cst_97 = arith.constant 2.000000e+00 : f32
    %135 = vector.broadcast %cst_97 : f32 to vector<256x64xf32>
    %136 = arith.mulf %135, %134 : vector<256x64xf32>
    %137 = arith.addf %130, %136 : vector<256x64xf32>
    %cst_98 = arith.constant 0.000000e+00 : f32
    %138 = vector.broadcast %cst_98 : f32 to vector<256x64xf32>
    %139 = arith.subf %138, %137 : vector<256x64xf32>
    %cst_99 = arith.constant dense<0.000000e+00> : vector<256xf32>
    %140 = vector.multi_reduction <add>, %139, %cst_99 [1] : vector<256x64xf32> to vector<256xf32>
    %141 = vector.shape_cast %140 : vector<256xf32> to vector<256x1xf32>
    %c0_100 = arith.constant 0 : index
    %c0_101 = arith.constant 0 : index
    %142 = memref.load %arg36[%c0_100, %c0_101] : memref<1x1xf32, #tpu.memory_space<smem>>
    %143 = vector.broadcast %142 : f32 to vector<256x1xf32>
    %144 = arith.addf %141, %143 : vector<256x1xf32>
    %c0_102 = arith.constant 0 : index
    %c0_103 = arith.constant 0 : index
    %145 = vector.load %arg37[%c0_102, %c0_103] : memref<256x1xf32, #tpu.memory_space<vmem>>, vector<256x1xf32>
    tpu.vector_store %arg37[%c0_102, %c0_103], %144 {strides = array<i32>} : memref<256x1xf32, #tpu.memory_space<vmem>>, vector<256x1xf32>,
    return
  }
  func.func @transform_0(%arg0: i32) -> (i32, i32) {
    %c0_i32 = arith.constant 0 : i32
    %c0_i32_0 = arith.constant 0 : i32
    return %arg0, %c0_i32 : i32, i32
  }
  func.func @transform_1(%arg0: i32) -> (i32, i32) {
    %c0_i32 = arith.constant 0 : i32
    %c0_i32_0 = arith.constant 0 : i32
    return %arg0, %c0_i32 : i32, i32
  }
  func.func @transform_2(%arg0: i32) -> (i32, i32) {
    %c0_i32 = arith.constant 0 : i32
    %c0_i32_0 = arith.constant 0 : i32
    %c0_i32_1 = arith.constant 0 : i32
    return %c0_i32, %c0_i32_0 : i32, i32
  }
  func.func @transform_3(%arg0: i32) -> (i32, i32) {
    %c0_i32 = arith.constant 0 : i32
    %c0_i32_0 = arith.constant 0 : i32
    %c0_i32_1 = arith.constant 0 : i32
    return %c0_i32, %c0_i32_0 : i32, i32
  }
  func.func @transform_4(%arg0: i32) -> (i32, i32) {
    %c0_i32 = arith.constant 0 : i32
    %c0_i32_0 = arith.constant 0 : i32
    %c0_i32_1 = arith.constant 0 : i32
    return %c0_i32, %c0_i32_0 : i32, i32
  }
  func.func @transform_5(%arg0: i32) -> (i32, i32) {
    %c0_i32 = arith.constant 0 : i32
    %c0_i32_0 = arith.constant 0 : i32
    %c0_i32_1 = arith.constant 0 : i32
    return %c0_i32, %c0_i32_0 : i32, i32
  }
  func.func @transform_6(%arg0: i32) -> (i32, i32) {
    %c0_i32 = arith.constant 0 : i32
    %c0_i32_0 = arith.constant 0 : i32
    %c0_i32_1 = arith.constant 0 : i32
    return %c0_i32, %c0_i32_0 : i32, i32
  }
  func.func @transform_7(%arg0: i32) -> (i32, i32) {
    %c0_i32 = arith.constant 0 : i32
    %c0_i32_0 = arith.constant 0 : i32
    %c0_i32_1 = arith.constant 0 : i32
    return %c0_i32, %c0_i32_0 : i32, i32
  }
  func.func @transform_8(%arg0: i32) -> (i32, i32) {
    %c0_i32 = arith.constant 0 : i32
    %c0_i32_0 = arith.constant 0 : i32
    %c0_i32_1 = arith.constant 0 : i32
    return %c0_i32, %c0_i32_0 : i32, i32
  }
  func.func @transform_9(%arg0: i32) -> (i32, i32) {
    %c0_i32 = arith.constant 0 : i32
    %c0_i32_0 = arith.constant 0 : i32
    %c0_i32_1 = arith.constant 0 : i32
    return %c0_i32, %c0_i32_0 : i32, i32
  }
  func.func @transform_10(%arg0: i32) -> (i32, i32) {
    %c0_i32 = arith.constant 0 : i32
    %c0_i32_0 = arith.constant 0 : i32
    %c0_i32_1 = arith.constant 0 : i32
    return %c0_i32, %c0_i32_0 : i32, i32
  }
  func.func @transform_11(%arg0: i32) -> (i32, i32) {
    %c0_i32 = arith.constant 0 : i32
    %c0_i32_0 = arith.constant 0 : i32
    %c0_i32_1 = arith.constant 0 : i32
    return %c0_i32, %c0_i32_0 : i32, i32
  }
  func.func @transform_12(%arg0: i32) -> (i32, i32) {
    %c0_i32 = arith.constant 0 : i32
    %c0_i32_0 = arith.constant 0 : i32
    %c0_i32_1 = arith.constant 0 : i32
    return %c0_i32, %c0_i32_0 : i32, i32
  }
  func.func @transform_13(%arg0: i32) -> (i32, i32) {
    %c0_i32 = arith.constant 0 : i32
    %c0_i32_0 = arith.constant 0 : i32
    %c0_i32_1 = arith.constant 0 : i32
    return %c0_i32, %c0_i32_0 : i32, i32
  }
  func.func @transform_14(%arg0: i32) -> (i32, i32) {
    %c0_i32 = arith.constant 0 : i32
    %c0_i32_0 = arith.constant 0 : i32
    %c0_i32_1 = arith.constant 0 : i32
    return %c0_i32, %c0_i32_0 : i32, i32
  }
  func.func @transform_15(%arg0: i32) -> (i32, i32) {
    %c0_i32 = arith.constant 0 : i32
    %c0_i32_0 = arith.constant 0 : i32
    %c0_i32_1 = arith.constant 0 : i32
    return %c0_i32, %c0_i32_0 : i32, i32
  }
  func.func @transform_16(%arg0: i32) -> (i32, i32) {
    %c0_i32 = arith.constant 0 : i32
    %c0_i32_0 = arith.constant 0 : i32
    %c0_i32_1 = arith.constant 0 : i32
    return %c0_i32, %c0_i32_0 : i32, i32
  }
  func.func @transform_17(%arg0: i32) -> (i32, i32) {
    %c0_i32 = arith.constant 0 : i32
    %c0_i32_0 = arith.constant 0 : i32
    %c0_i32_1 = arith.constant 0 : i32
    return %c0_i32, %c0_i32_0 : i32, i32
  }
  func.func @transform_18(%arg0: i32) -> (i32, i32) {
    %c0_i32 = arith.constant 0 : i32
    %c0_i32_0 = arith.constant 0 : i32
    %c0_i32_1 = arith.constant 0 : i32
    return %c0_i32, %c0_i32_0 : i32, i32
  }
  func.func @transform_19(%arg0: i32) -> (i32, i32) {
    %c0_i32 = arith.constant 0 : i32
    %c0_i32_0 = arith.constant 0 : i32
    %c0_i32_1 = arith.constant 0 : i32
    return %c0_i32, %c0_i32_0 : i32, i32
  }
  func.func @transform_20(%arg0: i32) -> (i32, i32) {
    %c0_i32 = arith.constant 0 : i32
    %c0_i32_0 = arith.constant 0 : i32
    %c0_i32_1 = arith.constant 0 : i32
    return %c0_i32, %c0_i32_0 : i32, i32
  }
  func.func @transform_21(%arg0: i32) -> (i32, i32) {
    %c0_i32 = arith.constant 0 : i32
    %c0_i32_0 = arith.constant 0 : i32
    %c0_i32_1 = arith.constant 0 : i32
    return %c0_i32, %c0_i32_0 : i32, i32
  }
  func.func @transform_22(%arg0: i32) -> (i32, i32) {
    %c0_i32 = arith.constant 0 : i32
    %c0_i32_0 = arith.constant 0 : i32
    %c0_i32_1 = arith.constant 0 : i32
    return %c0_i32, %c0_i32_0 : i32, i32
  }
  func.func @transform_23(%arg0: i32) -> (i32, i32) {
    %c0_i32 = arith.constant 0 : i32
    %c0_i32_0 = arith.constant 0 : i32
    %c0_i32_1 = arith.constant 0 : i32
    return %c0_i32, %c0_i32_0 : i32, i32
  }
  func.func @transform_24(%arg0: i32) -> (i32, i32) {
    %c0_i32 = arith.constant 0 : i32
    %c0_i32_0 = arith.constant 0 : i32
    %c0_i32_1 = arith.constant 0 : i32
    return %c0_i32, %c0_i32_0 : i32, i32
  }
  func.func @transform_25(%arg0: i32) -> (i32, i32) {
    %c0_i32 = arith.constant 0 : i32
    %c0_i32_0 = arith.constant 0 : i32
    %c0_i32_1 = arith.constant 0 : i32
    return %c0_i32, %c0_i32_0 : i32, i32
  }
  func.func @transform_26(%arg0: i32) -> (i32, i32) {
    %c0_i32 = arith.constant 0 : i32
    %c0_i32_0 = arith.constant 0 : i32
    %c0_i32_1 = arith.constant 0 : i32
    return %c0_i32, %c0_i32_0 : i32, i32
  }
  func.func @transform_27(%arg0: i32) -> (i32, i32) {
    %c0_i32 = arith.constant 0 : i32
    %c0_i32_0 = arith.constant 0 : i32
    %c0_i32_1 = arith.constant 0 : i32
    return %c0_i32, %c0_i32_0 : i32, i32
  }
  func.func @transform_28(%arg0: i32) -> (i32, i32) {
    %c0_i32 = arith.constant 0 : i32
    %c0_i32_0 = arith.constant 0 : i32
    %c0_i32_1 = arith.constant 0 : i32
    return %c0_i32, %c0_i32_0 : i32, i32
  }
  func.func @transform_29(%arg0: i32) -> (i32, i32) {
    %c0_i32 = arith.constant 0 : i32
    %c0_i32_0 = arith.constant 0 : i32
    %c0_i32_1 = arith.constant 0 : i32
    return %c0_i32, %c0_i32_0 : i32, i32
  }
  func.func @transform_30(%arg0: i32) -> (i32, i32) {
    %c0_i32 = arith.constant 0 : i32
    %c0_i32_0 = arith.constant 0 : i32
    %c0_i32_1 = arith.constant 0 : i32
    return %c0_i32, %c0_i32_0 : i32, i32
  }
  func.func @transform_31(%arg0: i32) -> (i32, i32) {
    %c0_i32 = arith.constant 0 : i32
    %c0_i32_0 = arith.constant 0 : i32
    %c0_i32_1 = arith.constant 0 : i32
    return %c0_i32, %c0_i32_0 : i32, i32
  }
  func.func @transform_32(%arg0: i32) -> (i32, i32) {
    %c0_i32 = arith.constant 0 : i32
    %c0_i32_0 = arith.constant 0 : i32
    %c0_i32_1 = arith.constant 0 : i32
    return %c0_i32, %c0_i32_0 : i32, i32
  }
  func.func @transform_33(%arg0: i32) -> (i32, i32) {
    %c0_i32 = arith.constant 0 : i32
    %c0_i32_0 = arith.constant 0 : i32
    %c0_i32_1 = arith.constant 0 : i32
    return %c0_i32, %c0_i32_0 : i32, i32
  }
  func.func @transform_34(%arg0: i32) -> (i32, i32) {
    %c0_i32 = arith.constant 0 : i32
    %c0_i32_0 = arith.constant 0 : i32
    %c0_i32_1 = arith.constant 0 : i32
    return %c0_i32, %c0_i32_0 : i32, i32
  }
  func.func @transform_35(%arg0: i32) -> (i32, i32) {
    %c0_i32 = arith.constant 0 : i32
    %c0_i32_0 = arith.constant 0 : i32
    %c0_i32_1 = arith.constant 0 : i32
    return %c0_i32, %c0_i32_0 : i32, i32
  }
  func.func @transform_36(%arg0: i32) -> (i32, i32) {
    %c0_i32 = arith.constant 0 : i32
    %c0_i32_0 = arith.constant 0 : i32
    return %arg0, %c0_i32 : i32, i32
  }
}

module attributes {stable_mosaic.version = 11 : i64} {
  func.func @_nice_kernel(%arg0: i32, %arg1: memref<256x32xf32, #tpu.memory_space<vmem>>, %arg2: memref<256x32xf32, #tpu.memory_space<vmem>>, %arg3: memref<32x64xbf16, #tpu.memory_space<vmem>>, %arg4: memref<1x64xf32, #tpu.memory_space<vmem>>, %arg5: memref<64x64xbf16, #tpu.memory_space<vmem>>, %arg6: memref<1x64xf32, #tpu.memory_space<vmem>>, %arg7: memref<64x64xbf16, #tpu.memory_space<vmem>>, %arg8: memref<1x64xf32, #tpu.memory_space<vmem>>, %arg9: memref<64x32xbf16, #tpu.memory_space<vmem>>, %arg10: memref<1x32xf32, #tpu.memory_space<vmem>>, %arg11: memref<32x64xbf16, #tpu.memory_space<vmem>>, %arg12: memref<1x64xf32, #tpu.memory_space<vmem>>, %arg13: memref<64x64xbf16, #tpu.memory_space<vmem>>, %arg14: memref<1x64xf32, #tpu.memory_space<vmem>>, %arg15: memref<64x64xbf16, #tpu.memory_space<vmem>>, %arg16: memref<1x64xf32, #tpu.memory_space<vmem>>, %arg17: memref<64x32xbf16, #tpu.memory_space<vmem>>, %arg18: memref<1x32xf32, #tpu.memory_space<vmem>>, %arg19: memref<32x64xbf16, #tpu.memory_space<vmem>>, %arg20: memref<1x64xf32, #tpu.memory_space<vmem>>, %arg21: memref<64x64xbf16, #tpu.memory_space<vmem>>, %arg22: memref<1x64xf32, #tpu.memory_space<vmem>>, %arg23: memref<64x64xbf16, #tpu.memory_space<vmem>>, %arg24: memref<1x64xf32, #tpu.memory_space<vmem>>, %arg25: memref<64x32xbf16, #tpu.memory_space<vmem>>, %arg26: memref<1x32xf32, #tpu.memory_space<vmem>>, %arg27: memref<32x64xbf16, #tpu.memory_space<vmem>>, %arg28: memref<1x64xf32, #tpu.memory_space<vmem>>, %arg29: memref<64x64xbf16, #tpu.memory_space<vmem>>, %arg30: memref<1x64xf32, #tpu.memory_space<vmem>>, %arg31: memref<64x64xbf16, #tpu.memory_space<vmem>>, %arg32: memref<1x64xf32, #tpu.memory_space<vmem>>, %arg33: memref<64x32xbf16, #tpu.memory_space<vmem>>, %arg34: memref<1x32xf32, #tpu.memory_space<vmem>>, %arg35: memref<1x64xf32, #tpu.memory_space<vmem>>, %arg36: memref<1x1xf32, #tpu.memory_space<smem>>, %arg37: memref<256x1xf32, #tpu.memory_space<vmem>>) attributes {dimension_semantics = [#tpu.dimension_semantics<parallel>], iteration_bounds = array<i64: 1>, scalar_prefetch = 0 : i64, scratch_operands = 0 : i64, tpu.core_type = #tpu.core_type<tc>, window_params = [{transform_indices = @transform_0, window_bounds = array<i64: 256, 32>}, {transform_indices = @transform_1, window_bounds = array<i64: 256, 32>}, {pipeline_mode = #tpu.pipeline_mode<synchronous>, transform_indices = @transform_2, window_bounds = array<i64: 32, 64>}, {pipeline_mode = #tpu.pipeline_mode<synchronous>, transform_indices = @transform_3, window_bounds = array<i64: 1, 64>}, {pipeline_mode = #tpu.pipeline_mode<synchronous>, transform_indices = @transform_4, window_bounds = array<i64: 64, 64>}, {pipeline_mode = #tpu.pipeline_mode<synchronous>, transform_indices = @transform_5, window_bounds = array<i64: 1, 64>}, {pipeline_mode = #tpu.pipeline_mode<synchronous>, transform_indices = @transform_6, window_bounds = array<i64: 64, 64>}, {pipeline_mode = #tpu.pipeline_mode<synchronous>, transform_indices = @transform_7, window_bounds = array<i64: 1, 64>}, {pipeline_mode = #tpu.pipeline_mode<synchronous>, transform_indices = @transform_8, window_bounds = array<i64: 64, 32>}, {pipeline_mode = #tpu.pipeline_mode<synchronous>, transform_indices = @transform_9, window_bounds = array<i64: 1, 32>}, {pipeline_mode = #tpu.pipeline_mode<synchronous>, transform_indices = @transform_10, window_bounds = array<i64: 32, 64>}, {pipeline_mode = #tpu.pipeline_mode<synchronous>, transform_indices = @transform_11, window_bounds = array<i64: 1, 64>}, {pipeline_mode = #tpu.pipeline_mode<synchronous>, transform_indices = @transform_12, window_bounds = array<i64: 64, 64>}, {pipeline_mode = #tpu.pipeline_mode<synchronous>, transform_indices = @transform_13, window_bounds = array<i64: 1, 64>}, {pipeline_mode = #tpu.pipeline_mode<synchronous>, transform_indices = @transform_14, window_bounds = array<i64: 64, 64>}, {pipeline_mode = #tpu.pipeline_mode<synchronous>, transform_indices = @transform_15, window_bounds = array<i64: 1, 64>}, {pipeline_mode = #tpu.pipeline_mode<synchronous>, transform_indices = @transform_16, window_bounds = array<i64: 64, 32>}, {pipeline_mode = #tpu.pipeline_mode<synchronous>, transform_indices = @transform_17, window_bounds = array<i64: 1, 32>}, {pipeline_mode = #tpu.pipeline_mode<synchronous>, transform_indices = @transform_18, window_bounds = array<i64: 32, 64>}, {pipeline_mode = #tpu.pipeline_mode<synchronous>, transform_indices = @transform_19, window_bounds = array<i64: 1, 64>}, {pipeline_mode = #tpu.pipeline_mode<synchronous>, transform_indices = @transform_20, window_bounds = array<i64: 64, 64>}, {pipeline_mode = #tpu.pipeline_mode<synchronous>, transform_indices = @transform_21, window_bounds = array<i64: 1, 64>}, {pipeline_mode = #tpu.pipeline_mode<synchronous>, transform_indices = @transform_22, window_bounds = array<i64: 64, 64>}, {pipeline_mode = #tpu.pipeline_mode<synchronous>, transform_indices = @transform_23, window_bounds = array<i64: 1, 64>}, {pipeline_mode = #tpu.pipeline_mode<synchronous>, transform_indices = @transform_24, window_bounds = array<i64: 64, 32>}, {pipeline_mode = #tpu.pipeline_mode<synchronous>, transform_indices = @transform_25, window_bounds = array<i64: 1, 32>}, {pipeline_mode = #tpu.pipeline_mode<synchronous>, transform_indices = @transform_26, window_bounds = array<i64: 32, 64>}, {pipeline_mode = #tpu.pipeline_mode<synchronous>, transform_indices = @transform_27, window_bounds = array<i64: 1, 64>}, {pipeline_mode = #tpu.pipeline_mode<synchronous>, transform_indices = @transform_28, window_bounds = array<i64: 64, 64>}, {pipeline_mode = #tpu.pipeline_mode<synchronous>, transform_indices = @transform_29, window_bounds = array<i64: 1, 64>}, {pipeline_mode = #tpu.pipeline_mode<synchronous>, transform_indices = @transform_30, window_bounds = array<i64: 64, 64>}, {pipeline_mode = #tpu.pipeline_mode<synchronous>, transform_indices = @transform_31, window_bounds = array<i64: 1, 64>}, {pipeline_mode = #tpu.pipeline_mode<synchronous>, transform_indices = @transform_32, window_bounds = array<i64: 64, 32>}, {pipeline_mode = #tpu.pipeline_mode<synchronous>, transform_indices = @transform_33, window_bounds = array<i64: 1, 32>}, {pipeline_mode = #tpu.pipeline_mode<synchronous>, transform_indices = @transform_34, window_bounds = array<i64: 1, 64>}, {transform_indices = @transform_35, window_bounds = array<i64: 1, 1>}, {transform_indices = @transform_36, window_bounds = array<i64: 256, 1>}]} {
    %c0 = arith.constant 0 : index
    %c0_0 = arith.constant 0 : index
    %0 = vector.load %arg1[%c0, %c0_0] : memref<256x32xf32, #tpu.memory_space<vmem>>, vector<256x32xf32>
    %c0_1 = arith.constant 0 : index
    %c0_2 = arith.constant 0 : index
    %1 = vector.load %arg2[%c0_1, %c0_2] : memref<256x32xf32, #tpu.memory_space<vmem>>, vector<256x32xf32>
    %2 = arith.truncf %1 : vector<256x32xf32> to vector<256x32xbf16>
    %c0_3 = arith.constant 0 : index
    %c0_4 = arith.constant 0 : index
    %3 = vector.load %arg3[%c0_3, %c0_4] : memref<32x64xbf16, #tpu.memory_space<vmem>>, vector<32x64xbf16>
    %cst = arith.constant dense<0.000000e+00> : vector<256x64xf32>
    %4 = tpu.matmul %2, %3, %cst {dimension_numbers = #tpu.dot_dimension_numbers<[1], [0], [0], [1], [0, 0, 1, 1], [], []>} : vector<256x32xbf16>, vector<32x64xbf16>, vector<256x64xf32> -> vector<256x64xf32>
    %c0_5 = arith.constant 0 : index
    %c0_6 = arith.constant 0 : index
    %5 = vector.load %arg4[%c0_5, %c0_6] : memref<1x64xf32, #tpu.memory_space<vmem>>, vector<1x64xf32>
    %6 = vector.broadcast %5 : vector<1x64xf32> to vector<256x64xf32>
    %7 = arith.addf %4, %6 : vector<256x64xf32>
    %cst_7 = arith.constant 0.000000e+00 : f32
    %8 = vector.broadcast %cst_7 : f32 to vector<256x64xf32>
    %9 = arith.maximumf %7, %8 : vector<256x64xf32>
    %10 = arith.truncf %9 : vector<256x64xf32> to vector<256x64xbf16>
    %c0_8 = arith.constant 0 : index
    %c0_9 = arith.constant 0 : index
    %11 = vector.load %arg5[%c0_8, %c0_9] : memref<64x64xbf16, #tpu.memory_space<vmem>>, vector<64x64xbf16>
    %cst_10 = arith.constant dense<0.000000e+00> : vector<256x64xf32>
    %12 = tpu.matmul %10, %11, %cst_10 {dimension_numbers = #tpu.dot_dimension_numbers<[1], [0], [0], [1], [0, 0, 1, 1], [], []>} : vector<256x64xbf16>, vector<64x64xbf16>, vector<256x64xf32> -> vector<256x64xf32>
    %c0_11 = arith.constant 0 : index
    %c0_12 = arith.constant 0 : index
    %13 = vector.load %arg6[%c0_11, %c0_12] : memref<1x64xf32, #tpu.memory_space<vmem>>, vector<1x64xf32>
    %14 = vector.broadcast %13 : vector<1x64xf32> to vector<256x64xf32>
    %15 = arith.addf %12, %14 : vector<256x64xf32>
    %cst_13 = arith.constant 0.000000e+00 : f32
    %16 = vector.broadcast %cst_13 : f32 to vector<256x64xf32>
    %17 = arith.maximumf %15, %16 : vector<256x64xf32>
    %18 = arith.truncf %17 : vector<256x64xf32> to vector<256x64xbf16>
    %c0_14 = arith.constant 0 : index
    %c0_15 = arith.constant 0 : index
    %19 = vector.load %arg7[%c0_14, %c0_15] : memref<64x64xbf16, #tpu.memory_space<vmem>>, vector<64x64xbf16>
    %cst_16 = arith.constant dense<0.000000e+00> : vector<256x64xf32>
    %20 = tpu.matmul %18, %19, %cst_16 {dimension_numbers = #tpu.dot_dimension_numbers<[1], [0], [0], [1], [0, 0, 1, 1], [], []>} : vector<256x64xbf16>, vector<64x64xbf16>, vector<256x64xf32> -> vector<256x64xf32>
    %c0_17 = arith.constant 0 : index
    %c0_18 = arith.constant 0 : index
    %21 = vector.load %arg8[%c0_17, %c0_18] : memref<1x64xf32, #tpu.memory_space<vmem>>, vector<1x64xf32>
    %22 = vector.broadcast %21 : vector<1x64xf32> to vector<256x64xf32>
    %23 = arith.addf %20, %22 : vector<256x64xf32>
    %cst_19 = arith.constant 0.000000e+00 : f32
    %24 = vector.broadcast %cst_19 : f32 to vector<256x64xf32>
    %25 = arith.maximumf %23, %24 : vector<256x64xf32>
    %26 = arith.truncf %25 : vector<256x64xf32> to vector<256x64xbf16>
    %c0_20 = arith.constant 0 : index
    %c0_21 = arith.constant 0 : index
    %27 = vector.load %arg9[%c0_20, %c0_21] : memref<64x32xbf16, #tpu.memory_space<vmem>>, vector<64x32xbf16>
    %cst_22 = arith.constant dense<0.000000e+00> : vector<256x32xf32>
    %28 = tpu.matmul %26, %27, %cst_22 {dimension_numbers = #tpu.dot_dimension_numbers<[1], [0], [0], [1], [0, 0, 1, 1], [], []>} : vector<256x64xbf16>, vector<64x32xbf16>, vector<256x32xf32> -> vector<256x32xf32>
    %c0_23 = arith.constant 0 : index
    %c0_24 = arith.constant 0 : index
    %29 = vector.load %arg10[%c0_23, %c0_24] : memref<1x32xf32, #tpu.memory_space<vmem>>, vector<1x32xf32>
    %30 = vector.broadcast %29 : vector<1x32xf32> to vector<256x32xf32>
    %31 = arith.addf %28, %30 : vector<256x32xf32>
    %32 = arith.addf %0, %31 : vector<256x32xf32>
    %33 = arith.truncf %32 : vector<256x32xf32> to vector<256x32xbf16>
    %c0_25 = arith.constant 0 : index
    %c0_26 = arith.constant 0 : index
    %34 = vector.load %arg11[%c0_25, %c0_26] : memref<32x64xbf16, #tpu.memory_space<vmem>>, vector<32x64xbf16>
    %cst_27 = arith.constant dense<0.000000e+00> : vector<256x64xf32>
    %35 = tpu.matmul %33, %34, %cst_27 {dimension_numbers = #tpu.dot_dimension_numbers<[1], [0], [0], [1], [0, 0, 1, 1], [], []>} : vector<256x32xbf16>, vector<32x64xbf16>, vector<256x64xf32> -> vector<256x64xf32>
    %c0_28 = arith.constant 0 : index
    %c0_29 = arith.constant 0 : index
    %36 = vector.load %arg12[%c0_28, %c0_29] : memref<1x64xf32, #tpu.memory_space<vmem>>, vector<1x64xf32>
    %37 = vector.broadcast %36 : vector<1x64xf32> to vector<256x64xf32>
    %38 = arith.addf %35, %37 : vector<256x64xf32>
    %cst_30 = arith.constant 0.000000e+00 : f32
    %39 = vector.broadcast %cst_30 : f32 to vector<256x64xf32>
    %40 = arith.maximumf %38, %39 : vector<256x64xf32>
    %41 = arith.truncf %40 : vector<256x64xf32> to vector<256x64xbf16>
    %c0_31 = arith.constant 0 : index
    %c0_32 = arith.constant 0 : index
    %42 = vector.load %arg13[%c0_31, %c0_32] : memref<64x64xbf16, #tpu.memory_space<vmem>>, vector<64x64xbf16>
    %cst_33 = arith.constant dense<0.000000e+00> : vector<256x64xf32>
    %43 = tpu.matmul %41, %42, %cst_33 {dimension_numbers = #tpu.dot_dimension_numbers<[1], [0], [0], [1], [0, 0, 1, 1], [], []>} : vector<256x64xbf16>, vector<64x64xbf16>, vector<256x64xf32> -> vector<256x64xf32>
    %c0_34 = arith.constant 0 : index
    %c0_35 = arith.constant 0 : index
    %44 = vector.load %arg14[%c0_34, %c0_35] : memref<1x64xf32, #tpu.memory_space<vmem>>, vector<1x64xf32>
    %45 = vector.broadcast %44 : vector<1x64xf32> to vector<256x64xf32>
    %46 = arith.addf %43, %45 : vector<256x64xf32>
    %cst_36 = arith.constant 0.000000e+00 : f32
    %47 = vector.broadcast %cst_36 : f32 to vector<256x64xf32>
    %48 = arith.maximumf %46, %47 : vector<256x64xf32>
    %49 = arith.truncf %48 : vector<256x64xf32> to vector<256x64xbf16>
    %c0_37 = arith.constant 0 : index
    %c0_38 = arith.constant 0 : index
    %50 = vector.load %arg15[%c0_37, %c0_38] : memref<64x64xbf16, #tpu.memory_space<vmem>>, vector<64x64xbf16>
    %cst_39 = arith.constant dense<0.000000e+00> : vector<256x64xf32>
    %51 = tpu.matmul %49, %50, %cst_39 {dimension_numbers = #tpu.dot_dimension_numbers<[1], [0], [0], [1], [0, 0, 1, 1], [], []>} : vector<256x64xbf16>, vector<64x64xbf16>, vector<256x64xf32> -> vector<256x64xf32>
    %c0_40 = arith.constant 0 : index
    %c0_41 = arith.constant 0 : index
    %52 = vector.load %arg16[%c0_40, %c0_41] : memref<1x64xf32, #tpu.memory_space<vmem>>, vector<1x64xf32>
    %53 = vector.broadcast %52 : vector<1x64xf32> to vector<256x64xf32>
    %54 = arith.addf %51, %53 : vector<256x64xf32>
    %cst_42 = arith.constant 0.000000e+00 : f32
    %55 = vector.broadcast %cst_42 : f32 to vector<256x64xf32>
    %56 = arith.maximumf %54, %55 : vector<256x64xf32>
    %57 = arith.truncf %56 : vector<256x64xf32> to vector<256x64xbf16>
    %c0_43 = arith.constant 0 : index
    %c0_44 = arith.constant 0 : index
    %58 = vector.load %arg17[%c0_43, %c0_44] : memref<64x32xbf16, #tpu.memory_space<vmem>>, vector<64x32xbf16>
    %cst_45 = arith.constant dense<0.000000e+00> : vector<256x32xf32>
    %59 = tpu.matmul %57, %58, %cst_45 {dimension_numbers = #tpu.dot_dimension_numbers<[1], [0], [0], [1], [0, 0, 1, 1], [], []>} : vector<256x64xbf16>, vector<64x32xbf16>, vector<256x32xf32> -> vector<256x32xf32>
    %c0_46 = arith.constant 0 : index
    %c0_47 = arith.constant 0 : index
    %60 = vector.load %arg18[%c0_46, %c0_47] : memref<1x32xf32, #tpu.memory_space<vmem>>, vector<1x32xf32>
    %61 = vector.broadcast %60 : vector<1x32xf32> to vector<256x32xf32>
    %62 = arith.addf %59, %61 : vector<256x32xf32>
    %63 = arith.addf %1, %62 : vector<256x32xf32>
    %64 = arith.truncf %63 : vector<256x32xf32> to vector<256x32xbf16>
    %c0_48 = arith.constant 0 : index
    %c0_49 = arith.constant 0 : index
    %65 = vector.load %arg19[%c0_48, %c0_49] : memref<32x64xbf16, #tpu.memory_space<vmem>>, vector<32x64xbf16>
    %cst_50 = arith.constant dense<0.000000e+00> : vector<256x64xf32>
    %66 = tpu.matmul %64, %65, %cst_50 {dimension_numbers = #tpu.dot_dimension_numbers<[1], [0], [0], [1], [0, 0, 1, 1], [], []>} : vector<256x32xbf16>, vector<32x64xbf16>, vector<256x64xf32> -> vector<256x64xf32>
    %c0_51 = arith.constant 0 : index
    %c0_52 = arith.constant 0 : index
    %67 = vector.load %arg20[%c0_51, %c0_52] : memref<1x64xf32, #tpu.memory_space<vmem>>, vector<1x64xf32>
    %68 = vector.broadcast %67 : vector<1x64xf32> to vector<256x64xf32>
    %69 = arith.addf %66, %68 : vector<256x64xf32>
    %cst_53 = arith.constant 0.000000e+00 : f32
    %70 = vector.broadcast %cst_53 : f32 to vector<256x64xf32>
    %71 = arith.maximumf %69, %70 : vector<256x64xf32>
    %72 = arith.truncf %71 : vector<256x64xf32> to vector<256x64xbf16>
    %c0_54 = arith.constant 0 : index
    %c0_55 = arith.constant 0 : index
    %73 = vector.load %arg21[%c0_54, %c0_55] : memref<64x64xbf16, #tpu.memory_space<vmem>>, vector<64x64xbf16>
    %cst_56 = arith.constant dense<0.000000e+00> : vector<256x64xf32>
    %74 = tpu.matmul %72, %73, %cst_56 {dimension_numbers = #tpu.dot_dimension_numbers<[1], [0], [0], [1], [0, 0, 1, 1], [], []>} : vector<256x64xbf16>, vector<64x64xbf16>, vector<256x64xf32> -> vector<256x64xf32>
    %c0_57 = arith.constant 0 : index
    %c0_58 = arith.constant 0 : index
    %75 = vector.load %arg22[%c0_57, %c0_58] : memref<1x64xf32, #tpu.memory_space<vmem>>, vector<1x64xf32>
    %76 = vector.broadcast %75 : vector<1x64xf32> to vector<256x64xf32>
    %77 = arith.addf %74, %76 : vector<256x64xf32>
    %cst_59 = arith.constant 0.000000e+00 : f32
    %78 = vector.broadcast %cst_59 : f32 to vector<256x64xf32>
    %79 = arith.maximumf %77, %78 : vector<256x64xf32>
    %80 = arith.truncf %79 : vector<256x64xf32> to vector<256x64xbf16>
    %c0_60 = arith.constant 0 : index
    %c0_61 = arith.constant 0 : index
    %81 = vector.load %arg23[%c0_60, %c0_61] : memref<64x64xbf16, #tpu.memory_space<vmem>>, vector<64x64xbf16>
    %cst_62 = arith.constant dense<0.000000e+00> : vector<256x64xf32>
    %82 = tpu.matmul %80, %81, %cst_62 {dimension_numbers = #tpu.dot_dimension_numbers<[1], [0], [0], [1], [0, 0, 1, 1], [], []>} : vector<256x64xbf16>, vector<64x64xbf16>, vector<256x64xf32> -> vector<256x64xf32>
    %c0_63 = arith.constant 0 : index
    %c0_64 = arith.constant 0 : index
    %83 = vector.load %arg24[%c0_63, %c0_64] : memref<1x64xf32, #tpu.memory_space<vmem>>, vector<1x64xf32>
    %84 = vector.broadcast %83 : vector<1x64xf32> to vector<256x64xf32>
    %85 = arith.addf %82, %84 : vector<256x64xf32>
    %cst_65 = arith.constant 0.000000e+00 : f32
    %86 = vector.broadcast %cst_65 : f32 to vector<256x64xf32>
    %87 = arith.maximumf %85, %86 : vector<256x64xf32>
    %88 = arith.truncf %87 : vector<256x64xf32> to vector<256x64xbf16>
    %c0_66 = arith.constant 0 : index
    %c0_67 = arith.constant 0 : index
    %89 = vector.load %arg25[%c0_66, %c0_67] : memref<64x32xbf16, #tpu.memory_space<vmem>>, vector<64x32xbf16>
    %cst_68 = arith.constant dense<0.000000e+00> : vector<256x32xf32>
    %90 = tpu.matmul %88, %89, %cst_68 {dimension_numbers = #tpu.dot_dimension_numbers<[1], [0], [0], [1], [0, 0, 1, 1], [], []>} : vector<256x64xbf16>, vector<64x32xbf16>, vector<256x32xf32> -> vector<256x32xf32>
    %c0_69 = arith.constant 0 : index
    %c0_70 = arith.constant 0 : index
    %91 = vector.load %arg26[%c0_69, %c0_70] : memref<1x32xf32, #tpu.memory_space<vmem>>, vector<1x32xf32>
    %92 = vector.broadcast %91 : vector<1x32xf32> to vector<256x32xf32>
    %93 = arith.addf %90, %92 : vector<256x32xf32>
    %94 = arith.addf %32, %93 : vector<256x32xf32>
    %95 = arith.truncf %94 : vector<256x32xf32> to vector<256x32xbf16>
    %c0_71 = arith.constant 0 : index
    %c0_72 = arith.constant 0 : index
    %96 = vector.load %arg27[%c0_71, %c0_72] : memref<32x64xbf16, #tpu.memory_space<vmem>>, vector<32x64xbf16>
    %cst_73 = arith.constant dense<0.000000e+00> : vector<256x64xf32>
    %97 = tpu.matmul %95, %96, %cst_73 {dimension_numbers = #tpu.dot_dimension_numbers<[1], [0], [0], [1], [0, 0, 1, 1], [], []>} : vector<256x32xbf16>, vector<32x64xbf16>, vector<256x64xf32> -> vector<256x64xf32>
    %c0_74 = arith.constant 0 : index
    %c0_75 = arith.constant 0 : index
    %98 = vector.load %arg28[%c0_74, %c0_75] : memref<1x64xf32, #tpu.memory_space<vmem>>, vector<1x64xf32>
    %99 = vector.broadcast %98 : vector<1x64xf32> to vector<256x64xf32>
    %100 = arith.addf %97, %99 : vector<256x64xf32>
    %cst_76 = arith.constant 0.000000e+00 : f32
    %101 = vector.broadcast %cst_76 : f32 to vector<256x64xf32>
    %102 = arith.maximumf %100, %101 : vector<256x64xf32>
    %103 = arith.truncf %102 : vector<256x64xf32> to vector<256x64xbf16>
    %c0_77 = arith.constant 0 : index
    %c0_78 = arith.constant 0 : index
    %104 = vector.load %arg29[%c0_77, %c0_78] : memref<64x64xbf16, #tpu.memory_space<vmem>>, vector<64x64xbf16>
    %cst_79 = arith.constant dense<0.000000e+00> : vector<256x64xf32>
    %105 = tpu.matmul %103, %104, %cst_79 {dimension_numbers = #tpu.dot_dimension_numbers<[1], [0], [0], [1], [0, 0, 1, 1], [], []>} : vector<256x64xbf16>, vector<64x64xbf16>, vector<256x64xf32> -> vector<256x64xf32>
    %c0_80 = arith.constant 0 : index
    %c0_81 = arith.constant 0 : index
    %106 = vector.load %arg30[%c0_80, %c0_81] : memref<1x64xf32, #tpu.memory_space<vmem>>, vector<1x64xf32>
    %107 = vector.broadcast %106 : vector<1x64xf32> to vector<256x64xf32>
    %108 = arith.addf %105, %107 : vector<256x64xf32>
    %cst_82 = arith.constant 0.000000e+00 : f32
    %109 = vector.broadcast %cst_82 : f32 to vector<256x64xf32>
    %110 = arith.maximumf %108, %109 : vector<256x64xf32>
    %111 = arith.truncf %110 : vector<256x64xf32> to vector<256x64xbf16>
    %c0_83 = arith.constant 0 : index
    %c0_84 = arith.constant 0 : index
    %112 = vector.load %arg31[%c0_83, %c0_84] : memref<64x64xbf16, #tpu.memory_space<vmem>>, vector<64x64xbf16>
    %cst_85 = arith.constant dense<0.000000e+00> : vector<256x64xf32>
    %113 = tpu.matmul %111, %112, %cst_85 {dimension_numbers = #tpu.dot_dimension_numbers<[1], [0], [0], [1], [0, 0, 1, 1], [], []>} : vector<256x64xbf16>, vector<64x64xbf16>, vector<256x64xf32> -> vector<256x64xf32>
    %c0_86 = arith.constant 0 : index
    %c0_87 = arith.constant 0 : index
    %114 = vector.load %arg32[%c0_86, %c0_87] : memref<1x64xf32, #tpu.memory_space<vmem>>, vector<1x64xf32>
    %115 = vector.broadcast %114 : vector<1x64xf32> to vector<256x64xf32>
    %116 = arith.addf %113, %115 : vector<256x64xf32>
    %cst_88 = arith.constant 0.000000e+00 : f32
    %117 = vector.broadcast %cst_88 : f32 to vector<256x64xf32>
    %118 = arith.maximumf %116, %117 : vector<256x64xf32>
    %119 = arith.truncf %118 : vector<256x64xf32> to vector<256x64xbf16>
    %c0_89 = arith.constant 0 : index
    %c0_90 = arith.constant 0 : index
    %120 = vector.load %arg33[%c0_89, %c0_90] : memref<64x32xbf16, #tpu.memory_space<vmem>>, vector<64x32xbf16>
    %cst_91 = arith.constant dense<0.000000e+00> : vector<256x32xf32>
    %121 = tpu.matmul %119, %120, %cst_91 {dimension_numbers = #tpu.dot_dimension_numbers<[1], [0], [0], [1], [0, 0, 1, 1], [], []>} : vector<256x64xbf16>, vector<64x32xbf16>, vector<256x32xf32> -> vector<256x32xf32>
    %c0_92 = arith.constant 0 : index
    %c0_93 = arith.constant 0 : index
    %122 = vector.load %arg34[%c0_92, %c0_93] : memref<1x32xf32, #tpu.memory_space<vmem>>, vector<1x32xf32>
    %123 = vector.broadcast %122 : vector<1x32xf32> to vector<256x32xf32>
    %124 = arith.addf %121, %123 : vector<256x32xf32>
    %125 = arith.addf %63, %124 : vector<256x32xf32>
    %126 = tpu.concatenate %94, %125 in 1 : vector<256x32xf32>, vector<256x32xf32> -> vector<256x64xf32>
    %c0_94 = arith.constant 0 : index
    %c0_95 = arith.constant 0 : index
    %127 = vector.load %arg35[%c0_94, %c0_95] : memref<1x64xf32, #tpu.memory_space<vmem>>, vector<1x64xf32>
    %128 = vector.broadcast %127 : vector<1x64xf32> to vector<256x64xf32>
    %129 = arith.mulf %126, %128 : vector<256x64xf32>
    %130 = math.absf %129 : vector<256x64xf32>
    %cst_96 = arith.constant 0.000000e+00 : f32
    %131 = vector.broadcast %cst_96 : f32 to vector<256x64xf32>
    %132 = arith.subf %131, %130 : vector<256x64xf32>
    %133 = math.exp %132 : vector<256x64xf32>
    %134 = math.log1p %133 : vector<256x64xf32>
    %cst_97 = arith.constant 2.000000e+00 : f32
    %135 = vector.broadcast %cst_97 : f32 to vector<256x64xf32>
    %136 = arith.mulf %135, %134 : vector<256x64xf32>
    %137 = arith.addf %130, %136 : vector<256x64xf32>
    %cst_98 = arith.constant 0.000000e+00 : f32
    %138 = vector.broadcast %cst_98 : f32 to vector<256x64xf32>
    %139 = arith.subf %138, %137 : vector<256x64xf32>
    %cst_99 = arith.constant dense<0.000000e+00> : vector<256xf32>
    %140 = vector.multi_reduction <add>, %139, %cst_99 [1] : vector<256x64xf32> to vector<256xf32>
    %141 = vector.shape_cast %140 : vector<256xf32> to vector<256x1xf32>
    %c0_100 = arith.constant 0 : index
    %c0_101 = arith.constant 0 : index
    %142 = memref.load %arg36[%c0_100, %c0_101] : memref<1x1xf32, #tpu.memory_space<smem>>
    %143 = vector.broadcast %142 : f32 to vector<256x1xf32>
    %144 = arith.addf %141, %143 : vector<256x1xf32>
    %c0_102 = arith.constant 0 : index
    %c0_103 = arith.constant 0 : index
    %145 = vector.load %arg37[%c0_102, %c0_103] : memref<256x1xf32, #tpu.memory_space<vmem>>, vector<256x1xf32>
    tpu.vector_store %arg37[%c0_102, %c0_103], %144 {strides = array<i32>} : memref<256x1xf32, #tpu.memory_space<vmem>>, vector<256x1xf32>,
    return
  }
  func.func @transform_0(%arg0: i32) -> (i32, i32) {
    %c0_i32 = arith.constant 0 : i32
    %c0_i32_0 = arith.constant 0 : i32
    return %arg0, %c0_i32 : i32, i32
  }
  func.func @transform_1(%arg0: i32) -> (i32, i32) {
    %c0_i32 = arith.constant 0 : i32
    %c0_i32_0 = arith.constant 0 : i32
    return %arg0, %c0_i32 : i32, i32
  }
  func.func @transform_2(%arg0: i32) -> (i32, i32) {
    %c0_i32 = arith.constant 0 : i32
    %c0_i32_0 = arith.constant 0 : i32
    %c0_i32_1 = arith.constant 0 : i32
    return %c0_i32, %c0_i32_0 : i32, i32
  }
  func.func @transform_3(%arg0: i32) -> (i32, i32) {
    %c0_i32 = arith.constant 0 : i32
    %c0_i32_0 = arith.constant 0 : i32
    %c0_i32_1 = arith.constant 0 : i32
    return %c0_i32, %c0_i32_0 : i32, i32
  }
  func.func @transform_4(%arg0: i32) -> (i32, i32) {
    %c0_i32 = arith.constant 0 : i32
    %c0_i32_0 = arith.constant 0 : i32
    %c0_i32_1 = arith.constant 0 : i32
    return %c0_i32, %c0_i32_0 : i32, i32
  }
  func.func @transform_5(%arg0: i32) -> (i32, i32) {
    %c0_i32 = arith.constant 0 : i32
    %c0_i32_0 = arith.constant 0 : i32
    %c0_i32_1 = arith.constant 0 : i32
    return %c0_i32, %c0_i32_0 : i32, i32
  }
  func.func @transform_6(%arg0: i32) -> (i32, i32) {
    %c0_i32 = arith.constant 0 : i32
    %c0_i32_0 = arith.constant 0 : i32
    %c0_i32_1 = arith.constant 0 : i32
    return %c0_i32, %c0_i32_0 : i32, i32
  }
  func.func @transform_7(%arg0: i32) -> (i32, i32) {
    %c0_i32 = arith.constant 0 : i32
    %c0_i32_0 = arith.constant 0 : i32
    %c0_i32_1 = arith.constant 0 : i32
    return %c0_i32, %c0_i32_0 : i32, i32
  }
  func.func @transform_8(%arg0: i32) -> (i32, i32) {
    %c0_i32 = arith.constant 0 : i32
    %c0_i32_0 = arith.constant 0 : i32
    %c0_i32_1 = arith.constant 0 : i32
    return %c0_i32, %c0_i32_0 : i32, i32
  }
  func.func @transform_9(%arg0: i32) -> (i32, i32) {
    %c0_i32 = arith.constant 0 : i32
    %c0_i32_0 = arith.constant 0 : i32
    %c0_i32_1 = arith.constant 0 : i32
    return %c0_i32, %c0_i32_0 : i32, i32
  }
  func.func @transform_10(%arg0: i32) -> (i32, i32) {
    %c0_i32 = arith.constant 0 : i32
    %c0_i32_0 = arith.constant 0 : i32
    %c0_i32_1 = arith.constant 0 : i32
    return %c0_i32, %c0_i32_0 : i32, i32
  }
  func.func @transform_11(%arg0: i32) -> (i32, i32) {
    %c0_i32 = arith.constant 0 : i32
    %c0_i32_0 = arith.constant 0 : i32
    %c0_i32_1 = arith.constant 0 : i32
    return %c0_i32, %c0_i32_0 : i32, i32
  }
  func.func @transform_12(%arg0: i32) -> (i32, i32) {
    %c0_i32 = arith.constant 0 : i32
    %c0_i32_0 = arith.constant 0 : i32
    %c0_i32_1 = arith.constant 0 : i32
    return %c0_i32, %c0_i32_0 : i32, i32
  }
  func.func @transform_13(%arg0: i32) -> (i32, i32) {
    %c0_i32 = arith.constant 0 : i32
    %c0_i32_0 = arith.constant 0 : i32
    %c0_i32_1 = arith.constant 0 : i32
    return %c0_i32, %c0_i32_0 : i32, i32
  }
  func.func @transform_14(%arg0: i32) -> (i32, i32) {
    %c0_i32 = arith.constant 0 : i32
    %c0_i32_0 = arith.constant 0 : i32
    %c0_i32_1 = arith.constant 0 : i32
    return %c0_i32, %c0_i32_0 : i32, i32
  }
  func.func @transform_15(%arg0: i32) -> (i32, i32) {
    %c0_i32 = arith.constant 0 : i32
    %c0_i32_0 = arith.constant 0 : i32
    %c0_i32_1 = arith.constant 0 : i32
    return %c0_i32, %c0_i32_0 : i32, i32
  }
  func.func @transform_16(%arg0: i32) -> (i32, i32) {
    %c0_i32 = arith.constant 0 : i32
    %c0_i32_0 = arith.constant 0 : i32
    %c0_i32_1 = arith.constant 0 : i32
    return %c0_i32, %c0_i32_0 : i32, i32
  }
  func.func @transform_17(%arg0: i32) -> (i32, i32) {
    %c0_i32 = arith.constant 0 : i32
    %c0_i32_0 = arith.constant 0 : i32
    %c0_i32_1 = arith.constant 0 : i32
    return %c0_i32, %c0_i32_0 : i32, i32
  }
  func.func @transform_18(%arg0: i32) -> (i32, i32) {
    %c0_i32 = arith.constant 0 : i32
    %c0_i32_0 = arith.constant 0 : i32
    %c0_i32_1 = arith.constant 0 : i32
    return %c0_i32, %c0_i32_0 : i32, i32
  }
  func.func @transform_19(%arg0: i32) -> (i32, i32) {
    %c0_i32 = arith.constant 0 : i32
    %c0_i32_0 = arith.constant 0 : i32
    %c0_i32_1 = arith.constant 0 : i32
    return %c0_i32, %c0_i32_0 : i32, i32
  }
  func.func @transform_20(%arg0: i32) -> (i32, i32) {
    %c0_i32 = arith.constant 0 : i32
    %c0_i32_0 = arith.constant 0 : i32
    %c0_i32_1 = arith.constant 0 : i32
    return %c0_i32, %c0_i32_0 : i32, i32
  }
  func.func @transform_21(%arg0: i32) -> (i32, i32) {
    %c0_i32 = arith.constant 0 : i32
    %c0_i32_0 = arith.constant 0 : i32
    %c0_i32_1 = arith.constant 0 : i32
    return %c0_i32, %c0_i32_0 : i32, i32
  }
  func.func @transform_22(%arg0: i32) -> (i32, i32) {
    %c0_i32 = arith.constant 0 : i32
    %c0_i32_0 = arith.constant 0 : i32
    %c0_i32_1 = arith.constant 0 : i32
    return %c0_i32, %c0_i32_0 : i32, i32
  }
  func.func @transform_23(%arg0: i32) -> (i32, i32) {
    %c0_i32 = arith.constant 0 : i32
    %c0_i32_0 = arith.constant 0 : i32
    %c0_i32_1 = arith.constant 0 : i32
    return %c0_i32, %c0_i32_0 : i32, i32
  }
  func.func @transform_24(%arg0: i32) -> (i32, i32) {
    %c0_i32 = arith.constant 0 : i32
    %c0_i32_0 = arith.constant 0 : i32
    %c0_i32_1 = arith.constant 0 : i32
    return %c0_i32, %c0_i32_0 : i32, i32
  }
  func.func @transform_25(%arg0: i32) -> (i32, i32) {
    %c0_i32 = arith.constant 0 : i32
    %c0_i32_0 = arith.constant 0 : i32
    %c0_i32_1 = arith.constant 0 : i32
    return %c0_i32, %c0_i32_0 : i32, i32
  }
  func.func @transform_26(%arg0: i32) -> (i32, i32) {
    %c0_i32 = arith.constant 0 : i32
    %c0_i32_0 = arith.constant 0 : i32
    %c0_i32_1 = arith.constant 0 : i32
    return %c0_i32, %c0_i32_0 : i32, i32
  }
  func.func @transform_27(%arg0: i32) -> (i32, i32) {
    %c0_i32 = arith.constant 0 : i32
    %c0_i32_0 = arith.constant 0 : i32
    %c0_i32_1 = arith.constant 0 : i32
    return %c0_i32, %c0_i32_0 : i32, i32
  }
  func.func @transform_28(%arg0: i32) -> (i32, i32) {
    %c0_i32 = arith.constant 0 : i32
    %c0_i32_0 = arith.constant 0 : i32
    %c0_i32_1 = arith.constant 0 : i32
    return %c0_i32, %c0_i32_0 : i32, i32
  }
  func.func @transform_29(%arg0: i32) -> (i32, i32) {
    %c0_i32 = arith.constant 0 : i32
    %c0_i32_0 = arith.constant 0 : i32
    %c0_i32_1 = arith.constant 0 : i32
    return %c0_i32, %c0_i32_0 : i32, i32
  }
  func.func @transform_30(%arg0: i32) -> (i32, i32) {
    %c0_i32 = arith.constant 0 : i32
    %c0_i32_0 = arith.constant 0 : i32
    %c0_i32_1 = arith.constant 0 : i32
    return %c0_i32, %c0_i32_0 : i32, i32
  }
  func.func @transform_31(%arg0: i32) -> (i32, i32) {
    %c0_i32 = arith.constant 0 : i32
    %c0_i32_0 = arith.constant 0 : i32
    %c0_i32_1 = arith.constant 0 : i32
    return %c0_i32, %c0_i32_0 : i32, i32
  }
  func.func @transform_32(%arg0: i32) -> (i32, i32) {
    %c0_i32 = arith.constant 0 : i32
    %c0_i32_0 = arith.constant 0 : i32
    %c0_i32_1 = arith.constant 0 : i32
    return %c0_i32, %c0_i32_0 : i32, i32
  }
  func.func @transform_33(%arg0: i32) -> (i32, i32) {
    %c0_i32 = arith.constant 0 : i32
    %c0_i32_0 = arith.constant 0 : i32
    %c0_i32_1 = arith.constant 0 : i32
    return %c0_i32, %c0_i32_0 : i32, i32
  }
  func.func @transform_34(%arg0: i32) -> (i32, i32) {
    %c0_i32 = arith.constant 0 : i32
    %c0_i32_0 = arith.constant 0 : i32
    %c0_i32_1 = arith.constant 0 : i32
    return %c0_i32, %c0_i32_0 : i32, i32
  }
  func.func @transform_35(%arg0: i32) -> (i32, i32) {
    %c0_i32 = arith.constant 0 : i32
    %c0_i32_0 = arith.constant 0 : i32
    %c0_i32_1 = arith.constant 0 : i32
    return %c0_i32, %c0_i32_0 : i32, i32
  }
  func.func @transform_36(%arg0: i32) -> (i32, i32) {
    %c0_i32 = arith.constant 0 : i32
    %c0_i32_0 = arith.constant 0 : i32
    return %arg0, %c0_i32 : i32, i32
  }
}

</mosaic_0001>

<llo_original>
// kernel: tpu_custom_call.1
$region0: #{tpu_custom_call.1}
  #allocation0 [shape = 'u32[]', space=smem, size = 0x4, offset = 0x4, fixed_abs, tag = 'smem constant byte address 0x4 - core index']
  #allocation1 [shape = 'u32[72,128]{1,0:T(1,128)}', space=vmem, size = 0x9000, scoped, tag = 'internal scratch']
  #allocation2 [shape = 'f32[1,1]{1,0:T(1,128)S(6)}', space=smem, size = 0x200, scoped, tag = 'scoped memory for tpu_custom_call.1']
  %s0 = inlined_call_operand.smem [shape: u32[37], index: -1, kind: input, shape index: {}]
  %s1 = sld [smem:[%s0]]
  %s2 = scalar_lea.smem %s0, 1
  %s3 = sld [smem:[%s2]]
  %s4 = scalar_lea.smem %s0, 2
  %s5 = sld [smem:[%s4]]
  %s6 = scalar_lea.smem %s0, 3
  %s7 = sld [smem:[%s6]]
  %s8 = scalar_lea.smem %s0, 4
  %s9 = sld [smem:[%s8]]
  %s10 = scalar_lea.smem %s0, 5
  %s11 = sld [smem:[%s10]]
  %s12 = scalar_lea.smem %s0, 6
  %s13 = sld [smem:[%s12]]
  %s14 = scalar_lea.smem %s0, 7
  %s15 = sld [smem:[%s14]]
  %s16 = scalar_lea.smem %s0, 8
  %s17 = sld [smem:[%s16]]
  %s18 = scalar_lea.smem %s0, 9
  %s19 = sld [smem:[%s18]]
  %s20 = scalar_lea.smem %s0, 10
  %s21 = sld [smem:[%s20]]
  %s22 = scalar_lea.smem %s0, 11
  %s23 = sld [smem:[%s22]]
  %s24 = scalar_lea.smem %s0, 12
  %s25 = sld [smem:[%s24]]
  %s26 = scalar_lea.smem %s0, 13
  %s27 = sld [smem:[%s26]]
  %s28 = scalar_lea.smem %s0, 14
  %s29 = sld [smem:[%s28]]
  %s30 = scalar_lea.smem %s0, 15
  %s31 = sld [smem:[%s30]]
  %s32 = scalar_lea.smem %s0, 16
  %s33 = sld [smem:[%s32]]
  %s34 = scalar_lea.smem %s0, 17
  %s35 = sld [smem:[%s34]]
  %s36 = scalar_lea.smem %s0, 18
  %s37 = sld [smem:[%s36]]
  %s38 = scalar_lea.smem %s0, 19
  %s39 = sld [smem:[%s38]]
  %s40 = scalar_lea.smem %s0, 20
  %s41 = sld [smem:[%s40]]
  %s42 = scalar_lea.smem %s0, 21
  %s43 = sld [smem:[%s42]]
  %s44 = scalar_lea.smem %s0, 22
  %s45 = sld [smem:[%s44]]
  %s46 = scalar_lea.smem %s0, 23
  %s47 = sld [smem:[%s46]]
  %s48 = scalar_lea.smem %s0, 24
  %s49 = sld [smem:[%s48]]
  %s50 = scalar_lea.smem %s0, 25
  %s51 = sld [smem:[%s50]]
  %s52 = scalar_lea.smem %s0, 26
  %s53 = sld [smem:[%s52]]
  %s54 = scalar_lea.smem %s0, 27
  %s55 = sld [smem:[%s54]]
  %s56 = scalar_lea.smem %s0, 28
  %s57 = sld [smem:[%s56]]
  %s58 = scalar_lea.smem %s0, 29
  %s59 = sld [smem:[%s58]]
  %s60 = scalar_lea.smem %s0, 30
  %s61 = sld [smem:[%s60]]
  %s62 = scalar_lea.smem %s0, 31
  %s63 = sld [smem:[%s62]]
  %s64 = scalar_lea.smem %s0, 32
  %s65 = sld [smem:[%s64]]
  %s66 = scalar_lea.smem %s0, 33
  %s67 = sld [smem:[%s66]]
  %s68 = scalar_lea.smem %s0, 34
  %s69 = sld [smem:[%s68]]
  %s70 = scalar_lea.smem %s0, 35
  %s71 = sld [smem:[%s70]]
  %s72 = scalar_lea.smem %s0, 36
  %s73 = sld [smem:[%s72]]
  %s74 = sld [smem:[#allocation0]]
  $region154: #{tpu_custom_call.1} parent=0
    _
  %s76 = ssub.s32 1, %s74
  %s77 = scalar_select 0, %s76, %s74
  %78 = sst [smem:[#allocation2]] %s71
  // Predicated region
  $region2: #{tpu_custom_call.1} parent=0 // pred_check
    _
  $region3: #{tpu_custom_call.1} parent=0 // pred_check_branch
    %80 = sbr.rel (0) target = $region5
  $region4: #{tpu_custom_call.1} parent=0 // pred_region
    _
  $region5: #{tpu_custom_call.1} parent=0 // pred_fallthru
    _
  // Predicated region
  $region6: #{tpu_custom_call.1} parent=0 // pred_check
    _
  $region7: #{tpu_custom_call.1} parent=0 // pred_check_branch
    %82 = sbr.rel (0) target = $region9
  $region8: #{tpu_custom_call.1} parent=0 // pred_region
    _
  $region9: #{tpu_custom_call.1} parent=0 // pred_fallthru
    _
  // Predicated region
  $region10: #{tpu_custom_call.1} parent=0 // pred_check
    _
  $region11: #{tpu_custom_call.1} parent=0 // pred_check_branch
    %84 = sbr.rel (0) target = $region13
  $region12: #{tpu_custom_call.1} parent=0 // pred_region
    _
  $region13: #{tpu_custom_call.1} parent=0 // pred_fallthru
    _
  // Predicated region
  $region14: #{tpu_custom_call.1} parent=0 // pred_check
    _
  $region15: #{tpu_custom_call.1} parent=0 // pred_check_branch
    %86 = sbr.rel (0) target = $region17
  $region16: #{tpu_custom_call.1} parent=0 // pred_region
    _
  $region17: #{tpu_custom_call.1} parent=0 // pred_fallthru
    _
  // Predicated region
  $region18: #{tpu_custom_call.1} parent=0 // pred_check
    _
  $region19: #{tpu_custom_call.1} parent=0 // pred_check_branch
    %88 = sbr.rel (0) target = $region21
  $region20: #{tpu_custom_call.1} parent=0 // pred_region
    _
  $region21: #{tpu_custom_call.1} parent=0 // pred_fallthru
    _
  // Predicated region
  $region22: #{tpu_custom_call.1} parent=0 // pred_check
    _
  $region23: #{tpu_custom_call.1} parent=0 // pred_check_branch
    %90 = sbr.rel (0) target = $region25
  $region24: #{tpu_custom_call.1} parent=0 // pred_region
    _
  $region25: #{tpu_custom_call.1} parent=0 // pred_fallthru
    _
  // Predicated region
  $region26: #{tpu_custom_call.1} parent=0 // pred_check
    _
  $region27: #{tpu_custom_call.1} parent=0 // pred_check_branch
    %92 = sbr.rel (0) target = $region29
  $region28: #{tpu_custom_call.1} parent=0 // pred_region
    _
  $region29: #{tpu_custom_call.1} parent=0 // pred_fallthru
    _
  // Predicated region
  $region30: #{tpu_custom_call.1} parent=0 // pred_check
    _
  $region31: #{tpu_custom_call.1} parent=0 // pred_check_branch
    %94 = sbr.rel (0) target = $region33
  $region32: #{tpu_custom_call.1} parent=0 // pred_region
    _
  $region33: #{tpu_custom_call.1} parent=0 // pred_fallthru
    _
  // Predicated region
  $region34: #{tpu_custom_call.1} parent=0 // pred_check
    _
  $region35: #{tpu_custom_call.1} parent=0 // pred_check_branch
    %96 = sbr.rel (0) target = $region37
  $region36: #{tpu_custom_call.1} parent=0 // pred_region
    _
  $region37: #{tpu_custom_call.1} parent=0 // pred_fallthru
    _
  // Predicated region
  $region38: #{tpu_custom_call.1} parent=0 // pred_check
    _
  $region39: #{tpu_custom_call.1} parent=0 // pred_check_branch
    %98 = sbr.rel (0) target = $region41
  $region40: #{tpu_custom_call.1} parent=0 // pred_region
    _
  $region41: #{tpu_custom_call.1} parent=0 // pred_fallthru
    _
  // Predicated region
  $region42: #{tpu_custom_call.1} parent=0 // pred_check
    _
  $region43: #{tpu_custom_call.1} parent=0 // pred_check_branch
    %100 = sbr.rel (0) target = $region45
  $region44: #{tpu_custom_call.1} parent=0 // pred_region
    _
  $region45: #{tpu_custom_call.1} parent=0 // pred_fallthru
    _
  // Predicated region
  $region46: #{tpu_custom_call.1} parent=0 // pred_check
    _
  $region47: #{tpu_custom_call.1} parent=0 // pred_check_branch
    %102 = sbr.rel (0) target = $region49
  $region48: #{tpu_custom_call.1} parent=0 // pred_region
    _
  $region49: #{tpu_custom_call.1} parent=0 // pred_fallthru
    _
  // Predicated region
  $region50: #{tpu_custom_call.1} parent=0 // pred_check
    _
  $region51: #{tpu_custom_call.1} parent=0 // pred_check_branch
    %104 = sbr.rel (0) target = $region53
  $region52: #{tpu_custom_call.1} parent=0 // pred_region
    _
  $region53: #{tpu_custom_call.1} parent=0 // pred_fallthru
    _
  // Predicated region
  $region54: #{tpu_custom_call.1} parent=0 // pred_check
    _
  $region55: #{tpu_custom_call.1} parent=0 // pred_check_branch
    %106 = sbr.rel (0) target = $region57
  $region56: #{tpu_custom_call.1} parent=0 // pred_region
    _
  $region57: #{tpu_custom_call.1} parent=0 // pred_fallthru
    _
  // Predicated region
  $region58: #{tpu_custom_call.1} parent=0 // pred_check
    _
  $region59: #{tpu_custom_call.1} parent=0 // pred_check_branch
    %108 = sbr.rel (0) target = $region61
  $region60: #{tpu_custom_call.1} parent=0 // pred_region
    _
  $region61: #{tpu_custom_call.1} parent=0 // pred_fallthru
    _
  // Predicated region
  $region62: #{tpu_custom_call.1} parent=0 // pred_check
    _
  $region63: #{tpu_custom_call.1} parent=0 // pred_check_branch
    %110 = sbr.rel (0) target = $region65
  $region64: #{tpu_custom_call.1} parent=0 // pred_region
    _
  $region65: #{tpu_custom_call.1} parent=0 // pred_fallthru
    _
  // Predicated region
  $region66: #{tpu_custom_call.1} parent=0 // pred_check
    _
  $region67: #{tpu_custom_call.1} parent=0 // pred_check_branch
    %112 = sbr.rel (0) target = $region69
  $region68: #{tpu_custom_call.1} parent=0 // pred_region
    _
  $region69: #{tpu_custom_call.1} parent=0 // pred_fallthru
    _
  // Predicated region
  $region70: #{tpu_custom_call.1} parent=0 // pred_check
    _
  $region71: #{tpu_custom_call.1} parent=0 // pred_check_branch
    %114 = sbr.rel (0) target = $region73
  $region72: #{tpu_custom_call.1} parent=0 // pred_region
    _
  $region73: #{tpu_custom_call.1} parent=0 // pred_fallthru
    _
  // Predicated region
  $region74: #{tpu_custom_call.1} parent=0 // pred_check
    _
  $region75: #{tpu_custom_call.1} parent=0 // pred_check_branch
    %116 = sbr.rel (0) target = $region77
  $region76: #{tpu_custom_call.1} parent=0 // pred_region
    _
  $region77: #{tpu_custom_call.1} parent=0 // pred_fallthru
    _
  // Predicated region
  $region78: #{tpu_custom_call.1} parent=0 // pred_check
    _
  $region79: #{tpu_custom_call.1} parent=0 // pred_check_branch
    %118 = sbr.rel (0) target = $region81
  $region80: #{tpu_custom_call.1} parent=0 // pred_region
    _
  $region81: #{tpu_custom_call.1} parent=0 // pred_fallthru
    _
  // Predicated region
  $region82: #{tpu_custom_call.1} parent=0 // pred_check
    _
  $region83: #{tpu_custom_call.1} parent=0 // pred_check_branch
    %120 = sbr.rel (0) target = $region85
  $region84: #{tpu_custom_call.1} parent=0 // pred_region
    _
  $region85: #{tpu_custom_call.1} parent=0 // pred_fallthru
    _
  // Predicated region
  $region86: #{tpu_custom_call.1} parent=0 // pred_check
    _
  $region87: #{tpu_custom_call.1} parent=0 // pred_check_branch
    %122 = sbr.rel (0) target = $region89
  $region88: #{tpu_custom_call.1} parent=0 // pred_region
    _
  $region89: #{tpu_custom_call.1} parent=0 // pred_fallthru
    _
  // Predicated region
  $region90: #{tpu_custom_call.1} parent=0 // pred_check
    _
  $region91: #{tpu_custom_call.1} parent=0 // pred_check_branch
    %124 = sbr.rel (0) target = $region93
  $region92: #{tpu_custom_call.1} parent=0 // pred_region
    _
  $region93: #{tpu_custom_call.1} parent=0 // pred_fallthru
    _
  // Predicated region
  $region94: #{tpu_custom_call.1} parent=0 // pred_check
    _
  $region95: #{tpu_custom_call.1} parent=0 // pred_check_branch
    %126 = sbr.rel (0) target = $region97
  $region96: #{tpu_custom_call.1} parent=0 // pred_region
    _
  $region97: #{tpu_custom_call.1} parent=0 // pred_fallthru
    _
  // Predicated region
  $region98: #{tpu_custom_call.1} parent=0 // pred_check
    _
  $region99: #{tpu_custom_call.1} parent=0 // pred_check_branch
    %128 = sbr.rel (0) target = $region101
  $region100: #{tpu_custom_call.1} parent=0 // pred_region
    _
  $region101: #{tpu_custom_call.1} parent=0 // pred_fallthru
    _
  // Predicated region
  $region102: #{tpu_custom_call.1} parent=0 // pred_check
    _
  $region103: #{tpu_custom_call.1} parent=0 // pred_check_branch
    %130 = sbr.rel (0) target = $region105
  $region104: #{tpu_custom_call.1} parent=0 // pred_region
    _
  $region105: #{tpu_custom_call.1} parent=0 // pred_fallthru
    _
  // Predicated region
  $region106: #{tpu_custom_call.1} parent=0 // pred_check
    _
  $region107: #{tpu_custom_call.1} parent=0 // pred_check_branch
    %132 = sbr.rel (0) target = $region109
  $region108: #{tpu_custom_call.1} parent=0 // pred_region
    _
  $region109: #{tpu_custom_call.1} parent=0 // pred_fallthru
    _
  // Predicated region
  $region110: #{tpu_custom_call.1} parent=0 // pred_check
    _
  $region111: #{tpu_custom_call.1} parent=0 // pred_check_branch
    %134 = sbr.rel (0) target = $region113
  $region112: #{tpu_custom_call.1} parent=0 // pred_region
    _
  $region113: #{tpu_custom_call.1} parent=0 // pred_fallthru
    _
  // Predicated region
  $region114: #{tpu_custom_call.1} parent=0 // pred_check
    _
  $region115: #{tpu_custom_call.1} parent=0 // pred_check_branch
    %136 = sbr.rel (0) target = $region117
  $region116: #{tpu_custom_call.1} parent=0 // pred_region
    _
  $region117: #{tpu_custom_call.1} parent=0 // pred_fallthru
    _
  // Predicated region
  $region118: #{tpu_custom_call.1} parent=0 // pred_check
    _
  $region119: #{tpu_custom_call.1} parent=0 // pred_check_branch
    %138 = sbr.rel (0) target = $region121
  $region120: #{tpu_custom_call.1} parent=0 // pred_region
    _
  $region121: #{tpu_custom_call.1} parent=0 // pred_fallthru
    _
  // Predicated region
  $region122: #{tpu_custom_call.1} parent=0 // pred_check
    _
  $region123: #{tpu_custom_call.1} parent=0 // pred_check_branch
    %140 = sbr.rel (0) target = $region125
  $region124: #{tpu_custom_call.1} parent=0 // pred_region
    _
  $region125: #{tpu_custom_call.1} parent=0 // pred_fallthru
    _
  // Predicated region
  $region126: #{tpu_custom_call.1} parent=0 // pred_check
    _
  $region127: #{tpu_custom_call.1} parent=0 // pred_check_branch
    %142 = sbr.rel (0) target = $region129
  $region128: #{tpu_custom_call.1} parent=0 // pred_region
    _
  $region129: #{tpu_custom_call.1} parent=0 // pred_fallthru
    _
  // Predicated region
  $region130: #{tpu_custom_call.1} parent=0 // pred_check
    _
  $region131: #{tpu_custom_call.1} parent=0 // pred_check_branch
    %144 = sbr.rel (0) target = $region133
  $region132: #{tpu_custom_call.1} parent=0 // pred_region
    _
  $region133: #{tpu_custom_call.1} parent=0 // pred_fallthru
    _
  // Predicated region
  $region134: #{tpu_custom_call.1} parent=0 // pred_check
    _
  $region135: #{tpu_custom_call.1} parent=0 // pred_check_branch
    %146 = sbr.rel (0) target = $region137
  $region136: #{tpu_custom_call.1} parent=0 // pred_region
    _
  $region137: #{tpu_custom_call.1} parent=0 // pred_fallthru
    _
  // Predicated region
  $region138: #{tpu_custom_call.1} parent=0 // pred_check
    _
  $region139: #{tpu_custom_call.1} parent=0 // pred_check_branch
    %148 = sbr.rel (0) target = $region141
  $region140: #{tpu_custom_call.1} parent=0 // pred_region
    _
  $region141: #{tpu_custom_call.1} parent=0 // pred_fallthru
    _
  // Predicated region
  $region142: #{tpu_custom_call.1} parent=0 // pred_check
    _
  $region143: #{tpu_custom_call.1} parent=0 // pred_check_branch
    %150 = sbr.rel (0) target = $region145
  $region144: #{tpu_custom_call.1} parent=0 // pred_region
    _
  $region145: #{tpu_custom_call.1} parent=0 // pred_fallthru
    _
  %v152 = vld [vmem:[%s1] sm:$0xff]
  %v153 = vld [vmem:[%s1 + $0x8] sm:$0xff]
  %v154 = vld [vmem:[%s1 + $0x10] sm:$0xff]
  %v155 = vld [vmem:[%s1 + $0x18] sm:$0xff]
  %v156 = vld [vmem:[%s1 + $0x20] sm:$0xff]
  %v157 = vld [vmem:[%s1 + $0x28] sm:$0xff]
  %v158 = vld [vmem:[%s1 + $0x30] sm:$0xff]
  %v159 = vld [vmem:[%s1 + $0x38] sm:$0xff]
  %v160 = vld [vmem:[%s1 + $0x40] sm:$0xff]
  %v161 = vld [vmem:[%s1 + $0x48] sm:$0xff]
  %v162 = vld [vmem:[%s1 + $0x50] sm:$0xff]
  %v163 = vld [vmem:[%s1 + $0x58] sm:$0xff]
  %v164 = vld [vmem:[%s1 + $0x60] sm:$0xff]
  %v165 = vld [vmem:[%s1 + $0x68] sm:$0xff]
  %v166 = vld [vmem:[%s1 + $0x70] sm:$0xff]
  %v167 = vld [vmem:[%s1 + $0x78] sm:$0xff]
  %v168 = vld [vmem:[%s1 + $0x80] sm:$0xff]
  %v169 = vld [vmem:[%s1 + $0x88] sm:$0xff]
  %v170 = vld [vmem:[%s1 + $0x90] sm:$0xff]
  %v171 = vld [vmem:[%s1 + $0x98] sm:$0xff]
  %v172 = vld [vmem:[%s1 + $0xa0] sm:$0xff]
  %v173 = vld [vmem:[%s1 + $0xa8] sm:$0xff]
  %v174 = vld [vmem:[%s1 + $0xb0] sm:$0xff]
  %v175 = vld [vmem:[%s1 + $0xb8] sm:$0xff]
  %v176 = vld [vmem:[%s1 + $0xc0] sm:$0xff]
  %v177 = vld [vmem:[%s1 + $0xc8] sm:$0xff]
  %v178 = vld [vmem:[%s1 + $0xd0] sm:$0xff]
  %v179 = vld [vmem:[%s1 + $0xd8] sm:$0xff]
  %v180 = vld [vmem:[%s1 + $0xe0] sm:$0xff]
  %v181 = vld [vmem:[%s1 + $0xe8] sm:$0xff]
  %v182 = vld [vmem:[%s1 + $0xf0] sm:$0xff]
  %v183 = vld [vmem:[%s1 + $0xf8] sm:$0xff]
  %v184 = vld [vmem:[%s3] sm:$0xff]
  %v185 = vld [vmem:[%s3 + $0x8] sm:$0xff]
  %v186 = vld [vmem:[%s3 + $0x10] sm:$0xff]
  %v187 = vld [vmem:[%s3 + $0x18] sm:$0xff]
  %v188 = vld [vmem:[%s3 + $0x20] sm:$0xff]
  %v189 = vld [vmem:[%s3 + $0x28] sm:$0xff]
  %v190 = vld [vmem:[%s3 + $0x30] sm:$0xff]
  %v191 = vld [vmem:[%s3 + $0x38] sm:$0xff]
  %v192 = vld [vmem:[%s3 + $0x40] sm:$0xff]
  %v193 = vld [vmem:[%s3 + $0x48] sm:$0xff]
  %v194 = vld [vmem:[%s3 + $0x50] sm:$0xff]
  %v195 = vld [vmem:[%s3 + $0x58] sm:$0xff]
  %v196 = vld [vmem:[%s3 + $0x60] sm:$0xff]
  %v197 = vld [vmem:[%s3 + $0x68] sm:$0xff]
  %v198 = vld [vmem:[%s3 + $0x70] sm:$0xff]
  %v199 = vld [vmem:[%s3 + $0x78] sm:$0xff]
  %v200 = vld [vmem:[%s3 + $0x80] sm:$0xff]
  %v201 = vld [vmem:[%s3 + $0x88] sm:$0xff]
  %v202 = vld [vmem:[%s3 + $0x90] sm:$0xff]
  %v203 = vld [vmem:[%s3 + $0x98] sm:$0xff]
  %v204 = vld [vmem:[%s3 + $0xa0] sm:$0xff]
  %v205 = vld [vmem:[%s3 + $0xa8] sm:$0xff]
  %v206 = vld [vmem:[%s3 + $0xb0] sm:$0xff]
  %v207 = vld [vmem:[%s3 + $0xb8] sm:$0xff]
  %v208 = vld [vmem:[%s3 + $0xc0] sm:$0xff]
  %v209 = vld [vmem:[%s3 + $0xc8] sm:$0xff]
  %v210 = vld [vmem:[%s3 + $0xd0] sm:$0xff]
  %v211 = vld [vmem:[%s3 + $0xd8] sm:$0xff]
  %v212 = vld [vmem:[%s3 + $0xe0] sm:$0xff]
  %v213 = vld [vmem:[%s3 + $0xe8] sm:$0xff]
  %v214 = vld [vmem:[%s3 + $0xf0] sm:$0xff]
  %v215 = vld [vmem:[%s3 + $0xf8] sm:$0xff]
  %v216 = vpack.c.bf16 %v185, %v184
  %v217 = vpack.c.bf16 %v187, %v186
  %v218 = vpack.c.bf16 %v189, %v188
  %v219 = vpack.c.bf16 %v191, %v190
  %v220 = vpack.c.bf16 %v193, %v192
  %v221 = vpack.c.bf16 %v195, %v194
  %v222 = vpack.c.bf16 %v197, %v196
  %v223 = vpack.c.bf16 %v199, %v198
  %v224 = vpack.c.bf16 %v201, %v200
  %v225 = vpack.c.bf16 %v203, %v202
  %v226 = vpack.c.bf16 %v205, %v204
  %v227 = vpack.c.bf16 %v207, %v206
  %v228 = vpack.c.bf16 %v209, %v208
  %v229 = vpack.c.bf16 %v211, %v210
  %v230 = vpack.c.bf16 %v213, %v212
  %v231 = vpack.c.bf16 %v215, %v214
  %v232 = vld [vmem:[%s5] sm:$0xf]
  %v233 = vld [vmem:[%s5 + $0x4] sm:$0xf]
  %v234 = vld [vmem:[%s5 + $0x8] sm:$0xf]
  %v235 = vld [vmem:[%s5 + $0xc] sm:$0xf]
  %v236 = vld [vmem:[%s7] sm:$0x1]
  %v238 = vperm.slane %v236, 0
  %v244 = vunpack.c.l.b16 %v232
  %v245 = vunpack.c.l.b16 %v233
  %v246 = vunpack.c.l.b16 %v234
  %v247 = vunpack.c.l.b16 %v235
  %v248 = vpack.c.b16 %v245, %v244
  %v249 = vpack.c.b16 %v247, %v246
  %vm252 = vcmask 261120
  %v254 = vsel %vm252, %v216, 0
  %v257 = vsel %vm252, %v217, 0
  %v260 = vsel %vm252, %v218, 0
  %v263 = vsel %vm252, %v219, 0
  %v266 = vsel %vm252, %v220, 0
  %v269 = vsel %vm252, %v221, 0
  %v272 = vsel %vm252, %v222, 0
  %v275 = vsel %vm252, %v223, 0
  %v278 = vsel %vm252, %v224, 0
  %v281 = vsel %vm252, %v225, 0
  %v284 = vsel %vm252, %v226, 0
  %v287 = vsel %vm252, %v227, 0
  %v290 = vsel %vm252, %v228, 0
  %v293 = vsel %vm252, %v229, 0
  %v296 = vsel %vm252, %v230, 0
  %v299 = vsel %vm252, %v231, 0
  %301 = vmatpush.bf16.msra.mxu0 0
  %302 = vmatpush.bf16.msra.mxu0 0
  %303 = vmatpush.bf16.msra.mxu0 0
  %304 = vmatpush.bf16.msra.mxu0 0
  %305 = vmatpush.bf16.msra.mxu0 0
  %306 = vmatpush.bf16.msra.mxu0 0
  %307 = vmatpush.bf16.msra.mxu0 %v249
  %308 = vmatpush.bf16.msra.mxu0 %v248
  %309 = vmatmul.bf16.gmra.mxu0 %v254
  %v310 = vpop.f32.mrf.mxu0
  %v311 = vadd.f32 %v238, %v310
  %v312 = vpop.f32.mrf.mxu0
  %v313 = vadd.f32 %v238, %v312
  %314 = vmatmul.bf16.gmra.mxu0 %v257
  %v315 = vpop.f32.mrf.mxu0
  %v316 = vadd.f32 %v238, %v315
  %v317 = vpop.f32.mrf.mxu0
  %v318 = vadd.f32 %v238, %v317
  %319 = vmatmul.bf16.gmra.mxu0 %v260
  %v320 = vpop.f32.mrf.mxu0
  %v321 = vadd.f32 %v238, %v320
  %v322 = vpop.f32.mrf.mxu0
  %v323 = vadd.f32 %v238, %v322
  %324 = vmatmul.bf16.gmra.mxu0 %v263
  %v325 = vpop.f32.mrf.mxu0
  %v326 = vadd.f32 %v238, %v325
  %v327 = vpop.f32.mrf.mxu0
  %v328 = vadd.f32 %v238, %v327
  %329 = vmatmul.bf16.gmra.mxu0 %v266
  %v330 = vpop.f32.mrf.mxu0
  %v331 = vadd.f32 %v238, %v330
  %v332 = vpop.f32.mrf.mxu0
  %v333 = vadd.f32 %v238, %v332
  %334 = vmatmul.bf16.gmra.mxu0 %v269
  %v335 = vpop.f32.mrf.mxu0
  %v336 = vadd.f32 %v238, %v335
  %v337 = vpop.f32.mrf.mxu0
  %v338 = vadd.f32 %v238, %v337
  %339 = vmatmul.bf16.gmra.mxu0 %v272
  %v340 = vpop.f32.mrf.mxu0
  %v341 = vadd.f32 %v238, %v340
  %v342 = vpop.f32.mrf.mxu0
  %v343 = vadd.f32 %v238, %v342
  %344 = vmatmul.bf16.gmra.mxu0 %v275
  %v345 = vpop.f32.mrf.mxu0
  %v346 = vadd.f32 %v238, %v345
  %v347 = vpop.f32.mrf.mxu0
  %v348 = vadd.f32 %v238, %v347
  %349 = vmatmul.bf16.gmra.mxu0 %v278
  %v350 = vpop.f32.mrf.mxu0
  %v351 = vadd.f32 %v238, %v350
  %v352 = vpop.f32.mrf.mxu0
  %v353 = vadd.f32 %v238, %v352
  %354 = vmatmul.bf16.gmra.mxu0 %v281
  %v355 = vpop.f32.mrf.mxu0
  %v356 = vadd.f32 %v238, %v355
  %v357 = vpop.f32.mrf.mxu0
  %v358 = vadd.f32 %v238, %v357
  %359 = vmatmul.bf16.gmra.mxu0 %v284
  %v360 = vpop.f32.mrf.mxu0
  %v361 = vadd.f32 %v238, %v360
  %v362 = vpop.f32.mrf.mxu0
  %v363 = vadd.f32 %v238, %v362
  %364 = vmatmul.bf16.gmra.mxu0 %v287
  %v365 = vpop.f32.mrf.mxu0
  %v366 = vadd.f32 %v238, %v365
  %v367 = vpop.f32.mrf.mxu0
  %v368 = vadd.f32 %v238, %v367
  %369 = vmatmul.bf16.gmra.mxu0 %v290
  %v370 = vpop.f32.mrf.mxu0
  %v371 = vadd.f32 %v238, %v370
  %v372 = vpop.f32.mrf.mxu0
  %v373 = vadd.f32 %v238, %v372
  %374 = vmatmul.bf16.gmra.mxu0 %v293
  %v375 = vpop.f32.mrf.mxu0
  %v376 = vadd.f32 %v238, %v375
  %v377 = vpop.f32.mrf.mxu0
  %v378 = vadd.f32 %v238, %v377
  %379 = vmatmul.bf16.gmra.mxu0 %v296
  %v380 = vpop.f32.mrf.mxu0
  %v381 = vadd.f32 %v238, %v380
  %v382 = vpop.f32.mrf.mxu0
  %v383 = vadd.f32 %v238, %v382
  %384 = vmatmul.bf16.gmra.mxu0 %v299
  %v385 = vpop.f32.mrf.mxu0
  %v386 = vadd.f32 %v238, %v385
  %v387 = vpop.f32.mrf.mxu0
  %v388 = vadd.f32 %v238, %v387
  %389 = vdwg.mxu0
  %v390 = vmax.f32 %v311, 0.0
  %v391 = vmax.f32 %v313, 0.0
  %v392 = vmax.f32 %v316, 0.0
  %v393 = vmax.f32 %v318, 0.0
  %v394 = vmax.f32 %v321, 0.0
  %v395 = vmax.f32 %v323, 0.0
  %v396 = vmax.f32 %v326, 0.0
  %v397 = vmax.f32 %v328, 0.0
  %v398 = vmax.f32 %v331, 0.0
  %v399 = vmax.f32 %v333, 0.0
  %v400 = vmax.f32 %v336, 0.0
  %v401 = vmax.f32 %v338, 0.0
  %v402 = vmax.f32 %v341, 0.0
  %v403 = vmax.f32 %v343, 0.0
  %v404 = vmax.f32 %v346, 0.0
  %v405 = vmax.f32 %v348, 0.0
  %v406 = vmax.f32 %v351, 0.0
  %v407 = vmax.f32 %v353, 0.0
  %v408 = vmax.f32 %v356, 0.0
  %v409 = vmax.f32 %v358, 0.0
  %v410 = vmax.f32 %v361, 0.0
  %v411 = vmax.f32 %v363, 0.0
  %v412 = vmax.f32 %v366, 0.0
  %v413 = vmax.f32 %v368, 0.0
  %v414 = vmax.f32 %v371, 0.0
  %v415 = vmax.f32 %v373, 0.0
  %v416 = vmax.f32 %v376, 0.0
  %v417 = vmax.f32 %v378, 0.0
  %v418 = vmax.f32 %v381, 0.0
  %v419 = vmax.f32 %v383, 0.0
  %v420 = vmax.f32 %v386, 0.0
  %v421 = vmax.f32 %v388, 0.0
  %v422 = vpack.c.bf16 %v391, %v390
  %v423 = vpack.c.bf16 %v393, %v392
  %v424 = vpack.c.bf16 %v395, %v394
  %v425 = vpack.c.bf16 %v397, %v396
  %v426 = vpack.c.bf16 %v399, %v398
  %v427 = vpack.c.bf16 %v401, %v400
  %v428 = vpack.c.bf16 %v403, %v402
  %v429 = vpack.c.bf16 %v405, %v404
  %v430 = vpack.c.bf16 %v407, %v406
  %v431 = vpack.c.bf16 %v409, %v408
  %v432 = vpack.c.bf16 %v411, %v410
  %v433 = vpack.c.bf16 %v413, %v412
  %v434 = vpack.c.bf16 %v415, %v414
  %v435 = vpack.c.bf16 %v417, %v416
  %v436 = vpack.c.bf16 %v419, %v418
  %v437 = vpack.c.bf16 %v421, %v420
  %v438 = vld [vmem:[%s9] sm:$0xf]
  %v439 = vld [vmem:[%s9 + $0x4] sm:$0xf]
  %v440 = vld [vmem:[%s9 + $0x8] sm:$0xf]
  %v441 = vld [vmem:[%s9 + $0xc] sm:$0xf]
  %v442 = vld [vmem:[%s9 + $0x10] sm:$0xf]
  %v443 = vld [vmem:[%s9 + $0x14] sm:$0xf]
  %v444 = vld [vmem:[%s9 + $0x18] sm:$0xf]
  %v445 = vld [vmem:[%s9 + $0x1c] sm:$0xf]
  %v446 = vld [vmem:[%s11] sm:$0x1]
  %v448 = vperm.slane %v446, 0
  %v458 = vunpack.c.l.b16 %v438
  %v459 = vunpack.c.l.b16 %v439
  %v460 = vunpack.c.l.b16 %v440
  %v461 = vunpack.c.l.b16 %v441
  %v462 = vunpack.c.l.b16 %v442
  %v463 = vunpack.c.l.b16 %v443
  %v464 = vunpack.c.l.b16 %v444
  %v465 = vunpack.c.l.b16 %v445
  %v466 = vpack.c.b16 %v459, %v458
  %v467 = vpack.c.b16 %v461, %v460
  %v468 = vpack.c.b16 %v463, %v462
  %v469 = vpack.c.b16 %v465, %v464
  %vm474 = vcmask 523264
  %v476 = vsel %vm474, %v422, 0
  %v479 = vsel %vm474, %v423, 0
  %v482 = vsel %vm474, %v424, 0
  %v485 = vsel %vm474, %v425, 0
  %v488 = vsel %vm474, %v426, 0
  %v491 = vsel %vm474, %v427, 0
  %v494 = vsel %vm474, %v428, 0
  %v497 = vsel %vm474, %v429, 0
  %v500 = vsel %vm474, %v430, 0
  %v503 = vsel %vm474, %v431, 0
  %v506 = vsel %vm474, %v432, 0
  %v509 = vsel %vm474, %v433, 0
  %v512 = vsel %vm474, %v434, 0
  %v515 = vsel %vm474, %v435, 0
  %v518 = vsel %vm474, %v436, 0
  %v521 = vsel %vm474, %v437, 0
  %523 = vmatpush.bf16.msra.mxu0 0
  %524 = vmatpush.bf16.msra.mxu0 0
  %525 = vmatpush.bf16.msra.mxu0 0
  %526 = vmatpush.bf16.msra.mxu0 0
  %527 = vmatpush.bf16.msra.mxu0 %v469
  %528 = vmatpush.bf16.msra.mxu0 %v468
  %529 = vmatpush.bf16.msra.mxu0 %v467
  %530 = vmatpush.bf16.msra.mxu0 %v466
  %531 = vmatmul.bf16.gmra.mxu0 %v476
  %v532 = vpop.f32.mrf.mxu0
  %v533 = vadd.f32 %v448, %v532
  %v534 = vpop.f32.mrf.mxu0
  %v535 = vadd.f32 %v448, %v534
  %536 = vmatmul.bf16.gmra.mxu0 %v479
  %v537 = vpop.f32.mrf.mxu0
  %v538 = vadd.f32 %v448, %v537
  %v539 = vpop.f32.mrf.mxu0
  %v540 = vadd.f32 %v448, %v539
  %541 = vmatmul.bf16.gmra.mxu0 %v482
  %v542 = vpop.f32.mrf.mxu0
  %v543 = vadd.f32 %v448, %v542
  %v544 = vpop.f32.mrf.mxu0
  %v545 = vadd.f32 %v448, %v544
  %546 = vmatmul.bf16.gmra.mxu0 %v485
  %v547 = vpop.f32.mrf.mxu0
  %v548 = vadd.f32 %v448, %v547
  %v549 = vpop.f32.mrf.mxu0
  %v550 = vadd.f32 %v448, %v549
  %551 = vmatmul.bf16.gmra.mxu0 %v488
  %v552 = vpop.f32.mrf.mxu0
  %v553 = vadd.f32 %v448, %v552
  %v554 = vpop.f32.mrf.mxu0
  %v555 = vadd.f32 %v448, %v554
  %556 = vmatmul.bf16.gmra.mxu0 %v491
  %v557 = vpop.f32.mrf.mxu0
  %v558 = vadd.f32 %v448, %v557
  %v559 = vpop.f32.mrf.mxu0
  %v560 = vadd.f32 %v448, %v559
  %561 = vmatmul.bf16.gmra.mxu0 %v494
  %v562 = vpop.f32.mrf.mxu0
  %v563 = vadd.f32 %v448, %v562
  %v564 = vpop.f32.mrf.mxu0
  %v565 = vadd.f32 %v448, %v564
  %566 = vmatmul.bf16.gmra.mxu0 %v497
  %v567 = vpop.f32.mrf.mxu0
  %v568 = vadd.f32 %v448, %v567
  %v569 = vpop.f32.mrf.mxu0
  %v570 = vadd.f32 %v448, %v569
  %571 = vmatmul.bf16.gmra.mxu0 %v500
  %v572 = vpop.f32.mrf.mxu0
  %v573 = vadd.f32 %v448, %v572
  %v574 = vpop.f32.mrf.mxu0
  %v575 = vadd.f32 %v448, %v574
  %576 = vmatmul.bf16.gmra.mxu0 %v503
  %v577 = vpop.f32.mrf.mxu0
  %v578 = vadd.f32 %v448, %v577
  %v579 = vpop.f32.mrf.mxu0
  %v580 = vadd.f32 %v448, %v579
  %581 = vmatmul.bf16.gmra.mxu0 %v506
  %v582 = vpop.f32.mrf.mxu0
  %v583 = vadd.f32 %v448, %v582
  %v584 = vpop.f32.mrf.mxu0
  %v585 = vadd.f32 %v448, %v584
  %586 = vmatmul.bf16.gmra.mxu0 %v509
  %v587 = vpop.f32.mrf.mxu0
  %v588 = vadd.f32 %v448, %v587
  %v589 = vpop.f32.mrf.mxu0
  %v590 = vadd.f32 %v448, %v589
  %591 = vmatmul.bf16.gmra.mxu0 %v512
  %v592 = vpop.f32.mrf.mxu0
  %v593 = vadd.f32 %v448, %v592
  %v594 = vpop.f32.mrf.mxu0
  %v595 = vadd.f32 %v448, %v594
  %596 = vmatmul.bf16.gmra.mxu0 %v515
  %v597 = vpop.f32.mrf.mxu0
  %v598 = vadd.f32 %v448, %v597
  %v599 = vpop.f32.mrf.mxu0
  %v600 = vadd.f32 %v448, %v599
  %601 = vmatmul.bf16.gmra.mxu0 %v518
  %v602 = vpop.f32.mrf.mxu0
  %v603 = vadd.f32 %v448, %v602
  %v604 = vpop.f32.mrf.mxu0
  %v605 = vadd.f32 %v448, %v604
  %606 = vmatmul.bf16.gmra.mxu0 %v521
  %v607 = vpop.f32.mrf.mxu0
  %v608 = vadd.f32 %v448, %v607
  %v609 = vpop.f32.mrf.mxu0
  %v610 = vadd.f32 %v448, %v609
  %611 = vdwg.mxu0
  %v612 = vmax.f32 %v533, 0.0
  %v613 = vmax.f32 %v535, 0.0
  %v614 = vmax.f32 %v538, 0.0
  %v615 = vmax.f32 %v540, 0.0
  %v616 = vmax.f32 %v543, 0.0
  %v617 = vmax.f32 %v545, 0.0
  %v618 = vmax.f32 %v548, 0.0
  %v619 = vmax.f32 %v550, 0.0
  %v620 = vmax.f32 %v553, 0.0
  %v621 = vmax.f32 %v555, 0.0
  %v622 = vmax.f32 %v558, 0.0
  %v623 = vmax.f32 %v560, 0.0
  %v624 = vmax.f32 %v563, 0.0
  %v625 = vmax.f32 %v565, 0.0
  %v626 = vmax.f32 %v568, 0.0
  %v627 = vmax.f32 %v570, 0.0
  %v628 = vmax.f32 %v573, 0.0
  %v629 = vmax.f32 %v575, 0.0
  %v630 = vmax.f32 %v578, 0.0
  %v631 = vmax.f32 %v580, 0.0
  %v632 = vmax.f32 %v583, 0.0
  %v633 = vmax.f32 %v585, 0.0
  %v634 = vmax.f32 %v588, 0.0
  %v635 = vmax.f32 %v590, 0.0
  %v636 = vmax.f32 %v593, 0.0
  %v637 = vmax.f32 %v595, 0.0
  %v638 = vmax.f32 %v598, 0.0
  %v639 = vmax.f32 %v600, 0.0
  %v640 = vmax.f32 %v603, 0.0
  %v641 = vmax.f32 %v605, 0.0
  %v642 = vmax.f32 %v608, 0.0
  %v643 = vmax.f32 %v610, 0.0
  %v644 = vpack.c.bf16 %v613, %v612
  %v645 = vpack.c.bf16 %v615, %v614
  %v646 = vpack.c.bf16 %v617, %v616
  %v647 = vpack.c.bf16 %v619, %v618
  %v648 = vpack.c.bf16 %v621, %v620
  %v649 = vpack.c.bf16 %v623, %v622
  %v650 = vpack.c.bf16 %v625, %v624
  %v651 = vpack.c.bf16 %v627, %v626
  %v652 = vpack.c.bf16 %v629, %v628
  %v653 = vpack.c.bf16 %v631, %v630
  %v654 = vpack.c.bf16 %v633, %v632
  %v655 = vpack.c.bf16 %v635, %v634
  %v656 = vpack.c.bf16 %v637, %v636
  %v657 = vpack.c.bf16 %v639, %v638
  %v658 = vpack.c.bf16 %v641, %v640
  %v659 = vpack.c.bf16 %v643, %v642
  %v660 = vld [vmem:[%s13] sm:$0xf]
  %v661 = vld [vmem:[%s13 + $0x4] sm:$0xf]
  %v662 = vld [vmem:[%s13 + $0x8] sm:$0xf]
  %v663 = vld [vmem:[%s13 + $0xc] sm:$0xf]
  %v664 = vld [vmem:[%s13 + $0x10] sm:$0xf]
  %v665 = vld [vmem:[%s13 + $0x14] sm:$0xf]
  %v666 = vld [vmem:[%s13 + $0x18] sm:$0xf]
  %v667 = vld [vmem:[%s13 + $0x1c] sm:$0xf]
  %v668 = vld [vmem:[%s15] sm:$0x1]
  %v670 = vperm.slane %v668, 0
  %v680 = vunpack.c.l.b16 %v660
  %v681 = vunpack.c.l.b16 %v661
  %v682 = vunpack.c.l.b16 %v662
  %v683 = vunpack.c.l.b16 %v663
  %v684 = vunpack.c.l.b16 %v664
  %v685 = vunpack.c.l.b16 %v665
  %v686 = vunpack.c.l.b16 %v666
  %v687 = vunpack.c.l.b16 %v667
  %v688 = vpack.c.b16 %v681, %v680
  %v689 = vpack.c.b16 %v683, %v682
  %v690 = vpack.c.b16 %v685, %v684
  %v691 = vpack.c.b16 %v687, %v686
  %v697 = vsel %vm474, %v644, 0
  %v700 = vsel %vm474, %v645, 0
  %v703 = vsel %vm474, %v646, 0
  %v706 = vsel %vm474, %v647, 0
  %v709 = vsel %vm474, %v648, 0
  %v712 = vsel %vm474, %v649, 0
  %v715 = vsel %vm474, %v650, 0
  %v718 = vsel %vm474, %v651, 0
  %v721 = vsel %vm474, %v652, 0
  %v724 = vsel %vm474, %v653, 0
  %v727 = vsel %vm474, %v654, 0
  %v730 = vsel %vm474, %v655, 0
  %v733 = vsel %vm474, %v656, 0
  %v736 = vsel %vm474, %v657, 0
  %v739 = vsel %vm474, %v658, 0
  %v742 = vsel %vm474, %v659, 0
  %744 = vmatpush.bf16.msra.mxu0 0
  %745 = vmatpush.bf16.msra.mxu0 0
  %746 = vmatpush.bf16.msra.mxu0 0
  %747 = vmatpush.bf16.msra.mxu0 0
  %748 = vmatpush.bf16.msra.mxu0 %v691
  %749 = vmatpush.bf16.msra.mxu0 %v690
  %750 = vmatpush.bf16.msra.mxu0 %v689
  %751 = vmatpush.bf16.msra.mxu0 %v688
  %752 = vmatmul.bf16.gmra.mxu0 %v697
  %v753 = vpop.f32.mrf.mxu0
  %v754 = vadd.f32 %v670, %v753
  %v755 = vpop.f32.mrf.mxu0
  %v756 = vadd.f32 %v670, %v755
  %757 = vmatmul.bf16.gmra.mxu0 %v700
  %v758 = vpop.f32.mrf.mxu0
  %v759 = vadd.f32 %v670, %v758
  %v760 = vpop.f32.mrf.mxu0
  %v761 = vadd.f32 %v670, %v760
  %762 = vmatmul.bf16.gmra.mxu0 %v703
  %v763 = vpop.f32.mrf.mxu0
  %v764 = vadd.f32 %v670, %v763
  %v765 = vpop.f32.mrf.mxu0
  %v766 = vadd.f32 %v670, %v765
  %767 = vmatmul.bf16.gmra.mxu0 %v706
  %v768 = vpop.f32.mrf.mxu0
  %v769 = vadd.f32 %v670, %v768
  %v770 = vpop.f32.mrf.mxu0
  %v771 = vadd.f32 %v670, %v770
  %772 = vmatmul.bf16.gmra.mxu0 %v709
  %v773 = vpop.f32.mrf.mxu0
  %v774 = vadd.f32 %v670, %v773
  %v775 = vpop.f32.mrf.mxu0
  %v776 = vadd.f32 %v670, %v775
  %777 = vmatmul.bf16.gmra.mxu0 %v712
  %v778 = vpop.f32.mrf.mxu0
  %v779 = vadd.f32 %v670, %v778
  %v780 = vpop.f32.mrf.mxu0
  %v781 = vadd.f32 %v670, %v780
  %782 = vmatmul.bf16.gmra.mxu0 %v715
  %v783 = vpop.f32.mrf.mxu0
  %v784 = vadd.f32 %v670, %v783
  %v785 = vpop.f32.mrf.mxu0
  %v786 = vadd.f32 %v670, %v785
  %787 = vmatmul.bf16.gmra.mxu0 %v718
  %v788 = vpop.f32.mrf.mxu0
  %v789 = vadd.f32 %v670, %v788
  %v790 = vpop.f32.mrf.mxu0
  %v791 = vadd.f32 %v670, %v790
  %792 = vmatmul.bf16.gmra.mxu0 %v721
  %v793 = vpop.f32.mrf.mxu0
  %v794 = vadd.f32 %v670, %v793
  %v795 = vpop.f32.mrf.mxu0
  %v796 = vadd.f32 %v670, %v795
  %797 = vmatmul.bf16.gmra.mxu0 %v724
  %v798 = vpop.f32.mrf.mxu0
  %v799 = vadd.f32 %v670, %v798
  %v800 = vpop.f32.mrf.mxu0
  %v801 = vadd.f32 %v670, %v800
  %802 = vmatmul.bf16.gmra.mxu0 %v727
  %v803 = vpop.f32.mrf.mxu0
  %v804 = vadd.f32 %v670, %v803
  %v805 = vpop.f32.mrf.mxu0
  %v806 = vadd.f32 %v670, %v805
  %807 = vmatmul.bf16.gmra.mxu0 %v730
  %v808 = vpop.f32.mrf.mxu0
  %v809 = vadd.f32 %v670, %v808
  %v810 = vpop.f32.mrf.mxu0
  %v811 = vadd.f32 %v670, %v810
  %812 = vmatmul.bf16.gmra.mxu0 %v733
  %v813 = vpop.f32.mrf.mxu0
  %v814 = vadd.f32 %v670, %v813
  %v815 = vpop.f32.mrf.mxu0
  %v816 = vadd.f32 %v670, %v815
  %817 = vmatmul.bf16.gmra.mxu0 %v736
  %v818 = vpop.f32.mrf.mxu0
  %v819 = vadd.f32 %v670, %v818
  %v820 = vpop.f32.mrf.mxu0
  %v821 = vadd.f32 %v670, %v820
  %822 = vmatmul.bf16.gmra.mxu0 %v739
  %v823 = vpop.f32.mrf.mxu0
  %v824 = vadd.f32 %v670, %v823
  %v825 = vpop.f32.mrf.mxu0
  %v826 = vadd.f32 %v670, %v825
  %827 = vmatmul.bf16.gmra.mxu0 %v742
  %v828 = vpop.f32.mrf.mxu0
  %v829 = vadd.f32 %v670, %v828
  %v830 = vpop.f32.mrf.mxu0
  %v831 = vadd.f32 %v670, %v830
  %832 = vdwg.mxu0
  %v833 = vmax.f32 %v754, 0.0
  %v834 = vmax.f32 %v756, 0.0
  %v835 = vmax.f32 %v759, 0.0
  %v836 = vmax.f32 %v761, 0.0
  %v837 = vmax.f32 %v764, 0.0
  %v838 = vmax.f32 %v766, 0.0
  %v839 = vmax.f32 %v769, 0.0
  %v840 = vmax.f32 %v771, 0.0
  %v841 = vmax.f32 %v774, 0.0
  %v842 = vmax.f32 %v776, 0.0
  %v843 = vmax.f32 %v779, 0.0
  %v844 = vmax.f32 %v781, 0.0
  %v845 = vmax.f32 %v784, 0.0
  %v846 = vmax.f32 %v786, 0.0
  %v847 = vmax.f32 %v789, 0.0
  %v848 = vmax.f32 %v791, 0.0
  %v849 = vmax.f32 %v794, 0.0
  %v850 = vmax.f32 %v796, 0.0
  %v851 = vmax.f32 %v799, 0.0
  %v852 = vmax.f32 %v801, 0.0
  %v853 = vmax.f32 %v804, 0.0
  %v854 = vmax.f32 %v806, 0.0
  %v855 = vmax.f32 %v809, 0.0
  %v856 = vmax.f32 %v811, 0.0
  %v857 = vmax.f32 %v814, 0.0
  %v858 = vmax.f32 %v816, 0.0
  %v859 = vmax.f32 %v819, 0.0
  %v860 = vmax.f32 %v821, 0.0
  %v861 = vmax.f32 %v824, 0.0
  %v862 = vmax.f32 %v826, 0.0
  %v863 = vmax.f32 %v829, 0.0
  %v864 = vmax.f32 %v831, 0.0
  %v865 = vpack.c.bf16 %v834, %v833
  %v866 = vpack.c.bf16 %v836, %v835
  %v867 = vpack.c.bf16 %v838, %v837
  %v868 = vpack.c.bf16 %v840, %v839
  %v869 = vpack.c.bf16 %v842, %v841
  %v870 = vpack.c.bf16 %v844, %v843
  %v871 = vpack.c.bf16 %v846, %v845
  %v872 = vpack.c.bf16 %v848, %v847
  %v873 = vpack.c.bf16 %v850, %v849
  %v874 = vpack.c.bf16 %v852, %v851
  %v875 = vpack.c.bf16 %v854, %v853
  %v876 = vpack.c.bf16 %v856, %v855
  %v877 = vpack.c.bf16 %v858, %v857
  %v878 = vpack.c.bf16 %v860, %v859
  %v879 = vpack.c.bf16 %v862, %v861
  %v880 = vpack.c.bf16 %v864, %v863
  %v881 = vld [vmem:[%s17] sm:$0xf]
  %v882 = vld [vmem:[%s17 + $0x4] sm:$0xf]
  %v883 = vld [vmem:[%s17 + $0x8] sm:$0xf]
  %v884 = vld [vmem:[%s17 + $0xc] sm:$0xf]
  %v885 = vld [vmem:[%s17 + $0x10] sm:$0xf]
  %v886 = vld [vmem:[%s17 + $0x14] sm:$0xf]
  %v887 = vld [vmem:[%s17 + $0x18] sm:$0xf]
  %v888 = vld [vmem:[%s17 + $0x1c] sm:$0xf]
  %v889 = vld [vmem:[%s19] sm:$0x1]
  %v891 = vperm.slane %v889, 0
  %v901 = vunpack.c.l.b16 %v881
  %v902 = vunpack.c.l.b16 %v882
  %v903 = vunpack.c.l.b16 %v883
  %v904 = vunpack.c.l.b16 %v884
  %v905 = vunpack.c.l.b16 %v885
  %v906 = vunpack.c.l.b16 %v886
  %v907 = vunpack.c.l.b16 %v887
  %v908 = vunpack.c.l.b16 %v888
  %v909 = vpack.c.b16 %v902, %v901
  %v910 = vpack.c.b16 %v904, %v903
  %v911 = vpack.c.b16 %v906, %v905
  %v912 = vpack.c.b16 %v908, %v907
  %v918 = vsel %vm474, %v865, 0
  %v921 = vsel %vm474, %v866, 0
  %v924 = vsel %vm474, %v867, 0
  %v927 = vsel %vm474, %v868, 0
  %v930 = vsel %vm474, %v869, 0
  %v933 = vsel %vm474, %v870, 0
  %v936 = vsel %vm474, %v871, 0
  %v939 = vsel %vm474, %v872, 0
  %v942 = vsel %vm474, %v873, 0
  %v945 = vsel %vm474, %v874, 0
  %v948 = vsel %vm474, %v875, 0
  %v951 = vsel %vm474, %v876, 0
  %v954 = vsel %vm474, %v877, 0
  %v957 = vsel %vm474, %v878, 0
  %v960 = vsel %vm474, %v879, 0
  %v963 = vsel %vm474, %v880, 0
  %965 = vmatpush.bf16.msra.mxu0 0
  %966 = vmatpush.bf16.msra.mxu0 0
  %967 = vmatpush.bf16.msra.mxu0 0
  %968 = vmatpush.bf16.msra.mxu0 0
  %969 = vmatpush.bf16.msra.mxu0 %v912
  %970 = vmatpush.bf16.msra.mxu0 %v911
  %971 = vmatpush.bf16.msra.mxu0 %v910
  %972 = vmatpush.bf16.msra.mxu0 %v909
  %973 = vmatmul.bf16.gmra.mxu0 %v918
  %v974 = vpop.f32.mrf.mxu0
  %v975 = vadd.f32 %v891, %v974
  %v976 = vpop.f32.mrf.mxu0
  %v977 = vadd.f32 %v891, %v976
  %978 = vmatmul.bf16.gmra.mxu0 %v921
  %v979 = vpop.f32.mrf.mxu0
  %v980 = vadd.f32 %v891, %v979
  %v981 = vpop.f32.mrf.mxu0
  %v982 = vadd.f32 %v891, %v981
  %983 = vmatmul.bf16.gmra.mxu0 %v924
  %v984 = vpop.f32.mrf.mxu0
  %v985 = vadd.f32 %v891, %v984
  %v986 = vpop.f32.mrf.mxu0
  %v987 = vadd.f32 %v891, %v986
  %988 = vmatmul.bf16.gmra.mxu0 %v927
  %v989 = vpop.f32.mrf.mxu0
  %v990 = vadd.f32 %v891, %v989
  %v991 = vpop.f32.mrf.mxu0
  %v992 = vadd.f32 %v891, %v991
  %993 = vmatmul.bf16.gmra.mxu0 %v930
  %v994 = vpop.f32.mrf.mxu0
  %v995 = vadd.f32 %v891, %v994
  %v996 = vpop.f32.mrf.mxu0
  %v997 = vadd.f32 %v891, %v996
  %998 = vmatmul.bf16.gmra.mxu0 %v933
  %v999 = vpop.f32.mrf.mxu0
  %v1000 = vadd.f32 %v891, %v999
  %v1001 = vpop.f32.mrf.mxu0
  %v1002 = vadd.f32 %v891, %v1001
  %1003 = vmatmul.bf16.gmra.mxu0 %v936
  %v1004 = vpop.f32.mrf.mxu0
  %v1005 = vadd.f32 %v891, %v1004
  %v1006 = vpop.f32.mrf.mxu0
  %v1007 = vadd.f32 %v891, %v1006
  %1008 = vmatmul.bf16.gmra.mxu0 %v939
  %v1009 = vpop.f32.mrf.mxu0
  %v1010 = vadd.f32 %v891, %v1009
  %v1011 = vpop.f32.mrf.mxu0
  %v1012 = vadd.f32 %v891, %v1011
  %1013 = vmatmul.bf16.gmra.mxu0 %v942
  %v1014 = vpop.f32.mrf.mxu0
  %v1015 = vadd.f32 %v891, %v1014
  %v1016 = vpop.f32.mrf.mxu0
  %v1017 = vadd.f32 %v891, %v1016
  %1018 = vmatmul.bf16.gmra.mxu0 %v945
  %v1019 = vpop.f32.mrf.mxu0
  %v1020 = vadd.f32 %v891, %v1019
  %v1021 = vpop.f32.mrf.mxu0
  %v1022 = vadd.f32 %v891, %v1021
  %1023 = vmatmul.bf16.gmra.mxu0 %v948
  %v1024 = vpop.f32.mrf.mxu0
  %v1025 = vadd.f32 %v891, %v1024
  %v1026 = vpop.f32.mrf.mxu0
  %v1027 = vadd.f32 %v891, %v1026
  %1028 = vmatmul.bf16.gmra.mxu0 %v951
  %v1029 = vpop.f32.mrf.mxu0
  %v1030 = vadd.f32 %v891, %v1029
  %v1031 = vpop.f32.mrf.mxu0
  %v1032 = vadd.f32 %v891, %v1031
  %1033 = vmatmul.bf16.gmra.mxu0 %v954
  %v1034 = vpop.f32.mrf.mxu0
  %v1035 = vadd.f32 %v891, %v1034
  %v1036 = vpop.f32.mrf.mxu0
  %v1037 = vadd.f32 %v891, %v1036
  %1038 = vmatmul.bf16.gmra.mxu0 %v957
  %v1039 = vpop.f32.mrf.mxu0
  %v1040 = vadd.f32 %v891, %v1039
  %v1041 = vpop.f32.mrf.mxu0
  %v1042 = vadd.f32 %v891, %v1041
  %1043 = vmatmul.bf16.gmra.mxu0 %v960
  %v1044 = vpop.f32.mrf.mxu0
  %v1045 = vadd.f32 %v891, %v1044
  %v1046 = vpop.f32.mrf.mxu0
  %v1047 = vadd.f32 %v891, %v1046
  %1048 = vmatmul.bf16.gmra.mxu0 %v963
  %v1049 = vpop.f32.mrf.mxu0
  %v1050 = vadd.f32 %v891, %v1049
  %v1051 = vpop.f32.mrf.mxu0
  %v1052 = vadd.f32 %v891, %v1051
  %1053 = vdwg.mxu0
  %v1054 = vadd.f32 %v152, %v975
  %v1055 = vadd.f32 %v153, %v977
  %v1056 = vadd.f32 %v154, %v980
  %v1057 = vadd.f32 %v155, %v982
  %v1058 = vadd.f32 %v156, %v985
  %v1059 = vadd.f32 %v157, %v987
  %v1060 = vadd.f32 %v158, %v990
  %v1061 = vadd.f32 %v159, %v992
  %v1062 = vadd.f32 %v160, %v995
  %v1063 = vadd.f32 %v161, %v997
  %v1064 = vadd.f32 %v162, %v1000
  %v1065 = vadd.f32 %v163, %v1002
  %v1066 = vadd.f32 %v164, %v1005
  %v1067 = vadd.f32 %v165, %v1007
  %v1068 = vadd.f32 %v166, %v1010
  %v1069 = vadd.f32 %v167, %v1012
  %v1070 = vadd.f32 %v168, %v1015
  %v1071 = vadd.f32 %v169, %v1017
  %v1072 = vadd.f32 %v170, %v1020
  %v1073 = vadd.f32 %v171, %v1022
  %v1074 = vadd.f32 %v172, %v1025
  %v1075 = vadd.f32 %v173, %v1027
  %v1076 = vadd.f32 %v174, %v1030
  %v1077 = vadd.f32 %v175, %v1032
  %v1078 = vadd.f32 %v176, %v1035
  %v1079 = vadd.f32 %v177, %v1037
  %v1080 = vadd.f32 %v178, %v1040
  %v1081 = vadd.f32 %v179, %v1042
  %v1082 = vadd.f32 %v180, %v1045
  %v1083 = vadd.f32 %v181, %v1047
  %v1084 = vadd.f32 %v182, %v1050
  %v1085 = vadd.f32 %v183, %v1052
  %v1086 = vpack.c.bf16 %v1055, %v1054
  %v1087 = vpack.c.bf16 %v1057, %v1056
  %v1088 = vpack.c.bf16 %v1059, %v1058
  %v1089 = vpack.c.bf16 %v1061, %v1060
  %v1090 = vpack.c.bf16 %v1063, %v1062
  %v1091 = vpack.c.bf16 %v1065, %v1064
  %v1092 = vpack.c.bf16 %v1067, %v1066
  %v1093 = vpack.c.bf16 %v1069, %v1068
  %v1094 = vpack.c.bf16 %v1071, %v1070
  %v1095 = vpack.c.bf16 %v1073, %v1072
  %v1096 = vpack.c.bf16 %v1075, %v1074
  %v1097 = vpack.c.bf16 %v1077, %v1076
  %v1098 = vpack.c.bf16 %v1079, %v1078
  %v1099 = vpack.c.bf16 %v1081, %v1080
  %v1100 = vpack.c.bf16 %v1083, %v1082
  %v1101 = vpack.c.bf16 %v1085, %v1084
  %v1102 = vld [vmem:[%s21] sm:$0xf]
  %v1103 = vld [vmem:[%s21 + $0x4] sm:$0xf]
  %v1104 = vld [vmem:[%s21 + $0x8] sm:$0xf]
  %v1105 = vld [vmem:[%s21 + $0xc] sm:$0xf]
  %v1106 = vld [vmem:[%s23] sm:$0x1]
  %v1108 = vperm.slane %v1106, 0
  %v1114 = vunpack.c.l.b16 %v1102
  %v1115 = vunpack.c.l.b16 %v1103
  %v1116 = vunpack.c.l.b16 %v1104
  %v1117 = vunpack.c.l.b16 %v1105
  %v1118 = vpack.c.b16 %v1115, %v1114
  %v1119 = vpack.c.b16 %v1117, %v1116
  %v1123 = vsel %vm252, %v1086, 0
  %v1126 = vsel %vm252, %v1087, 0
  %v1129 = vsel %vm252, %v1088, 0
  %v1132 = vsel %vm252, %v1089, 0
  %v1135 = vsel %vm252, %v1090, 0
  %v1138 = vsel %vm252, %v1091, 0
  %v1141 = vsel %vm252, %v1092, 0
  %v1144 = vsel %vm252, %v1093, 0
  %v1147 = vsel %vm252, %v1094, 0
  %v1150 = vsel %vm252, %v1095, 0
  %v1153 = vsel %vm252, %v1096, 0
  %v1156 = vsel %vm252, %v1097, 0
  %v1159 = vsel %vm252, %v1098, 0
  %v1162 = vsel %vm252, %v1099, 0
  %v1165 = vsel %vm252, %v1100, 0
  %v1168 = vsel %vm252, %v1101, 0
  %1170 = vmatpush.bf16.msra.mxu0 0
  %1171 = vmatpush.bf16.msra.mxu0 0
  %1172 = vmatpush.bf16.msra.mxu0 0
  %1173 = vmatpush.bf16.msra.mxu0 0
  %1174 = vmatpush.bf16.msra.mxu0 0
  %1175 = vmatpush.bf16.msra.mxu0 0
  %1176 = vmatpush.bf16.msra.mxu0 %v1119
  %1177 = vmatpush.bf16.msra.mxu0 %v1118
  %1178 = vmatmul.bf16.gmra.mxu0 %v1123
  %v1179 = vpop.f32.mrf.mxu0
  %v1180 = vadd.f32 %v1108, %v1179
  %v1181 = vpop.f32.mrf.mxu0
  %v1182 = vadd.f32 %v1108, %v1181
  %1183 = vmatmul.bf16.gmra.mxu0 %v1126
  %v1184 = vpop.f32.mrf.mxu0
  %v1185 = vadd.f32 %v1108, %v1184
  %v1186 = vpop.f32.mrf.mxu0
  %v1187 = vadd.f32 %v1108, %v1186
  %1188 = vmatmul.bf16.gmra.mxu0 %v1129
  %v1189 = vpop.f32.mrf.mxu0
  %v1190 = vadd.f32 %v1108, %v1189
  %v1191 = vpop.f32.mrf.mxu0
  %v1192 = vadd.f32 %v1108, %v1191
  %1193 = vmatmul.bf16.gmra.mxu0 %v1132
  %v1194 = vpop.f32.mrf.mxu0
  %v1195 = vadd.f32 %v1108, %v1194
  %v1196 = vpop.f32.mrf.mxu0
  %v1197 = vadd.f32 %v1108, %v1196
  %1198 = vmatmul.bf16.gmra.mxu0 %v1135
  %v1199 = vpop.f32.mrf.mxu0
  %v1200 = vadd.f32 %v1108, %v1199
  %v1201 = vpop.f32.mrf.mxu0
  %v1202 = vadd.f32 %v1108, %v1201
  %1203 = vmatmul.bf16.gmra.mxu0 %v1138
  %v1204 = vpop.f32.mrf.mxu0
  %v1205 = vadd.f32 %v1108, %v1204
  %v1206 = vpop.f32.mrf.mxu0
  %v1207 = vadd.f32 %v1108, %v1206
  %1208 = vmatmul.bf16.gmra.mxu0 %v1141
  %v1209 = vpop.f32.mrf.mxu0
  %v1210 = vadd.f32 %v1108, %v1209
  %v1211 = vpop.f32.mrf.mxu0
  %v1212 = vadd.f32 %v1108, %v1211
  %1213 = vmatmul.bf16.gmra.mxu0 %v1144
  %v1214 = vpop.f32.mrf.mxu0
  %v1215 = vadd.f32 %v1108, %v1214
  %v1216 = vpop.f32.mrf.mxu0
  %v1217 = vadd.f32 %v1108, %v1216
  %1218 = vmatmul.bf16.gmra.mxu0 %v1147
  %v1219 = vpop.f32.mrf.mxu0
  %v1220 = vadd.f32 %v1108, %v1219
  %v1221 = vpop.f32.mrf.mxu0
  %v1222 = vadd.f32 %v1108, %v1221
  %1223 = vmatmul.bf16.gmra.mxu0 %v1150
  %v1224 = vpop.f32.mrf.mxu0
  %v1225 = vadd.f32 %v1108, %v1224
  %v1226 = vpop.f32.mrf.mxu0
  %v1227 = vadd.f32 %v1108, %v1226
  %1228 = vmatmul.bf16.gmra.mxu0 %v1153
  %v1229 = vpop.f32.mrf.mxu0
  %v1230 = vadd.f32 %v1108, %v1229
  %v1231 = vpop.f32.mrf.mxu0
  %v1232 = vadd.f32 %v1108, %v1231
  %1233 = vmatmul.bf16.gmra.mxu0 %v1156
  %v1234 = vpop.f32.mrf.mxu0
  %v1235 = vadd.f32 %v1108, %v1234
  %v1236 = vpop.f32.mrf.mxu0
  %v1237 = vadd.f32 %v1108, %v1236
  %1238 = vmatmul.bf16.gmra.mxu0 %v1159
  %v1239 = vpop.f32.mrf.mxu0
  %v1240 = vadd.f32 %v1108, %v1239
  %v1241 = vpop.f32.mrf.mxu0
  %v1242 = vadd.f32 %v1108, %v1241
  %1243 = vmatmul.bf16.gmra.mxu0 %v1162
  %v1244 = vpop.f32.mrf.mxu0
  %v1245 = vadd.f32 %v1108, %v1244
  %v1246 = vpop.f32.mrf.mxu0
  %v1247 = vadd.f32 %v1108, %v1246
  %1248 = vmatmul.bf16.gmra.mxu0 %v1165
  %v1249 = vpop.f32.mrf.mxu0
  %v1250 = vadd.f32 %v1108, %v1249
  %v1251 = vpop.f32.mrf.mxu0
  %v1252 = vadd.f32 %v1108, %v1251
  %1253 = vmatmul.bf16.gmra.mxu0 %v1168
  %v1254 = vpop.f32.mrf.mxu0
  %v1255 = vadd.f32 %v1108, %v1254
  %v1256 = vpop.f32.mrf.mxu0
  %v1257 = vadd.f32 %v1108, %v1256
  %1258 = vdwg.mxu0
  %v1259 = vmax.f32 %v1180, 0.0
  %v1260 = vmax.f32 %v1182, 0.0
  %v1261 = vmax.f32 %v1185, 0.0
  %v1262 = vmax.f32 %v1187, 0.0
  %v1263 = vmax.f32 %v1190, 0.0
  %v1264 = vmax.f32 %v1192, 0.0
  %v1265 = vmax.f32 %v1195, 0.0
  %v1266 = vmax.f32 %v1197, 0.0
  %v1267 = vmax.f32 %v1200, 0.0
  %v1268 = vmax.f32 %v1202, 0.0
  %v1269 = vmax.f32 %v1205, 0.0
  %v1270 = vmax.f32 %v1207, 0.0
  %v1271 = vmax.f32 %v1210, 0.0
  %v1272 = vmax.f32 %v1212, 0.0
  %v1273 = vmax.f32 %v1215, 0.0
  %v1274 = vmax.f32 %v1217, 0.0
  %v1275 = vmax.f32 %v1220, 0.0
  %v1276 = vmax.f32 %v1222, 0.0
  %v1277 = vmax.f32 %v1225, 0.0
  %v1278 = vmax.f32 %v1227, 0.0
  %v1279 = vmax.f32 %v1230, 0.0
  %v1280 = vmax.f32 %v1232, 0.0
  %v1281 = vmax.f32 %v1235, 0.0
  %v1282 = vmax.f32 %v1237, 0.0
  %v1283 = vmax.f32 %v1240, 0.0
  %v1284 = vmax.f32 %v1242, 0.0
  %v1285 = vmax.f32 %v1245, 0.0
  %v1286 = vmax.f32 %v1247, 0.0
  %v1287 = vmax.f32 %v1250, 0.0
  %v1288 = vmax.f32 %v1252, 0.0
  %v1289 = vmax.f32 %v1255, 0.0
  %v1290 = vmax.f32 %v1257, 0.0
  %v1291 = vpack.c.bf16 %v1260, %v1259
  %v1292 = vpack.c.bf16 %v1262, %v1261
  %v1293 = vpack.c.bf16 %v1264, %v1263
  %v1294 = vpack.c.bf16 %v1266, %v1265
  %v1295 = vpack.c.bf16 %v1268, %v1267
  %v1296 = vpack.c.bf16 %v1270, %v1269
  %v1297 = vpack.c.bf16 %v1272, %v1271
  %v1298 = vpack.c.bf16 %v1274, %v1273
  %v1299 = vpack.c.bf16 %v1276, %v1275
  %v1300 = vpack.c.bf16 %v1278, %v1277
  %v1301 = vpack.c.bf16 %v1280, %v1279
  %v1302 = vpack.c.bf16 %v1282, %v1281
  %v1303 = vpack.c.bf16 %v1284, %v1283
  %v1304 = vpack.c.bf16 %v1286, %v1285
  %v1305 = vpack.c.bf16 %v1288, %v1287
  %v1306 = vpack.c.bf16 %v1290, %v1289
  %v1307 = vld [vmem:[%s25] sm:$0xf]
  %v1308 = vld [vmem:[%s25 + $0x4] sm:$0xf]
  %v1309 = vld [vmem:[%s25 + $0x8] sm:$0xf]
  %v1310 = vld [vmem:[%s25 + $0xc] sm:$0xf]
  %v1311 = vld [vmem:[%s25 + $0x10] sm:$0xf]
  %v1312 = vld [vmem:[%s25 + $0x14] sm:$0xf]
  %v1313 = vld [vmem:[%s25 + $0x18] sm:$0xf]
  %v1314 = vld [vmem:[%s25 + $0x1c] sm:$0xf]
  %v1315 = vld [vmem:[%s27] sm:$0x1]
  %v1317 = vperm.slane %v1315, 0
  %v1327 = vunpack.c.l.b16 %v1307
  %v1328 = vunpack.c.l.b16 %v1308
  %v1329 = vunpack.c.l.b16 %v1309
  %v1330 = vunpack.c.l.b16 %v1310
  %v1331 = vunpack.c.l.b16 %v1311
  %v1332 = vunpack.c.l.b16 %v1312
  %v1333 = vunpack.c.l.b16 %v1313
  %v1334 = vunpack.c.l.b16 %v1314
  %v1335 = vpack.c.b16 %v1328, %v1327
  %v1336 = vpack.c.b16 %v1330, %v1329
  %v1337 = vpack.c.b16 %v1332, %v1331
  %v1338 = vpack.c.b16 %v1334, %v1333
  %v1344 = vsel %vm474, %v1291, 0
  %v1347 = vsel %vm474, %v1292, 0
  %v1350 = vsel %vm474, %v1293, 0
  %v1353 = vsel %vm474, %v1294, 0
  %v1356 = vsel %vm474, %v1295, 0
  %v1359 = vsel %vm474, %v1296, 0
  %v1362 = vsel %vm474, %v1297, 0
  %v1365 = vsel %vm474, %v1298, 0
  %v1368 = vsel %vm474, %v1299, 0
  %v1371 = vsel %vm474, %v1300, 0
  %v1374 = vsel %vm474, %v1301, 0
  %v1377 = vsel %vm474, %v1302, 0
  %v1380 = vsel %vm474, %v1303, 0
  %v1383 = vsel %vm474, %v1304, 0
  %v1386 = vsel %vm474, %v1305, 0
  %v1389 = vsel %vm474, %v1306, 0
  %1391 = vmatpush.bf16.msra.mxu0 0
  %1392 = vmatpush.bf16.msra.mxu0 0
  %1393 = vmatpush.bf16.msra.mxu0 0
  %1394 = vmatpush.bf16.msra.mxu0 0
  %1395 = vmatpush.bf16.msra.mxu0 %v1338
  %1396 = vmatpush.bf16.msra.mxu0 %v1337
  %1397 = vmatpush.bf16.msra.mxu0 %v1336
  %1398 = vmatpush.bf16.msra.mxu0 %v1335
  %1399 = vmatmul.bf16.gmra.mxu0 %v1344
  %v1400 = vpop.f32.mrf.mxu0
  %v1401 = vadd.f32 %v1317, %v1400
  %v1402 = vpop.f32.mrf.mxu0
  %v1403 = vadd.f32 %v1317, %v1402
  %1404 = vmatmul.bf16.gmra.mxu0 %v1347
  %v1405 = vpop.f32.mrf.mxu0
  %v1406 = vadd.f32 %v1317, %v1405
  %v1407 = vpop.f32.mrf.mxu0
  %v1408 = vadd.f32 %v1317, %v1407
  %1409 = vmatmul.bf16.gmra.mxu0 %v1350
  %v1410 = vpop.f32.mrf.mxu0
  %v1411 = vadd.f32 %v1317, %v1410
  %v1412 = vpop.f32.mrf.mxu0
  %v1413 = vadd.f32 %v1317, %v1412
  %1414 = vmatmul.bf16.gmra.mxu0 %v1353
  %v1415 = vpop.f32.mrf.mxu0
  %v1416 = vadd.f32 %v1317, %v1415
  %v1417 = vpop.f32.mrf.mxu0
  %v1418 = vadd.f32 %v1317, %v1417
  %1419 = vmatmul.bf16.gmra.mxu0 %v1356
  %v1420 = vpop.f32.mrf.mxu0
  %v1421 = vadd.f32 %v1317, %v1420
  %v1422 = vpop.f32.mrf.mxu0
  %v1423 = vadd.f32 %v1317, %v1422
  %1424 = vmatmul.bf16.gmra.mxu0 %v1359
  %v1425 = vpop.f32.mrf.mxu0
  %v1426 = vadd.f32 %v1317, %v1425
  %v1427 = vpop.f32.mrf.mxu0
  %v1428 = vadd.f32 %v1317, %v1427
  %1429 = vmatmul.bf16.gmra.mxu0 %v1362
  %v1430 = vpop.f32.mrf.mxu0
  %v1431 = vadd.f32 %v1317, %v1430
  %v1432 = vpop.f32.mrf.mxu0
  %v1433 = vadd.f32 %v1317, %v1432
  %1434 = vmatmul.bf16.gmra.mxu0 %v1365
  %v1435 = vpop.f32.mrf.mxu0
  %v1436 = vadd.f32 %v1317, %v1435
  %v1437 = vpop.f32.mrf.mxu0
  %v1438 = vadd.f32 %v1317, %v1437
  %1439 = vmatmul.bf16.gmra.mxu0 %v1368
  %v1440 = vpop.f32.mrf.mxu0
  %v1441 = vadd.f32 %v1317, %v1440
  %v1442 = vpop.f32.mrf.mxu0
  %v1443 = vadd.f32 %v1317, %v1442
  %1444 = vmatmul.bf16.gmra.mxu0 %v1371
  %v1445 = vpop.f32.mrf.mxu0
  %v1446 = vadd.f32 %v1317, %v1445
  %v1447 = vpop.f32.mrf.mxu0
  %v1448 = vadd.f32 %v1317, %v1447
  %1449 = vmatmul.bf16.gmra.mxu0 %v1374
  %v1450 = vpop.f32.mrf.mxu0
  %v1451 = vadd.f32 %v1317, %v1450
  %v1452 = vpop.f32.mrf.mxu0
  %v1453 = vadd.f32 %v1317, %v1452
  %1454 = vmatmul.bf16.gmra.mxu0 %v1377
  %v1455 = vpop.f32.mrf.mxu0
  %v1456 = vadd.f32 %v1317, %v1455
  %v1457 = vpop.f32.mrf.mxu0
  %v1458 = vadd.f32 %v1317, %v1457
  %1459 = vmatmul.bf16.gmra.mxu0 %v1380
  %v1460 = vpop.f32.mrf.mxu0
  %v1461 = vadd.f32 %v1317, %v1460
  %v1462 = vpop.f32.mrf.mxu0
  %v1463 = vadd.f32 %v1317, %v1462
  %1464 = vmatmul.bf16.gmra.mxu0 %v1383
  %v1465 = vpop.f32.mrf.mxu0
  %v1466 = vadd.f32 %v1317, %v1465
  %v1467 = vpop.f32.mrf.mxu0
  %v1468 = vadd.f32 %v1317, %v1467
  %1469 = vmatmul.bf16.gmra.mxu0 %v1386
  %v1470 = vpop.f32.mrf.mxu0
  %v1471 = vadd.f32 %v1317, %v1470
  %v1472 = vpop.f32.mrf.mxu0
  %v1473 = vadd.f32 %v1317, %v1472
  %1474 = vmatmul.bf16.gmra.mxu0 %v1389
  %v1475 = vpop.f32.mrf.mxu0
  %v1476 = vadd.f32 %v1317, %v1475
  %v1477 = vpop.f32.mrf.mxu0
  %v1478 = vadd.f32 %v1317, %v1477
  %1479 = vdwg.mxu0
  %v1480 = vmax.f32 %v1401, 0.0
  %v1481 = vmax.f32 %v1403, 0.0
  %v1482 = vmax.f32 %v1406, 0.0
  %v1483 = vmax.f32 %v1408, 0.0
  %v1484 = vmax.f32 %v1411, 0.0
  %v1485 = vmax.f32 %v1413, 0.0
  %v1486 = vmax.f32 %v1416, 0.0
  %v1487 = vmax.f32 %v1418, 0.0
  %v1488 = vmax.f32 %v1421, 0.0
  %v1489 = vmax.f32 %v1423, 0.0
  %v1490 = vmax.f32 %v1426, 0.0
  %v1491 = vmax.f32 %v1428, 0.0
  %v1492 = vmax.f32 %v1431, 0.0
  %v1493 = vmax.f32 %v1433, 0.0
  %v1494 = vmax.f32 %v1436, 0.0
  %v1495 = vmax.f32 %v1438, 0.0
  %v1496 = vmax.f32 %v1441, 0.0
  %v1497 = vmax.f32 %v1443, 0.0
  %v1498 = vmax.f32 %v1446, 0.0
  %v1499 = vmax.f32 %v1448, 0.0
  %v1500 = vmax.f32 %v1451, 0.0
  %v1501 = vmax.f32 %v1453, 0.0
  %v1502 = vmax.f32 %v1456, 0.0
  %v1503 = vmax.f32 %v1458, 0.0
  %v1504 = vmax.f32 %v1461, 0.0
  %v1505 = vmax.f32 %v1463, 0.0
  %v1506 = vmax.f32 %v1466, 0.0
  %v1507 = vmax.f32 %v1468, 0.0
  %v1508 = vmax.f32 %v1471, 0.0
  %v1509 = vmax.f32 %v1473, 0.0
  %v1510 = vmax.f32 %v1476, 0.0
  %v1511 = vmax.f32 %v1478, 0.0
  %v1512 = vpack.c.bf16 %v1481, %v1480
  %v1513 = vpack.c.bf16 %v1483, %v1482
  %v1514 = vpack.c.bf16 %v1485, %v1484
  %v1515 = vpack.c.bf16 %v1487, %v1486
  %v1516 = vpack.c.bf16 %v1489, %v1488
  %v1517 = vpack.c.bf16 %v1491, %v1490
  %v1518 = vpack.c.bf16 %v1493, %v1492
  %v1519 = vpack.c.bf16 %v1495, %v1494
  %v1520 = vpack.c.bf16 %v1497, %v1496
  %v1521 = vpack.c.bf16 %v1499, %v1498
  %v1522 = vpack.c.bf16 %v1501, %v1500
  %v1523 = vpack.c.bf16 %v1503, %v1502
  %v1524 = vpack.c.bf16 %v1505, %v1504
  %v1525 = vpack.c.bf16 %v1507, %v1506
  %v1526 = vpack.c.bf16 %v1509, %v1508
  %v1527 = vpack.c.bf16 %v1511, %v1510
  %v1528 = vld [vmem:[%s29] sm:$0xf]
  %v1529 = vld [vmem:[%s29 + $0x4] sm:$0xf]
  %v1530 = vld [vmem:[%s29 + $0x8] sm:$0xf]
  %v1531 = vld [vmem:[%s29 + $0xc] sm:$0xf]
  %v1532 = vld [vmem:[%s29 + $0x10] sm:$0xf]
  %v1533 = vld [vmem:[%s29 + $0x14] sm:$0xf]
  %v1534 = vld [vmem:[%s29 + $0x18] sm:$0xf]
  %v1535 = vld [vmem:[%s29 + $0x1c] sm:$0xf]
  %v1536 = vld [vmem:[%s31] sm:$0x1]
  %v1538 = vperm.slane %v1536, 0
  %v1548 = vunpack.c.l.b16 %v1528
  %v1549 = vunpack.c.l.b16 %v1529
  %v1550 = vunpack.c.l.b16 %v1530
  %v1551 = vunpack.c.l.b16 %v1531
  %v1552 = vunpack.c.l.b16 %v1532
  %v1553 = vunpack.c.l.b16 %v1533
  %v1554 = vunpack.c.l.b16 %v1534
  %v1555 = vunpack.c.l.b16 %v1535
  %v1556 = vpack.c.b16 %v1549, %v1548
  %v1557 = vpack.c.b16 %v1551, %v1550
  %v1558 = vpack.c.b16 %v1553, %v1552
  %v1559 = vpack.c.b16 %v1555, %v1554
  %v1565 = vsel %vm474, %v1512, 0
  %v1568 = vsel %vm474, %v1513, 0
  %v1571 = vsel %vm474, %v1514, 0
  %v1574 = vsel %vm474, %v1515, 0
  %v1577 = vsel %vm474, %v1516, 0
  %v1580 = vsel %vm474, %v1517, 0
  %v1583 = vsel %vm474, %v1518, 0
  %v1586 = vsel %vm474, %v1519, 0
  %v1589 = vsel %vm474, %v1520, 0
  %v1592 = vsel %vm474, %v1521, 0
  %v1595 = vsel %vm474, %v1522, 0
  %v1598 = vsel %vm474, %v1523, 0
  %v1601 = vsel %vm474, %v1524, 0
  %v1604 = vsel %vm474, %v1525, 0
  %v1607 = vsel %vm474, %v1526, 0
  %v1610 = vsel %vm474, %v1527, 0
  %1612 = vmatpush.bf16.msra.mxu0 0
  %1613 = vmatpush.bf16.msra.mxu0 0
  %1614 = vmatpush.bf16.msra.mxu0 0
  %1615 = vmatpush.bf16.msra.mxu0 0
  %1616 = vmatpush.bf16.msra.mxu0 %v1559
  %1617 = vmatpush.bf16.msra.mxu0 %v1558
  %1618 = vmatpush.bf16.msra.mxu0 %v1557
  %1619 = vmatpush.bf16.msra.mxu0 %v1556
  %1620 = vmatmul.bf16.gmra.mxu0 %v1565
  %v1621 = vpop.f32.mrf.mxu0
  %v1622 = vadd.f32 %v1538, %v1621
  %v1623 = vpop.f32.mrf.mxu0
  %v1624 = vadd.f32 %v1538, %v1623
  %1625 = vmatmul.bf16.gmra.mxu0 %v1568
  %v1626 = vpop.f32.mrf.mxu0
  %v1627 = vadd.f32 %v1538, %v1626
  %v1628 = vpop.f32.mrf.mxu0
  %v1629 = vadd.f32 %v1538, %v1628
  %1630 = vmatmul.bf16.gmra.mxu0 %v1571
  %v1631 = vpop.f32.mrf.mxu0
  %v1632 = vadd.f32 %v1538, %v1631
  %v1633 = vpop.f32.mrf.mxu0
  %v1634 = vadd.f32 %v1538, %v1633
  %1635 = vmatmul.bf16.gmra.mxu0 %v1574
  %v1636 = vpop.f32.mrf.mxu0
  %v1637 = vadd.f32 %v1538, %v1636
  %v1638 = vpop.f32.mrf.mxu0
  %v1639 = vadd.f32 %v1538, %v1638
  %1640 = vmatmul.bf16.gmra.mxu0 %v1577
  %v1641 = vpop.f32.mrf.mxu0
  %v1642 = vadd.f32 %v1538, %v1641
  %v1643 = vpop.f32.mrf.mxu0
  %v1644 = vadd.f32 %v1538, %v1643
  %1645 = vmatmul.bf16.gmra.mxu0 %v1580
  %v1646 = vpop.f32.mrf.mxu0
  %v1647 = vadd.f32 %v1538, %v1646
  %v1648 = vpop.f32.mrf.mxu0
  %v1649 = vadd.f32 %v1538, %v1648
  %1650 = vmatmul.bf16.gmra.mxu0 %v1583
  %v1651 = vpop.f32.mrf.mxu0
  %v1652 = vadd.f32 %v1538, %v1651
  %v1653 = vpop.f32.mrf.mxu0
  %v1654 = vadd.f32 %v1538, %v1653
  %1655 = vmatmul.bf16.gmra.mxu0 %v1586
  %v1656 = vpop.f32.mrf.mxu0
  %v1657 = vadd.f32 %v1538, %v1656
  %v1658 = vpop.f32.mrf.mxu0
  %v1659 = vadd.f32 %v1538, %v1658
  %1660 = vmatmul.bf16.gmra.mxu0 %v1589
  %v1661 = vpop.f32.mrf.mxu0
  %v1662 = vadd.f32 %v1538, %v1661
  %v1663 = vpop.f32.mrf.mxu0
  %v1664 = vadd.f32 %v1538, %v1663
  %1665 = vmatmul.bf16.gmra.mxu0 %v1592
  %v1666 = vpop.f32.mrf.mxu0
  %v1667 = vadd.f32 %v1538, %v1666
  %v1668 = vpop.f32.mrf.mxu0
  %v1669 = vadd.f32 %v1538, %v1668
  %1670 = vmatmul.bf16.gmra.mxu0 %v1595
  %v1671 = vpop.f32.mrf.mxu0
  %v1672 = vadd.f32 %v1538, %v1671
  %v1673 = vpop.f32.mrf.mxu0
  %v1674 = vadd.f32 %v1538, %v1673
  %1675 = vmatmul.bf16.gmra.mxu0 %v1598
  %v1676 = vpop.f32.mrf.mxu0
  %v1677 = vadd.f32 %v1538, %v1676
  %v1678 = vpop.f32.mrf.mxu0
  %v1679 = vadd.f32 %v1538, %v1678
  %1680 = vmatmul.bf16.gmra.mxu0 %v1601
  %v1681 = vpop.f32.mrf.mxu0
  %v1682 = vadd.f32 %v1538, %v1681
  %v1683 = vpop.f32.mrf.mxu0
  %v1684 = vadd.f32 %v1538, %v1683
  %1685 = vmatmul.bf16.gmra.mxu0 %v1604
  %v1686 = vpop.f32.mrf.mxu0
  %v1687 = vadd.f32 %v1538, %v1686
  %v1688 = vpop.f32.mrf.mxu0
  %v1689 = vadd.f32 %v1538, %v1688
  %1690 = vmatmul.bf16.gmra.mxu0 %v1607
  %v1691 = vpop.f32.mrf.mxu0
  %v1692 = vadd.f32 %v1538, %v1691
  %v1693 = vpop.f32.mrf.mxu0
  %v1694 = vadd.f32 %v1538, %v1693
  %1695 = vmatmul.bf16.gmra.mxu0 %v1610
  %v1696 = vpop.f32.mrf.mxu0
  %v1697 = vadd.f32 %v1538, %v1696
  %v1698 = vpop.f32.mrf.mxu0
  %v1699 = vadd.f32 %v1538, %v1698
  %1700 = vdwg.mxu0
  %v1701 = vmax.f32 %v1622, 0.0
  %v1702 = vmax.f32 %v1624, 0.0
  %v1703 = vmax.f32 %v1627, 0.0
  %v1704 = vmax.f32 %v1629, 0.0
  %v1705 = vmax.f32 %v1632, 0.0
  %v1706 = vmax.f32 %v1634, 0.0
  %v1707 = vmax.f32 %v1637, 0.0
  %v1708 = vmax.f32 %v1639, 0.0
  %v1709 = vmax.f32 %v1642, 0.0
  %v1710 = vmax.f32 %v1644, 0.0
  %v1711 = vmax.f32 %v1647, 0.0
  %v1712 = vmax.f32 %v1649, 0.0
  %v1713 = vmax.f32 %v1652, 0.0
  %v1714 = vmax.f32 %v1654, 0.0
  %v1715 = vmax.f32 %v1657, 0.0
  %v1716 = vmax.f32 %v1659, 0.0
  %v1717 = vmax.f32 %v1662, 0.0
  %v1718 = vmax.f32 %v1664, 0.0
  %v1719 = vmax.f32 %v1667, 0.0
  %v1720 = vmax.f32 %v1669, 0.0
  %v1721 = vmax.f32 %v1672, 0.0
  %v1722 = vmax.f32 %v1674, 0.0
  %v1723 = vmax.f32 %v1677, 0.0
  %v1724 = vmax.f32 %v1679, 0.0
  %v1725 = vmax.f32 %v1682, 0.0
  %v1726 = vmax.f32 %v1684, 0.0
  %v1727 = vmax.f32 %v1687, 0.0
  %v1728 = vmax.f32 %v1689, 0.0
  %v1729 = vmax.f32 %v1692, 0.0
  %v1730 = vmax.f32 %v1694, 0.0
  %v1731 = vmax.f32 %v1697, 0.0
  %v1732 = vmax.f32 %v1699, 0.0
  %v1733 = vpack.c.bf16 %v1702, %v1701
  %v1734 = vpack.c.bf16 %v1704, %v1703
  %v1735 = vpack.c.bf16 %v1706, %v1705
  %v1736 = vpack.c.bf16 %v1708, %v1707
  %v1737 = vpack.c.bf16 %v1710, %v1709
  %v1738 = vpack.c.bf16 %v1712, %v1711
  %v1739 = vpack.c.bf16 %v1714, %v1713
  %v1740 = vpack.c.bf16 %v1716, %v1715
  %v1741 = vpack.c.bf16 %v1718, %v1717
  %v1742 = vpack.c.bf16 %v1720, %v1719
  %v1743 = vpack.c.bf16 %v1722, %v1721
  %v1744 = vpack.c.bf16 %v1724, %v1723
  %v1745 = vpack.c.bf16 %v1726, %v1725
  %v1746 = vpack.c.bf16 %v1728, %v1727
  %v1747 = vpack.c.bf16 %v1730, %v1729
  %v1748 = vpack.c.bf16 %v1732, %v1731
  %v1749 = vld [vmem:[%s33] sm:$0xf]
  %v1750 = vld [vmem:[%s33 + $0x4] sm:$0xf]
  %v1751 = vld [vmem:[%s33 + $0x8] sm:$0xf]
  %v1752 = vld [vmem:[%s33 + $0xc] sm:$0xf]
  %v1753 = vld [vmem:[%s33 + $0x10] sm:$0xf]
  %v1754 = vld [vmem:[%s33 + $0x14] sm:$0xf]
  %v1755 = vld [vmem:[%s33 + $0x18] sm:$0xf]
  %v1756 = vld [vmem:[%s33 + $0x1c] sm:$0xf]
  %v1757 = vld [vmem:[%s35] sm:$0x1]
  %v1759 = vperm.slane %v1757, 0
  %v1769 = vunpack.c.l.b16 %v1749
  %v1770 = vunpack.c.l.b16 %v1750
  %v1771 = vunpack.c.l.b16 %v1751
  %v1772 = vunpack.c.l.b16 %v1752
  %v1773 = vunpack.c.l.b16 %v1753
  %v1774 = vunpack.c.l.b16 %v1754
  %v1775 = vunpack.c.l.b16 %v1755
  %v1776 = vunpack.c.l.b16 %v1756
  %v1777 = vpack.c.b16 %v1770, %v1769
  %v1778 = vpack.c.b16 %v1772, %v1771
  %v1779 = vpack.c.b16 %v1774, %v1773
  %v1780 = vpack.c.b16 %v1776, %v1775
  %v1786 = vsel %vm474, %v1733, 0
  %v1789 = vsel %vm474, %v1734, 0
  %v1792 = vsel %vm474, %v1735, 0
  %v1795 = vsel %vm474, %v1736, 0
  %v1798 = vsel %vm474, %v1737, 0
  %v1801 = vsel %vm474, %v1738, 0
  %v1804 = vsel %vm474, %v1739, 0
  %v1807 = vsel %vm474, %v1740, 0
  %v1810 = vsel %vm474, %v1741, 0
  %v1813 = vsel %vm474, %v1742, 0
  %v1816 = vsel %vm474, %v1743, 0
  %v1819 = vsel %vm474, %v1744, 0
  %v1822 = vsel %vm474, %v1745, 0
  %v1825 = vsel %vm474, %v1746, 0
  %v1828 = vsel %vm474, %v1747, 0
  %v1831 = vsel %vm474, %v1748, 0
  %1833 = vmatpush.bf16.msra.mxu0 0
  %1834 = vmatpush.bf16.msra.mxu0 0
  %1835 = vmatpush.bf16.msra.mxu0 0
  %1836 = vmatpush.bf16.msra.mxu0 0
  %1837 = vmatpush.bf16.msra.mxu0 %v1780
  %1838 = vmatpush.bf16.msra.mxu0 %v1779
  %1839 = vmatpush.bf16.msra.mxu0 %v1778
  %1840 = vmatpush.bf16.msra.mxu0 %v1777
  %1841 = vmatmul.bf16.gmra.mxu0 %v1786
  %v1842 = vpop.f32.mrf.mxu0
  %v1843 = vadd.f32 %v1759, %v1842
  %v1844 = vpop.f32.mrf.mxu0
  %v1845 = vadd.f32 %v1759, %v1844
  %1846 = vmatmul.bf16.gmra.mxu0 %v1789
  %v1847 = vpop.f32.mrf.mxu0
  %v1848 = vadd.f32 %v1759, %v1847
  %v1849 = vpop.f32.mrf.mxu0
  %v1850 = vadd.f32 %v1759, %v1849
  %1851 = vmatmul.bf16.gmra.mxu0 %v1792
  %v1852 = vpop.f32.mrf.mxu0
  %v1853 = vadd.f32 %v1759, %v1852
  %v1854 = vpop.f32.mrf.mxu0
  %v1855 = vadd.f32 %v1759, %v1854
  %1856 = vmatmul.bf16.gmra.mxu0 %v1795
  %v1857 = vpop.f32.mrf.mxu0
  %v1858 = vadd.f32 %v1759, %v1857
  %v1859 = vpop.f32.mrf.mxu0
  %v1860 = vadd.f32 %v1759, %v1859
  %1861 = vmatmul.bf16.gmra.mxu0 %v1798
  %v1862 = vpop.f32.mrf.mxu0
  %v1863 = vadd.f32 %v1759, %v1862
  %v1864 = vpop.f32.mrf.mxu0
  %v1865 = vadd.f32 %v1759, %v1864
  %1866 = vmatmul.bf16.gmra.mxu0 %v1801
  %v1867 = vpop.f32.mrf.mxu0
  %v1868 = vadd.f32 %v1759, %v1867
  %v1869 = vpop.f32.mrf.mxu0
  %v1870 = vadd.f32 %v1759, %v1869
  %1871 = vmatmul.bf16.gmra.mxu0 %v1804
  %v1872 = vpop.f32.mrf.mxu0
  %v1873 = vadd.f32 %v1759, %v1872
  %v1874 = vpop.f32.mrf.mxu0
  %v1875 = vadd.f32 %v1759, %v1874
  %1876 = vmatmul.bf16.gmra.mxu0 %v1807
  %v1877 = vpop.f32.mrf.mxu0
  %v1878 = vadd.f32 %v1759, %v1877
  %v1879 = vpop.f32.mrf.mxu0
  %v1880 = vadd.f32 %v1759, %v1879
  %1881 = vmatmul.bf16.gmra.mxu0 %v1810
  %v1882 = vpop.f32.mrf.mxu0
  %v1883 = vadd.f32 %v1759, %v1882
  %v1884 = vpop.f32.mrf.mxu0
  %v1885 = vadd.f32 %v1759, %v1884
  %1886 = vmatmul.bf16.gmra.mxu0 %v1813
  %v1887 = vpop.f32.mrf.mxu0
  %v1888 = vadd.f32 %v1759, %v1887
  %v1889 = vpop.f32.mrf.mxu0
  %v1890 = vadd.f32 %v1759, %v1889
  %1891 = vmatmul.bf16.gmra.mxu0 %v1816
  %v1892 = vpop.f32.mrf.mxu0
  %v1893 = vadd.f32 %v1759, %v1892
  %v1894 = vpop.f32.mrf.mxu0
  %v1895 = vadd.f32 %v1759, %v1894
  %1896 = vmatmul.bf16.gmra.mxu0 %v1819
  %v1897 = vpop.f32.mrf.mxu0
  %v1898 = vadd.f32 %v1759, %v1897
  %v1899 = vpop.f32.mrf.mxu0
  %v1900 = vadd.f32 %v1759, %v1899
  %1901 = vmatmul.bf16.gmra.mxu0 %v1822
  %v1902 = vpop.f32.mrf.mxu0
  %v1903 = vadd.f32 %v1759, %v1902
  %v1904 = vpop.f32.mrf.mxu0
  %v1905 = vadd.f32 %v1759, %v1904
  %1906 = vmatmul.bf16.gmra.mxu0 %v1825
  %v1907 = vpop.f32.mrf.mxu0
  %v1908 = vadd.f32 %v1759, %v1907
  %v1909 = vpop.f32.mrf.mxu0
  %v1910 = vadd.f32 %v1759, %v1909
  %1911 = vmatmul.bf16.gmra.mxu0 %v1828
  %v1912 = vpop.f32.mrf.mxu0
  %v1913 = vadd.f32 %v1759, %v1912
  %v1914 = vpop.f32.mrf.mxu0
  %v1915 = vadd.f32 %v1759, %v1914
  %1916 = vmatmul.bf16.gmra.mxu0 %v1831
  %v1917 = vpop.f32.mrf.mxu0
  %v1918 = vadd.f32 %v1759, %v1917
  %v1919 = vpop.f32.mrf.mxu0
  %v1920 = vadd.f32 %v1759, %v1919
  %1921 = vdwg.mxu0
  %v1922 = vadd.f32 %v184, %v1843
  %v1923 = vadd.f32 %v185, %v1845
  %v1924 = vadd.f32 %v186, %v1848
  %v1925 = vadd.f32 %v187, %v1850
  %v1926 = vadd.f32 %v188, %v1853
  %v1927 = vadd.f32 %v189, %v1855
  %v1928 = vadd.f32 %v190, %v1858
  %v1929 = vadd.f32 %v191, %v1860
  %v1930 = vadd.f32 %v192, %v1863
  %v1931 = vadd.f32 %v193, %v1865
  %v1932 = vadd.f32 %v194, %v1868
  %v1933 = vadd.f32 %v195, %v1870
  %v1934 = vadd.f32 %v196, %v1873
  %v1935 = vadd.f32 %v197, %v1875
  %v1936 = vadd.f32 %v198, %v1878
  %v1937 = vadd.f32 %v199, %v1880
  %v1938 = vadd.f32 %v200, %v1883
  %v1939 = vadd.f32 %v201, %v1885
  %v1940 = vadd.f32 %v202, %v1888
  %v1941 = vadd.f32 %v203, %v1890
  %v1942 = vadd.f32 %v204, %v1893
  %v1943 = vadd.f32 %v205, %v1895
  %v1944 = vadd.f32 %v206, %v1898
  %v1945 = vadd.f32 %v207, %v1900
  %v1946 = vadd.f32 %v208, %v1903
  %v1947 = vadd.f32 %v209, %v1905
  %v1948 = vadd.f32 %v210, %v1908
  %v1949 = vadd.f32 %v211, %v1910
  %v1950 = vadd.f32 %v212, %v1913
  %v1951 = vadd.f32 %v213, %v1915
  %v1952 = vadd.f32 %v214, %v1918
  %v1953 = vadd.f32 %v215, %v1920
  %v1954 = vpack.c.bf16 %v1923, %v1922
  %v1955 = vpack.c.bf16 %v1925, %v1924
  %v1956 = vpack.c.bf16 %v1927, %v1926
  %v1957 = vpack.c.bf16 %v1929, %v1928
  %v1958 = vpack.c.bf16 %v1931, %v1930
  %v1959 = vpack.c.bf16 %v1933, %v1932
  %v1960 = vpack.c.bf16 %v1935, %v1934
  %v1961 = vpack.c.bf16 %v1937, %v1936
  %v1962 = vpack.c.bf16 %v1939, %v1938
  %v1963 = vpack.c.bf16 %v1941, %v1940
  %v1964 = vpack.c.bf16 %v1943, %v1942
  %v1965 = vpack.c.bf16 %v1945, %v1944
  %v1966 = vpack.c.bf16 %v1947, %v1946
  %v1967 = vpack.c.bf16 %v1949, %v1948
  %v1968 = vpack.c.bf16 %v1951, %v1950
  %v1969 = vpack.c.bf16 %v1953, %v1952
  %v1970 = vld [vmem:[%s37] sm:$0xf]
  %v1971 = vld [vmem:[%s37 + $0x4] sm:$0xf]
  %v1972 = vld [vmem:[%s37 + $0x8] sm:$0xf]
  %v1973 = vld [vmem:[%s37 + $0xc] sm:$0xf]
  %v1974 = vld [vmem:[%s39] sm:$0x1]
  %v1976 = vperm.slane %v1974, 0
  %v1982 = vunpack.c.l.b16 %v1970
  %v1983 = vunpack.c.l.b16 %v1971
  %v1984 = vunpack.c.l.b16 %v1972
  %v1985 = vunpack.c.l.b16 %v1973
  %v1986 = vpack.c.b16 %v1983, %v1982
  %v1987 = vpack.c.b16 %v1985, %v1984
  %v1991 = vsel %vm252, %v1954, 0
  %v1994 = vsel %vm252, %v1955, 0
  %v1997 = vsel %vm252, %v1956, 0
  %v2000 = vsel %vm252, %v1957, 0
  %v2003 = vsel %vm252, %v1958, 0
  %v2006 = vsel %vm252, %v1959, 0
  %v2009 = vsel %vm252, %v1960, 0
  %v2012 = vsel %vm252, %v1961, 0
  %v2015 = vsel %vm252, %v1962, 0
  %v2018 = vsel %vm252, %v1963, 0
  %v2021 = vsel %vm252, %v1964, 0
  %v2024 = vsel %vm252, %v1965, 0
  %v2027 = vsel %vm252, %v1966, 0
  %v2030 = vsel %vm252, %v1967, 0
  %v2033 = vsel %vm252, %v1968, 0
  %v2036 = vsel %vm252, %v1969, 0
  %2038 = vmatpush.bf16.msra.mxu0 0
  %2039 = vmatpush.bf16.msra.mxu0 0
  %2040 = vmatpush.bf16.msra.mxu0 0
  %2041 = vmatpush.bf16.msra.mxu0 0
  %2042 = vmatpush.bf16.msra.mxu0 0
  %2043 = vmatpush.bf16.msra.mxu0 0
  %2044 = vmatpush.bf16.msra.mxu0 %v1987
  %2045 = vmatpush.bf16.msra.mxu0 %v1986
  %2046 = vmatmul.bf16.gmra.mxu0 %v1991
  %v2047 = vpop.f32.mrf.mxu0
  %v2048 = vadd.f32 %v1976, %v2047
  %v2049 = vpop.f32.mrf.mxu0
  %v2050 = vadd.f32 %v1976, %v2049
  %2051 = vmatmul.bf16.gmra.mxu0 %v1994
  %v2052 = vpop.f32.mrf.mxu0
  %v2053 = vadd.f32 %v1976, %v2052
  %v2054 = vpop.f32.mrf.mxu0
  %v2055 = vadd.f32 %v1976, %v2054
  %2056 = vmatmul.bf16.gmra.mxu0 %v1997
  %v2057 = vpop.f32.mrf.mxu0
  %v2058 = vadd.f32 %v1976, %v2057
  %v2059 = vpop.f32.mrf.mxu0
  %v2060 = vadd.f32 %v1976, %v2059
  %2061 = vmatmul.bf16.gmra.mxu0 %v2000
  %v2062 = vpop.f32.mrf.mxu0
  %v2063 = vadd.f32 %v1976, %v2062
  %v2064 = vpop.f32.mrf.mxu0
  %v2065 = vadd.f32 %v1976, %v2064
  %2066 = vmatmul.bf16.gmra.mxu0 %v2003
  %v2067 = vpop.f32.mrf.mxu0
  %v2068 = vadd.f32 %v1976, %v2067
  %v2069 = vpop.f32.mrf.mxu0
  %v2070 = vadd.f32 %v1976, %v2069
  %2071 = vmatmul.bf16.gmra.mxu0 %v2006
  %v2072 = vpop.f32.mrf.mxu0
  %v2073 = vadd.f32 %v1976, %v2072
  %v2074 = vpop.f32.mrf.mxu0
  %v2075 = vadd.f32 %v1976, %v2074
  %2076 = vmatmul.bf16.gmra.mxu0 %v2009
  %v2077 = vpop.f32.mrf.mxu0
  %v2078 = vadd.f32 %v1976, %v2077
  %v2079 = vpop.f32.mrf.mxu0
  %v2080 = vadd.f32 %v1976, %v2079
  %2081 = vmatmul.bf16.gmra.mxu0 %v2012
  %v2082 = vpop.f32.mrf.mxu0
  %v2083 = vadd.f32 %v1976, %v2082
  %v2084 = vpop.f32.mrf.mxu0
  %v2085 = vadd.f32 %v1976, %v2084
  %2086 = vmatmul.bf16.gmra.mxu0 %v2015
  %v2087 = vpop.f32.mrf.mxu0
  %v2088 = vadd.f32 %v1976, %v2087
  %v2089 = vpop.f32.mrf.mxu0
  %v2090 = vadd.f32 %v1976, %v2089
  %2091 = vmatmul.bf16.gmra.mxu0 %v2018
  %v2092 = vpop.f32.mrf.mxu0
  %v2093 = vadd.f32 %v1976, %v2092
  %v2094 = vpop.f32.mrf.mxu0
  %v2095 = vadd.f32 %v1976, %v2094
  %2096 = vmatmul.bf16.gmra.mxu0 %v2021
  %v2097 = vpop.f32.mrf.mxu0
  %v2098 = vadd.f32 %v1976, %v2097
  %v2099 = vpop.f32.mrf.mxu0
  %v2100 = vadd.f32 %v1976, %v2099
  %2101 = vmatmul.bf16.gmra.mxu0 %v2024
  %v2102 = vpop.f32.mrf.mxu0
  %v2103 = vadd.f32 %v1976, %v2102
  %v2104 = vpop.f32.mrf.mxu0
  %v2105 = vadd.f32 %v1976, %v2104
  %2106 = vmatmul.bf16.gmra.mxu0 %v2027
  %v2107 = vpop.f32.mrf.mxu0
  %v2108 = vadd.f32 %v1976, %v2107
  %v2109 = vpop.f32.mrf.mxu0
  %v2110 = vadd.f32 %v1976, %v2109
  %2111 = vmatmul.bf16.gmra.mxu0 %v2030
  %v2112 = vpop.f32.mrf.mxu0
  %v2113 = vadd.f32 %v1976, %v2112
  %v2114 = vpop.f32.mrf.mxu0
  %v2115 = vadd.f32 %v1976, %v2114
  %2116 = vmatmul.bf16.gmra.mxu0 %v2033
  %v2117 = vpop.f32.mrf.mxu0
  %v2118 = vadd.f32 %v1976, %v2117
  %v2119 = vpop.f32.mrf.mxu0
  %v2120 = vadd.f32 %v1976, %v2119
  %2121 = vmatmul.bf16.gmra.mxu0 %v2036
  %v2122 = vpop.f32.mrf.mxu0
  %v2123 = vadd.f32 %v1976, %v2122
  %v2124 = vpop.f32.mrf.mxu0
  %v2125 = vadd.f32 %v1976, %v2124
  %2126 = vdwg.mxu0
  %v2127 = vmax.f32 %v2048, 0.0
  %v2128 = vmax.f32 %v2050, 0.0
  %v2129 = vmax.f32 %v2053, 0.0
  %v2130 = vmax.f32 %v2055, 0.0
  %v2131 = vmax.f32 %v2058, 0.0
  %v2132 = vmax.f32 %v2060, 0.0
  %v2133 = vmax.f32 %v2063, 0.0
  %v2134 = vmax.f32 %v2065, 0.0
  %v2135 = vmax.f32 %v2068, 0.0
  %v2136 = vmax.f32 %v2070, 0.0
  %v2137 = vmax.f32 %v2073, 0.0
  %v2138 = vmax.f32 %v2075, 0.0
  %v2139 = vmax.f32 %v2078, 0.0
  %v2140 = vmax.f32 %v2080, 0.0
  %v2141 = vmax.f32 %v2083, 0.0
  %v2142 = vmax.f32 %v2085, 0.0
  %v2143 = vmax.f32 %v2088, 0.0
  %v2144 = vmax.f32 %v2090, 0.0
  %v2145 = vmax.f32 %v2093, 0.0
  %v2146 = vmax.f32 %v2095, 0.0
  %v2147 = vmax.f32 %v2098, 0.0
  %v2148 = vmax.f32 %v2100, 0.0
  %v2149 = vmax.f32 %v2103, 0.0
  %v2150 = vmax.f32 %v2105, 0.0
  %v2151 = vmax.f32 %v2108, 0.0
  %v2152 = vmax.f32 %v2110, 0.0
  %v2153 = vmax.f32 %v2113, 0.0
  %v2154 = vmax.f32 %v2115, 0.0
  %v2155 = vmax.f32 %v2118, 0.0
  %v2156 = vmax.f32 %v2120, 0.0
  %v2157 = vmax.f32 %v2123, 0.0
  %v2158 = vmax.f32 %v2125, 0.0
  %v2159 = vpack.c.bf16 %v2128, %v2127
  %v2160 = vpack.c.bf16 %v2130, %v2129
  %v2161 = vpack.c.bf16 %v2132, %v2131
  %v2162 = vpack.c.bf16 %v2134, %v2133
  %v2163 = vpack.c.bf16 %v2136, %v2135
  %v2164 = vpack.c.bf16 %v2138, %v2137
  %v2165 = vpack.c.bf16 %v2140, %v2139
  %v2166 = vpack.c.bf16 %v2142, %v2141
  %v2167 = vpack.c.bf16 %v2144, %v2143
  %v2168 = vpack.c.bf16 %v2146, %v2145
  %v2169 = vpack.c.bf16 %v2148, %v2147
  %v2170 = vpack.c.bf16 %v2150, %v2149
  %v2171 = vpack.c.bf16 %v2152, %v2151
  %v2172 = vpack.c.bf16 %v2154, %v2153
  %v2173 = vpack.c.bf16 %v2156, %v2155
  %v2174 = vpack.c.bf16 %v2158, %v2157
  %v2175 = vld [vmem:[%s41] sm:$0xf]
  %v2176 = vld [vmem:[%s41 + $0x4] sm:$0xf]
  %v2177 = vld [vmem:[%s41 + $0x8] sm:$0xf]
  %v2178 = vld [vmem:[%s41 + $0xc] sm:$0xf]
  %v2179 = vld [vmem:[%s41 + $0x10] sm:$0xf]
  %v2180 = vld [vmem:[%s41 + $0x14] sm:$0xf]
  %v2181 = vld [vmem:[%s41 + $0x18] sm:$0xf]
  %v2182 = vld [vmem:[%s41 + $0x1c] sm:$0xf]
  %v2183 = vld [vmem:[%s43] sm:$0x1]
  %v2185 = vperm.slane %v2183, 0
  %v2195 = vunpack.c.l.b16 %v2175
  %v2196 = vunpack.c.l.b16 %v2176
  %v2197 = vunpack.c.l.b16 %v2177
  %v2198 = vunpack.c.l.b16 %v2178
  %v2199 = vunpack.c.l.b16 %v2179
  %v2200 = vunpack.c.l.b16 %v2180
  %v2201 = vunpack.c.l.b16 %v2181
  %v2202 = vunpack.c.l.b16 %v2182
  %v2203 = vpack.c.b16 %v2196, %v2195
  %v2204 = vpack.c.b16 %v2198, %v2197
  %v2205 = vpack.c.b16 %v2200, %v2199
  %v2206 = vpack.c.b16 %v2202, %v2201
  %v2212 = vsel %vm474, %v2159, 0
  %v2215 = vsel %vm474, %v2160, 0
  %v2218 = vsel %vm474, %v2161, 0
  %v2221 = vsel %vm474, %v2162, 0
  %v2224 = vsel %vm474, %v2163, 0
  %v2227 = vsel %vm474, %v2164, 0
  %v2230 = vsel %vm474, %v2165, 0
  %v2233 = vsel %vm474, %v2166, 0
  %v2236 = vsel %vm474, %v2167, 0
  %v2239 = vsel %vm474, %v2168, 0
  %v2242 = vsel %vm474, %v2169, 0
  %v2245 = vsel %vm474, %v2170, 0
  %v2248 = vsel %vm474, %v2171, 0
  %v2251 = vsel %vm474, %v2172, 0
  %v2254 = vsel %vm474, %v2173, 0
  %v2257 = vsel %vm474, %v2174, 0
  %2259 = vmatpush.bf16.msra.mxu0 0
  %2260 = vmatpush.bf16.msra.mxu0 0
  %2261 = vmatpush.bf16.msra.mxu0 0
  %2262 = vmatpush.bf16.msra.mxu0 0
  %2263 = vmatpush.bf16.msra.mxu0 %v2206
  %2264 = vmatpush.bf16.msra.mxu0 %v2205
  %2265 = vmatpush.bf16.msra.mxu0 %v2204
  %2266 = vmatpush.bf16.msra.mxu0 %v2203
  %2267 = vmatmul.bf16.gmra.mxu0 %v2212
  %v2268 = vpop.f32.mrf.mxu0
  %v2269 = vadd.f32 %v2185, %v2268
  %v2270 = vpop.f32.mrf.mxu0
  %v2271 = vadd.f32 %v2185, %v2270
  %2272 = vmatmul.bf16.gmra.mxu0 %v2215
  %v2273 = vpop.f32.mrf.mxu0
  %v2274 = vadd.f32 %v2185, %v2273
  %v2275 = vpop.f32.mrf.mxu0
  %v2276 = vadd.f32 %v2185, %v2275
  %2277 = vmatmul.bf16.gmra.mxu0 %v2218
  %v2278 = vpop.f32.mrf.mxu0
  %v2279 = vadd.f32 %v2185, %v2278
  %v2280 = vpop.f32.mrf.mxu0
  %v2281 = vadd.f32 %v2185, %v2280
  %2282 = vmatmul.bf16.gmra.mxu0 %v2221
  %v2283 = vpop.f32.mrf.mxu0
  %v2284 = vadd.f32 %v2185, %v2283
  %v2285 = vpop.f32.mrf.mxu0
  %v2286 = vadd.f32 %v2185, %v2285
  %2287 = vmatmul.bf16.gmra.mxu0 %v2224
  %v2288 = vpop.f32.mrf.mxu0
  %v2289 = vadd.f32 %v2185, %v2288
  %v2290 = vpop.f32.mrf.mxu0
  %v2291 = vadd.f32 %v2185, %v2290
  %2292 = vmatmul.bf16.gmra.mxu0 %v2227
  %v2293 = vpop.f32.mrf.mxu0
  %v2294 = vadd.f32 %v2185, %v2293
  %v2295 = vpop.f32.mrf.mxu0
  %v2296 = vadd.f32 %v2185, %v2295
  %2297 = vmatmul.bf16.gmra.mxu0 %v2230
  %v2298 = vpop.f32.mrf.mxu0
  %v2299 = vadd.f32 %v2185, %v2298
  %v2300 = vpop.f32.mrf.mxu0
  %v2301 = vadd.f32 %v2185, %v2300
  %2302 = vmatmul.bf16.gmra.mxu0 %v2233
  %v2303 = vpop.f32.mrf.mxu0
  %v2304 = vadd.f32 %v2185, %v2303
  %v2305 = vpop.f32.mrf.mxu0
  %v2306 = vadd.f32 %v2185, %v2305
  %2307 = vmatmul.bf16.gmra.mxu0 %v2236
  %v2308 = vpop.f32.mrf.mxu0
  %v2309 = vadd.f32 %v2185, %v2308
  %v2310 = vpop.f32.mrf.mxu0
  %v2311 = vadd.f32 %v2185, %v2310
  %2312 = vmatmul.bf16.gmra.mxu0 %v2239
  %v2313 = vpop.f32.mrf.mxu0
  %v2314 = vadd.f32 %v2185, %v2313
  %v2315 = vpop.f32.mrf.mxu0
  %v2316 = vadd.f32 %v2185, %v2315
  %2317 = vmatmul.bf16.gmra.mxu0 %v2242
  %v2318 = vpop.f32.mrf.mxu0
  %v2319 = vadd.f32 %v2185, %v2318
  %v2320 = vpop.f32.mrf.mxu0
  %v2321 = vadd.f32 %v2185, %v2320
  %2322 = vmatmul.bf16.gmra.mxu0 %v2245
  %v2323 = vpop.f32.mrf.mxu0
  %v2324 = vadd.f32 %v2185, %v2323
  %v2325 = vpop.f32.mrf.mxu0
  %v2326 = vadd.f32 %v2185, %v2325
  %2327 = vmatmul.bf16.gmra.mxu0 %v2248
  %v2328 = vpop.f32.mrf.mxu0
  %v2329 = vadd.f32 %v2185, %v2328
  %v2330 = vpop.f32.mrf.mxu0
  %v2331 = vadd.f32 %v2185, %v2330
  %2332 = vmatmul.bf16.gmra.mxu0 %v2251
  %v2333 = vpop.f32.mrf.mxu0
  %v2334 = vadd.f32 %v2185, %v2333
  %v2335 = vpop.f32.mrf.mxu0
  %v2336 = vadd.f32 %v2185, %v2335
  %2337 = vmatmul.bf16.gmra.mxu0 %v2254
  %v2338 = vpop.f32.mrf.mxu0
  %v2339 = vadd.f32 %v2185, %v2338
  %v2340 = vpop.f32.mrf.mxu0
  %v2341 = vadd.f32 %v2185, %v2340
  %2342 = vmatmul.bf16.gmra.mxu0 %v2257
  %v2343 = vpop.f32.mrf.mxu0
  %v2344 = vadd.f32 %v2185, %v2343
  %v2345 = vpop.f32.mrf.mxu0
  %v2346 = vadd.f32 %v2185, %v2345
  %2347 = vdwg.mxu0
  %v2348 = vmax.f32 %v2269, 0.0
  %v2349 = vmax.f32 %v2271, 0.0
  %v2350 = vmax.f32 %v2274, 0.0
  %v2351 = vmax.f32 %v2276, 0.0
  %v2352 = vmax.f32 %v2279, 0.0
  %v2353 = vmax.f32 %v2281, 0.0
  %v2354 = vmax.f32 %v2284, 0.0
  %v2355 = vmax.f32 %v2286, 0.0
  %v2356 = vmax.f32 %v2289, 0.0
  %v2357 = vmax.f32 %v2291, 0.0
  %v2358 = vmax.f32 %v2294, 0.0
  %v2359 = vmax.f32 %v2296, 0.0
  %v2360 = vmax.f32 %v2299, 0.0
  %v2361 = vmax.f32 %v2301, 0.0
  %v2362 = vmax.f32 %v2304, 0.0
  %v2363 = vmax.f32 %v2306, 0.0
  %v2364 = vmax.f32 %v2309, 0.0
  %v2365 = vmax.f32 %v2311, 0.0
  %v2366 = vmax.f32 %v2314, 0.0
  %v2367 = vmax.f32 %v2316, 0.0
  %v2368 = vmax.f32 %v2319, 0.0
  %v2369 = vmax.f32 %v2321, 0.0
  %v2370 = vmax.f32 %v2324, 0.0
  %v2371 = vmax.f32 %v2326, 0.0
  %v2372 = vmax.f32 %v2329, 0.0
  %v2373 = vmax.f32 %v2331, 0.0
  %v2374 = vmax.f32 %v2334, 0.0
  %v2375 = vmax.f32 %v2336, 0.0
  %v2376 = vmax.f32 %v2339, 0.0
  %v2377 = vmax.f32 %v2341, 0.0
  %v2378 = vmax.f32 %v2344, 0.0
  %v2379 = vmax.f32 %v2346, 0.0
  %v2380 = vpack.c.bf16 %v2349, %v2348
  %v2381 = vpack.c.bf16 %v2351, %v2350
  %v2382 = vpack.c.bf16 %v2353, %v2352
  %v2383 = vpack.c.bf16 %v2355, %v2354
  %v2384 = vpack.c.bf16 %v2357, %v2356
  %v2385 = vpack.c.bf16 %v2359, %v2358
  %v2386 = vpack.c.bf16 %v2361, %v2360
  %v2387 = vpack.c.bf16 %v2363, %v2362
  %v2388 = vpack.c.bf16 %v2365, %v2364
  %v2389 = vpack.c.bf16 %v2367, %v2366
  %v2390 = vpack.c.bf16 %v2369, %v2368
  %v2391 = vpack.c.bf16 %v2371, %v2370
  %v2392 = vpack.c.bf16 %v2373, %v2372
  %v2393 = vpack.c.bf16 %v2375, %v2374
  %v2394 = vpack.c.bf16 %v2377, %v2376
  %v2395 = vpack.c.bf16 %v2379, %v2378
  %v2396 = vld [vmem:[%s45] sm:$0xf]
  %v2397 = vld [vmem:[%s45 + $0x4] sm:$0xf]
  %v2398 = vld [vmem:[%s45 + $0x8] sm:$0xf]
  %v2399 = vld [vmem:[%s45 + $0xc] sm:$0xf]
  %v2400 = vld [vmem:[%s45 + $0x10] sm:$0xf]
  %v2401 = vld [vmem:[%s45 + $0x14] sm:$0xf]
  %v2402 = vld [vmem:[%s45 + $0x18] sm:$0xf]
  %v2403 = vld [vmem:[%s45 + $0x1c] sm:$0xf]
  %v2404 = vld [vmem:[%s47] sm:$0x1]
  %v2406 = vperm.slane %v2404, 0
  %v2416 = vunpack.c.l.b16 %v2396
  %v2417 = vunpack.c.l.b16 %v2397
  %v2418 = vunpack.c.l.b16 %v2398
  %v2419 = vunpack.c.l.b16 %v2399
  %v2420 = vunpack.c.l.b16 %v2400
  %v2421 = vunpack.c.l.b16 %v2401
  %v2422 = vunpack.c.l.b16 %v2402
  %v2423 = vunpack.c.l.b16 %v2403
  %v2424 = vpack.c.b16 %v2417, %v2416
  %v2425 = vpack.c.b16 %v2419, %v2418
  %v2426 = vpack.c.b16 %v2421, %v2420
  %v2427 = vpack.c.b16 %v2423, %v2422
  %v2433 = vsel %vm474, %v2380, 0
  %v2436 = vsel %vm474, %v2381, 0
  %v2439 = vsel %vm474, %v2382, 0
  %v2442 = vsel %vm474, %v2383, 0
  %v2445 = vsel %vm474, %v2384, 0
  %v2448 = vsel %vm474, %v2385, 0
  %v2451 = vsel %vm474, %v2386, 0
  %v2454 = vsel %vm474, %v2387, 0
  %v2457 = vsel %vm474, %v2388, 0
  %v2460 = vsel %vm474, %v2389, 0
  %v2463 = vsel %vm474, %v2390, 0
  %v2466 = vsel %vm474, %v2391, 0
  %v2469 = vsel %vm474, %v2392, 0
  %v2472 = vsel %vm474, %v2393, 0
  %v2475 = vsel %vm474, %v2394, 0
  %v2478 = vsel %vm474, %v2395, 0
  %2480 = vmatpush.bf16.msra.mxu0 0
  %2481 = vmatpush.bf16.msra.mxu0 0
  %2482 = vmatpush.bf16.msra.mxu0 0
  %2483 = vmatpush.bf16.msra.mxu0 0
  %2484 = vmatpush.bf16.msra.mxu0 %v2427
  %2485 = vmatpush.bf16.msra.mxu0 %v2426
  %2486 = vmatpush.bf16.msra.mxu0 %v2425
  %2487 = vmatpush.bf16.msra.mxu0 %v2424
  %2488 = vmatmul.bf16.gmra.mxu0 %v2433
  %v2489 = vpop.f32.mrf.mxu0
  %v2490 = vadd.f32 %v2406, %v2489
  %v2491 = vpop.f32.mrf.mxu0
  %v2492 = vadd.f32 %v2406, %v2491
  %2493 = vmatmul.bf16.gmra.mxu0 %v2436
  %v2494 = vpop.f32.mrf.mxu0
  %v2495 = vadd.f32 %v2406, %v2494
  %v2496 = vpop.f32.mrf.mxu0
  %v2497 = vadd.f32 %v2406, %v2496
  %2498 = vmatmul.bf16.gmra.mxu0 %v2439
  %v2499 = vpop.f32.mrf.mxu0
  %v2500 = vadd.f32 %v2406, %v2499
  %v2501 = vpop.f32.mrf.mxu0
  %v2502 = vadd.f32 %v2406, %v2501
  %2503 = vmatmul.bf16.gmra.mxu0 %v2442
  %v2504 = vpop.f32.mrf.mxu0
  %v2505 = vadd.f32 %v2406, %v2504
  %v2506 = vpop.f32.mrf.mxu0
  %v2507 = vadd.f32 %v2406, %v2506
  %2508 = vmatmul.bf16.gmra.mxu0 %v2445
  %v2509 = vpop.f32.mrf.mxu0
  %v2510 = vadd.f32 %v2406, %v2509
  %v2511 = vpop.f32.mrf.mxu0
  %v2512 = vadd.f32 %v2406, %v2511
  %2513 = vmatmul.bf16.gmra.mxu0 %v2448
  %v2514 = vpop.f32.mrf.mxu0
  %v2515 = vadd.f32 %v2406, %v2514
  %v2516 = vpop.f32.mrf.mxu0
  %v2517 = vadd.f32 %v2406, %v2516
  %2518 = vmatmul.bf16.gmra.mxu0 %v2451
  %v2519 = vpop.f32.mrf.mxu0
  %v2520 = vadd.f32 %v2406, %v2519
  %v2521 = vpop.f32.mrf.mxu0
  %v2522 = vadd.f32 %v2406, %v2521
  %2523 = vmatmul.bf16.gmra.mxu0 %v2454
  %v2524 = vpop.f32.mrf.mxu0
  %v2525 = vadd.f32 %v2406, %v2524
  %v2526 = vpop.f32.mrf.mxu0
  %v2527 = vadd.f32 %v2406, %v2526
  %2528 = vmatmul.bf16.gmra.mxu0 %v2457
  %v2529 = vpop.f32.mrf.mxu0
  %v2530 = vadd.f32 %v2406, %v2529
  %v2531 = vpop.f32.mrf.mxu0
  %v2532 = vadd.f32 %v2406, %v2531
  %2533 = vmatmul.bf16.gmra.mxu0 %v2460
  %v2534 = vpop.f32.mrf.mxu0
  %v2535 = vadd.f32 %v2406, %v2534
  %v2536 = vpop.f32.mrf.mxu0
  %v2537 = vadd.f32 %v2406, %v2536
  %2538 = vmatmul.bf16.gmra.mxu0 %v2463
  %v2539 = vpop.f32.mrf.mxu0
  %v2540 = vadd.f32 %v2406, %v2539
  %v2541 = vpop.f32.mrf.mxu0
  %v2542 = vadd.f32 %v2406, %v2541
  %2543 = vmatmul.bf16.gmra.mxu0 %v2466
  %v2544 = vpop.f32.mrf.mxu0
  %v2545 = vadd.f32 %v2406, %v2544
  %v2546 = vpop.f32.mrf.mxu0
  %v2547 = vadd.f32 %v2406, %v2546
  %2548 = vmatmul.bf16.gmra.mxu0 %v2469
  %v2549 = vpop.f32.mrf.mxu0
  %v2550 = vadd.f32 %v2406, %v2549
  %v2551 = vpop.f32.mrf.mxu0
  %v2552 = vadd.f32 %v2406, %v2551
  %2553 = vmatmul.bf16.gmra.mxu0 %v2472
  %v2554 = vpop.f32.mrf.mxu0
  %v2555 = vadd.f32 %v2406, %v2554
  %v2556 = vpop.f32.mrf.mxu0
  %v2557 = vadd.f32 %v2406, %v2556
  %2558 = vmatmul.bf16.gmra.mxu0 %v2475
  %v2559 = vpop.f32.mrf.mxu0
  %v2560 = vadd.f32 %v2406, %v2559
  %v2561 = vpop.f32.mrf.mxu0
  %v2562 = vadd.f32 %v2406, %v2561
  %2563 = vmatmul.bf16.gmra.mxu0 %v2478
  %v2564 = vpop.f32.mrf.mxu0
  %v2565 = vadd.f32 %v2406, %v2564
  %v2566 = vpop.f32.mrf.mxu0
  %v2567 = vadd.f32 %v2406, %v2566
  %2568 = vdwg.mxu0
  %v2569 = vmax.f32 %v2490, 0.0
  %v2570 = vmax.f32 %v2492, 0.0
  %v2571 = vmax.f32 %v2495, 0.0
  %v2572 = vmax.f32 %v2497, 0.0
  %v2573 = vmax.f32 %v2500, 0.0
  %v2574 = vmax.f32 %v2502, 0.0
  %v2575 = vmax.f32 %v2505, 0.0
  %v2576 = vmax.f32 %v2507, 0.0
  %v2577 = vmax.f32 %v2510, 0.0
  %v2578 = vmax.f32 %v2512, 0.0
  %v2579 = vmax.f32 %v2515, 0.0
  %v2580 = vmax.f32 %v2517, 0.0
  %v2581 = vmax.f32 %v2520, 0.0
  %v2582 = vmax.f32 %v2522, 0.0
  %v2583 = vmax.f32 %v2525, 0.0
  %v2584 = vmax.f32 %v2527, 0.0
  %v2585 = vmax.f32 %v2530, 0.0
  %v2586 = vmax.f32 %v2532, 0.0
  %v2587 = vmax.f32 %v2535, 0.0
  %v2588 = vmax.f32 %v2537, 0.0
  %v2589 = vmax.f32 %v2540, 0.0
  %v2590 = vmax.f32 %v2542, 0.0
  %v2591 = vmax.f32 %v2545, 0.0
  %v2592 = vmax.f32 %v2547, 0.0
  %v2593 = vmax.f32 %v2550, 0.0
  %v2594 = vmax.f32 %v2552, 0.0
  %v2595 = vmax.f32 %v2555, 0.0
  %v2596 = vmax.f32 %v2557, 0.0
  %v2597 = vmax.f32 %v2560, 0.0
  %v2598 = vmax.f32 %v2562, 0.0
  %v2599 = vmax.f32 %v2565, 0.0
  %v2600 = vmax.f32 %v2567, 0.0
  %v2601 = vpack.c.bf16 %v2570, %v2569
  %v2602 = vpack.c.bf16 %v2572, %v2571
  %v2603 = vpack.c.bf16 %v2574, %v2573
  %v2604 = vpack.c.bf16 %v2576, %v2575
  %v2605 = vpack.c.bf16 %v2578, %v2577
  %v2606 = vpack.c.bf16 %v2580, %v2579
  %v2607 = vpack.c.bf16 %v2582, %v2581
  %v2608 = vpack.c.bf16 %v2584, %v2583
  %v2609 = vpack.c.bf16 %v2586, %v2585
  %v2610 = vpack.c.bf16 %v2588, %v2587
  %v2611 = vpack.c.bf16 %v2590, %v2589
  %v2612 = vpack.c.bf16 %v2592, %v2591
  %v2613 = vpack.c.bf16 %v2594, %v2593
  %v2614 = vpack.c.bf16 %v2596, %v2595
  %v2615 = vpack.c.bf16 %v2598, %v2597
  %v2616 = vpack.c.bf16 %v2600, %v2599
  %v2617 = vld [vmem:[%s49] sm:$0xf]
  %v2618 = vld [vmem:[%s49 + $0x4] sm:$0xf]
  %v2619 = vld [vmem:[%s49 + $0x8] sm:$0xf]
  %v2620 = vld [vmem:[%s49 + $0xc] sm:$0xf]
  %v2621 = vld [vmem:[%s49 + $0x10] sm:$0xf]
  %v2622 = vld [vmem:[%s49 + $0x14] sm:$0xf]
  %v2623 = vld [vmem:[%s49 + $0x18] sm:$0xf]
  %v2624 = vld [vmem:[%s49 + $0x1c] sm:$0xf]
  %v2625 = vld [vmem:[%s51] sm:$0x1]
  %v2627 = vperm.slane %v2625, 0
  %v2637 = vunpack.c.l.b16 %v2617
  %v2638 = vunpack.c.l.b16 %v2618
  %v2639 = vunpack.c.l.b16 %v2619
  %v2640 = vunpack.c.l.b16 %v2620
  %v2641 = vunpack.c.l.b16 %v2621
  %v2642 = vunpack.c.l.b16 %v2622
  %v2643 = vunpack.c.l.b16 %v2623
  %v2644 = vunpack.c.l.b16 %v2624
  %v2645 = vpack.c.b16 %v2638, %v2637
  %v2646 = vpack.c.b16 %v2640, %v2639
  %v2647 = vpack.c.b16 %v2642, %v2641
  %v2648 = vpack.c.b16 %v2644, %v2643
  %v2654 = vsel %vm474, %v2601, 0
  %v2657 = vsel %vm474, %v2602, 0
  %v2660 = vsel %vm474, %v2603, 0
  %v2663 = vsel %vm474, %v2604, 0
  %v2666 = vsel %vm474, %v2605, 0
  %v2669 = vsel %vm474, %v2606, 0
  %v2672 = vsel %vm474, %v2607, 0
  %v2675 = vsel %vm474, %v2608, 0
  %v2678 = vsel %vm474, %v2609, 0
  %v2681 = vsel %vm474, %v2610, 0
  %v2684 = vsel %vm474, %v2611, 0
  %v2687 = vsel %vm474, %v2612, 0
  %v2690 = vsel %vm474, %v2613, 0
  %v2693 = vsel %vm474, %v2614, 0
  %v2696 = vsel %vm474, %v2615, 0
  %v2699 = vsel %vm474, %v2616, 0
  %2701 = vmatpush.bf16.msra.mxu0 0
  %2702 = vmatpush.bf16.msra.mxu0 0
  %2703 = vmatpush.bf16.msra.mxu0 0
  %2704 = vmatpush.bf16.msra.mxu0 0
  %2705 = vmatpush.bf16.msra.mxu0 %v2648
  %2706 = vmatpush.bf16.msra.mxu0 %v2647
  %2707 = vmatpush.bf16.msra.mxu0 %v2646
  %2708 = vmatpush.bf16.msra.mxu0 %v2645
  %2709 = vmatmul.bf16.gmra.mxu0 %v2654
  %v2710 = vpop.f32.mrf.mxu0
  %v2711 = vadd.f32 %v2627, %v2710
  %v2712 = vpop.f32.mrf.mxu0
  %v2713 = vadd.f32 %v2627, %v2712
  %2714 = vmatmul.bf16.gmra.mxu0 %v2657
  %v2715 = vpop.f32.mrf.mxu0
  %v2716 = vadd.f32 %v2627, %v2715
  %v2717 = vpop.f32.mrf.mxu0
  %v2718 = vadd.f32 %v2627, %v2717
  %2719 = vmatmul.bf16.gmra.mxu0 %v2660
  %v2720 = vpop.f32.mrf.mxu0
  %v2721 = vadd.f32 %v2627, %v2720
  %v2722 = vpop.f32.mrf.mxu0
  %v2723 = vadd.f32 %v2627, %v2722
  %2724 = vmatmul.bf16.gmra.mxu0 %v2663
  %v2725 = vpop.f32.mrf.mxu0
  %v2726 = vadd.f32 %v2627, %v2725
  %v2727 = vpop.f32.mrf.mxu0
  %v2728 = vadd.f32 %v2627, %v2727
  %2729 = vmatmul.bf16.gmra.mxu0 %v2666
  %v2730 = vpop.f32.mrf.mxu0
  %v2731 = vadd.f32 %v2627, %v2730
  %v2732 = vpop.f32.mrf.mxu0
  %v2733 = vadd.f32 %v2627, %v2732
  %2734 = vmatmul.bf16.gmra.mxu0 %v2669
  %v2735 = vpop.f32.mrf.mxu0
  %v2736 = vadd.f32 %v2627, %v2735
  %v2737 = vpop.f32.mrf.mxu0
  %v2738 = vadd.f32 %v2627, %v2737
  %2739 = vmatmul.bf16.gmra.mxu0 %v2672
  %v2740 = vpop.f32.mrf.mxu0
  %v2741 = vadd.f32 %v2627, %v2740
  %v2742 = vpop.f32.mrf.mxu0
  %v2743 = vadd.f32 %v2627, %v2742
  %2744 = vmatmul.bf16.gmra.mxu0 %v2675
  %v2745 = vpop.f32.mrf.mxu0
  %v2746 = vadd.f32 %v2627, %v2745
  %v2747 = vpop.f32.mrf.mxu0
  %v2748 = vadd.f32 %v2627, %v2747
  %2749 = vmatmul.bf16.gmra.mxu0 %v2678
  %v2750 = vpop.f32.mrf.mxu0
  %v2751 = vadd.f32 %v2627, %v2750
  %v2752 = vpop.f32.mrf.mxu0
  %v2753 = vadd.f32 %v2627, %v2752
  %2754 = vmatmul.bf16.gmra.mxu0 %v2681
  %v2755 = vpop.f32.mrf.mxu0
  %v2756 = vadd.f32 %v2627, %v2755
  %v2757 = vpop.f32.mrf.mxu0
  %v2758 = vadd.f32 %v2627, %v2757
  %2759 = vmatmul.bf16.gmra.mxu0 %v2684
  %v2760 = vpop.f32.mrf.mxu0
  %v2761 = vadd.f32 %v2627, %v2760
  %v2762 = vpop.f32.mrf.mxu0
  %v2763 = vadd.f32 %v2627, %v2762
  %2764 = vmatmul.bf16.gmra.mxu0 %v2687
  %v2765 = vpop.f32.mrf.mxu0
  %v2766 = vadd.f32 %v2627, %v2765
  %v2767 = vpop.f32.mrf.mxu0
  %v2768 = vadd.f32 %v2627, %v2767
  %2769 = vmatmul.bf16.gmra.mxu0 %v2690
  %v2770 = vpop.f32.mrf.mxu0
  %v2771 = vadd.f32 %v2627, %v2770
  %v2772 = vpop.f32.mrf.mxu0
  %v2773 = vadd.f32 %v2627, %v2772
  %2774 = vmatmul.bf16.gmra.mxu0 %v2693
  %v2775 = vpop.f32.mrf.mxu0
  %v2776 = vadd.f32 %v2627, %v2775
  %v2777 = vpop.f32.mrf.mxu0
  %v2778 = vadd.f32 %v2627, %v2777
  %2779 = vmatmul.bf16.gmra.mxu0 %v2696
  %v2780 = vpop.f32.mrf.mxu0
  %v2781 = vadd.f32 %v2627, %v2780
  %v2782 = vpop.f32.mrf.mxu0
  %v2783 = vadd.f32 %v2627, %v2782
  %2784 = vmatmul.bf16.gmra.mxu0 %v2699
  %v2785 = vpop.f32.mrf.mxu0
  %v2786 = vadd.f32 %v2627, %v2785
  %v2787 = vpop.f32.mrf.mxu0
  %v2788 = vadd.f32 %v2627, %v2787
  %2789 = vdwg.mxu0
  %v2790 = vadd.f32 %v1054, %v2711
  %v2791 = vadd.f32 %v1055, %v2713
  %v2792 = vadd.f32 %v1056, %v2716
  %v2793 = vadd.f32 %v1057, %v2718
  %v2794 = vadd.f32 %v1058, %v2721
  %v2795 = vadd.f32 %v1059, %v2723
  %v2796 = vadd.f32 %v1060, %v2726
  %v2797 = vadd.f32 %v1061, %v2728
  %v2798 = vadd.f32 %v1062, %v2731
  %v2799 = vadd.f32 %v1063, %v2733
  %v2800 = vadd.f32 %v1064, %v2736
  %v2801 = vadd.f32 %v1065, %v2738
  %v2802 = vadd.f32 %v1066, %v2741
  %v2803 = vadd.f32 %v1067, %v2743
  %v2804 = vadd.f32 %v1068, %v2746
  %v2805 = vadd.f32 %v1069, %v2748
  %v2806 = vadd.f32 %v1070, %v2751
  %v2807 = vadd.f32 %v1071, %v2753
  %v2808 = vadd.f32 %v1072, %v2756
  %v2809 = vadd.f32 %v1073, %v2758
  %v2810 = vadd.f32 %v1074, %v2761
  %v2811 = vadd.f32 %v1075, %v2763
  %v2812 = vadd.f32 %v1076, %v2766
  %v2813 = vadd.f32 %v1077, %v2768
  %v2814 = vadd.f32 %v1078, %v2771
  %v2815 = vadd.f32 %v1079, %v2773
  %v2816 = vadd.f32 %v1080, %v2776
  %v2817 = vadd.f32 %v1081, %v2778
  %v2818 = vadd.f32 %v1082, %v2781
  %v2819 = vadd.f32 %v1083, %v2783
  %v2820 = vadd.f32 %v1084, %v2786
  %v2821 = vadd.f32 %v1085, %v2788
  %v2822 = vpack.c.bf16 %v2791, %v2790
  %v2823 = vpack.c.bf16 %v2793, %v2792
  %v2824 = vpack.c.bf16 %v2795, %v2794
  %v2825 = vpack.c.bf16 %v2797, %v2796
  %v2826 = vpack.c.bf16 %v2799, %v2798
  %v2827 = vpack.c.bf16 %v2801, %v2800
  %v2828 = vpack.c.bf16 %v2803, %v2802
  %v2829 = vpack.c.bf16 %v2805, %v2804
  %v2830 = vpack.c.bf16 %v2807, %v2806
  %v2831 = vpack.c.bf16 %v2809, %v2808
  %v2832 = vpack.c.bf16 %v2811, %v2810
  %v2833 = vpack.c.bf16 %v2813, %v2812
  %v2834 = vpack.c.bf16 %v2815, %v2814
  %v2835 = vpack.c.bf16 %v2817, %v2816
  %v2836 = vpack.c.bf16 %v2819, %v2818
  %v2837 = vpack.c.bf16 %v2821, %v2820
  %v2838 = vld [vmem:[%s53] sm:$0xf]
  %v2839 = vld [vmem:[%s53 + $0x4] sm:$0xf]
  %v2840 = vld [vmem:[%s53 + $0x8] sm:$0xf]
  %v2841 = vld [vmem:[%s53 + $0xc] sm:$0xf]
  %v2842 = vld [vmem:[%s55] sm:$0x1]
  %v2844 = vperm.slane %v2842, 0
  %v2850 = vunpack.c.l.b16 %v2838
  %v2851 = vunpack.c.l.b16 %v2839
  %v2852 = vunpack.c.l.b16 %v2840
  %v2853 = vunpack.c.l.b16 %v2841
  %v2854 = vpack.c.b16 %v2851, %v2850
  %v2855 = vpack.c.b16 %v2853, %v2852
  %v2859 = vsel %vm252, %v2822, 0
  %v2862 = vsel %vm252, %v2823, 0
  %v2865 = vsel %vm252, %v2824, 0
  %v2868 = vsel %vm252, %v2825, 0
  %v2871 = vsel %vm252, %v2826, 0
  %v2874 = vsel %vm252, %v2827, 0
  %v2877 = vsel %vm252, %v2828, 0
  %v2880 = vsel %vm252, %v2829, 0
  %v2883 = vsel %vm252, %v2830, 0
  %v2886 = vsel %vm252, %v2831, 0
  %v2889 = vsel %vm252, %v2832, 0
  %v2892 = vsel %vm252, %v2833, 0
  %v2895 = vsel %vm252, %v2834, 0
  %v2898 = vsel %vm252, %v2835, 0
  %v2901 = vsel %vm252, %v2836, 0
  %v2904 = vsel %vm252, %v2837, 0
  %2906 = vmatpush.bf16.msra.mxu0 0
  %2907 = vmatpush.bf16.msra.mxu0 0
  %2908 = vmatpush.bf16.msra.mxu0 0
  %2909 = vmatpush.bf16.msra.mxu0 0
  %2910 = vmatpush.bf16.msra.mxu0 0
  %2911 = vmatpush.bf16.msra.mxu0 0
  %2912 = vmatpush.bf16.msra.mxu0 %v2855
  %2913 = vmatpush.bf16.msra.mxu0 %v2854
  %2914 = vmatmul.bf16.gmra.mxu0 %v2859
  %v2915 = vpop.f32.mrf.mxu0
  %v2916 = vadd.f32 %v2844, %v2915
  %v2917 = vpop.f32.mrf.mxu0
  %v2918 = vadd.f32 %v2844, %v2917
  %2919 = vmatmul.bf16.gmra.mxu0 %v2862
  %v2920 = vpop.f32.mrf.mxu0
  %v2921 = vadd.f32 %v2844, %v2920
  %v2922 = vpop.f32.mrf.mxu0
  %v2923 = vadd.f32 %v2844, %v2922
  %2924 = vmatmul.bf16.gmra.mxu0 %v2865
  %v2925 = vpop.f32.mrf.mxu0
  %v2926 = vadd.f32 %v2844, %v2925
  %v2927 = vpop.f32.mrf.mxu0
  %v2928 = vadd.f32 %v2844, %v2927
  %2929 = vmatmul.bf16.gmra.mxu0 %v2868
  %v2930 = vpop.f32.mrf.mxu0
  %v2931 = vadd.f32 %v2844, %v2930
  %v2932 = vpop.f32.mrf.mxu0
  %v2933 = vadd.f32 %v2844, %v2932
  %2934 = vmatmul.bf16.gmra.mxu0 %v2871
  %v2935 = vpop.f32.mrf.mxu0
  %v2936 = vadd.f32 %v2844, %v2935
  %v2937 = vpop.f32.mrf.mxu0
  %v2938 = vadd.f32 %v2844, %v2937
  %2939 = vmatmul.bf16.gmra.mxu0 %v2874
  %v2940 = vpop.f32.mrf.mxu0
  %v2941 = vadd.f32 %v2844, %v2940
  %v2942 = vpop.f32.mrf.mxu0
  %v2943 = vadd.f32 %v2844, %v2942
  %2944 = vmatmul.bf16.gmra.mxu0 %v2877
  %v2945 = vpop.f32.mrf.mxu0
  %v2946 = vadd.f32 %v2844, %v2945
  %v2947 = vpop.f32.mrf.mxu0
  %v2948 = vadd.f32 %v2844, %v2947
  %2949 = vmatmul.bf16.gmra.mxu0 %v2880
  %v2950 = vpop.f32.mrf.mxu0
  %v2951 = vadd.f32 %v2844, %v2950
  %v2952 = vpop.f32.mrf.mxu0
  %v2953 = vadd.f32 %v2844, %v2952
  %2954 = vmatmul.bf16.gmra.mxu0 %v2883
  %v2955 = vpop.f32.mrf.mxu0
  %v2956 = vadd.f32 %v2844, %v2955
  %v2957 = vpop.f32.mrf.mxu0
  %v2958 = vadd.f32 %v2844, %v2957
  %2959 = vmatmul.bf16.gmra.mxu0 %v2886
  %v2960 = vpop.f32.mrf.mxu0
  %v2961 = vadd.f32 %v2844, %v2960
  %v2962 = vpop.f32.mrf.mxu0
  %v2963 = vadd.f32 %v2844, %v2962
  %2964 = vmatmul.bf16.gmra.mxu0 %v2889
  %v2965 = vpop.f32.mrf.mxu0
  %v2966 = vadd.f32 %v2844, %v2965
  %v2967 = vpop.f32.mrf.mxu0
  %v2968 = vadd.f32 %v2844, %v2967
  %2969 = vmatmul.bf16.gmra.mxu0 %v2892
  %v2970 = vpop.f32.mrf.mxu0
  %v2971 = vadd.f32 %v2844, %v2970
  %v2972 = vpop.f32.mrf.mxu0
  %v2973 = vadd.f32 %v2844, %v2972
  %2974 = vmatmul.bf16.gmra.mxu0 %v2895
  %v2975 = vpop.f32.mrf.mxu0
  %v2976 = vadd.f32 %v2844, %v2975
  %v2977 = vpop.f32.mrf.mxu0
  %v2978 = vadd.f32 %v2844, %v2977
  %2979 = vmatmul.bf16.gmra.mxu0 %v2898
  %v2980 = vpop.f32.mrf.mxu0
  %v2981 = vadd.f32 %v2844, %v2980
  %v2982 = vpop.f32.mrf.mxu0
  %v2983 = vadd.f32 %v2844, %v2982
  %2984 = vmatmul.bf16.gmra.mxu0 %v2901
  %v2985 = vpop.f32.mrf.mxu0
  %v2986 = vadd.f32 %v2844, %v2985
  %v2987 = vpop.f32.mrf.mxu0
  %v2988 = vadd.f32 %v2844, %v2987
  %2989 = vmatmul.bf16.gmra.mxu0 %v2904
  %v2990 = vpop.f32.mrf.mxu0
  %v2991 = vadd.f32 %v2844, %v2990
  %v2992 = vpop.f32.mrf.mxu0
  %v2993 = vadd.f32 %v2844, %v2992
  %2994 = vdwg.mxu0
  %v2995 = vmax.f32 %v2916, 0.0
  %v2996 = vmax.f32 %v2918, 0.0
  %v2997 = vmax.f32 %v2921, 0.0
  %v2998 = vmax.f32 %v2923, 0.0
  %v2999 = vmax.f32 %v2926, 0.0
  %v3000 = vmax.f32 %v2928, 0.0
  %v3001 = vmax.f32 %v2931, 0.0
  %v3002 = vmax.f32 %v2933, 0.0
  %v3003 = vmax.f32 %v2936, 0.0
  %v3004 = vmax.f32 %v2938, 0.0
  %v3005 = vmax.f32 %v2941, 0.0
  %v3006 = vmax.f32 %v2943, 0.0
  %v3007 = vmax.f32 %v2946, 0.0
  %v3008 = vmax.f32 %v2948, 0.0
  %v3009 = vmax.f32 %v2951, 0.0
  %v3010 = vmax.f32 %v2953, 0.0
  %v3011 = vmax.f32 %v2956, 0.0
  %v3012 = vmax.f32 %v2958, 0.0
  %v3013 = vmax.f32 %v2961, 0.0
  %v3014 = vmax.f32 %v2963, 0.0
  %v3015 = vmax.f32 %v2966, 0.0
  %v3016 = vmax.f32 %v2968, 0.0
  %v3017 = vmax.f32 %v2971, 0.0
  %v3018 = vmax.f32 %v2973, 0.0
  %v3019 = vmax.f32 %v2976, 0.0
  %v3020 = vmax.f32 %v2978, 0.0
  %v3021 = vmax.f32 %v2981, 0.0
  %v3022 = vmax.f32 %v2983, 0.0
  %v3023 = vmax.f32 %v2986, 0.0
  %v3024 = vmax.f32 %v2988, 0.0
  %v3025 = vmax.f32 %v2991, 0.0
  %v3026 = vmax.f32 %v2993, 0.0
  %v3027 = vpack.c.bf16 %v2996, %v2995
  %v3028 = vpack.c.bf16 %v2998, %v2997
  %v3029 = vpack.c.bf16 %v3000, %v2999
  %v3030 = vpack.c.bf16 %v3002, %v3001
  %v3031 = vpack.c.bf16 %v3004, %v3003
  %v3032 = vpack.c.bf16 %v3006, %v3005
  %v3033 = vpack.c.bf16 %v3008, %v3007
  %v3034 = vpack.c.bf16 %v3010, %v3009
  %v3035 = vpack.c.bf16 %v3012, %v3011
  %v3036 = vpack.c.bf16 %v3014, %v3013
  %v3037 = vpack.c.bf16 %v3016, %v3015
  %v3038 = vpack.c.bf16 %v3018, %v3017
  %v3039 = vpack.c.bf16 %v3020, %v3019
  %v3040 = vpack.c.bf16 %v3022, %v3021
  %v3041 = vpack.c.bf16 %v3024, %v3023
  %v3042 = vpack.c.bf16 %v3026, %v3025
  %v3043 = vld [vmem:[%s57] sm:$0xf]
  %v3044 = vld [vmem:[%s57 + $0x4] sm:$0xf]
  %v3045 = vld [vmem:[%s57 + $0x8] sm:$0xf]
  %v3046 = vld [vmem:[%s57 + $0xc] sm:$0xf]
  %v3047 = vld [vmem:[%s57 + $0x10] sm:$0xf]
  %v3048 = vld [vmem:[%s57 + $0x14] sm:$0xf]
  %v3049 = vld [vmem:[%s57 + $0x18] sm:$0xf]
  %v3050 = vld [vmem:[%s57 + $0x1c] sm:$0xf]
  %v3051 = vld [vmem:[%s59] sm:$0x1]
  %v3053 = vperm.slane %v3051, 0
  %v3063 = vunpack.c.l.b16 %v3043
  %v3064 = vunpack.c.l.b16 %v3044
  %v3065 = vunpack.c.l.b16 %v3045
  %v3066 = vunpack.c.l.b16 %v3046
  %v3067 = vunpack.c.l.b16 %v3047
  %v3068 = vunpack.c.l.b16 %v3048
  %v3069 = vunpack.c.l.b16 %v3049
  %v3070 = vunpack.c.l.b16 %v3050
  %v3071 = vpack.c.b16 %v3064, %v3063
  %v3072 = vpack.c.b16 %v3066, %v3065
  %v3073 = vpack.c.b16 %v3068, %v3067
  %v3074 = vpack.c.b16 %v3070, %v3069
  %v3080 = vsel %vm474, %v3027, 0
  %v3083 = vsel %vm474, %v3028, 0
  %v3086 = vsel %vm474, %v3029, 0
  %v3089 = vsel %vm474, %v3030, 0
  %v3092 = vsel %vm474, %v3031, 0
  %v3095 = vsel %vm474, %v3032, 0
  %v3098 = vsel %vm474, %v3033, 0
  %v3101 = vsel %vm474, %v3034, 0
  %v3104 = vsel %vm474, %v3035, 0
  %v3107 = vsel %vm474, %v3036, 0
  %v3110 = vsel %vm474, %v3037, 0
  %v3113 = vsel %vm474, %v3038, 0
  %v3116 = vsel %vm474, %v3039, 0
  %v3119 = vsel %vm474, %v3040, 0
  %v3122 = vsel %vm474, %v3041, 0
  %v3125 = vsel %vm474, %v3042, 0
  %3127 = vmatpush.bf16.msra.mxu0 0
  %3128 = vmatpush.bf16.msra.mxu0 0
  %3129 = vmatpush.bf16.msra.mxu0 0
  %3130 = vmatpush.bf16.msra.mxu0 0
  %3131 = vmatpush.bf16.msra.mxu0 %v3074
  %3132 = vmatpush.bf16.msra.mxu0 %v3073
  %3133 = vmatpush.bf16.msra.mxu0 %v3072
  %3134 = vmatpush.bf16.msra.mxu0 %v3071
  %3135 = vmatmul.bf16.gmra.mxu0 %v3080
  %v3136 = vpop.f32.mrf.mxu0
  %v3137 = vadd.f32 %v3053, %v3136
  %v3138 = vpop.f32.mrf.mxu0
  %v3139 = vadd.f32 %v3053, %v3138
  %3140 = vmatmul.bf16.gmra.mxu0 %v3083
  %v3141 = vpop.f32.mrf.mxu0
  %v3142 = vadd.f32 %v3053, %v3141
  %v3143 = vpop.f32.mrf.mxu0
  %v3144 = vadd.f32 %v3053, %v3143
  %3145 = vmatmul.bf16.gmra.mxu0 %v3086
  %v3146 = vpop.f32.mrf.mxu0
  %v3147 = vadd.f32 %v3053, %v3146
  %v3148 = vpop.f32.mrf.mxu0
  %v3149 = vadd.f32 %v3053, %v3148
  %3150 = vmatmul.bf16.gmra.mxu0 %v3089
  %v3151 = vpop.f32.mrf.mxu0
  %v3152 = vadd.f32 %v3053, %v3151
  %v3153 = vpop.f32.mrf.mxu0
  %v3154 = vadd.f32 %v3053, %v3153
  %3155 = vmatmul.bf16.gmra.mxu0 %v3092
  %v3156 = vpop.f32.mrf.mxu0
  %v3157 = vadd.f32 %v3053, %v3156
  %v3158 = vpop.f32.mrf.mxu0
  %v3159 = vadd.f32 %v3053, %v3158
  %3160 = vmatmul.bf16.gmra.mxu0 %v3095
  %v3161 = vpop.f32.mrf.mxu0
  %v3162 = vadd.f32 %v3053, %v3161
  %v3163 = vpop.f32.mrf.mxu0
  %v3164 = vadd.f32 %v3053, %v3163
  %3165 = vmatmul.bf16.gmra.mxu0 %v3098
  %v3166 = vpop.f32.mrf.mxu0
  %v3167 = vadd.f32 %v3053, %v3166
  %v3168 = vpop.f32.mrf.mxu0
  %v3169 = vadd.f32 %v3053, %v3168
  %3170 = vmatmul.bf16.gmra.mxu0 %v3101
  %v3171 = vpop.f32.mrf.mxu0
  %v3172 = vadd.f32 %v3053, %v3171
  %v3173 = vpop.f32.mrf.mxu0
  %v3174 = vadd.f32 %v3053, %v3173
  %3175 = vmatmul.bf16.gmra.mxu0 %v3104
  %v3176 = vpop.f32.mrf.mxu0
  %v3177 = vadd.f32 %v3053, %v3176
  %v3178 = vpop.f32.mrf.mxu0
  %v3179 = vadd.f32 %v3053, %v3178
  %3180 = vmatmul.bf16.gmra.mxu0 %v3107
  %v3181 = vpop.f32.mrf.mxu0
  %v3182 = vadd.f32 %v3053, %v3181
  %v3183 = vpop.f32.mrf.mxu0
  %v3184 = vadd.f32 %v3053, %v3183
  %3185 = vmatmul.bf16.gmra.mxu0 %v3110
  %v3186 = vpop.f32.mrf.mxu0
  %v3187 = vadd.f32 %v3053, %v3186
  %v3188 = vpop.f32.mrf.mxu0
  %v3189 = vadd.f32 %v3053, %v3188
  %3190 = vmatmul.bf16.gmra.mxu0 %v3113
  %v3191 = vpop.f32.mrf.mxu0
  %v3192 = vadd.f32 %v3053, %v3191
  %v3193 = vpop.f32.mrf.mxu0
  %v3194 = vadd.f32 %v3053, %v3193
  %3195 = vmatmul.bf16.gmra.mxu0 %v3116
  %v3196 = vpop.f32.mrf.mxu0
  %v3197 = vadd.f32 %v3053, %v3196
  %v3198 = vpop.f32.mrf.mxu0
  %v3199 = vadd.f32 %v3053, %v3198
  %3200 = vmatmul.bf16.gmra.mxu0 %v3119
  %v3201 = vpop.f32.mrf.mxu0
  %v3202 = vadd.f32 %v3053, %v3201
  %v3203 = vpop.f32.mrf.mxu0
  %v3204 = vadd.f32 %v3053, %v3203
  %3205 = vmatmul.bf16.gmra.mxu0 %v3122
  %v3206 = vpop.f32.mrf.mxu0
  %v3207 = vadd.f32 %v3053, %v3206
  %v3208 = vpop.f32.mrf.mxu0
  %v3209 = vadd.f32 %v3053, %v3208
  %3210 = vmatmul.bf16.gmra.mxu0 %v3125
  %v3211 = vpop.f32.mrf.mxu0
  %v3212 = vadd.f32 %v3053, %v3211
  %v3213 = vpop.f32.mrf.mxu0
  %v3214 = vadd.f32 %v3053, %v3213
  %3215 = vdwg.mxu0
  %v3216 = vmax.f32 %v3137, 0.0
  %v3217 = vmax.f32 %v3139, 0.0
  %v3218 = vmax.f32 %v3142, 0.0
  %v3219 = vmax.f32 %v3144, 0.0
  %v3220 = vmax.f32 %v3147, 0.0
  %v3221 = vmax.f32 %v3149, 0.0
  %v3222 = vmax.f32 %v3152, 0.0
  %v3223 = vmax.f32 %v3154, 0.0
  %v3224 = vmax.f32 %v3157, 0.0
  %v3225 = vmax.f32 %v3159, 0.0
  %v3226 = vmax.f32 %v3162, 0.0
  %v3227 = vmax.f32 %v3164, 0.0
  %v3228 = vmax.f32 %v3167, 0.0
  %v3229 = vmax.f32 %v3169, 0.0
  %v3230 = vmax.f32 %v3172, 0.0
  %v3231 = vmax.f32 %v3174, 0.0
  %v3232 = vmax.f32 %v3177, 0.0
  %v3233 = vmax.f32 %v3179, 0.0
  %v3234 = vmax.f32 %v3182, 0.0
  %v3235 = vmax.f32 %v3184, 0.0
  %v3236 = vmax.f32 %v3187, 0.0
  %v3237 = vmax.f32 %v3189, 0.0
  %v3238 = vmax.f32 %v3192, 0.0
  %v3239 = vmax.f32 %v3194, 0.0
  %v3240 = vmax.f32 %v3197, 0.0
  %v3241 = vmax.f32 %v3199, 0.0
  %v3242 = vmax.f32 %v3202, 0.0
  %v3243 = vmax.f32 %v3204, 0.0
  %v3244 = vmax.f32 %v3207, 0.0
  %v3245 = vmax.f32 %v3209, 0.0
  %v3246 = vmax.f32 %v3212, 0.0
  %v3247 = vmax.f32 %v3214, 0.0
  %v3248 = vpack.c.bf16 %v3217, %v3216
  %v3249 = vpack.c.bf16 %v3219, %v3218
  %v3250 = vpack.c.bf16 %v3221, %v3220
  %v3251 = vpack.c.bf16 %v3223, %v3222
  %v3252 = vpack.c.bf16 %v3225, %v3224
  %v3253 = vpack.c.bf16 %v3227, %v3226
  %v3254 = vpack.c.bf16 %v3229, %v3228
  %v3255 = vpack.c.bf16 %v3231, %v3230
  %v3256 = vpack.c.bf16 %v3233, %v3232
  %v3257 = vpack.c.bf16 %v3235, %v3234
  %v3258 = vpack.c.bf16 %v3237, %v3236
  %v3259 = vpack.c.bf16 %v3239, %v3238
  %v3260 = vpack.c.bf16 %v3241, %v3240
  %v3261 = vpack.c.bf16 %v3243, %v3242
  %v3262 = vpack.c.bf16 %v3245, %v3244
  %v3263 = vpack.c.bf16 %v3247, %v3246
  %v3264 = vld [vmem:[%s61] sm:$0xf]
  %v3265 = vld [vmem:[%s61 + $0x4] sm:$0xf]
  %v3266 = vld [vmem:[%s61 + $0x8] sm:$0xf]
  %v3267 = vld [vmem:[%s61 + $0xc] sm:$0xf]
  %v3268 = vld [vmem:[%s61 + $0x10] sm:$0xf]
  %v3269 = vld [vmem:[%s61 + $0x14] sm:$0xf]
  %v3270 = vld [vmem:[%s61 + $0x18] sm:$0xf]
  %v3271 = vld [vmem:[%s61 + $0x1c] sm:$0xf]
  %v3272 = vld [vmem:[%s63] sm:$0x1]
  %v3274 = vperm.slane %v3272, 0
  %v3284 = vunpack.c.l.b16 %v3264
  %v3285 = vunpack.c.l.b16 %v3265
  %v3286 = vunpack.c.l.b16 %v3266
  %v3287 = vunpack.c.l.b16 %v3267
  %v3288 = vunpack.c.l.b16 %v3268
  %v3289 = vunpack.c.l.b16 %v3269
  %v3290 = vunpack.c.l.b16 %v3270
  %v3291 = vunpack.c.l.b16 %v3271
  %v3292 = vpack.c.b16 %v3285, %v3284
  %v3293 = vpack.c.b16 %v3287, %v3286
  %v3294 = vpack.c.b16 %v3289, %v3288
  %v3295 = vpack.c.b16 %v3291, %v3290
  %v3301 = vsel %vm474, %v3248, 0
  %v3304 = vsel %vm474, %v3249, 0
  %v3307 = vsel %vm474, %v3250, 0
  %v3310 = vsel %vm474, %v3251, 0
  %v3313 = vsel %vm474, %v3252, 0
  %v3316 = vsel %vm474, %v3253, 0
  %v3319 = vsel %vm474, %v3254, 0
  %v3322 = vsel %vm474, %v3255, 0
  %v3325 = vsel %vm474, %v3256, 0
  %v3328 = vsel %vm474, %v3257, 0
  %v3331 = vsel %vm474, %v3258, 0
  %v3334 = vsel %vm474, %v3259, 0
  %v3337 = vsel %vm474, %v3260, 0
  %v3340 = vsel %vm474, %v3261, 0
  %v3343 = vsel %vm474, %v3262, 0
  %v3346 = vsel %vm474, %v3263, 0
  %3348 = vmatpush.bf16.msra.mxu0 0
  %3349 = vmatpush.bf16.msra.mxu0 0
  %3350 = vmatpush.bf16.msra.mxu0 0
  %3351 = vmatpush.bf16.msra.mxu0 0
  %3352 = vmatpush.bf16.msra.mxu0 %v3295
  %3353 = vmatpush.bf16.msra.mxu0 %v3294
  %3354 = vmatpush.bf16.msra.mxu0 %v3293
  %3355 = vmatpush.bf16.msra.mxu0 %v3292
  %3356 = vmatmul.bf16.gmra.mxu0 %v3301
  %v3357 = vpop.f32.mrf.mxu0
  %v3358 = vadd.f32 %v3274, %v3357
  %v3359 = vpop.f32.mrf.mxu0
  %v3360 = vadd.f32 %v3274, %v3359
  %3361 = vmatmul.bf16.gmra.mxu0 %v3304
  %v3362 = vpop.f32.mrf.mxu0
  %v3363 = vadd.f32 %v3274, %v3362
  %v3364 = vpop.f32.mrf.mxu0
  %v3365 = vadd.f32 %v3274, %v3364
  %3366 = vmatmul.bf16.gmra.mxu0 %v3307
  %v3367 = vpop.f32.mrf.mxu0
  %v3368 = vadd.f32 %v3274, %v3367
  %v3369 = vpop.f32.mrf.mxu0
  %v3370 = vadd.f32 %v3274, %v3369
  %3371 = vmatmul.bf16.gmra.mxu0 %v3310
  %v3372 = vpop.f32.mrf.mxu0
  %v3373 = vadd.f32 %v3274, %v3372
  %v3374 = vpop.f32.mrf.mxu0
  %v3375 = vadd.f32 %v3274, %v3374
  %3376 = vmatmul.bf16.gmra.mxu0 %v3313
  %v3377 = vpop.f32.mrf.mxu0
  %v3378 = vadd.f32 %v3274, %v3377
  %v3379 = vpop.f32.mrf.mxu0
  %v3380 = vadd.f32 %v3274, %v3379
  %3381 = vmatmul.bf16.gmra.mxu0 %v3316
  %v3382 = vpop.f32.mrf.mxu0
  %v3383 = vadd.f32 %v3274, %v3382
  %v3384 = vpop.f32.mrf.mxu0
  %v3385 = vadd.f32 %v3274, %v3384
  %3386 = vmatmul.bf16.gmra.mxu0 %v3319
  %v3387 = vpop.f32.mrf.mxu0
  %v3388 = vadd.f32 %v3274, %v3387
  %v3389 = vpop.f32.mrf.mxu0
  %v3390 = vadd.f32 %v3274, %v3389
  %3391 = vmatmul.bf16.gmra.mxu0 %v3322
  %v3392 = vpop.f32.mrf.mxu0
  %v3393 = vadd.f32 %v3274, %v3392
  %v3394 = vpop.f32.mrf.mxu0
  %v3395 = vadd.f32 %v3274, %v3394
  %3396 = vmatmul.bf16.gmra.mxu0 %v3325
  %v3397 = vpop.f32.mrf.mxu0
  %v3398 = vadd.f32 %v3274, %v3397
  %v3399 = vpop.f32.mrf.mxu0
  %v3400 = vadd.f32 %v3274, %v3399
  %3401 = vmatmul.bf16.gmra.mxu0 %v3328
  %v3402 = vpop.f32.mrf.mxu0
  %v3403 = vadd.f32 %v3274, %v3402
  %v3404 = vpop.f32.mrf.mxu0
  %v3405 = vadd.f32 %v3274, %v3404
  %3406 = vmatmul.bf16.gmra.mxu0 %v3331
  %v3407 = vpop.f32.mrf.mxu0
  %v3408 = vadd.f32 %v3274, %v3407
  %v3409 = vpop.f32.mrf.mxu0
  %v3410 = vadd.f32 %v3274, %v3409
  %3411 = vmatmul.bf16.gmra.mxu0 %v3334
  %v3412 = vpop.f32.mrf.mxu0
  %v3413 = vadd.f32 %v3274, %v3412
  %v3414 = vpop.f32.mrf.mxu0
  %v3415 = vadd.f32 %v3274, %v3414
  %3416 = vmatmul.bf16.gmra.mxu0 %v3337
  %v3417 = vpop.f32.mrf.mxu0
  %v3418 = vadd.f32 %v3274, %v3417
  %v3419 = vpop.f32.mrf.mxu0
  %v3420 = vadd.f32 %v3274, %v3419
  %3421 = vmatmul.bf16.gmra.mxu0 %v3340
  %v3422 = vpop.f32.mrf.mxu0
  %v3423 = vadd.f32 %v3274, %v3422
  %v3424 = vpop.f32.mrf.mxu0
  %v3425 = vadd.f32 %v3274, %v3424
  %3426 = vmatmul.bf16.gmra.mxu0 %v3343
  %v3427 = vpop.f32.mrf.mxu0
  %v3428 = vadd.f32 %v3274, %v3427
  %v3429 = vpop.f32.mrf.mxu0
  %v3430 = vadd.f32 %v3274, %v3429
  %3431 = vmatmul.bf16.gmra.mxu0 %v3346
  %v3432 = vpop.f32.mrf.mxu0
  %v3433 = vadd.f32 %v3274, %v3432
  %v3434 = vpop.f32.mrf.mxu0
  %v3435 = vadd.f32 %v3274, %v3434
  %3436 = vdwg.mxu0
  %v3437 = vmax.f32 %v3358, 0.0
  %v3438 = vmax.f32 %v3360, 0.0
  %v3439 = vmax.f32 %v3363, 0.0
  %v3440 = vmax.f32 %v3365, 0.0
  %v3441 = vmax.f32 %v3368, 0.0
  %v3442 = vmax.f32 %v3370, 0.0
  %v3443 = vmax.f32 %v3373, 0.0
  %v3444 = vmax.f32 %v3375, 0.0
  %v3445 = vmax.f32 %v3378, 0.0
  %v3446 = vmax.f32 %v3380, 0.0
  %v3447 = vmax.f32 %v3383, 0.0
  %v3448 = vmax.f32 %v3385, 0.0
  %v3449 = vmax.f32 %v3388, 0.0
  %v3450 = vmax.f32 %v3390, 0.0
  %v3451 = vmax.f32 %v3393, 0.0
  %v3452 = vmax.f32 %v3395, 0.0
  %v3453 = vmax.f32 %v3398, 0.0
  %v3454 = vmax.f32 %v3400, 0.0
  %v3455 = vmax.f32 %v3403, 0.0
  %v3456 = vmax.f32 %v3405, 0.0
  %v3457 = vmax.f32 %v3408, 0.0
  %v3458 = vmax.f32 %v3410, 0.0
  %v3459 = vmax.f32 %v3413, 0.0
  %v3460 = vmax.f32 %v3415, 0.0
  %v3461 = vmax.f32 %v3418, 0.0
  %v3462 = vmax.f32 %v3420, 0.0
  %v3463 = vmax.f32 %v3423, 0.0
  %v3464 = vmax.f32 %v3425, 0.0
  %v3465 = vmax.f32 %v3428, 0.0
  %v3466 = vmax.f32 %v3430, 0.0
  %v3467 = vmax.f32 %v3433, 0.0
  %v3468 = vmax.f32 %v3435, 0.0
  %v3469 = vpack.c.bf16 %v3438, %v3437
  %v3470 = vpack.c.bf16 %v3440, %v3439
  %v3471 = vpack.c.bf16 %v3442, %v3441
  %v3472 = vpack.c.bf16 %v3444, %v3443
  %v3473 = vpack.c.bf16 %v3446, %v3445
  %v3474 = vpack.c.bf16 %v3448, %v3447
  %v3475 = vpack.c.bf16 %v3450, %v3449
  %v3476 = vpack.c.bf16 %v3452, %v3451
  %v3477 = vpack.c.bf16 %v3454, %v3453
  %v3478 = vpack.c.bf16 %v3456, %v3455
  %v3479 = vpack.c.bf16 %v3458, %v3457
  %v3480 = vpack.c.bf16 %v3460, %v3459
  %v3481 = vpack.c.bf16 %v3462, %v3461
  %v3482 = vpack.c.bf16 %v3464, %v3463
  %v3483 = vpack.c.bf16 %v3466, %v3465
  %v3484 = vpack.c.bf16 %v3468, %v3467
  %v3485 = vld [vmem:[%s65] sm:$0xf]
  %v3486 = vld [vmem:[%s65 + $0x4] sm:$0xf]
  %v3487 = vld [vmem:[%s65 + $0x8] sm:$0xf]
  %v3488 = vld [vmem:[%s65 + $0xc] sm:$0xf]
  %v3489 = vld [vmem:[%s65 + $0x10] sm:$0xf]
  %v3490 = vld [vmem:[%s65 + $0x14] sm:$0xf]
  %v3491 = vld [vmem:[%s65 + $0x18] sm:$0xf]
  %v3492 = vld [vmem:[%s65 + $0x1c] sm:$0xf]
  %v3493 = vld [vmem:[%s67] sm:$0x1]
  %v3495 = vperm.slane %v3493, 0
  %v3505 = vunpack.c.l.b16 %v3485
  %v3506 = vunpack.c.l.b16 %v3486
  %v3507 = vunpack.c.l.b16 %v3487
  %v3508 = vunpack.c.l.b16 %v3488
  %v3509 = vunpack.c.l.b16 %v3489
  %v3510 = vunpack.c.l.b16 %v3490
  %v3511 = vunpack.c.l.b16 %v3491
  %v3512 = vunpack.c.l.b16 %v3492
  %v3513 = vpack.c.b16 %v3506, %v3505
  %v3514 = vpack.c.b16 %v3508, %v3507
  %v3515 = vpack.c.b16 %v3510, %v3509
  %v3516 = vpack.c.b16 %v3512, %v3511
  %v3522 = vsel %vm474, %v3469, 0
  %v3525 = vsel %vm474, %v3470, 0
  %v3528 = vsel %vm474, %v3471, 0
  %v3531 = vsel %vm474, %v3472, 0
  %v3534 = vsel %vm474, %v3473, 0
  %v3537 = vsel %vm474, %v3474, 0
  %v3540 = vsel %vm474, %v3475, 0
  %v3543 = vsel %vm474, %v3476, 0
  %v3546 = vsel %vm474, %v3477, 0
  %v3549 = vsel %vm474, %v3478, 0
  %v3552 = vsel %vm474, %v3479, 0
  %v3555 = vsel %vm474, %v3480, 0
  %v3558 = vsel %vm474, %v3481, 0
  %v3561 = vsel %vm474, %v3482, 0
  %v3564 = vsel %vm474, %v3483, 0
  %v3567 = vsel %vm474, %v3484, 0
  %3569 = vmatpush.bf16.msra.mxu0 0
  %3570 = vmatpush.bf16.msra.mxu0 0
  %3571 = vmatpush.bf16.msra.mxu0 0
  %3572 = vmatpush.bf16.msra.mxu0 0
  %3573 = vmatpush.bf16.msra.mxu0 %v3516
  %3574 = vmatpush.bf16.msra.mxu0 %v3515
  %3575 = vmatpush.bf16.msra.mxu0 %v3514
  %3576 = vmatpush.bf16.msra.mxu0 %v3513
  %3577 = vmatmul.bf16.gmra.mxu0 %v3522
  %v3578 = vpop.f32.mrf.mxu0
  %v3579 = vadd.f32 %v3495, %v3578
  %v3580 = vpop.f32.mrf.mxu0
  %v3581 = vadd.f32 %v3495, %v3580
  %3582 = vmatmul.bf16.gmra.mxu0 %v3525
  %v3583 = vpop.f32.mrf.mxu0
  %v3584 = vadd.f32 %v3495, %v3583
  %v3585 = vpop.f32.mrf.mxu0
  %v3586 = vadd.f32 %v3495, %v3585
  %3587 = vmatmul.bf16.gmra.mxu0 %v3528
  %v3588 = vpop.f32.mrf.mxu0
  %v3589 = vadd.f32 %v3495, %v3588
  %v3590 = vpop.f32.mrf.mxu0
  %v3591 = vadd.f32 %v3495, %v3590
  %3592 = vmatmul.bf16.gmra.mxu0 %v3531
  %v3593 = vpop.f32.mrf.mxu0
  %v3594 = vadd.f32 %v3495, %v3593
  %v3595 = vpop.f32.mrf.mxu0
  %v3596 = vadd.f32 %v3495, %v3595
  %3597 = vmatmul.bf16.gmra.mxu0 %v3534
  %v3598 = vpop.f32.mrf.mxu0
  %v3599 = vadd.f32 %v3495, %v3598
  %v3600 = vpop.f32.mrf.mxu0
  %v3601 = vadd.f32 %v3495, %v3600
  %3602 = vmatmul.bf16.gmra.mxu0 %v3537
  %v3603 = vpop.f32.mrf.mxu0
  %v3604 = vadd.f32 %v3495, %v3603
  %v3605 = vpop.f32.mrf.mxu0
  %v3606 = vadd.f32 %v3495, %v3605
  %3607 = vmatmul.bf16.gmra.mxu0 %v3540
  %v3608 = vpop.f32.mrf.mxu0
  %v3609 = vadd.f32 %v3495, %v3608
  %v3610 = vpop.f32.mrf.mxu0
  %v3611 = vadd.f32 %v3495, %v3610
  %3612 = vmatmul.bf16.gmra.mxu0 %v3543
  %v3613 = vpop.f32.mrf.mxu0
  %v3614 = vadd.f32 %v3495, %v3613
  %v3615 = vpop.f32.mrf.mxu0
  %v3616 = vadd.f32 %v3495, %v3615
  %3617 = vmatmul.bf16.gmra.mxu0 %v3546
  %v3618 = vpop.f32.mrf.mxu0
  %v3619 = vadd.f32 %v3495, %v3618
  %v3620 = vpop.f32.mrf.mxu0
  %v3621 = vadd.f32 %v3495, %v3620
  %3622 = vmatmul.bf16.gmra.mxu0 %v3549
  %v3623 = vpop.f32.mrf.mxu0
  %v3624 = vadd.f32 %v3495, %v3623
  %v3625 = vpop.f32.mrf.mxu0
  %v3626 = vadd.f32 %v3495, %v3625
  %3627 = vmatmul.bf16.gmra.mxu0 %v3552
  %v3628 = vpop.f32.mrf.mxu0
  %v3629 = vadd.f32 %v3495, %v3628
  %v3630 = vpop.f32.mrf.mxu0
  %v3631 = vadd.f32 %v3495, %v3630
  %3632 = vmatmul.bf16.gmra.mxu0 %v3555
  %v3633 = vpop.f32.mrf.mxu0
  %v3634 = vadd.f32 %v3495, %v3633
  %v3635 = vpop.f32.mrf.mxu0
  %v3636 = vadd.f32 %v3495, %v3635
  %3637 = vmatmul.bf16.gmra.mxu0 %v3558
  %v3638 = vpop.f32.mrf.mxu0
  %v3639 = vadd.f32 %v3495, %v3638
  %v3640 = vpop.f32.mrf.mxu0
  %v3641 = vadd.f32 %v3495, %v3640
  %3642 = vmatmul.bf16.gmra.mxu0 %v3561
  %v3643 = vpop.f32.mrf.mxu0
  %v3644 = vadd.f32 %v3495, %v3643
  %v3645 = vpop.f32.mrf.mxu0
  %v3646 = vadd.f32 %v3495, %v3645
  %3647 = vmatmul.bf16.gmra.mxu0 %v3564
  %v3648 = vpop.f32.mrf.mxu0
  %v3649 = vadd.f32 %v3495, %v3648
  %v3650 = vpop.f32.mrf.mxu0
  %v3651 = vadd.f32 %v3495, %v3650
  %3652 = vmatmul.bf16.gmra.mxu0 %v3567
  %v3653 = vpop.f32.mrf.mxu0
  %v3654 = vadd.f32 %v3495, %v3653
  %v3655 = vpop.f32.mrf.mxu0
  %v3656 = vadd.f32 %v3495, %v3655
  %3657 = vdwg.mxu0
  %v3658 = vadd.f32 %v1922, %v3579
  %v3659 = vadd.f32 %v1923, %v3581
  %v3660 = vadd.f32 %v1924, %v3584
  %v3661 = vadd.f32 %v1925, %v3586
  %v3662 = vadd.f32 %v1926, %v3589
  %v3663 = vadd.f32 %v1927, %v3591
  %v3664 = vadd.f32 %v1928, %v3594
  %v3665 = vadd.f32 %v1929, %v3596
  %v3666 = vadd.f32 %v1930, %v3599
  %v3667 = vadd.f32 %v1931, %v3601
  %v3668 = vadd.f32 %v1932, %v3604
  %v3669 = vadd.f32 %v1933, %v3606
  %v3670 = vadd.f32 %v1934, %v3609
  %v3671 = vadd.f32 %v1935, %v3611
  %v3672 = vadd.f32 %v1936, %v3614
  %v3673 = vadd.f32 %v1937, %v3616
  %v3674 = vadd.f32 %v1938, %v3619
  %v3675 = vadd.f32 %v1939, %v3621
  %v3676 = vadd.f32 %v1940, %v3624
  %v3677 = vadd.f32 %v1941, %v3626
  %v3678 = vadd.f32 %v1942, %v3629
  %v3679 = vadd.f32 %v1943, %v3631
  %v3680 = vadd.f32 %v1944, %v3634
  %v3681 = vadd.f32 %v1945, %v3636
  %v3682 = vadd.f32 %v1946, %v3639
  %v3683 = vadd.f32 %v1947, %v3641
  %v3684 = vadd.f32 %v1948, %v3644
  %v3685 = vadd.f32 %v1949, %v3646
  %v3686 = vadd.f32 %v1950, %v3649
  %v3687 = vadd.f32 %v1951, %v3651
  %v3688 = vadd.f32 %v1952, %v3654
  %v3689 = vadd.f32 %v1953, %v3656
  %3722 = vrot.lane.b32.xlu0 %v3658, 32
  %v3723 = vpop.permute.xlu0 %3722
  %3724 = vrot.lane.b32.xlu0 %v3659, 32
  %v3725 = vpop.permute.xlu0 %3724
  %3726 = vrot.lane.b32.xlu0 %v3660, 32
  %v3727 = vpop.permute.xlu0 %3726
  %3728 = vrot.lane.b32.xlu0 %v3661, 32
  %v3729 = vpop.permute.xlu0 %3728
  %3730 = vrot.lane.b32.xlu0 %v3662, 32
  %v3731 = vpop.permute.xlu0 %3730
  %3732 = vrot.lane.b32.xlu0 %v3663, 32
  %v3733 = vpop.permute.xlu0 %3732
  %3734 = vrot.lane.b32.xlu0 %v3664, 32
  %v3735 = vpop.permute.xlu0 %3734
  %3736 = vrot.lane.b32.xlu0 %v3665, 32
  %v3737 = vpop.permute.xlu0 %3736
  %3738 = vrot.lane.b32.xlu0 %v3666, 32
  %v3739 = vpop.permute.xlu0 %3738
  %3740 = vrot.lane.b32.xlu0 %v3667, 32
  %v3741 = vpop.permute.xlu0 %3740
  %3742 = vrot.lane.b32.xlu0 %v3668, 32
  %v3743 = vpop.permute.xlu0 %3742
  %3744 = vrot.lane.b32.xlu0 %v3669, 32
  %v3745 = vpop.permute.xlu0 %3744
  %3746 = vrot.lane.b32.xlu0 %v3670, 32
  %v3747 = vpop.permute.xlu0 %3746
  %3748 = vrot.lane.b32.xlu0 %v3671, 32
  %v3749 = vpop.permute.xlu0 %3748
  %3750 = vrot.lane.b32.xlu0 %v3672, 32
  %v3751 = vpop.permute.xlu0 %3750
  %3752 = vrot.lane.b32.xlu0 %v3673, 32
  %v3753 = vpop.permute.xlu0 %3752
  %3754 = vrot.lane.b32.xlu0 %v3674, 32
  %v3755 = vpop.permute.xlu0 %3754
  %3756 = vrot.lane.b32.xlu0 %v3675, 32
  %v3757 = vpop.permute.xlu0 %3756
  %3758 = vrot.lane.b32.xlu0 %v3676, 32
  %v3759 = vpop.permute.xlu0 %3758
  %3760 = vrot.lane.b32.xlu0 %v3677, 32
  %v3761 = vpop.permute.xlu0 %3760
  %3762 = vrot.lane.b32.xlu0 %v3678, 32
  %v3763 = vpop.permute.xlu0 %3762
  %3764 = vrot.lane.b32.xlu0 %v3679, 32
  %v3765 = vpop.permute.xlu0 %3764
  %3766 = vrot.lane.b32.xlu0 %v3680, 32
  %v3767 = vpop.permute.xlu0 %3766
  %3768 = vrot.lane.b32.xlu0 %v3681, 32
  %v3769 = vpop.permute.xlu0 %3768
  %3770 = vrot.lane.b32.xlu0 %v3682, 32
  %v3771 = vpop.permute.xlu0 %3770
  %3772 = vrot.lane.b32.xlu0 %v3683, 32
  %v3773 = vpop.permute.xlu0 %3772
  %3774 = vrot.lane.b32.xlu0 %v3684, 32
  %v3775 = vpop.permute.xlu0 %3774
  %3776 = vrot.lane.b32.xlu0 %v3685, 32
  %v3777 = vpop.permute.xlu0 %3776
  %3778 = vrot.lane.b32.xlu0 %v3686, 32
  %v3779 = vpop.permute.xlu0 %3778
  %3780 = vrot.lane.b32.xlu0 %v3687, 32
  %v3781 = vpop.permute.xlu0 %3780
  %3782 = vrot.lane.b32.xlu0 %v3688, 32
  %v3783 = vpop.permute.xlu0 %3782
  %3784 = vrot.lane.b32.xlu0 %v3689, 32
  %v3785 = vpop.permute.xlu0 %3784
  %v3818 = vsel %vm252, %v2790, %v3723
  %v3819 = vsel %vm252, %v2791, %v3725
  %v3820 = vsel %vm252, %v2792, %v3727
  %v3821 = vsel %vm252, %v2793, %v3729
  %v3822 = vsel %vm252, %v2794, %v3731
  %v3823 = vsel %vm252, %v2795, %v3733
  %v3824 = vsel %vm252, %v2796, %v3735
  %v3825 = vsel %vm252, %v2797, %v3737
  %v3826 = vsel %vm252, %v2798, %v3739
  %v3827 = vsel %vm252, %v2799, %v3741
  %v3828 = vsel %vm252, %v2800, %v3743
  %v3829 = vsel %vm252, %v2801, %v3745
  %v3830 = vsel %vm252, %v2802, %v3747
  %v3831 = vsel %vm252, %v2803, %v3749
  %v3832 = vsel %vm252, %v2804, %v3751
  %v3833 = vsel %vm252, %v2805, %v3753
  %v3834 = vsel %vm252, %v2806, %v3755
  %v3835 = vsel %vm252, %v2807, %v3757
  %v3836 = vsel %vm252, %v2808, %v3759
  %v3837 = vsel %vm252, %v2809, %v3761
  %v3838 = vsel %vm252, %v2810, %v3763
  %v3839 = vsel %vm252, %v2811, %v3765
  %v3840 = vsel %vm252, %v2812, %v3767
  %v3841 = vsel %vm252, %v2813, %v3769
  %v3842 = vsel %vm252, %v2814, %v3771
  %v3843 = vsel %vm252, %v2815, %v3773
  %v3844 = vsel %vm252, %v2816, %v3775
  %v3845 = vsel %vm252, %v2817, %v3777
  %v3846 = vsel %vm252, %v2818, %v3779
  %v3847 = vsel %vm252, %v2819, %v3781
  %v3848 = vsel %vm252, %v2820, %v3783
  %v3849 = vsel %vm252, %v2821, %v3785
  %v3850 = vld [vmem:[%s69] sm:$0x1]
  %v3852 = vperm.slane %v3850, 0
  %v3854 = vmul.f32 %v3818, %v3852
  %v3855 = vmul.f32 %v3819, %v3852
  %v3856 = vmul.f32 %v3820, %v3852
  %v3857 = vmul.f32 %v3821, %v3852
  %v3858 = vmul.f32 %v3822, %v3852
  %v3859 = vmul.f32 %v3823, %v3852
  %v3860 = vmul.f32 %v3824, %v3852
  %v3861 = vmul.f32 %v3825, %v3852
  %v3862 = vmul.f32 %v3826, %v3852
  %v3863 = vmul.f32 %v3827, %v3852
  %v3864 = vmul.f32 %v3828, %v3852
  %v3865 = vmul.f32 %v3829, %v3852
  %v3866 = vmul.f32 %v3830, %v3852
  %v3867 = vmul.f32 %v3831, %v3852
  %v3868 = vmul.f32 %v3832, %v3852
  %v3869 = vmul.f32 %v3833, %v3852
  %v3870 = vmul.f32 %v3834, %v3852
  %v3871 = vmul.f32 %v3835, %v3852
  %v3872 = vmul.f32 %v3836, %v3852
  %v3873 = vmul.f32 %v3837, %v3852
  %v3874 = vmul.f32 %v3838, %v3852
  %v3875 = vmul.f32 %v3839, %v3852
  %v3876 = vmul.f32 %v3840, %v3852
  %v3877 = vmul.f32 %v3841, %v3852
  %v3878 = vmul.f32 %v3842, %v3852
  %v3879 = vmul.f32 %v3843, %v3852
  %v3880 = vmul.f32 %v3844, %v3852
  %v3881 = vmul.f32 %v3845, %v3852
  %v3882 = vmul.f32 %v3846, %v3852
  %v3883 = vmul.f32 %v3847, %v3852
  %v3884 = vmul.f32 %v3848, %v3852
  %v3885 = vmul.f32 %v3849, %v3852
  %v3886 = vand.u32 2147483647, %v3854
  %v3887 = vand.u32 2147483647, %v3855
  %v3888 = vand.u32 2147483647, %v3856
  %v3889 = vand.u32 2147483647, %v3857
  %v3890 = vand.u32 2147483647, %v3858
  %v3891 = vand.u32 2147483647, %v3859
  %v3892 = vand.u32 2147483647, %v3860
  %v3893 = vand.u32 2147483647, %v3861
  %v3894 = vand.u32 2147483647, %v3862
  %v3895 = vand.u32 2147483647, %v3863
  %v3896 = vand.u32 2147483647, %v3864
  %v3897 = vand.u32 2147483647, %v3865
  %v3898 = vand.u32 2147483647, %v3866
  %v3899 = vand.u32 2147483647, %v3867
  %v3900 = vand.u32 2147483647, %v3868
  %v3901 = vand.u32 2147483647, %v3869
  %v3902 = vand.u32 2147483647, %v3870
  %v3903 = vand.u32 2147483647, %v3871
  %v3904 = vand.u32 2147483647, %v3872
  %v3905 = vand.u32 2147483647, %v3873
  %v3906 = vand.u32 2147483647, %v3874
  %v3907 = vand.u32 2147483647, %v3875
  %v3908 = vand.u32 2147483647, %v3876
  %v3909 = vand.u32 2147483647, %v3877
  %v3910 = vand.u32 2147483647, %v3878
  %v3911 = vand.u32 2147483647, %v3879
  %v3912 = vand.u32 2147483647, %v3880
  %v3913 = vand.u32 2147483647, %v3881
  %v3914 = vand.u32 2147483647, %v3882
  %v3915 = vand.u32 2147483647, %v3883
  %v3916 = vand.u32 2147483647, %v3884
  %v3917 = vand.u32 2147483647, %v3885
  %v3918 = vsub.f32 0.0, %v3886
  %v3919 = vsub.f32 0.0, %v3887
  %v3920 = vsub.f32 0.0, %v3888
  %v3921 = vsub.f32 0.0, %v3889
  %v3922 = vsub.f32 0.0, %v3890
  %v3923 = vsub.f32 0.0, %v3891
  %v3924 = vsub.f32 0.0, %v3892
  %v3925 = vsub.f32 0.0, %v3893
  %v3926 = vsub.f32 0.0, %v3894
  %v3927 = vsub.f32 0.0, %v3895
  %v3928 = vsub.f32 0.0, %v3896
  %v3929 = vsub.f32 0.0, %v3897
  %v3930 = vsub.f32 0.0, %v3898
  %v3931 = vsub.f32 0.0, %v3899
  %v3932 = vsub.f32 0.0, %v3900
  %v3933 = vsub.f32 0.0, %v3901
  %v3934 = vsub.f32 0.0, %v3902
  %v3935 = vsub.f32 0.0, %v3903
  %v3936 = vsub.f32 0.0, %v3904
  %v3937 = vsub.f32 0.0, %v3905
  %v3938 = vsub.f32 0.0, %v3906
  %v3939 = vsub.f32 0.0, %v3907
  %v3940 = vsub.f32 0.0, %v3908
  %v3941 = vsub.f32 0.0, %v3909
  %v3942 = vsub.f32 0.0, %v3910
  %v3943 = vsub.f32 0.0, %v3911
  %v3944 = vsub.f32 0.0, %v3912
  %v3945 = vsub.f32 0.0, %v3913
  %v3946 = vsub.f32 0.0, %v3914
  %v3947 = vsub.f32 0.0, %v3915
  %v3948 = vsub.f32 0.0, %v3916
  %v3949 = vsub.f32 0.0, %v3917
  %v3950 = vmul.f32 %v3918, 1.442695
  %v3951 = vpow.pop %v3950
  %v3952 = vmul.f32 %v3919, 1.442695
  %v3953 = vpow.pop %v3952
  %v3954 = vmul.f32 %v3920, 1.442695
  %v3955 = vpow.pop %v3954
  %v3956 = vmul.f32 %v3921, 1.442695
  %v3957 = vpow.pop %v3956
  %v3958 = vmul.f32 %v3922, 1.442695
  %v3959 = vpow.pop %v3958
  %v3960 = vmul.f32 %v3923, 1.442695
  %v3961 = vpow.pop %v3960
  %v3962 = vmul.f32 %v3924, 1.442695
  %v3963 = vpow.pop %v3962
  %v3964 = vmul.f32 %v3925, 1.442695
  %v3965 = vpow.pop %v3964
  %v3966 = vmul.f32 %v3926, 1.442695
  %v3967 = vpow.pop %v3966
  %v3968 = vmul.f32 %v3927, 1.442695
  %v3969 = vpow.pop %v3968
  %v3970 = vmul.f32 %v3928, 1.442695
  %v3971 = vpow.pop %v3970
  %v3972 = vmul.f32 %v3929, 1.442695
  %v3973 = vpow.pop %v3972
  %v3974 = vmul.f32 %v3930, 1.442695
  %v3975 = vpow.pop %v3974
  %v3976 = vmul.f32 %v3931, 1.442695
  %v3977 = vpow.pop %v3976
  %v3978 = vmul.f32 %v3932, 1.442695
  %v3979 = vpow.pop %v3978
  %v3980 = vmul.f32 %v3933, 1.442695
  %v3981 = vpow.pop %v3980
  %v3982 = vmul.f32 %v3934, 1.442695
  %v3983 = vpow.pop %v3982
  %v3984 = vmul.f32 %v3935, 1.442695
  %v3985 = vpow.pop %v3984
  %v3986 = vmul.f32 %v3936, 1.442695
  %v3987 = vpow.pop %v3986
  %v3988 = vmul.f32 %v3937, 1.442695
  %v3989 = vpow.pop %v3988
  %v3990 = vmul.f32 %v3938, 1.442695
  %v3991 = vpow.pop %v3990
  %v3992 = vmul.f32 %v3939, 1.442695
  %v3993 = vpow.pop %v3992
  %v3994 = vmul.f32 %v3940, 1.442695
  %v3995 = vpow.pop %v3994
  %v3996 = vmul.f32 %v3941, 1.442695
  %v3997 = vpow.pop %v3996
  %v3998 = vmul.f32 %v3942, 1.442695
  %v3999 = vpow.pop %v3998
  %v4000 = vmul.f32 %v3943, 1.442695
  %v4001 = vpow.pop %v4000
  %v4002 = vmul.f32 %v3944, 1.442695
  %v4003 = vpow.pop %v4002
  %v4004 = vmul.f32 %v3945, 1.442695
  %v4005 = vpow.pop %v4004
  %v4006 = vmul.f32 %v3946, 1.442695
  %v4007 = vpow.pop %v4006
  %v4008 = vmul.f32 %v3947, 1.442695
  %v4009 = vpow.pop %v4008
  %v4010 = vmul.f32 %v3948, 1.442695
  %v4011 = vpow.pop %v4010
  %v4012 = vmul.f32 %v3949, 1.442695
  %v4013 = vpow.pop %v4012
  %v4014 = vadd.f32 %v3951, 1.0
  %v4015 = vlog2.pop %v4014
  %v4016 = vmul.f32 %v4015, 0.6931472
  %v4017 = vmul.f32 -0.5, %v3951
  %v4018 = vadd.f32 %v4017, 1.0
  %v4019 = vmul.f32 %v4018, %v3951
  %v4020 = vand.u32 2147483647, %v3951
  %vm4021 = vcmp.lt.f32.partialorder %v4020, 0.0004427343
  %v4022 = vsel %vm4021, %v4019, %v4016
  %v4023 = vadd.f32 %v3953, 1.0
  %v4024 = vlog2.pop %v4023
  %v4025 = vmul.f32 %v4024, 0.6931472
  %v4026 = vmul.f32 -0.5, %v3953
  %v4027 = vadd.f32 %v4026, 1.0
  %v4028 = vmul.f32 %v4027, %v3953
  %v4029 = vand.u32 2147483647, %v3953
  %vm4030 = vcmp.lt.f32.partialorder %v4029, 0.0004427343
  %v4031 = vsel %vm4030, %v4028, %v4025
  %v4032 = vadd.f32 %v3955, 1.0
  %v4033 = vlog2.pop %v4032
  %v4034 = vmul.f32 %v4033, 0.6931472
  %v4035 = vmul.f32 -0.5, %v3955
  %v4036 = vadd.f32 %v4035, 1.0
  %v4037 = vmul.f32 %v4036, %v3955
  %v4038 = vand.u32 2147483647, %v3955
  %vm4039 = vcmp.lt.f32.partialorder %v4038, 0.0004427343
  %v4040 = vsel %vm4039, %v4037, %v4034
  %v4041 = vadd.f32 %v3957, 1.0
  %v4042 = vlog2.pop %v4041
  %v4043 = vmul.f32 %v4042, 0.6931472
  %v4044 = vmul.f32 -0.5, %v3957
  %v4045 = vadd.f32 %v4044, 1.0
  %v4046 = vmul.f32 %v4045, %v3957
  %v4047 = vand.u32 2147483647, %v3957
  %vm4048 = vcmp.lt.f32.partialorder %v4047, 0.0004427343
  %v4049 = vsel %vm4048, %v4046, %v4043
  %v4050 = vadd.f32 %v3959, 1.0
  %v4051 = vlog2.pop %v4050
  %v4052 = vmul.f32 %v4051, 0.6931472
  %v4053 = vmul.f32 -0.5, %v3959
  %v4054 = vadd.f32 %v4053, 1.0
  %v4055 = vmul.f32 %v4054, %v3959
  %v4056 = vand.u32 2147483647, %v3959
  %vm4057 = vcmp.lt.f32.partialorder %v4056, 0.0004427343
  %v4058 = vsel %vm4057, %v4055, %v4052
  %v4059 = vadd.f32 %v3961, 1.0
  %v4060 = vlog2.pop %v4059
  %v4061 = vmul.f32 %v4060, 0.6931472
  %v4062 = vmul.f32 -0.5, %v3961
  %v4063 = vadd.f32 %v4062, 1.0
  %v4064 = vmul.f32 %v4063, %v3961
  %v4065 = vand.u32 2147483647, %v3961
  %vm4066 = vcmp.lt.f32.partialorder %v4065, 0.0004427343
  %v4067 = vsel %vm4066, %v4064, %v4061
  %v4068 = vadd.f32 %v3963, 1.0
  %v4069 = vlog2.pop %v4068
  %v4070 = vmul.f32 %v4069, 0.6931472
  %v4071 = vmul.f32 -0.5, %v3963
  %v4072 = vadd.f32 %v4071, 1.0
  %v4073 = vmul.f32 %v4072, %v3963
  %v4074 = vand.u32 2147483647, %v3963
  %vm4075 = vcmp.lt.f32.partialorder %v4074, 0.0004427343
  %v4076 = vsel %vm4075, %v4073, %v4070
  %v4077 = vadd.f32 %v3965, 1.0
  %v4078 = vlog2.pop %v4077
  %v4079 = vmul.f32 %v4078, 0.6931472
  %v4080 = vmul.f32 -0.5, %v3965
  %v4081 = vadd.f32 %v4080, 1.0
  %v4082 = vmul.f32 %v4081, %v3965
  %v4083 = vand.u32 2147483647, %v3965
  %vm4084 = vcmp.lt.f32.partialorder %v4083, 0.0004427343
  %v4085 = vsel %vm4084, %v4082, %v4079
  %v4086 = vadd.f32 %v3967, 1.0
  %v4087 = vlog2.pop %v4086
  %v4088 = vmul.f32 %v4087, 0.6931472
  %v4089 = vmul.f32 -0.5, %v3967
  %v4090 = vadd.f32 %v4089, 1.0
  %v4091 = vmul.f32 %v4090, %v3967
  %v4092 = vand.u32 2147483647, %v3967
  %vm4093 = vcmp.lt.f32.partialorder %v4092, 0.0004427343
  %v4094 = vsel %vm4093, %v4091, %v4088
  %v4095 = vadd.f32 %v3969, 1.0
  %v4096 = vlog2.pop %v4095
  %v4097 = vmul.f32 %v4096, 0.6931472
  %v4098 = vmul.f32 -0.5, %v3969
  %v4099 = vadd.f32 %v4098, 1.0
  %v4100 = vmul.f32 %v4099, %v3969
  %v4101 = vand.u32 2147483647, %v3969
  %vm4102 = vcmp.lt.f32.partialorder %v4101, 0.0004427343
  %v4103 = vsel %vm4102, %v4100, %v4097
  %v4104 = vadd.f32 %v3971, 1.0
  %v4105 = vlog2.pop %v4104
  %v4106 = vmul.f32 %v4105, 0.6931472
  %v4107 = vmul.f32 -0.5, %v3971
  %v4108 = vadd.f32 %v4107, 1.0
  %v4109 = vmul.f32 %v4108, %v3971
  %v4110 = vand.u32 2147483647, %v3971
  %vm4111 = vcmp.lt.f32.partialorder %v4110, 0.0004427343
  %v4112 = vsel %vm4111, %v4109, %v4106
  %v4113 = vadd.f32 %v3973, 1.0
  %v4114 = vlog2.pop %v4113
  %v4115 = vmul.f32 %v4114, 0.6931472
  %v4116 = vmul.f32 -0.5, %v3973
  %v4117 = vadd.f32 %v4116, 1.0
  %v4118 = vmul.f32 %v4117, %v3973
  %v4119 = vand.u32 2147483647, %v3973
  %vm4120 = vcmp.lt.f32.partialorder %v4119, 0.0004427343
  %v4121 = vsel %vm4120, %v4118, %v4115
  %v4122 = vadd.f32 %v3975, 1.0
  %v4123 = vlog2.pop %v4122
  %v4124 = vmul.f32 %v4123, 0.6931472
  %v4125 = vmul.f32 -0.5, %v3975
  %v4126 = vadd.f32 %v4125, 1.0
  %v4127 = vmul.f32 %v4126, %v3975
  %v4128 = vand.u32 2147483647, %v3975
  %vm4129 = vcmp.lt.f32.partialorder %v4128, 0.0004427343
  %v4130 = vsel %vm4129, %v4127, %v4124
  %v4131 = vadd.f32 %v3977, 1.0
  %v4132 = vlog2.pop %v4131
  %v4133 = vmul.f32 %v4132, 0.6931472
  %v4134 = vmul.f32 -0.5, %v3977
  %v4135 = vadd.f32 %v4134, 1.0
  %v4136 = vmul.f32 %v4135, %v3977
  %v4137 = vand.u32 2147483647, %v3977
  %vm4138 = vcmp.lt.f32.partialorder %v4137, 0.0004427343
  %v4139 = vsel %vm4138, %v4136, %v4133
  %v4140 = vadd.f32 %v3979, 1.0
  %v4141 = vlog2.pop %v4140
  %v4142 = vmul.f32 %v4141, 0.6931472
  %v4143 = vmul.f32 -0.5, %v3979
  %v4144 = vadd.f32 %v4143, 1.0
  %v4145 = vmul.f32 %v4144, %v3979
  %v4146 = vand.u32 2147483647, %v3979
  %vm4147 = vcmp.lt.f32.partialorder %v4146, 0.0004427343
  %v4148 = vsel %vm4147, %v4145, %v4142
  %v4149 = vadd.f32 %v3981, 1.0
  %v4150 = vlog2.pop %v4149
  %v4151 = vmul.f32 %v4150, 0.6931472
  %v4152 = vmul.f32 -0.5, %v3981
  %v4153 = vadd.f32 %v4152, 1.0
  %v4154 = vmul.f32 %v4153, %v3981
  %v4155 = vand.u32 2147483647, %v3981
  %vm4156 = vcmp.lt.f32.partialorder %v4155, 0.0004427343
  %v4157 = vsel %vm4156, %v4154, %v4151
  %v4158 = vadd.f32 %v3983, 1.0
  %v4159 = vlog2.pop %v4158
  %v4160 = vmul.f32 %v4159, 0.6931472
  %v4161 = vmul.f32 -0.5, %v3983
  %v4162 = vadd.f32 %v4161, 1.0
  %v4163 = vmul.f32 %v4162, %v3983
  %v4164 = vand.u32 2147483647, %v3983
  %vm4165 = vcmp.lt.f32.partialorder %v4164, 0.0004427343
  %v4166 = vsel %vm4165, %v4163, %v4160
  %v4167 = vadd.f32 %v3985, 1.0
  %v4168 = vlog2.pop %v4167
  %v4169 = vmul.f32 %v4168, 0.6931472
  %v4170 = vmul.f32 -0.5, %v3985
  %v4171 = vadd.f32 %v4170, 1.0
  %v4172 = vmul.f32 %v4171, %v3985
  %v4173 = vand.u32 2147483647, %v3985
  %vm4174 = vcmp.lt.f32.partialorder %v4173, 0.0004427343
  %v4175 = vsel %vm4174, %v4172, %v4169
  %v4176 = vadd.f32 %v3987, 1.0
  %v4177 = vlog2.pop %v4176
  %v4178 = vmul.f32 %v4177, 0.6931472
  %v4179 = vmul.f32 -0.5, %v3987
  %v4180 = vadd.f32 %v4179, 1.0
  %v4181 = vmul.f32 %v4180, %v3987
  %v4182 = vand.u32 2147483647, %v3987
  %vm4183 = vcmp.lt.f32.partialorder %v4182, 0.0004427343
  %v4184 = vsel %vm4183, %v4181, %v4178
  %v4185 = vadd.f32 %v3989, 1.0
  %v4186 = vlog2.pop %v4185
  %v4187 = vmul.f32 %v4186, 0.6931472
  %v4188 = vmul.f32 -0.5, %v3989
  %v4189 = vadd.f32 %v4188, 1.0
  %v4190 = vmul.f32 %v4189, %v3989
  %v4191 = vand.u32 2147483647, %v3989
  %vm4192 = vcmp.lt.f32.partialorder %v4191, 0.0004427343
  %v4193 = vsel %vm4192, %v4190, %v4187
  %v4194 = vadd.f32 %v3991, 1.0
  %v4195 = vlog2.pop %v4194
  %v4196 = vmul.f32 %v4195, 0.6931472
  %v4197 = vmul.f32 -0.5, %v3991
  %v4198 = vadd.f32 %v4197, 1.0
  %v4199 = vmul.f32 %v4198, %v3991
  %v4200 = vand.u32 2147483647, %v3991
  %vm4201 = vcmp.lt.f32.partialorder %v4200, 0.0004427343
  %v4202 = vsel %vm4201, %v4199, %v4196
  %v4203 = vadd.f32 %v3993, 1.0
  %v4204 = vlog2.pop %v4203
  %v4205 = vmul.f32 %v4204, 0.6931472
  %v4206 = vmul.f32 -0.5, %v3993
  %v4207 = vadd.f32 %v4206, 1.0
  %v4208 = vmul.f32 %v4207, %v3993
  %v4209 = vand.u32 2147483647, %v3993
  %vm4210 = vcmp.lt.f32.partialorder %v4209, 0.0004427343
  %v4211 = vsel %vm4210, %v4208, %v4205
  %v4212 = vadd.f32 %v3995, 1.0
  %v4213 = vlog2.pop %v4212
  %v4214 = vmul.f32 %v4213, 0.6931472
  %v4215 = vmul.f32 -0.5, %v3995
  %v4216 = vadd.f32 %v4215, 1.0
  %v4217 = vmul.f32 %v4216, %v3995
  %v4218 = vand.u32 2147483647, %v3995
  %vm4219 = vcmp.lt.f32.partialorder %v4218, 0.0004427343
  %v4220 = vsel %vm4219, %v4217, %v4214
  %v4221 = vadd.f32 %v3997, 1.0
  %v4222 = vlog2.pop %v4221
  %v4223 = vmul.f32 %v4222, 0.6931472
  %v4224 = vmul.f32 -0.5, %v3997
  %v4225 = vadd.f32 %v4224, 1.0
  %v4226 = vmul.f32 %v4225, %v3997
  %v4227 = vand.u32 2147483647, %v3997
  %vm4228 = vcmp.lt.f32.partialorder %v4227, 0.0004427343
  %v4229 = vsel %vm4228, %v4226, %v4223
  %v4230 = vadd.f32 %v3999, 1.0
  %v4231 = vlog2.pop %v4230
  %v4232 = vmul.f32 %v4231, 0.6931472
  %v4233 = vmul.f32 -0.5, %v3999
  %v4234 = vadd.f32 %v4233, 1.0
  %v4235 = vmul.f32 %v4234, %v3999
  %v4236 = vand.u32 2147483647, %v3999
  %vm4237 = vcmp.lt.f32.partialorder %v4236, 0.0004427343
  %v4238 = vsel %vm4237, %v4235, %v4232
  %v4239 = vadd.f32 %v4001, 1.0
  %v4240 = vlog2.pop %v4239
  %v4241 = vmul.f32 %v4240, 0.6931472
  %v4242 = vmul.f32 -0.5, %v4001
  %v4243 = vadd.f32 %v4242, 1.0
  %v4244 = vmul.f32 %v4243, %v4001
  %v4245 = vand.u32 2147483647, %v4001
  %vm4246 = vcmp.lt.f32.partialorder %v4245, 0.0004427343
  %v4247 = vsel %vm4246, %v4244, %v4241
  %v4248 = vadd.f32 %v4003, 1.0
  %v4249 = vlog2.pop %v4248
  %v4250 = vmul.f32 %v4249, 0.6931472
  %v4251 = vmul.f32 -0.5, %v4003
  %v4252 = vadd.f32 %v4251, 1.0
  %v4253 = vmul.f32 %v4252, %v4003
  %v4254 = vand.u32 2147483647, %v4003
  %vm4255 = vcmp.lt.f32.partialorder %v4254, 0.0004427343
  %v4256 = vsel %vm4255, %v4253, %v4250
  %v4257 = vadd.f32 %v4005, 1.0
  %v4258 = vlog2.pop %v4257
  %v4259 = vmul.f32 %v4258, 0.6931472
  %v4260 = vmul.f32 -0.5, %v4005
  %v4261 = vadd.f32 %v4260, 1.0
  %v4262 = vmul.f32 %v4261, %v4005
  %v4263 = vand.u32 2147483647, %v4005
  %vm4264 = vcmp.lt.f32.partialorder %v4263, 0.0004427343
  %v4265 = vsel %vm4264, %v4262, %v4259
  %v4266 = vadd.f32 %v4007, 1.0
  %v4267 = vlog2.pop %v4266
  %v4268 = vmul.f32 %v4267, 0.6931472
  %v4269 = vmul.f32 -0.5, %v4007
  %v4270 = vadd.f32 %v4269, 1.0
  %v4271 = vmul.f32 %v4270, %v4007
  %v4272 = vand.u32 2147483647, %v4007
  %vm4273 = vcmp.lt.f32.partialorder %v4272, 0.0004427343
  %v4274 = vsel %vm4273, %v4271, %v4268
  %v4275 = vadd.f32 %v4009, 1.0
  %v4276 = vlog2.pop %v4275
  %v4277 = vmul.f32 %v4276, 0.6931472
  %v4278 = vmul.f32 -0.5, %v4009
  %v4279 = vadd.f32 %v4278, 1.0
  %v4280 = vmul.f32 %v4279, %v4009
  %v4281 = vand.u32 2147483647, %v4009
  %vm4282 = vcmp.lt.f32.partialorder %v4281, 0.0004427343
  %v4283 = vsel %vm4282, %v4280, %v4277
  %v4284 = vadd.f32 %v4011, 1.0
  %v4285 = vlog2.pop %v4284
  %v4286 = vmul.f32 %v4285, 0.6931472
  %v4287 = vmul.f32 -0.5, %v4011
  %v4288 = vadd.f32 %v4287, 1.0
  %v4289 = vmul.f32 %v4288, %v4011
  %v4290 = vand.u32 2147483647, %v4011
  %vm4291 = vcmp.lt.f32.partialorder %v4290, 0.0004427343
  %v4292 = vsel %vm4291, %v4289, %v4286
  %v4293 = vadd.f32 %v4013, 1.0
  %v4294 = vlog2.pop %v4293
  %v4295 = vmul.f32 %v4294, 0.6931472
  %v4296 = vmul.f32 -0.5, %v4013
  %v4297 = vadd.f32 %v4296, 1.0
  %v4298 = vmul.f32 %v4297, %v4013
  %v4299 = vand.u32 2147483647, %v4013
  %vm4300 = vcmp.lt.f32.partialorder %v4299, 0.0004427343
  %v4301 = vsel %vm4300, %v4298, %v4295
  %v4302 = vmul.f32 %v4022, 2.0
  %v4303 = vmul.f32 %v4031, 2.0
  %v4304 = vmul.f32 %v4040, 2.0
  %v4305 = vmul.f32 %v4049, 2.0
  %v4306 = vmul.f32 %v4058, 2.0
  %v4307 = vmul.f32 %v4067, 2.0
  %v4308 = vmul.f32 %v4076, 2.0
  %v4309 = vmul.f32 %v4085, 2.0
  %v4310 = vmul.f32 %v4094, 2.0
  %v4311 = vmul.f32 %v4103, 2.0
  %v4312 = vmul.f32 %v4112, 2.0
  %v4313 = vmul.f32 %v4121, 2.0
  %v4314 = vmul.f32 %v4130, 2.0
  %v4315 = vmul.f32 %v4139, 2.0
  %v4316 = vmul.f32 %v4148, 2.0
  %v4317 = vmul.f32 %v4157, 2.0
  %v4318 = vmul.f32 %v4166, 2.0
  %v4319 = vmul.f32 %v4175, 2.0
  %v4320 = vmul.f32 %v4184, 2.0
  %v4321 = vmul.f32 %v4193, 2.0
  %v4322 = vmul.f32 %v4202, 2.0
  %v4323 = vmul.f32 %v4211, 2.0
  %v4324 = vmul.f32 %v4220, 2.0
  %v4325 = vmul.f32 %v4229, 2.0
  %v4326 = vmul.f32 %v4238, 2.0
  %v4327 = vmul.f32 %v4247, 2.0
  %v4328 = vmul.f32 %v4256, 2.0
  %v4329 = vmul.f32 %v4265, 2.0
  %v4330 = vmul.f32 %v4274, 2.0
  %v4331 = vmul.f32 %v4283, 2.0
  %v4332 = vmul.f32 %v4292, 2.0
  %v4333 = vmul.f32 %v4301, 2.0
  %v4334 = vadd.f32 %v3886, %v4302
  %v4335 = vadd.f32 %v3887, %v4303
  %v4336 = vadd.f32 %v3888, %v4304
  %v4337 = vadd.f32 %v3889, %v4305
  %v4338 = vadd.f32 %v3890, %v4306
  %v4339 = vadd.f32 %v3891, %v4307
  %v4340 = vadd.f32 %v3892, %v4308
  %v4341 = vadd.f32 %v3893, %v4309
  %v4342 = vadd.f32 %v3894, %v4310
  %v4343 = vadd.f32 %v3895, %v4311
  %v4344 = vadd.f32 %v3896, %v4312
  %v4345 = vadd.f32 %v3897, %v4313
  %v4346 = vadd.f32 %v3898, %v4314
  %v4347 = vadd.f32 %v3899, %v4315
  %v4348 = vadd.f32 %v3900, %v4316
  %v4349 = vadd.f32 %v3901, %v4317
  %v4350 = vadd.f32 %v3902, %v4318
  %v4351 = vadd.f32 %v3903, %v4319
  %v4352 = vadd.f32 %v3904, %v4320
  %v4353 = vadd.f32 %v3905, %v4321
  %v4354 = vadd.f32 %v3906, %v4322
  %v4355 = vadd.f32 %v3907, %v4323
  %v4356 = vadd.f32 %v3908, %v4324
  %v4357 = vadd.f32 %v3909, %v4325
  %v4358 = vadd.f32 %v3910, %v4326
  %v4359 = vadd.f32 %v3911, %v4327
  %v4360 = vadd.f32 %v3912, %v4328
  %v4361 = vadd.f32 %v3913, %v4329
  %v4362 = vadd.f32 %v3914, %v4330
  %v4363 = vadd.f32 %v3915, %v4331
  %v4364 = vadd.f32 %v3916, %v4332
  %v4365 = vadd.f32 %v3917, %v4333
  %v4366 = vsub.f32 0.0, %v4334
  %v4367 = vsub.f32 0.0, %v4335
  %v4368 = vsub.f32 0.0, %v4336
  %v4369 = vsub.f32 0.0, %v4337
  %v4370 = vsub.f32 0.0, %v4338
  %v4371 = vsub.f32 0.0, %v4339
  %v4372 = vsub.f32 0.0, %v4340
  %v4373 = vsub.f32 0.0, %v4341
  %v4374 = vsub.f32 0.0, %v4342
  %v4375 = vsub.f32 0.0, %v4343
  %v4376 = vsub.f32 0.0, %v4344
  %v4377 = vsub.f32 0.0, %v4345
  %v4378 = vsub.f32 0.0, %v4346
  %v4379 = vsub.f32 0.0, %v4347
  %v4380 = vsub.f32 0.0, %v4348
  %v4381 = vsub.f32 0.0, %v4349
  %v4382 = vsub.f32 0.0, %v4350
  %v4383 = vsub.f32 0.0, %v4351
  %v4384 = vsub.f32 0.0, %v4352
  %v4385 = vsub.f32 0.0, %v4353
  %v4386 = vsub.f32 0.0, %v4354
  %v4387 = vsub.f32 0.0, %v4355
  %v4388 = vsub.f32 0.0, %v4356
  %v4389 = vsub.f32 0.0, %v4357
  %v4390 = vsub.f32 0.0, %v4358
  %v4391 = vsub.f32 0.0, %v4359
  %v4392 = vsub.f32 0.0, %v4360
  %v4393 = vsub.f32 0.0, %v4361
  %v4394 = vsub.f32 0.0, %v4362
  %v4395 = vsub.f32 0.0, %v4363
  %v4396 = vsub.f32 0.0, %v4364
  %v4397 = vsub.f32 0.0, %v4365
  %v4398 = vsel %vm474, %v4366, 0.0
  %4399 = vadd.xlane.f32.xlu0 %v4398
  %v4400 = vpop.xlane.xlu0 %4399
  %v4401 = vsel %vm474, %v4367, 0.0
  %4402 = vadd.xlane.f32.xlu0 %v4401
  %v4403 = vpop.xlane.xlu0 %4402
  %v4404 = vsel %vm474, %v4368, 0.0
  %4405 = vadd.xlane.f32.xlu0 %v4404
  %v4406 = vpop.xlane.xlu0 %4405
  %v4407 = vsel %vm474, %v4369, 0.0
  %4408 = vadd.xlane.f32.xlu0 %v4407
  %v4409 = vpop.xlane.xlu0 %4408
  %v4410 = vsel %vm474, %v4370, 0.0
  %4411 = vadd.xlane.f32.xlu0 %v4410
  %v4412 = vpop.xlane.xlu0 %4411
  %v4413 = vsel %vm474, %v4371, 0.0
  %4414 = vadd.xlane.f32.xlu0 %v4413
  %v4415 = vpop.xlane.xlu0 %4414
  %v4416 = vsel %vm474, %v4372, 0.0
  %4417 = vadd.xlane.f32.xlu0 %v4416
  %v4418 = vpop.xlane.xlu0 %4417
  %v4419 = vsel %vm474, %v4373, 0.0
  %4420 = vadd.xlane.f32.xlu0 %v4419
  %v4421 = vpop.xlane.xlu0 %4420
  %v4422 = vsel %vm474, %v4374, 0.0
  %4423 = vadd.xlane.f32.xlu0 %v4422
  %v4424 = vpop.xlane.xlu0 %4423
  %v4425 = vsel %vm474, %v4375, 0.0
  %4426 = vadd.xlane.f32.xlu0 %v4425
  %v4427 = vpop.xlane.xlu0 %4426
  %v4428 = vsel %vm474, %v4376, 0.0
  %4429 = vadd.xlane.f32.xlu0 %v4428
  %v4430 = vpop.xlane.xlu0 %4429
  %v4431 = vsel %vm474, %v4377, 0.0
  %4432 = vadd.xlane.f32.xlu0 %v4431
  %v4433 = vpop.xlane.xlu0 %4432
  %v4434 = vsel %vm474, %v4378, 0.0
  %4435 = vadd.xlane.f32.xlu0 %v4434
  %v4436 = vpop.xlane.xlu0 %4435
  %v4437 = vsel %vm474, %v4379, 0.0
  %4438 = vadd.xlane.f32.xlu0 %v4437
  %v4439 = vpop.xlane.xlu0 %4438
  %v4440 = vsel %vm474, %v4380, 0.0
  %4441 = vadd.xlane.f32.xlu0 %v4440
  %v4442 = vpop.xlane.xlu0 %4441
  %v4443 = vsel %vm474, %v4381, 0.0
  %4444 = vadd.xlane.f32.xlu0 %v4443
  %v4445 = vpop.xlane.xlu0 %4444
  %v4446 = vsel %vm474, %v4382, 0.0
  %4447 = vadd.xlane.f32.xlu0 %v4446
  %v4448 = vpop.xlane.xlu0 %4447
  %v4449 = vsel %vm474, %v4383, 0.0
  %4450 = vadd.xlane.f32.xlu0 %v4449
  %v4451 = vpop.xlane.xlu0 %4450
  %v4452 = vsel %vm474, %v4384, 0.0
  %4453 = vadd.xlane.f32.xlu0 %v4452
  %v4454 = vpop.xlane.xlu0 %4453
  %v4455 = vsel %vm474, %v4385, 0.0
  %4456 = vadd.xlane.f32.xlu0 %v4455
  %v4457 = vpop.xlane.xlu0 %4456
  %v4458 = vsel %vm474, %v4386, 0.0
  %4459 = vadd.xlane.f32.xlu0 %v4458
  %v4460 = vpop.xlane.xlu0 %4459
  %v4461 = vsel %vm474, %v4387, 0.0
  %4462 = vadd.xlane.f32.xlu0 %v4461
  %v4463 = vpop.xlane.xlu0 %4462
  %v4464 = vsel %vm474, %v4388, 0.0
  %4465 = vadd.xlane.f32.xlu0 %v4464
  %v4466 = vpop.xlane.xlu0 %4465
  %v4467 = vsel %vm474, %v4389, 0.0
  %4468 = vadd.xlane.f32.xlu0 %v4467
  %v4469 = vpop.xlane.xlu0 %4468
  %v4470 = vsel %vm474, %v4390, 0.0
  %4471 = vadd.xlane.f32.xlu0 %v4470
  %v4472 = vpop.xlane.xlu0 %4471
  %v4473 = vsel %vm474, %v4391, 0.0
  %4474 = vadd.xlane.f32.xlu0 %v4473
  %v4475 = vpop.xlane.xlu0 %4474
  %v4476 = vsel %vm474, %v4392, 0.0
  %4477 = vadd.xlane.f32.xlu0 %v4476
  %v4478 = vpop.xlane.xlu0 %4477
  %v4479 = vsel %vm474, %v4393, 0.0
  %4480 = vadd.xlane.f32.xlu0 %v4479
  %v4481 = vpop.xlane.xlu0 %4480
  %v4482 = vsel %vm474, %v4394, 0.0
  %4483 = vadd.xlane.f32.xlu0 %v4482
  %v4484 = vpop.xlane.xlu0 %4483
  %v4485 = vsel %vm474, %v4395, 0.0
  %4486 = vadd.xlane.f32.xlu0 %v4485
  %v4487 = vpop.xlane.xlu0 %4486
  %v4488 = vsel %vm474, %v4396, 0.0
  %4489 = vadd.xlane.f32.xlu0 %v4488
  %v4490 = vpop.xlane.xlu0 %4489
  %v4491 = vsel %vm474, %v4397, 0.0
  %4492 = vadd.xlane.f32.xlu0 %v4491
  %v4493 = vpop.xlane.xlu0 %4492
  %s4494 = sld [smem:[#allocation2]]
  %v4495 = vstv %s4494
  %v4496 = vadd.f32 %v4400, %v4495
  %v4497 = vadd.f32 %v4403, %v4495
  %v4498 = vadd.f32 %v4406, %v4495
  %v4499 = vadd.f32 %v4409, %v4495
  %v4500 = vadd.f32 %v4412, %v4495
  %v4501 = vadd.f32 %v4415, %v4495
  %v4502 = vadd.f32 %v4418, %v4495
  %v4503 = vadd.f32 %v4421, %v4495
  %v4504 = vadd.f32 %v4424, %v4495
  %v4505 = vadd.f32 %v4427, %v4495
  %v4506 = vadd.f32 %v4430, %v4495
  %v4507 = vadd.f32 %v4433, %v4495
  %v4508 = vadd.f32 %v4436, %v4495
  %v4509 = vadd.f32 %v4439, %v4495
  %v4510 = vadd.f32 %v4442, %v4495
  %v4511 = vadd.f32 %v4445, %v4495
  %v4512 = vadd.f32 %v4448, %v4495
  %v4513 = vadd.f32 %v4451, %v4495
  %v4514 = vadd.f32 %v4454, %v4495
  %v4515 = vadd.f32 %v4457, %v4495
  %v4516 = vadd.f32 %v4460, %v4495
  %v4517 = vadd.f32 %v4463, %v4495
  %v4518 = vadd.f32 %v4466, %v4495
  %v4519 = vadd.f32 %v4469, %v4495
  %v4520 = vadd.f32 %v4472, %v4495
  %v4521 = vadd.f32 %v4475, %v4495
  %v4522 = vadd.f32 %v4478, %v4495
  %v4523 = vadd.f32 %v4481, %v4495
  %v4524 = vadd.f32 %v4484, %v4495
  %v4525 = vadd.f32 %v4487, %v4495
  %v4526 = vadd.f32 %v4490, %v4495
  %v4527 = vadd.f32 %v4493, %v4495
  %vm4528 = vcmask 7168
  %4529 = vst.msk [vmem:[%s73] sm:$0xff] %vm4528, %v4496
  %4530 = vst.msk [vmem:[%s73 + $0x8] sm:$0xff] %vm4528, %v4497
  %4531 = vst.msk [vmem:[%s73 + $0x10] sm:$0xff] %vm4528, %v4498
  %4532 = vst.msk [vmem:[%s73 + $0x18] sm:$0xff] %vm4528, %v4499
  %4533 = vst.msk [vmem:[%s73 + $0x20] sm:$0xff] %vm4528, %v4500
  %4534 = vst.msk [vmem:[%s73 + $0x28] sm:$0xff] %vm4528, %v4501
  %4535 = vst.msk [vmem:[%s73 + $0x30] sm:$0xff] %vm4528, %v4502
  %4536 = vst.msk [vmem:[%s73 + $0x38] sm:$0xff] %vm4528, %v4503
  %4537 = vst.msk [vmem:[%s73 + $0x40] sm:$0xff] %vm4528, %v4504
  %4538 = vst.msk [vmem:[%s73 + $0x48] sm:$0xff] %vm4528, %v4505
  %4539 = vst.msk [vmem:[%s73 + $0x50] sm:$0xff] %vm4528, %v4506
  %4540 = vst.msk [vmem:[%s73 + $0x58] sm:$0xff] %vm4528, %v4507
  %4541 = vst.msk [vmem:[%s73 + $0x60] sm:$0xff] %vm4528, %v4508
  %4542 = vst.msk [vmem:[%s73 + $0x68] sm:$0xff] %vm4528, %v4509
  %4543 = vst.msk [vmem:[%s73 + $0x70] sm:$0xff] %vm4528, %v4510
  %4544 = vst.msk [vmem:[%s73 + $0x78] sm:$0xff] %vm4528, %v4511
  %4545 = vst.msk [vmem:[%s73 + $0x80] sm:$0xff] %vm4528, %v4512
  %4546 = vst.msk [vmem:[%s73 + $0x88] sm:$0xff] %vm4528, %v4513
  %4547 = vst.msk [vmem:[%s73 + $0x90] sm:$0xff] %vm4528, %v4514
  %4548 = vst.msk [vmem:[%s73 + $0x98] sm:$0xff] %vm4528, %v4515
  %4549 = vst.msk [vmem:[%s73 + $0xa0] sm:$0xff] %vm4528, %v4516
  %4550 = vst.msk [vmem:[%s73 + $0xa8] sm:$0xff] %vm4528, %v4517
  %4551 = vst.msk [vmem:[%s73 + $0xb0] sm:$0xff] %vm4528, %v4518
  %4552 = vst.msk [vmem:[%s73 + $0xb8] sm:$0xff] %vm4528, %v4519
  %4553 = vst.msk [vmem:[%s73 + $0xc0] sm:$0xff] %vm4528, %v4520
  %4554 = vst.msk [vmem:[%s73 + $0xc8] sm:$0xff] %vm4528, %v4521
  %4555 = vst.msk [vmem:[%s73 + $0xd0] sm:$0xff] %vm4528, %v4522
  %4556 = vst.msk [vmem:[%s73 + $0xd8] sm:$0xff] %vm4528, %v4523
  %4557 = vst.msk [vmem:[%s73 + $0xe0] sm:$0xff] %vm4528, %v4524
  %4558 = vst.msk [vmem:[%s73 + $0xe8] sm:$0xff] %vm4528, %v4525
  %4559 = vst.msk [vmem:[%s73 + $0xf0] sm:$0xff] %vm4528, %v4526
  %4560 = vst.msk [vmem:[%s73 + $0xf8] sm:$0xff] %vm4528, %v4527
  // Predicated region
  $region146: #{tpu_custom_call.1} parent=0 // pred_check
    _
  $region147: #{tpu_custom_call.1} parent=0 // pred_check_branch
    %4562 = sbr.rel (0) target = $region149
  $region148: #{tpu_custom_call.1} parent=0 // pred_region
    _
  $region149: #{tpu_custom_call.1} parent=0 // pred_fallthru
    _
  // Predicated region
  $region150: #{tpu_custom_call.1} parent=0 // pred_check
    _
  $region151: #{tpu_custom_call.1} parent=0 // pred_check_branch
    %4564 = sbr.rel (0) target = $region153
  $region152: #{tpu_custom_call.1} parent=0 // pred_region
    _
  $region153: #{tpu_custom_call.1} parent=0 // pred_fallthru
    _

// kernel: tpu_custom_call.1
$region0: #{tpu_custom_call.1}
  #allocation0 [shape = 'u32[]', space=smem, size = 0x4, offset = 0x4, fixed_abs, tag = 'smem constant byte address 0x4 - core index']
  #allocation1 [shape = 'u32[72,128]{1,0:T(1,128)}', space=vmem, size = 0x9000, scoped, tag = 'internal scratch']
  #allocation2 [shape = 'f32[1,1]{1,0:T(1,128)S(6)}', space=smem, size = 0x200, scoped, tag = 'scoped memory for tpu_custom_call.1']
  %s0 = inlined_call_operand.smem [shape: u32[37], index: -1, kind: input, shape index: {}]
  %s1 = sld [smem:[%s0]]
  %s2 = scalar_lea.smem %s0, 1
  %s3 = sld [smem:[%s2]]
  %s4 = scalar_lea.smem %s0, 2
  %s5 = sld [smem:[%s4]]
  %s6 = scalar_lea.smem %s0, 3
  %s7 = sld [smem:[%s6]]
  %s8 = scalar_lea.smem %s0, 4
  %s9 = sld [smem:[%s8]]
  %s10 = scalar_lea.smem %s0, 5
  %s11 = sld [smem:[%s10]]
  %s12 = scalar_lea.smem %s0, 6
  %s13 = sld [smem:[%s12]]
  %s14 = scalar_lea.smem %s0, 7
  %s15 = sld [smem:[%s14]]
  %s16 = scalar_lea.smem %s0, 8
  %s17 = sld [smem:[%s16]]
  %s18 = scalar_lea.smem %s0, 9
  %s19 = sld [smem:[%s18]]
  %s20 = scalar_lea.smem %s0, 10
  %s21 = sld [smem:[%s20]]
  %s22 = scalar_lea.smem %s0, 11
  %s23 = sld [smem:[%s22]]
  %s24 = scalar_lea.smem %s0, 12
  %s25 = sld [smem:[%s24]]
  %s26 = scalar_lea.smem %s0, 13
  %s27 = sld [smem:[%s26]]
  %s28 = scalar_lea.smem %s0, 14
  %s29 = sld [smem:[%s28]]
  %s30 = scalar_lea.smem %s0, 15
  %s31 = sld [smem:[%s30]]
  %s32 = scalar_lea.smem %s0, 16
  %s33 = sld [smem:[%s32]]
  %s34 = scalar_lea.smem %s0, 17
  %s35 = sld [smem:[%s34]]
  %s36 = scalar_lea.smem %s0, 18
  %s37 = sld [smem:[%s36]]
  %s38 = scalar_lea.smem %s0, 19
  %s39 = sld [smem:[%s38]]
  %s40 = scalar_lea.smem %s0, 20
  %s41 = sld [smem:[%s40]]
  %s42 = scalar_lea.smem %s0, 21
  %s43 = sld [smem:[%s42]]
  %s44 = scalar_lea.smem %s0, 22
  %s45 = sld [smem:[%s44]]
  %s46 = scalar_lea.smem %s0, 23
  %s47 = sld [smem:[%s46]]
  %s48 = scalar_lea.smem %s0, 24
  %s49 = sld [smem:[%s48]]
  %s50 = scalar_lea.smem %s0, 25
  %s51 = sld [smem:[%s50]]
  %s52 = scalar_lea.smem %s0, 26
  %s53 = sld [smem:[%s52]]
  %s54 = scalar_lea.smem %s0, 27
  %s55 = sld [smem:[%s54]]
  %s56 = scalar_lea.smem %s0, 28
  %s57 = sld [smem:[%s56]]
  %s58 = scalar_lea.smem %s0, 29
  %s59 = sld [smem:[%s58]]
  %s60 = scalar_lea.smem %s0, 30
  %s61 = sld [smem:[%s60]]
  %s62 = scalar_lea.smem %s0, 31
  %s63 = sld [smem:[%s62]]
  %s64 = scalar_lea.smem %s0, 32
  %s65 = sld [smem:[%s64]]
  %s66 = scalar_lea.smem %s0, 33
  %s67 = sld [smem:[%s66]]
  %s68 = scalar_lea.smem %s0, 34
  %s69 = sld [smem:[%s68]]
  %s70 = scalar_lea.smem %s0, 35
  %s71 = sld [smem:[%s70]]
  %s72 = scalar_lea.smem %s0, 36
  %s73 = sld [smem:[%s72]]
  %s74 = sld [smem:[#allocation0]]
  $region154: #{tpu_custom_call.1} parent=0
    _
  %s76 = ssub.s32 1, %s74
  %s77 = scalar_select 0, %s76, %s74
  %78 = sst [smem:[#allocation2]] %s71
  // Predicated region
  $region2: #{tpu_custom_call.1} parent=0 // pred_check
    _
  $region3: #{tpu_custom_call.1} parent=0 // pred_check_branch
    %80 = sbr.rel (0) target = $region5
  $region4: #{tpu_custom_call.1} parent=0 // pred_region
    _
  $region5: #{tpu_custom_call.1} parent=0 // pred_fallthru
    _
  // Predicated region
  $region6: #{tpu_custom_call.1} parent=0 // pred_check
    _
  $region7: #{tpu_custom_call.1} parent=0 // pred_check_branch
    %82 = sbr.rel (0) target = $region9
  $region8: #{tpu_custom_call.1} parent=0 // pred_region
    _
  $region9: #{tpu_custom_call.1} parent=0 // pred_fallthru
    _
  // Predicated region
  $region10: #{tpu_custom_call.1} parent=0 // pred_check
    _
  $region11: #{tpu_custom_call.1} parent=0 // pred_check_branch
    %84 = sbr.rel (0) target = $region13
  $region12: #{tpu_custom_call.1} parent=0 // pred_region
    _
  $region13: #{tpu_custom_call.1} parent=0 // pred_fallthru
    _
  // Predicated region
  $region14: #{tpu_custom_call.1} parent=0 // pred_check
    _
  $region15: #{tpu_custom_call.1} parent=0 // pred_check_branch
    %86 = sbr.rel (0) target = $region17
  $region16: #{tpu_custom_call.1} parent=0 // pred_region
    _
  $region17: #{tpu_custom_call.1} parent=0 // pred_fallthru
    _
  // Predicated region
  $region18: #{tpu_custom_call.1} parent=0 // pred_check
    _
  $region19: #{tpu_custom_call.1} parent=0 // pred_check_branch
    %88 = sbr.rel (0) target = $region21
  $region20: #{tpu_custom_call.1} parent=0 // pred_region
    _
  $region21: #{tpu_custom_call.1} parent=0 // pred_fallthru
    _
  // Predicated region
  $region22: #{tpu_custom_call.1} parent=0 // pred_check
    _
  $region23: #{tpu_custom_call.1} parent=0 // pred_check_branch
    %90 = sbr.rel (0) target = $region25
  $region24: #{tpu_custom_call.1} parent=0 // pred_region
    _
  $region25: #{tpu_custom_call.1} parent=0 // pred_fallthru
    _
  // Predicated region
  $region26: #{tpu_custom_call.1} parent=0 // pred_check
    _
  $region27: #{tpu_custom_call.1} parent=0 // pred_check_branch
    %92 = sbr.rel (0) target = $region29
  $region28: #{tpu_custom_call.1} parent=0 // pred_region
    _
  $region29: #{tpu_custom_call.1} parent=0 // pred_fallthru
    _
  // Predicated region
  $region30: #{tpu_custom_call.1} parent=0 // pred_check
    _
  $region31: #{tpu_custom_call.1} parent=0 // pred_check_branch
    %94 = sbr.rel (0) target = $region33
  $region32: #{tpu_custom_call.1} parent=0 // pred_region
    _
  $region33: #{tpu_custom_call.1} parent=0 // pred_fallthru
    _
  // Predicated region
  $region34: #{tpu_custom_call.1} parent=0 // pred_check
    _
  $region35: #{tpu_custom_call.1} parent=0 // pred_check_branch
    %96 = sbr.rel (0) target = $region37
  $region36: #{tpu_custom_call.1} parent=0 // pred_region
    _
  $region37: #{tpu_custom_call.1} parent=0 // pred_fallthru
    _
  // Predicated region
  $region38: #{tpu_custom_call.1} parent=0 // pred_check
    _
  $region39: #{tpu_custom_call.1} parent=0 // pred_check_branch
    %98 = sbr.rel (0) target = $region41
  $region40: #{tpu_custom_call.1} parent=0 // pred_region
    _
  $region41: #{tpu_custom_call.1} parent=0 // pred_fallthru
    _
  // Predicated region
  $region42: #{tpu_custom_call.1} parent=0 // pred_check
    _
  $region43: #{tpu_custom_call.1} parent=0 // pred_check_branch
    %100 = sbr.rel (0) target = $region45
  $region44: #{tpu_custom_call.1} parent=0 // pred_region
    _
  $region45: #{tpu_custom_call.1} parent=0 // pred_fallthru
    _
  // Predicated region
  $region46: #{tpu_custom_call.1} parent=0 // pred_check
    _
  $region47: #{tpu_custom_call.1} parent=0 // pred_check_branch
    %102 = sbr.rel (0) target = $region49
  $region48: #{tpu_custom_call.1} parent=0 // pred_region
    _
  $region49: #{tpu_custom_call.1} parent=0 // pred_fallthru
    _
  // Predicated region
  $region50: #{tpu_custom_call.1} parent=0 // pred_check
    _
  $region51: #{tpu_custom_call.1} parent=0 // pred_check_branch
    %104 = sbr.rel (0) target = $region53
  $region52: #{tpu_custom_call.1} parent=0 // pred_region
    _
  $region53: #{tpu_custom_call.1} parent=0 // pred_fallthru
    _
  // Predicated region
  $region54: #{tpu_custom_call.1} parent=0 // pred_check
    _
  $region55: #{tpu_custom_call.1} parent=0 // pred_check_branch
    %106 = sbr.rel (0) target = $region57
  $region56: #{tpu_custom_call.1} parent=0 // pred_region
    _
  $region57: #{tpu_custom_call.1} parent=0 // pred_fallthru
    _
  // Predicated region
  $region58: #{tpu_custom_call.1} parent=0 // pred_check
    _
  $region59: #{tpu_custom_call.1} parent=0 // pred_check_branch
    %108 = sbr.rel (0) target = $region61
  $region60: #{tpu_custom_call.1} parent=0 // pred_region
    _
  $region61: #{tpu_custom_call.1} parent=0 // pred_fallthru
    _
  // Predicated region
  $region62: #{tpu_custom_call.1} parent=0 // pred_check
    _
  $region63: #{tpu_custom_call.1} parent=0 // pred_check_branch
    %110 = sbr.rel (0) target = $region65
  $region64: #{tpu_custom_call.1} parent=0 // pred_region
    _
  $region65: #{tpu_custom_call.1} parent=0 // pred_fallthru
    _
  // Predicated region
  $region66: #{tpu_custom_call.1} parent=0 // pred_check
    _
  $region67: #{tpu_custom_call.1} parent=0 // pred_check_branch
    %112 = sbr.rel (0) target = $region69
  $region68: #{tpu_custom_call.1} parent=0 // pred_region
    _
  $region69: #{tpu_custom_call.1} parent=0 // pred_fallthru
    _
  // Predicated region
  $region70: #{tpu_custom_call.1} parent=0 // pred_check
    _
  $region71: #{tpu_custom_call.1} parent=0 // pred_check_branch
    %114 = sbr.rel (0) target = $region73
  $region72: #{tpu_custom_call.1} parent=0 // pred_region
    _
  $region73: #{tpu_custom_call.1} parent=0 // pred_fallthru
    _
  // Predicated region
  $region74: #{tpu_custom_call.1} parent=0 // pred_check
    _
  $region75: #{tpu_custom_call.1} parent=0 // pred_check_branch
    %116 = sbr.rel (0) target = $region77
  $region76: #{tpu_custom_call.1} parent=0 // pred_region
    _
  $region77: #{tpu_custom_call.1} parent=0 // pred_fallthru
    _
  // Predicated region
  $region78: #{tpu_custom_call.1} parent=0 // pred_check
    _
  $region79: #{tpu_custom_call.1} parent=0 // pred_check_branch
    %118 = sbr.rel (0) target = $region81
  $region80: #{tpu_custom_call.1} parent=0 // pred_region
    _
  $region81: #{tpu_custom_call.1} parent=0 // pred_fallthru
    _
  // Predicated region
  $region82: #{tpu_custom_call.1} parent=0 // pred_check
    _
  $region83: #{tpu_custom_call.1} parent=0 // pred_check_branch
    %120 = sbr.rel (0) target = $region85
  $region84: #{tpu_custom_call.1} parent=0 // pred_region
    _
  $region85: #{tpu_custom_call.1} parent=0 // pred_fallthru
    _
  // Predicated region
  $region86: #{tpu_custom_call.1} parent=0 // pred_check
    _
  $region87: #{tpu_custom_call.1} parent=0 // pred_check_branch
    %122 = sbr.rel (0) target = $region89
  $region88: #{tpu_custom_call.1} parent=0 // pred_region
    _
  $region89: #{tpu_custom_call.1} parent=0 // pred_fallthru
    _
  // Predicated region
  $region90: #{tpu_custom_call.1} parent=0 // pred_check
    _
  $region91: #{tpu_custom_call.1} parent=0 // pred_check_branch
    %124 = sbr.rel (0) target = $region93
  $region92: #{tpu_custom_call.1} parent=0 // pred_region
    _
  $region93: #{tpu_custom_call.1} parent=0 // pred_fallthru
    _
  // Predicated region
  $region94: #{tpu_custom_call.1} parent=0 // pred_check
    _
  $region95: #{tpu_custom_call.1} parent=0 // pred_check_branch
    %126 = sbr.rel (0) target = $region97
  $region96: #{tpu_custom_call.1} parent=0 // pred_region
    _
  $region97: #{tpu_custom_call.1} parent=0 // pred_fallthru
    _
  // Predicated region
  $region98: #{tpu_custom_call.1} parent=0 // pred_check
    _
  $region99: #{tpu_custom_call.1} parent=0 // pred_check_branch
    %128 = sbr.rel (0) target = $region101
  $region100: #{tpu_custom_call.1} parent=0 // pred_region
    _
  $region101: #{tpu_custom_call.1} parent=0 // pred_fallthru
    _
  // Predicated region
  $region102: #{tpu_custom_call.1} parent=0 // pred_check
    _
  $region103: #{tpu_custom_call.1} parent=0 // pred_check_branch
    %130 = sbr.rel (0) target = $region105
  $region104: #{tpu_custom_call.1} parent=0 // pred_region
    _
  $region105: #{tpu_custom_call.1} parent=0 // pred_fallthru
    _
  // Predicated region
  $region106: #{tpu_custom_call.1} parent=0 // pred_check
    _
  $region107: #{tpu_custom_call.1} parent=0 // pred_check_branch
    %132 = sbr.rel (0) target = $region109
  $region108: #{tpu_custom_call.1} parent=0 // pred_region
    _
  $region109: #{tpu_custom_call.1} parent=0 // pred_fallthru
    _
  // Predicated region
  $region110: #{tpu_custom_call.1} parent=0 // pred_check
    _
  $region111: #{tpu_custom_call.1} parent=0 // pred_check_branch
    %134 = sbr.rel (0) target = $region113
  $region112: #{tpu_custom_call.1} parent=0 // pred_region
    _
  $region113: #{tpu_custom_call.1} parent=0 // pred_fallthru
    _
  // Predicated region
  $region114: #{tpu_custom_call.1} parent=0 // pred_check
    _
  $region115: #{tpu_custom_call.1} parent=0 // pred_check_branch
    %136 = sbr.rel (0) target = $region117
  $region116: #{tpu_custom_call.1} parent=0 // pred_region
    _
  $region117: #{tpu_custom_call.1} parent=0 // pred_fallthru
    _
  // Predicated region
  $region118: #{tpu_custom_call.1} parent=0 // pred_check
    _
  $region119: #{tpu_custom_call.1} parent=0 // pred_check_branch
    %138 = sbr.rel (0) target = $region121
  $region120: #{tpu_custom_call.1} parent=0 // pred_region
    _
  $region121: #{tpu_custom_call.1} parent=0 // pred_fallthru
    _
  // Predicated region
  $region122: #{tpu_custom_call.1} parent=0 // pred_check
    _
  $region123: #{tpu_custom_call.1} parent=0 // pred_check_branch
    %140 = sbr.rel (0) target = $region125
  $region124: #{tpu_custom_call.1} parent=0 // pred_region
    _
  $region125: #{tpu_custom_call.1} parent=0 // pred_fallthru
    _
  // Predicated region
  $region126: #{tpu_custom_call.1} parent=0 // pred_check
    _
  $region127: #{tpu_custom_call.1} parent=0 // pred_check_branch
    %142 = sbr.rel (0) target = $region129
  $region128: #{tpu_custom_call.1} parent=0 // pred_region
    _
  $region129: #{tpu_custom_call.1} parent=0 // pred_fallthru
    _
  // Predicated region
  $region130: #{tpu_custom_call.1} parent=0 // pred_check
    _
  $region131: #{tpu_custom_call.1} parent=0 // pred_check_branch
    %144 = sbr.rel (0) target = $region133
  $region132: #{tpu_custom_call.1} parent=0 // pred_region
    _
  $region133: #{tpu_custom_call.1} parent=0 // pred_fallthru
    _
  // Predicated region
  $region134: #{tpu_custom_call.1} parent=0 // pred_check
    _
  $region135: #{tpu_custom_call.1} parent=0 // pred_check_branch
    %146 = sbr.rel (0) target = $region137
  $region136: #{tpu_custom_call.1} parent=0 // pred_region
    _
  $region137: #{tpu_custom_call.1} parent=0 // pred_fallthru
    _
  // Predicated region
  $region138: #{tpu_custom_call.1} parent=0 // pred_check
    _
  $region139: #{tpu_custom_call.1} parent=0 // pred_check_branch
    %148 = sbr.rel (0) target = $region141
  $region140: #{tpu_custom_call.1} parent=0 // pred_region
    _
  $region141: #{tpu_custom_call.1} parent=0 // pred_fallthru
    _
  // Predicated region
  $region142: #{tpu_custom_call.1} parent=0 // pred_check
    _
  $region143: #{tpu_custom_call.1} parent=0 // pred_check_branch
    %150 = sbr.rel (0) target = $region145
  $region144: #{tpu_custom_call.1} parent=0 // pred_region
    _
  $region145: #{tpu_custom_call.1} parent=0 // pred_fallthru
    _
  %v152 = vld [vmem:[%s1] sm:$0xff]
  %v153 = vld [vmem:[%s1 + $0x8] sm:$0xff]
  %v154 = vld [vmem:[%s1 + $0x10] sm:$0xff]
  %v155 = vld [vmem:[%s1 + $0x18] sm:$0xff]
  %v156 = vld [vmem:[%s1 + $0x20] sm:$0xff]
  %v157 = vld [vmem:[%s1 + $0x28] sm:$0xff]
  %v158 = vld [vmem:[%s1 + $0x30] sm:$0xff]
  %v159 = vld [vmem:[%s1 + $0x38] sm:$0xff]
  %v160 = vld [vmem:[%s1 + $0x40] sm:$0xff]
  %v161 = vld [vmem:[%s1 + $0x48] sm:$0xff]
  %v162 = vld [vmem:[%s1 + $0x50] sm:$0xff]
  %v163 = vld [vmem:[%s1 + $0x58] sm:$0xff]
  %v164 = vld [vmem:[%s1 + $0x60] sm:$0xff]
  %v165 = vld [vmem:[%s1 + $0x68] sm:$0xff]
  %v166 = vld [vmem:[%s1 + $0x70] sm:$0xff]
  %v167 = vld [vmem:[%s1 + $0x78] sm:$0xff]
  %v168 = vld [vmem:[%s1 + $0x80] sm:$0xff]
  %v169 = vld [vmem:[%s1 + $0x88] sm:$0xff]
  %v170 = vld [vmem:[%s1 + $0x90] sm:$0xff]
  %v171 = vld [vmem:[%s1 + $0x98] sm:$0xff]
  %v172 = vld [vmem:[%s1 + $0xa0] sm:$0xff]
  %v173 = vld [vmem:[%s1 + $0xa8] sm:$0xff]
  %v174 = vld [vmem:[%s1 + $0xb0] sm:$0xff]
  %v175 = vld [vmem:[%s1 + $0xb8] sm:$0xff]
  %v176 = vld [vmem:[%s1 + $0xc0] sm:$0xff]
  %v177 = vld [vmem:[%s1 + $0xc8] sm:$0xff]
  %v178 = vld [vmem:[%s1 + $0xd0] sm:$0xff]
  %v179 = vld [vmem:[%s1 + $0xd8] sm:$0xff]
  %v180 = vld [vmem:[%s1 + $0xe0] sm:$0xff]
  %v181 = vld [vmem:[%s1 + $0xe8] sm:$0xff]
  %v182 = vld [vmem:[%s1 + $0xf0] sm:$0xff]
  %v183 = vld [vmem:[%s1 + $0xf8] sm:$0xff]
  %v184 = vld [vmem:[%s3] sm:$0xff]
  %v185 = vld [vmem:[%s3 + $0x8] sm:$0xff]
  %v186 = vld [vmem:[%s3 + $0x10] sm:$0xff]
  %v187 = vld [vmem:[%s3 + $0x18] sm:$0xff]
  %v188 = vld [vmem:[%s3 + $0x20] sm:$0xff]
  %v189 = vld [vmem:[%s3 + $0x28] sm:$0xff]
  %v190 = vld [vmem:[%s3 + $0x30] sm:$0xff]
  %v191 = vld [vmem:[%s3 + $0x38] sm:$0xff]
  %v192 = vld [vmem:[%s3 + $0x40] sm:$0xff]
  %v193 = vld [vmem:[%s3 + $0x48] sm:$0xff]
  %v194 = vld [vmem:[%s3 + $0x50] sm:$0xff]
  %v195 = vld [vmem:[%s3 + $0x58] sm:$0xff]
  %v196 = vld [vmem:[%s3 + $0x60] sm:$0xff]
  %v197 = vld [vmem:[%s3 + $0x68] sm:$0xff]
  %v198 = vld [vmem:[%s3 + $0x70] sm:$0xff]
  %v199 = vld [vmem:[%s3 + $0x78] sm:$0xff]
  %v200 = vld [vmem:[%s3 + $0x80] sm:$0xff]
  %v201 = vld [vmem:[%s3 + $0x88] sm:$0xff]
  %v202 = vld [vmem:[%s3 + $0x90] sm:$0xff]
  %v203 = vld [vmem:[%s3 + $0x98] sm:$0xff]
  %v204 = vld [vmem:[%s3 + $0xa0] sm:$0xff]
  %v205 = vld [vmem:[%s3 + $0xa8] sm:$0xff]
  %v206 = vld [vmem:[%s3 + $0xb0] sm:$0xff]
  %v207 = vld [vmem:[%s3 + $0xb8] sm:$0xff]
  %v208 = vld [vmem:[%s3 + $0xc0] sm:$0xff]
  %v209 = vld [vmem:[%s3 + $0xc8] sm:$0xff]
  %v210 = vld [vmem:[%s3 + $0xd0] sm:$0xff]
  %v211 = vld [vmem:[%s3 + $0xd8] sm:$0xff]
  %v212 = vld [vmem:[%s3 + $0xe0] sm:$0xff]
  %v213 = vld [vmem:[%s3 + $0xe8] sm:$0xff]
  %v214 = vld [vmem:[%s3 + $0xf0] sm:$0xff]
  %v215 = vld [vmem:[%s3 + $0xf8] sm:$0xff]
  %v216 = vpack.c.bf16 %v185, %v184
  %v217 = vpack.c.bf16 %v187, %v186
  %v218 = vpack.c.bf16 %v189, %v188
  %v219 = vpack.c.bf16 %v191, %v190
  %v220 = vpack.c.bf16 %v193, %v192
  %v221 = vpack.c.bf16 %v195, %v194
  %v222 = vpack.c.bf16 %v197, %v196
  %v223 = vpack.c.bf16 %v199, %v198
  %v224 = vpack.c.bf16 %v201, %v200
  %v225 = vpack.c.bf16 %v203, %v202
  %v226 = vpack.c.bf16 %v205, %v204
  %v227 = vpack.c.bf16 %v207, %v206
  %v228 = vpack.c.bf16 %v209, %v208
  %v229 = vpack.c.bf16 %v211, %v210
  %v230 = vpack.c.bf16 %v213, %v212
  %v231 = vpack.c.bf16 %v215, %v214
  %v232 = vld [vmem:[%s5] sm:$0xf]
  %v233 = vld [vmem:[%s5 + $0x4] sm:$0xf]
  %v234 = vld [vmem:[%s5 + $0x8] sm:$0xf]
  %v235 = vld [vmem:[%s5 + $0xc] sm:$0xf]
  %v236 = vld [vmem:[%s7] sm:$0x1]
  %v238 = vperm.slane %v236, 0
  %v244 = vunpack.c.l.b16 %v232
  %v245 = vunpack.c.l.b16 %v233
  %v246 = vunpack.c.l.b16 %v234
  %v247 = vunpack.c.l.b16 %v235
  %v248 = vpack.c.b16 %v245, %v244
  %v249 = vpack.c.b16 %v247, %v246
  %vm252 = vcmask 261120
  %v254 = vsel %vm252, %v216, 0
  %v257 = vsel %vm252, %v217, 0
  %v260 = vsel %vm252, %v218, 0
  %v263 = vsel %vm252, %v219, 0
  %v266 = vsel %vm252, %v220, 0
  %v269 = vsel %vm252, %v221, 0
  %v272 = vsel %vm252, %v222, 0
  %v275 = vsel %vm252, %v223, 0
  %v278 = vsel %vm252, %v224, 0
  %v281 = vsel %vm252, %v225, 0
  %v284 = vsel %vm252, %v226, 0
  %v287 = vsel %vm252, %v227, 0
  %v290 = vsel %vm252, %v228, 0
  %v293 = vsel %vm252, %v229, 0
  %v296 = vsel %vm252, %v230, 0
  %v299 = vsel %vm252, %v231, 0
  %301 = vmatpush.bf16.msra.mxu0 0
  %302 = vmatpush.bf16.msra.mxu0 0
  %303 = vmatpush.bf16.msra.mxu0 0
  %304 = vmatpush.bf16.msra.mxu0 0
  %305 = vmatpush.bf16.msra.mxu0 0
  %306 = vmatpush.bf16.msra.mxu0 0
  %307 = vmatpush.bf16.msra.mxu0 %v249
  %308 = vmatpush.bf16.msra.mxu0 %v248
  %309 = vmatmul.bf16.gmra.mxu0 %v254
  %v310 = vpop.f32.mrf.mxu0
  %v311 = vadd.f32 %v238, %v310
  %v312 = vpop.f32.mrf.mxu0
  %v313 = vadd.f32 %v238, %v312
  %314 = vmatmul.bf16.gmra.mxu0 %v257
  %v315 = vpop.f32.mrf.mxu0
  %v316 = vadd.f32 %v238, %v315
  %v317 = vpop.f32.mrf.mxu0
  %v318 = vadd.f32 %v238, %v317
  %319 = vmatmul.bf16.gmra.mxu0 %v260
  %v320 = vpop.f32.mrf.mxu0
  %v321 = vadd.f32 %v238, %v320
  %v322 = vpop.f32.mrf.mxu0
  %v323 = vadd.f32 %v238, %v322
  %324 = vmatmul.bf16.gmra.mxu0 %v263
  %v325 = vpop.f32.mrf.mxu0
  %v326 = vadd.f32 %v238, %v325
  %v327 = vpop.f32.mrf.mxu0
  %v328 = vadd.f32 %v238, %v327
  %329 = vmatmul.bf16.gmra.mxu0 %v266
  %v330 = vpop.f32.mrf.mxu0
  %v331 = vadd.f32 %v238, %v330
  %v332 = vpop.f32.mrf.mxu0
  %v333 = vadd.f32 %v238, %v332
  %334 = vmatmul.bf16.gmra.mxu0 %v269
  %v335 = vpop.f32.mrf.mxu0
  %v336 = vadd.f32 %v238, %v335
  %v337 = vpop.f32.mrf.mxu0
  %v338 = vadd.f32 %v238, %v337
  %339 = vmatmul.bf16.gmra.mxu0 %v272
  %v340 = vpop.f32.mrf.mxu0
  %v341 = vadd.f32 %v238, %v340
  %v342 = vpop.f32.mrf.mxu0
  %v343 = vadd.f32 %v238, %v342
  %344 = vmatmul.bf16.gmra.mxu0 %v275
  %v345 = vpop.f32.mrf.mxu0
  %v346 = vadd.f32 %v238, %v345
  %v347 = vpop.f32.mrf.mxu0
  %v348 = vadd.f32 %v238, %v347
  %349 = vmatmul.bf16.gmra.mxu0 %v278
  %v350 = vpop.f32.mrf.mxu0
  %v351 = vadd.f32 %v238, %v350
  %v352 = vpop.f32.mrf.mxu0
  %v353 = vadd.f32 %v238, %v352
  %354 = vmatmul.bf16.gmra.mxu0 %v281
  %v355 = vpop.f32.mrf.mxu0
  %v356 = vadd.f32 %v238, %v355
  %v357 = vpop.f32.mrf.mxu0
  %v358 = vadd.f32 %v238, %v357
  %359 = vmatmul.bf16.gmra.mxu0 %v284
  %v360 = vpop.f32.mrf.mxu0
  %v361 = vadd.f32 %v238, %v360
  %v362 = vpop.f32.mrf.mxu0
  %v363 = vadd.f32 %v238, %v362
  %364 = vmatmul.bf16.gmra.mxu0 %v287
  %v365 = vpop.f32.mrf.mxu0
  %v366 = vadd.f32 %v238, %v365
  %v367 = vpop.f32.mrf.mxu0
  %v368 = vadd.f32 %v238, %v367
  %369 = vmatmul.bf16.gmra.mxu0 %v290
  %v370 = vpop.f32.mrf.mxu0
  %v371 = vadd.f32 %v238, %v370
  %v372 = vpop.f32.mrf.mxu0
  %v373 = vadd.f32 %v238, %v372
  %374 = vmatmul.bf16.gmra.mxu0 %v293
  %v375 = vpop.f32.mrf.mxu0
  %v376 = vadd.f32 %v238, %v375
  %v377 = vpop.f32.mrf.mxu0
  %v378 = vadd.f32 %v238, %v377
  %379 = vmatmul.bf16.gmra.mxu0 %v296
  %v380 = vpop.f32.mrf.mxu0
  %v381 = vadd.f32 %v238, %v380
  %v382 = vpop.f32.mrf.mxu0
  %v383 = vadd.f32 %v238, %v382
  %384 = vmatmul.bf16.gmra.mxu0 %v299
  %v385 = vpop.f32.mrf.mxu0
  %v386 = vadd.f32 %v238, %v385
  %v387 = vpop.f32.mrf.mxu0
  %v388 = vadd.f32 %v238, %v387
  %389 = vdwg.mxu0
  %v390 = vmax.f32 %v311, 0.0
  %v391 = vmax.f32 %v313, 0.0
  %v392 = vmax.f32 %v316, 0.0
  %v393 = vmax.f32 %v318, 0.0
  %v394 = vmax.f32 %v321, 0.0
  %v395 = vmax.f32 %v323, 0.0
  %v396 = vmax.f32 %v326, 0.0
  %v397 = vmax.f32 %v328, 0.0
  %v398 = vmax.f32 %v331, 0.0
  %v399 = vmax.f32 %v333, 0.0
  %v400 = vmax.f32 %v336, 0.0
  %v401 = vmax.f32 %v338, 0.0
  %v402 = vmax.f32 %v341, 0.0
  %v403 = vmax.f32 %v343, 0.0
  %v404 = vmax.f32 %v346, 0.0
  %v405 = vmax.f32 %v348, 0.0
  %v406 = vmax.f32 %v351, 0.0
  %v407 = vmax.f32 %v353, 0.0
  %v408 = vmax.f32 %v356, 0.0
  %v409 = vmax.f32 %v358, 0.0
  %v410 = vmax.f32 %v361, 0.0
  %v411 = vmax.f32 %v363, 0.0
  %v412 = vmax.f32 %v366, 0.0
  %v413 = vmax.f32 %v368, 0.0
  %v414 = vmax.f32 %v371, 0.0
  %v415 = vmax.f32 %v373, 0.0
  %v416 = vmax.f32 %v376, 0.0
  %v417 = vmax.f32 %v378, 0.0
  %v418 = vmax.f32 %v381, 0.0
  %v419 = vmax.f32 %v383, 0.0
  %v420 = vmax.f32 %v386, 0.0
  %v421 = vmax.f32 %v388, 0.0
  %v422 = vpack.c.bf16 %v391, %v390
  %v423 = vpack.c.bf16 %v393, %v392
  %v424 = vpack.c.bf16 %v395, %v394
  %v425 = vpack.c.bf16 %v397, %v396
  %v426 = vpack.c.bf16 %v399, %v398
  %v427 = vpack.c.bf16 %v401, %v400
  %v428 = vpack.c.bf16 %v403, %v402
  %v429 = vpack.c.bf16 %v405, %v404
  %v430 = vpack.c.bf16 %v407, %v406
  %v431 = vpack.c.bf16 %v409, %v408
  %v432 = vpack.c.bf16 %v411, %v410
  %v433 = vpack.c.bf16 %v413, %v412
  %v434 = vpack.c.bf16 %v415, %v414
  %v435 = vpack.c.bf16 %v417, %v416
  %v436 = vpack.c.bf16 %v419, %v418
  %v437 = vpack.c.bf16 %v421, %v420
  %v438 = vld [vmem:[%s9] sm:$0xf]
  %v439 = vld [vmem:[%s9 + $0x4] sm:$0xf]
  %v440 = vld [vmem:[%s9 + $0x8] sm:$0xf]
  %v441 = vld [vmem:[%s9 + $0xc] sm:$0xf]
  %v442 = vld [vmem:[%s9 + $0x10] sm:$0xf]
  %v443 = vld [vmem:[%s9 + $0x14] sm:$0xf]
  %v444 = vld [vmem:[%s9 + $0x18] sm:$0xf]
  %v445 = vld [vmem:[%s9 + $0x1c] sm:$0xf]
  %v446 = vld [vmem:[%s11] sm:$0x1]
  %v448 = vperm.slane %v446, 0
  %v458 = vunpack.c.l.b16 %v438
  %v459 = vunpack.c.l.b16 %v439
  %v460 = vunpack.c.l.b16 %v440
  %v461 = vunpack.c.l.b16 %v441
  %v462 = vunpack.c.l.b16 %v442
  %v463 = vunpack.c.l.b16 %v443
  %v464 = vunpack.c.l.b16 %v444
  %v465 = vunpack.c.l.b16 %v445
  %v466 = vpack.c.b16 %v459, %v458
  %v467 = vpack.c.b16 %v461, %v460
  %v468 = vpack.c.b16 %v463, %v462
  %v469 = vpack.c.b16 %v465, %v464
  %vm474 = vcmask 523264
  %v476 = vsel %vm474, %v422, 0
  %v479 = vsel %vm474, %v423, 0
  %v482 = vsel %vm474, %v424, 0
  %v485 = vsel %vm474, %v425, 0
  %v488 = vsel %vm474, %v426, 0
  %v491 = vsel %vm474, %v427, 0
  %v494 = vsel %vm474, %v428, 0
  %v497 = vsel %vm474, %v429, 0
  %v500 = vsel %vm474, %v430, 0
  %v503 = vsel %vm474, %v431, 0
  %v506 = vsel %vm474, %v432, 0
  %v509 = vsel %vm474, %v433, 0
  %v512 = vsel %vm474, %v434, 0
  %v515 = vsel %vm474, %v435, 0
  %v518 = vsel %vm474, %v436, 0
  %v521 = vsel %vm474, %v437, 0
  %523 = vmatpush.bf16.msra.mxu0 0
  %524 = vmatpush.bf16.msra.mxu0 0
  %525 = vmatpush.bf16.msra.mxu0 0
  %526 = vmatpush.bf16.msra.mxu0 0
  %527 = vmatpush.bf16.msra.mxu0 %v469
  %528 = vmatpush.bf16.msra.mxu0 %v468
  %529 = vmatpush.bf16.msra.mxu0 %v467
  %530 = vmatpush.bf16.msra.mxu0 %v466
  %531 = vmatmul.bf16.gmra.mxu0 %v476
  %v532 = vpop.f32.mrf.mxu0
  %v533 = vadd.f32 %v448, %v532
  %v534 = vpop.f32.mrf.mxu0
  %v535 = vadd.f32 %v448, %v534
  %536 = vmatmul.bf16.gmra.mxu0 %v479
  %v537 = vpop.f32.mrf.mxu0
  %v538 = vadd.f32 %v448, %v537
  %v539 = vpop.f32.mrf.mxu0
  %v540 = vadd.f32 %v448, %v539
  %541 = vmatmul.bf16.gmra.mxu0 %v482
  %v542 = vpop.f32.mrf.mxu0
  %v543 = vadd.f32 %v448, %v542
  %v544 = vpop.f32.mrf.mxu0
  %v545 = vadd.f32 %v448, %v544
  %546 = vmatmul.bf16.gmra.mxu0 %v485
  %v547 = vpop.f32.mrf.mxu0
  %v548 = vadd.f32 %v448, %v547
  %v549 = vpop.f32.mrf.mxu0
  %v550 = vadd.f32 %v448, %v549
  %551 = vmatmul.bf16.gmra.mxu0 %v488
  %v552 = vpop.f32.mrf.mxu0
  %v553 = vadd.f32 %v448, %v552
  %v554 = vpop.f32.mrf.mxu0
  %v555 = vadd.f32 %v448, %v554
  %556 = vmatmul.bf16.gmra.mxu0 %v491
  %v557 = vpop.f32.mrf.mxu0
  %v558 = vadd.f32 %v448, %v557
  %v559 = vpop.f32.mrf.mxu0
  %v560 = vadd.f32 %v448, %v559
  %561 = vmatmul.bf16.gmra.mxu0 %v494
  %v562 = vpop.f32.mrf.mxu0
  %v563 = vadd.f32 %v448, %v562
  %v564 = vpop.f32.mrf.mxu0
  %v565 = vadd.f32 %v448, %v564
  %566 = vmatmul.bf16.gmra.mxu0 %v497
  %v567 = vpop.f32.mrf.mxu0
  %v568 = vadd.f32 %v448, %v567
  %v569 = vpop.f32.mrf.mxu0
  %v570 = vadd.f32 %v448, %v569
  %571 = vmatmul.bf16.gmra.mxu0 %v500
  %v572 = vpop.f32.mrf.mxu0
  %v573 = vadd.f32 %v448, %v572
  %v574 = vpop.f32.mrf.mxu0
  %v575 = vadd.f32 %v448, %v574
  %576 = vmatmul.bf16.gmra.mxu0 %v503
  %v577 = vpop.f32.mrf.mxu0
  %v578 = vadd.f32 %v448, %v577
  %v579 = vpop.f32.mrf.mxu0
  %v580 = vadd.f32 %v448, %v579
  %581 = vmatmul.bf16.gmra.mxu0 %v506
  %v582 = vpop.f32.mrf.mxu0
  %v583 = vadd.f32 %v448, %v582
  %v584 = vpop.f32.mrf.mxu0
  %v585 = vadd.f32 %v448, %v584
  %586 = vmatmul.bf16.gmra.mxu0 %v509
  %v587 = vpop.f32.mrf.mxu0
  %v588 = vadd.f32 %v448, %v587
  %v589 = vpop.f32.mrf.mxu0
  %v590 = vadd.f32 %v448, %v589
  %591 = vmatmul.bf16.gmra.mxu0 %v512
  %v592 = vpop.f32.mrf.mxu0
  %v593 = vadd.f32 %v448, %v592
  %v594 = vpop.f32.mrf.mxu0
  %v595 = vadd.f32 %v448, %v594
  %596 = vmatmul.bf16.gmra.mxu0 %v515
  %v597 = vpop.f32.mrf.mxu0
  %v598 = vadd.f32 %v448, %v597
  %v599 = vpop.f32.mrf.mxu0
  %v600 = vadd.f32 %v448, %v599
  %601 = vmatmul.bf16.gmra.mxu0 %v518
  %v602 = vpop.f32.mrf.mxu0
  %v603 = vadd.f32 %v448, %v602
  %v604 = vpop.f32.mrf.mxu0
  %v605 = vadd.f32 %v448, %v604
  %606 = vmatmul.bf16.gmra.mxu0 %v521
  %v607 = vpop.f32.mrf.mxu0
  %v608 = vadd.f32 %v448, %v607
  %v609 = vpop.f32.mrf.mxu0
  %v610 = vadd.f32 %v448, %v609
  %611 = vdwg.mxu0
  %v612 = vmax.f32 %v533, 0.0
  %v613 = vmax.f32 %v535, 0.0
  %v614 = vmax.f32 %v538, 0.0
  %v615 = vmax.f32 %v540, 0.0
  %v616 = vmax.f32 %v543, 0.0
  %v617 = vmax.f32 %v545, 0.0
  %v618 = vmax.f32 %v548, 0.0
  %v619 = vmax.f32 %v550, 0.0
  %v620 = vmax.f32 %v553, 0.0
  %v621 = vmax.f32 %v555, 0.0
  %v622 = vmax.f32 %v558, 0.0
  %v623 = vmax.f32 %v560, 0.0
  %v624 = vmax.f32 %v563, 0.0
  %v625 = vmax.f32 %v565, 0.0
  %v626 = vmax.f32 %v568, 0.0
  %v627 = vmax.f32 %v570, 0.0
  %v628 = vmax.f32 %v573, 0.0
  %v629 = vmax.f32 %v575, 0.0
  %v630 = vmax.f32 %v578, 0.0
  %v631 = vmax.f32 %v580, 0.0
  %v632 = vmax.f32 %v583, 0.0
  %v633 = vmax.f32 %v585, 0.0
  %v634 = vmax.f32 %v588, 0.0
  %v635 = vmax.f32 %v590, 0.0
  %v636 = vmax.f32 %v593, 0.0
  %v637 = vmax.f32 %v595, 0.0
  %v638 = vmax.f32 %v598, 0.0
  %v639 = vmax.f32 %v600, 0.0
  %v640 = vmax.f32 %v603, 0.0
  %v641 = vmax.f32 %v605, 0.0
  %v642 = vmax.f32 %v608, 0.0
  %v643 = vmax.f32 %v610, 0.0
  %v644 = vpack.c.bf16 %v613, %v612
  %v645 = vpack.c.bf16 %v615, %v614
  %v646 = vpack.c.bf16 %v617, %v616
  %v647 = vpack.c.bf16 %v619, %v618
  %v648 = vpack.c.bf16 %v621, %v620
  %v649 = vpack.c.bf16 %v623, %v622
  %v650 = vpack.c.bf16 %v625, %v624
  %v651 = vpack.c.bf16 %v627, %v626
  %v652 = vpack.c.bf16 %v629, %v628
  %v653 = vpack.c.bf16 %v631, %v630
  %v654 = vpack.c.bf16 %v633, %v632
  %v655 = vpack.c.bf16 %v635, %v634
  %v656 = vpack.c.bf16 %v637, %v636
  %v657 = vpack.c.bf16 %v639, %v638
  %v658 = vpack.c.bf16 %v641, %v640
  %v659 = vpack.c.bf16 %v643, %v642
  %v660 = vld [vmem:[%s13] sm:$0xf]
  %v661 = vld [vmem:[%s13 + $0x4] sm:$0xf]
  %v662 = vld [vmem:[%s13 + $0x8] sm:$0xf]
  %v663 = vld [vmem:[%s13 + $0xc] sm:$0xf]
  %v664 = vld [vmem:[%s13 + $0x10] sm:$0xf]
  %v665 = vld [vmem:[%s13 + $0x14] sm:$0xf]
  %v666 = vld [vmem:[%s13 + $0x18] sm:$0xf]
  %v667 = vld [vmem:[%s13 + $0x1c] sm:$0xf]
  %v668 = vld [vmem:[%s15] sm:$0x1]
  %v670 = vperm.slane %v668, 0
  %v680 = vunpack.c.l.b16 %v660
  %v681 = vunpack.c.l.b16 %v661
  %v682 = vunpack.c.l.b16 %v662
  %v683 = vunpack.c.l.b16 %v663
  %v684 = vunpack.c.l.b16 %v664
  %v685 = vunpack.c.l.b16 %v665
  %v686 = vunpack.c.l.b16 %v666
  %v687 = vunpack.c.l.b16 %v667
  %v688 = vpack.c.b16 %v681, %v680
  %v689 = vpack.c.b16 %v683, %v682
  %v690 = vpack.c.b16 %v685, %v684
  %v691 = vpack.c.b16 %v687, %v686
  %v697 = vsel %vm474, %v644, 0
  %v700 = vsel %vm474, %v645, 0
  %v703 = vsel %vm474, %v646, 0
  %v706 = vsel %vm474, %v647, 0
  %v709 = vsel %vm474, %v648, 0
  %v712 = vsel %vm474, %v649, 0
  %v715 = vsel %vm474, %v650, 0
  %v718 = vsel %vm474, %v651, 0
  %v721 = vsel %vm474, %v652, 0
  %v724 = vsel %vm474, %v653, 0
  %v727 = vsel %vm474, %v654, 0
  %v730 = vsel %vm474, %v655, 0
  %v733 = vsel %vm474, %v656, 0
  %v736 = vsel %vm474, %v657, 0
  %v739 = vsel %vm474, %v658, 0
  %v742 = vsel %vm474, %v659, 0
  %744 = vmatpush.bf16.msra.mxu0 0
  %745 = vmatpush.bf16.msra.mxu0 0
  %746 = vmatpush.bf16.msra.mxu0 0
  %747 = vmatpush.bf16.msra.mxu0 0
  %748 = vmatpush.bf16.msra.mxu0 %v691
  %749 = vmatpush.bf16.msra.mxu0 %v690
  %750 = vmatpush.bf16.msra.mxu0 %v689
  %751 = vmatpush.bf16.msra.mxu0 %v688
  %752 = vmatmul.bf16.gmra.mxu0 %v697
  %v753 = vpop.f32.mrf.mxu0
  %v754 = vadd.f32 %v670, %v753
  %v755 = vpop.f32.mrf.mxu0
  %v756 = vadd.f32 %v670, %v755
  %757 = vmatmul.bf16.gmra.mxu0 %v700
  %v758 = vpop.f32.mrf.mxu0
  %v759 = vadd.f32 %v670, %v758
  %v760 = vpop.f32.mrf.mxu0
  %v761 = vadd.f32 %v670, %v760
  %762 = vmatmul.bf16.gmra.mxu0 %v703
  %v763 = vpop.f32.mrf.mxu0
  %v764 = vadd.f32 %v670, %v763
  %v765 = vpop.f32.mrf.mxu0
  %v766 = vadd.f32 %v670, %v765
  %767 = vmatmul.bf16.gmra.mxu0 %v706
  %v768 = vpop.f32.mrf.mxu0
  %v769 = vadd.f32 %v670, %v768
  %v770 = vpop.f32.mrf.mxu0
  %v771 = vadd.f32 %v670, %v770
  %772 = vmatmul.bf16.gmra.mxu0 %v709
  %v773 = vpop.f32.mrf.mxu0
  %v774 = vadd.f32 %v670, %v773
  %v775 = vpop.f32.mrf.mxu0
  %v776 = vadd.f32 %v670, %v775
  %777 = vmatmul.bf16.gmra.mxu0 %v712
  %v778 = vpop.f32.mrf.mxu0
  %v779 = vadd.f32 %v670, %v778
  %v780 = vpop.f32.mrf.mxu0
  %v781 = vadd.f32 %v670, %v780
  %782 = vmatmul.bf16.gmra.mxu0 %v715
  %v783 = vpop.f32.mrf.mxu0
  %v784 = vadd.f32 %v670, %v783
  %v785 = vpop.f32.mrf.mxu0
  %v786 = vadd.f32 %v670, %v785
  %787 = vmatmul.bf16.gmra.mxu0 %v718
  %v788 = vpop.f32.mrf.mxu0
  %v789 = vadd.f32 %v670, %v788
  %v790 = vpop.f32.mrf.mxu0
  %v791 = vadd.f32 %v670, %v790
  %792 = vmatmul.bf16.gmra.mxu0 %v721
  %v793 = vpop.f32.mrf.mxu0
  %v794 = vadd.f32 %v670, %v793
  %v795 = vpop.f32.mrf.mxu0
  %v796 = vadd.f32 %v670, %v795
  %797 = vmatmul.bf16.gmra.mxu0 %v724
  %v798 = vpop.f32.mrf.mxu0
  %v799 = vadd.f32 %v670, %v798
  %v800 = vpop.f32.mrf.mxu0
  %v801 = vadd.f32 %v670, %v800
  %802 = vmatmul.bf16.gmra.mxu0 %v727
  %v803 = vpop.f32.mrf.mxu0
  %v804 = vadd.f32 %v670, %v803
  %v805 = vpop.f32.mrf.mxu0
  %v806 = vadd.f32 %v670, %v805
  %807 = vmatmul.bf16.gmra.mxu0 %v730
  %v808 = vpop.f32.mrf.mxu0
  %v809 = vadd.f32 %v670, %v808
  %v810 = vpop.f32.mrf.mxu0
  %v811 = vadd.f32 %v670, %v810
  %812 = vmatmul.bf16.gmra.mxu0 %v733
  %v813 = vpop.f32.mrf.mxu0
  %v814 = vadd.f32 %v670, %v813
  %v815 = vpop.f32.mrf.mxu0
  %v816 = vadd.f32 %v670, %v815
  %817 = vmatmul.bf16.gmra.mxu0 %v736
  %v818 = vpop.f32.mrf.mxu0
  %v819 = vadd.f32 %v670, %v818
  %v820 = vpop.f32.mrf.mxu0
  %v821 = vadd.f32 %v670, %v820
  %822 = vmatmul.bf16.gmra.mxu0 %v739
  %v823 = vpop.f32.mrf.mxu0
  %v824 = vadd.f32 %v670, %v823
  %v825 = vpop.f32.mrf.mxu0
  %v826 = vadd.f32 %v670, %v825
  %827 = vmatmul.bf16.gmra.mxu0 %v742
  %v828 = vpop.f32.mrf.mxu0
  %v829 = vadd.f32 %v670, %v828
  %v830 = vpop.f32.mrf.mxu0
  %v831 = vadd.f32 %v670, %v830
  %832 = vdwg.mxu0
  %v833 = vmax.f32 %v754, 0.0
  %v834 = vmax.f32 %v756, 0.0
  %v835 = vmax.f32 %v759, 0.0
  %v836 = vmax.f32 %v761, 0.0
  %v837 = vmax.f32 %v764, 0.0
  %v838 = vmax.f32 %v766, 0.0
  %v839 = vmax.f32 %v769, 0.0
  %v840 = vmax.f32 %v771, 0.0
  %v841 = vmax.f32 %v774, 0.0
  %v842 = vmax.f32 %v776, 0.0
  %v843 = vmax.f32 %v779, 0.0
  %v844 = vmax.f32 %v781, 0.0
  %v845 = vmax.f32 %v784, 0.0
  %v846 = vmax.f32 %v786, 0.0
  %v847 = vmax.f32 %v789, 0.0
  %v848 = vmax.f32 %v791, 0.0
  %v849 = vmax.f32 %v794, 0.0
  %v850 = vmax.f32 %v796, 0.0
  %v851 = vmax.f32 %v799, 0.0
  %v852 = vmax.f32 %v801, 0.0
  %v853 = vmax.f32 %v804, 0.0
  %v854 = vmax.f32 %v806, 0.0
  %v855 = vmax.f32 %v809, 0.0
  %v856 = vmax.f32 %v811, 0.0
  %v857 = vmax.f32 %v814, 0.0
  %v858 = vmax.f32 %v816, 0.0
  %v859 = vmax.f32 %v819, 0.0
  %v860 = vmax.f32 %v821, 0.0
  %v861 = vmax.f32 %v824, 0.0
  %v862 = vmax.f32 %v826, 0.0
  %v863 = vmax.f32 %v829, 0.0
  %v864 = vmax.f32 %v831, 0.0
  %v865 = vpack.c.bf16 %v834, %v833
  %v866 = vpack.c.bf16 %v836, %v835
  %v867 = vpack.c.bf16 %v838, %v837
  %v868 = vpack.c.bf16 %v840, %v839
  %v869 = vpack.c.bf16 %v842, %v841
  %v870 = vpack.c.bf16 %v844, %v843
  %v871 = vpack.c.bf16 %v846, %v845
  %v872 = vpack.c.bf16 %v848, %v847
  %v873 = vpack.c.bf16 %v850, %v849
  %v874 = vpack.c.bf16 %v852, %v851
  %v875 = vpack.c.bf16 %v854, %v853
  %v876 = vpack.c.bf16 %v856, %v855
  %v877 = vpack.c.bf16 %v858, %v857
  %v878 = vpack.c.bf16 %v860, %v859
  %v879 = vpack.c.bf16 %v862, %v861
  %v880 = vpack.c.bf16 %v864, %v863
  %v881 = vld [vmem:[%s17] sm:$0xf]
  %v882 = vld [vmem:[%s17 + $0x4] sm:$0xf]
  %v883 = vld [vmem:[%s17 + $0x8] sm:$0xf]
  %v884 = vld [vmem:[%s17 + $0xc] sm:$0xf]
  %v885 = vld [vmem:[%s17 + $0x10] sm:$0xf]
  %v886 = vld [vmem:[%s17 + $0x14] sm:$0xf]
  %v887 = vld [vmem:[%s17 + $0x18] sm:$0xf]
  %v888 = vld [vmem:[%s17 + $0x1c] sm:$0xf]
  %v889 = vld [vmem:[%s19] sm:$0x1]
  %v891 = vperm.slane %v889, 0
  %v901 = vunpack.c.l.b16 %v881
  %v902 = vunpack.c.l.b16 %v882
  %v903 = vunpack.c.l.b16 %v883
  %v904 = vunpack.c.l.b16 %v884
  %v905 = vunpack.c.l.b16 %v885
  %v906 = vunpack.c.l.b16 %v886
  %v907 = vunpack.c.l.b16 %v887
  %v908 = vunpack.c.l.b16 %v888
  %v909 = vpack.c.b16 %v902, %v901
  %v910 = vpack.c.b16 %v904, %v903
  %v911 = vpack.c.b16 %v906, %v905
  %v912 = vpack.c.b16 %v908, %v907
  %v918 = vsel %vm474, %v865, 0
  %v921 = vsel %vm474, %v866, 0
  %v924 = vsel %vm474, %v867, 0
  %v927 = vsel %vm474, %v868, 0
  %v930 = vsel %vm474, %v869, 0
  %v933 = vsel %vm474, %v870, 0
  %v936 = vsel %vm474, %v871, 0
  %v939 = vsel %vm474, %v872, 0
  %v942 = vsel %vm474, %v873, 0
  %v945 = vsel %vm474, %v874, 0
  %v948 = vsel %vm474, %v875, 0
  %v951 = vsel %vm474, %v876, 0
  %v954 = vsel %vm474, %v877, 0
  %v957 = vsel %vm474, %v878, 0
  %v960 = vsel %vm474, %v879, 0
  %v963 = vsel %vm474, %v880, 0
  %965 = vmatpush.bf16.msra.mxu0 0
  %966 = vmatpush.bf16.msra.mxu0 0
  %967 = vmatpush.bf16.msra.mxu0 0
  %968 = vmatpush.bf16.msra.mxu0 0
  %969 = vmatpush.bf16.msra.mxu0 %v912
  %970 = vmatpush.bf16.msra.mxu0 %v911
  %971 = vmatpush.bf16.msra.mxu0 %v910
  %972 = vmatpush.bf16.msra.mxu0 %v909
  %973 = vmatmul.bf16.gmra.mxu0 %v918
  %v974 = vpop.f32.mrf.mxu0
  %v975 = vadd.f32 %v891, %v974
  %v976 = vpop.f32.mrf.mxu0
  %v977 = vadd.f32 %v891, %v976
  %978 = vmatmul.bf16.gmra.mxu0 %v921
  %v979 = vpop.f32.mrf.mxu0
  %v980 = vadd.f32 %v891, %v979
  %v981 = vpop.f32.mrf.mxu0
  %v982 = vadd.f32 %v891, %v981
  %983 = vmatmul.bf16.gmra.mxu0 %v924
  %v984 = vpop.f32.mrf.mxu0
  %v985 = vadd.f32 %v891, %v984
  %v986 = vpop.f32.mrf.mxu0
  %v987 = vadd.f32 %v891, %v986
  %988 = vmatmul.bf16.gmra.mxu0 %v927
  %v989 = vpop.f32.mrf.mxu0
  %v990 = vadd.f32 %v891, %v989
  %v991 = vpop.f32.mrf.mxu0
  %v992 = vadd.f32 %v891, %v991
  %993 = vmatmul.bf16.gmra.mxu0 %v930
  %v994 = vpop.f32.mrf.mxu0
  %v995 = vadd.f32 %v891, %v994
  %v996 = vpop.f32.mrf.mxu0
  %v997 = vadd.f32 %v891, %v996
  %998 = vmatmul.bf16.gmra.mxu0 %v933
  %v999 = vpop.f32.mrf.mxu0
  %v1000 = vadd.f32 %v891, %v999
  %v1001 = vpop.f32.mrf.mxu0
  %v1002 = vadd.f32 %v891, %v1001
  %1003 = vmatmul.bf16.gmra.mxu0 %v936
  %v1004 = vpop.f32.mrf.mxu0
  %v1005 = vadd.f32 %v891, %v1004
  %v1006 = vpop.f32.mrf.mxu0
  %v1007 = vadd.f32 %v891, %v1006
  %1008 = vmatmul.bf16.gmra.mxu0 %v939
  %v1009 = vpop.f32.mrf.mxu0
  %v1010 = vadd.f32 %v891, %v1009
  %v1011 = vpop.f32.mrf.mxu0
  %v1012 = vadd.f32 %v891, %v1011
  %1013 = vmatmul.bf16.gmra.mxu0 %v942
  %v1014 = vpop.f32.mrf.mxu0
  %v1015 = vadd.f32 %v891, %v1014
  %v1016 = vpop.f32.mrf.mxu0
  %v1017 = vadd.f32 %v891, %v1016
  %1018 = vmatmul.bf16.gmra.mxu0 %v945
  %v1019 = vpop.f32.mrf.mxu0
  %v1020 = vadd.f32 %v891, %v1019
  %v1021 = vpop.f32.mrf.mxu0
  %v1022 = vadd.f32 %v891, %v1021
  %1023 = vmatmul.bf16.gmra.mxu0 %v948
  %v1024 = vpop.f32.mrf.mxu0
  %v1025 = vadd.f32 %v891, %v1024
  %v1026 = vpop.f32.mrf.mxu0
  %v1027 = vadd.f32 %v891, %v1026
  %1028 = vmatmul.bf16.gmra.mxu0 %v951
  %v1029 = vpop.f32.mrf.mxu0
  %v1030 = vadd.f32 %v891, %v1029
  %v1031 = vpop.f32.mrf.mxu0
  %v1032 = vadd.f32 %v891, %v1031
  %1033 = vmatmul.bf16.gmra.mxu0 %v954
  %v1034 = vpop.f32.mrf.mxu0
  %v1035 = vadd.f32 %v891, %v1034
  %v1036 = vpop.f32.mrf.mxu0
  %v1037 = vadd.f32 %v891, %v1036
  %1038 = vmatmul.bf16.gmra.mxu0 %v957
  %v1039 = vpop.f32.mrf.mxu0
  %v1040 = vadd.f32 %v891, %v1039
  %v1041 = vpop.f32.mrf.mxu0
  %v1042 = vadd.f32 %v891, %v1041
  %1043 = vmatmul.bf16.gmra.mxu0 %v960
  %v1044 = vpop.f32.mrf.mxu0
  %v1045 = vadd.f32 %v891, %v1044
  %v1046 = vpop.f32.mrf.mxu0
  %v1047 = vadd.f32 %v891, %v1046
  %1048 = vmatmul.bf16.gmra.mxu0 %v963
  %v1049 = vpop.f32.mrf.mxu0
  %v1050 = vadd.f32 %v891, %v1049
  %v1051 = vpop.f32.mrf.mxu0
  %v1052 = vadd.f32 %v891, %v1051
  %1053 = vdwg.mxu0
  %v1054 = vadd.f32 %v152, %v975
  %v1055 = vadd.f32 %v153, %v977
  %v1056 = vadd.f32 %v154, %v980
  %v1057 = vadd.f32 %v155, %v982
  %v1058 = vadd.f32 %v156, %v985
  %v1059 = vadd.f32 %v157, %v987
  %v1060 = vadd.f32 %v158, %v990
  %v1061 = vadd.f32 %v159, %v992
  %v1062 = vadd.f32 %v160, %v995
  %v1063 = vadd.f32 %v161, %v997
  %v1064 = vadd.f32 %v162, %v1000
  %v1065 = vadd.f32 %v163, %v1002
  %v1066 = vadd.f32 %v164, %v1005
  %v1067 = vadd.f32 %v165, %v1007
  %v1068 = vadd.f32 %v166, %v1010
  %v1069 = vadd.f32 %v167, %v1012
  %v1070 = vadd.f32 %v168, %v1015
  %v1071 = vadd.f32 %v169, %v1017
  %v1072 = vadd.f32 %v170, %v1020
  %v1073 = vadd.f32 %v171, %v1022
  %v1074 = vadd.f32 %v172, %v1025
  %v1075 = vadd.f32 %v173, %v1027
  %v1076 = vadd.f32 %v174, %v1030
  %v1077 = vadd.f32 %v175, %v1032
  %v1078 = vadd.f32 %v176, %v1035
  %v1079 = vadd.f32 %v177, %v1037
  %v1080 = vadd.f32 %v178, %v1040
  %v1081 = vadd.f32 %v179, %v1042
  %v1082 = vadd.f32 %v180, %v1045
  %v1083 = vadd.f32 %v181, %v1047
  %v1084 = vadd.f32 %v182, %v1050
  %v1085 = vadd.f32 %v183, %v1052
  %v1086 = vpack.c.bf16 %v1055, %v1054
  %v1087 = vpack.c.bf16 %v1057, %v1056
  %v1088 = vpack.c.bf16 %v1059, %v1058
  %v1089 = vpack.c.bf16 %v1061, %v1060
  %v1090 = vpack.c.bf16 %v1063, %v1062
  %v1091 = vpack.c.bf16 %v1065, %v1064
  %v1092 = vpack.c.bf16 %v1067, %v1066
  %v1093 = vpack.c.bf16 %v1069, %v1068
  %v1094 = vpack.c.bf16 %v1071, %v1070
  %v1095 = vpack.c.bf16 %v1073, %v1072
  %v1096 = vpack.c.bf16 %v1075, %v1074
  %v1097 = vpack.c.bf16 %v1077, %v1076
  %v1098 = vpack.c.bf16 %v1079, %v1078
  %v1099 = vpack.c.bf16 %v1081, %v1080
  %v1100 = vpack.c.bf16 %v1083, %v1082
  %v1101 = vpack.c.bf16 %v1085, %v1084
  %v1102 = vld [vmem:[%s21] sm:$0xf]
  %v1103 = vld [vmem:[%s21 + $0x4] sm:$0xf]
  %v1104 = vld [vmem:[%s21 + $0x8] sm:$0xf]
  %v1105 = vld [vmem:[%s21 + $0xc] sm:$0xf]
  %v1106 = vld [vmem:[%s23] sm:$0x1]
  %v1108 = vperm.slane %v1106, 0
  %v1114 = vunpack.c.l.b16 %v1102
  %v1115 = vunpack.c.l.b16 %v1103
  %v1116 = vunpack.c.l.b16 %v1104
  %v1117 = vunpack.c.l.b16 %v1105
  %v1118 = vpack.c.b16 %v1115, %v1114
  %v1119 = vpack.c.b16 %v1117, %v1116
  %v1123 = vsel %vm252, %v1086, 0
  %v1126 = vsel %vm252, %v1087, 0
  %v1129 = vsel %vm252, %v1088, 0
  %v1132 = vsel %vm252, %v1089, 0
  %v1135 = vsel %vm252, %v1090, 0
  %v1138 = vsel %vm252, %v1091, 0
  %v1141 = vsel %vm252, %v1092, 0
  %v1144 = vsel %vm252, %v1093, 0
  %v1147 = vsel %vm252, %v1094, 0
  %v1150 = vsel %vm252, %v1095, 0
  %v1153 = vsel %vm252, %v1096, 0
  %v1156 = vsel %vm252, %v1097, 0
  %v1159 = vsel %vm252, %v1098, 0
  %v1162 = vsel %vm252, %v1099, 0
  %v1165 = vsel %vm252, %v1100, 0
  %v1168 = vsel %vm252, %v1101, 0
  %1170 = vmatpush.bf16.msra.mxu0 0
  %1171 = vmatpush.bf16.msra.mxu0 0
  %1172 = vmatpush.bf16.msra.mxu0 0
  %1173 = vmatpush.bf16.msra.mxu0 0
  %1174 = vmatpush.bf16.msra.mxu0 0
  %1175 = vmatpush.bf16.msra.mxu0 0
  %1176 = vmatpush.bf16.msra.mxu0 %v1119
  %1177 = vmatpush.bf16.msra.mxu0 %v1118
  %1178 = vmatmul.bf16.gmra.mxu0 %v1123
  %v1179 = vpop.f32.mrf.mxu0
  %v1180 = vadd.f32 %v1108, %v1179
  %v1181 = vpop.f32.mrf.mxu0
  %v1182 = vadd.f32 %v1108, %v1181
  %1183 = vmatmul.bf16.gmra.mxu0 %v1126
  %v1184 = vpop.f32.mrf.mxu0
  %v1185 = vadd.f32 %v1108, %v1184
  %v1186 = vpop.f32.mrf.mxu0
  %v1187 = vadd.f32 %v1108, %v1186
  %1188 = vmatmul.bf16.gmra.mxu0 %v1129
  %v1189 = vpop.f32.mrf.mxu0
  %v1190 = vadd.f32 %v1108, %v1189
  %v1191 = vpop.f32.mrf.mxu0
  %v1192 = vadd.f32 %v1108, %v1191
  %1193 = vmatmul.bf16.gmra.mxu0 %v1132
  %v1194 = vpop.f32.mrf.mxu0
  %v1195 = vadd.f32 %v1108, %v1194
  %v1196 = vpop.f32.mrf.mxu0
  %v1197 = vadd.f32 %v1108, %v1196
  %1198 = vmatmul.bf16.gmra.mxu0 %v1135
  %v1199 = vpop.f32.mrf.mxu0
  %v1200 = vadd.f32 %v1108, %v1199
  %v1201 = vpop.f32.mrf.mxu0
  %v1202 = vadd.f32 %v1108, %v1201
  %1203 = vmatmul.bf16.gmra.mxu0 %v1138
  %v1204 = vpop.f32.mrf.mxu0
  %v1205 = vadd.f32 %v1108, %v1204
  %v1206 = vpop.f32.mrf.mxu0
  %v1207 = vadd.f32 %v1108, %v1206
  %1208 = vmatmul.bf16.gmra.mxu0 %v1141
  %v1209 = vpop.f32.mrf.mxu0
  %v1210 = vadd.f32 %v1108, %v1209
  %v1211 = vpop.f32.mrf.mxu0
  %v1212 = vadd.f32 %v1108, %v1211
  %1213 = vmatmul.bf16.gmra.mxu0 %v1144
  %v1214 = vpop.f32.mrf.mxu0
  %v1215 = vadd.f32 %v1108, %v1214
  %v1216 = vpop.f32.mrf.mxu0
  %v1217 = vadd.f32 %v1108, %v1216
  %1218 = vmatmul.bf16.gmra.mxu0 %v1147
  %v1219 = vpop.f32.mrf.mxu0
  %v1220 = vadd.f32 %v1108, %v1219
  %v1221 = vpop.f32.mrf.mxu0
  %v1222 = vadd.f32 %v1108, %v1221
  %1223 = vmatmul.bf16.gmra.mxu0 %v1150
  %v1224 = vpop.f32.mrf.mxu0
  %v1225 = vadd.f32 %v1108, %v1224
  %v1226 = vpop.f32.mrf.mxu0
  %v1227 = vadd.f32 %v1108, %v1226
  %1228 = vmatmul.bf16.gmra.mxu0 %v1153
  %v1229 = vpop.f32.mrf.mxu0
  %v1230 = vadd.f32 %v1108, %v1229
  %v1231 = vpop.f32.mrf.mxu0
  %v1232 = vadd.f32 %v1108, %v1231
  %1233 = vmatmul.bf16.gmra.mxu0 %v1156
  %v1234 = vpop.f32.mrf.mxu0
  %v1235 = vadd.f32 %v1108, %v1234
  %v1236 = vpop.f32.mrf.mxu0
  %v1237 = vadd.f32 %v1108, %v1236
  %1238 = vmatmul.bf16.gmra.mxu0 %v1159
  %v1239 = vpop.f32.mrf.mxu0
  %v1240 = vadd.f32 %v1108, %v1239
  %v1241 = vpop.f32.mrf.mxu0
  %v1242 = vadd.f32 %v1108, %v1241
  %1243 = vmatmul.bf16.gmra.mxu0 %v1162
  %v1244 = vpop.f32.mrf.mxu0
  %v1245 = vadd.f32 %v1108, %v1244
  %v1246 = vpop.f32.mrf.mxu0
  %v1247 = vadd.f32 %v1108, %v1246
  %1248 = vmatmul.bf16.gmra.mxu0 %v1165
  %v1249 = vpop.f32.mrf.mxu0
  %v1250 = vadd.f32 %v1108, %v1249
  %v1251 = vpop.f32.mrf.mxu0
  %v1252 = vadd.f32 %v1108, %v1251
  %1253 = vmatmul.bf16.gmra.mxu0 %v1168
  %v1254 = vpop.f32.mrf.mxu0
  %v1255 = vadd.f32 %v1108, %v1254
  %v1256 = vpop.f32.mrf.mxu0
  %v1257 = vadd.f32 %v1108, %v1256
  %1258 = vdwg.mxu0
  %v1259 = vmax.f32 %v1180, 0.0
  %v1260 = vmax.f32 %v1182, 0.0
  %v1261 = vmax.f32 %v1185, 0.0
  %v1262 = vmax.f32 %v1187, 0.0
  %v1263 = vmax.f32 %v1190, 0.0
  %v1264 = vmax.f32 %v1192, 0.0
  %v1265 = vmax.f32 %v1195, 0.0
  %v1266 = vmax.f32 %v1197, 0.0
  %v1267 = vmax.f32 %v1200, 0.0
  %v1268 = vmax.f32 %v1202, 0.0
  %v1269 = vmax.f32 %v1205, 0.0
  %v1270 = vmax.f32 %v1207, 0.0
  %v1271 = vmax.f32 %v1210, 0.0
  %v1272 = vmax.f32 %v1212, 0.0
  %v1273 = vmax.f32 %v1215, 0.0
  %v1274 = vmax.f32 %v1217, 0.0
  %v1275 = vmax.f32 %v1220, 0.0
  %v1276 = vmax.f32 %v1222, 0.0
  %v1277 = vmax.f32 %v1225, 0.0
  %v1278 = vmax.f32 %v1227, 0.0
  %v1279 = vmax.f32 %v1230, 0.0
  %v1280 = vmax.f32 %v1232, 0.0
  %v1281 = vmax.f32 %v1235, 0.0
  %v1282 = vmax.f32 %v1237, 0.0
  %v1283 = vmax.f32 %v1240, 0.0
  %v1284 = vmax.f32 %v1242, 0.0
  %v1285 = vmax.f32 %v1245, 0.0
  %v1286 = vmax.f32 %v1247, 0.0
  %v1287 = vmax.f32 %v1250, 0.0
  %v1288 = vmax.f32 %v1252, 0.0
  %v1289 = vmax.f32 %v1255, 0.0
  %v1290 = vmax.f32 %v1257, 0.0
  %v1291 = vpack.c.bf16 %v1260, %v1259
  %v1292 = vpack.c.bf16 %v1262, %v1261
  %v1293 = vpack.c.bf16 %v1264, %v1263
  %v1294 = vpack.c.bf16 %v1266, %v1265
  %v1295 = vpack.c.bf16 %v1268, %v1267
  %v1296 = vpack.c.bf16 %v1270, %v1269
  %v1297 = vpack.c.bf16 %v1272, %v1271
  %v1298 = vpack.c.bf16 %v1274, %v1273
  %v1299 = vpack.c.bf16 %v1276, %v1275
  %v1300 = vpack.c.bf16 %v1278, %v1277
  %v1301 = vpack.c.bf16 %v1280, %v1279
  %v1302 = vpack.c.bf16 %v1282, %v1281
  %v1303 = vpack.c.bf16 %v1284, %v1283
  %v1304 = vpack.c.bf16 %v1286, %v1285
  %v1305 = vpack.c.bf16 %v1288, %v1287
  %v1306 = vpack.c.bf16 %v1290, %v1289
  %v1307 = vld [vmem:[%s25] sm:$0xf]
  %v1308 = vld [vmem:[%s25 + $0x4] sm:$0xf]
  %v1309 = vld [vmem:[%s25 + $0x8] sm:$0xf]
  %v1310 = vld [vmem:[%s25 + $0xc] sm:$0xf]
  %v1311 = vld [vmem:[%s25 + $0x10] sm:$0xf]
  %v1312 = vld [vmem:[%s25 + $0x14] sm:$0xf]
  %v1313 = vld [vmem:[%s25 + $0x18] sm:$0xf]
  %v1314 = vld [vmem:[%s25 + $0x1c] sm:$0xf]
  %v1315 = vld [vmem:[%s27] sm:$0x1]
  %v1317 = vperm.slane %v1315, 0
  %v1327 = vunpack.c.l.b16 %v1307
  %v1328 = vunpack.c.l.b16 %v1308
  %v1329 = vunpack.c.l.b16 %v1309
  %v1330 = vunpack.c.l.b16 %v1310
  %v1331 = vunpack.c.l.b16 %v1311
  %v1332 = vunpack.c.l.b16 %v1312
  %v1333 = vunpack.c.l.b16 %v1313
  %v1334 = vunpack.c.l.b16 %v1314
  %v1335 = vpack.c.b16 %v1328, %v1327
  %v1336 = vpack.c.b16 %v1330, %v1329
  %v1337 = vpack.c.b16 %v1332, %v1331
  %v1338 = vpack.c.b16 %v1334, %v1333
  %v1344 = vsel %vm474, %v1291, 0
  %v1347 = vsel %vm474, %v1292, 0
  %v1350 = vsel %vm474, %v1293, 0
  %v1353 = vsel %vm474, %v1294, 0
  %v1356 = vsel %vm474, %v1295, 0
  %v1359 = vsel %vm474, %v1296, 0
  %v1362 = vsel %vm474, %v1297, 0
  %v1365 = vsel %vm474, %v1298, 0
  %v1368 = vsel %vm474, %v1299, 0
  %v1371 = vsel %vm474, %v1300, 0
  %v1374 = vsel %vm474, %v1301, 0
  %v1377 = vsel %vm474, %v1302, 0
  %v1380 = vsel %vm474, %v1303, 0
  %v1383 = vsel %vm474, %v1304, 0
  %v1386 = vsel %vm474, %v1305, 0
  %v1389 = vsel %vm474, %v1306, 0
  %1391 = vmatpush.bf16.msra.mxu0 0
  %1392 = vmatpush.bf16.msra.mxu0 0
  %1393 = vmatpush.bf16.msra.mxu0 0
  %1394 = vmatpush.bf16.msra.mxu0 0
  %1395 = vmatpush.bf16.msra.mxu0 %v1338
  %1396 = vmatpush.bf16.msra.mxu0 %v1337
  %1397 = vmatpush.bf16.msra.mxu0 %v1336
  %1398 = vmatpush.bf16.msra.mxu0 %v1335
  %1399 = vmatmul.bf16.gmra.mxu0 %v1344
  %v1400 = vpop.f32.mrf.mxu0
  %v1401 = vadd.f32 %v1317, %v1400
  %v1402 = vpop.f32.mrf.mxu0
  %v1403 = vadd.f32 %v1317, %v1402
  %1404 = vmatmul.bf16.gmra.mxu0 %v1347
  %v1405 = vpop.f32.mrf.mxu0
  %v1406 = vadd.f32 %v1317, %v1405
  %v1407 = vpop.f32.mrf.mxu0
  %v1408 = vadd.f32 %v1317, %v1407
  %1409 = vmatmul.bf16.gmra.mxu0 %v1350
  %v1410 = vpop.f32.mrf.mxu0
  %v1411 = vadd.f32 %v1317, %v1410
  %v1412 = vpop.f32.mrf.mxu0
  %v1413 = vadd.f32 %v1317, %v1412
  %1414 = vmatmul.bf16.gmra.mxu0 %v1353
  %v1415 = vpop.f32.mrf.mxu0
  %v1416 = vadd.f32 %v1317, %v1415
  %v1417 = vpop.f32.mrf.mxu0
  %v1418 = vadd.f32 %v1317, %v1417
  %1419 = vmatmul.bf16.gmra.mxu0 %v1356
  %v1420 = vpop.f32.mrf.mxu0
  %v1421 = vadd.f32 %v1317, %v1420
  %v1422 = vpop.f32.mrf.mxu0
  %v1423 = vadd.f32 %v1317, %v1422
  %1424 = vmatmul.bf16.gmra.mxu0 %v1359
  %v1425 = vpop.f32.mrf.mxu0
  %v1426 = vadd.f32 %v1317, %v1425
  %v1427 = vpop.f32.mrf.mxu0
  %v1428 = vadd.f32 %v1317, %v1427
  %1429 = vmatmul.bf16.gmra.mxu0 %v1362
  %v1430 = vpop.f32.mrf.mxu0
  %v1431 = vadd.f32 %v1317, %v1430
  %v1432 = vpop.f32.mrf.mxu0
  %v1433 = vadd.f32 %v1317, %v1432
  %1434 = vmatmul.bf16.gmra.mxu0 %v1365
  %v1435 = vpop.f32.mrf.mxu0
  %v1436 = vadd.f32 %v1317, %v1435
  %v1437 = vpop.f32.mrf.mxu0
  %v1438 = vadd.f32 %v1317, %v1437
  %1439 = vmatmul.bf16.gmra.mxu0 %v1368
  %v1440 = vpop.f32.mrf.mxu0
  %v1441 = vadd.f32 %v1317, %v1440
  %v1442 = vpop.f32.mrf.mxu0
  %v1443 = vadd.f32 %v1317, %v1442
  %1444 = vmatmul.bf16.gmra.mxu0 %v1371
  %v1445 = vpop.f32.mrf.mxu0
  %v1446 = vadd.f32 %v1317, %v1445
  %v1447 = vpop.f32.mrf.mxu0
  %v1448 = vadd.f32 %v1317, %v1447
  %1449 = vmatmul.bf16.gmra.mxu0 %v1374
  %v1450 = vpop.f32.mrf.mxu0
  %v1451 = vadd.f32 %v1317, %v1450
  %v1452 = vpop.f32.mrf.mxu0
  %v1453 = vadd.f32 %v1317, %v1452
  %1454 = vmatmul.bf16.gmra.mxu0 %v1377
  %v1455 = vpop.f32.mrf.mxu0
  %v1456 = vadd.f32 %v1317, %v1455
  %v1457 = vpop.f32.mrf.mxu0
  %v1458 = vadd.f32 %v1317, %v1457
  %1459 = vmatmul.bf16.gmra.mxu0 %v1380
  %v1460 = vpop.f32.mrf.mxu0
  %v1461 = vadd.f32 %v1317, %v1460
  %v1462 = vpop.f32.mrf.mxu0
  %v1463 = vadd.f32 %v1317, %v1462
  %1464 = vmatmul.bf16.gmra.mxu0 %v1383
  %v1465 = vpop.f32.mrf.mxu0
  %v1466 = vadd.f32 %v1317, %v1465
  %v1467 = vpop.f32.mrf.mxu0
  %v1468 = vadd.f32 %v1317, %v1467
  %1469 = vmatmul.bf16.gmra.mxu0 %v1386
  %v1470 = vpop.f32.mrf.mxu0
  %v1471 = vadd.f32 %v1317, %v1470
  %v1472 = vpop.f32.mrf.mxu0
  %v1473 = vadd.f32 %v1317, %v1472
  %1474 = vmatmul.bf16.gmra.mxu0 %v1389
  %v1475 = vpop.f32.mrf.mxu0
  %v1476 = vadd.f32 %v1317, %v1475
  %v1477 = vpop.f32.mrf.mxu0
  %v1478 = vadd.f32 %v1317, %v1477
  %1479 = vdwg.mxu0
  %v1480 = vmax.f32 %v1401, 0.0
  %v1481 = vmax.f32 %v1403, 0.0
  %v1482 = vmax.f32 %v1406, 0.0
  %v1483 = vmax.f32 %v1408, 0.0
  %v1484 = vmax.f32 %v1411, 0.0
  %v1485 = vmax.f32 %v1413, 0.0
  %v1486 = vmax.f32 %v1416, 0.0
  %v1487 = vmax.f32 %v1418, 0.0
  %v1488 = vmax.f32 %v1421, 0.0
  %v1489 = vmax.f32 %v1423, 0.0
  %v1490 = vmax.f32 %v1426, 0.0
  %v1491 = vmax.f32 %v1428, 0.0
  %v1492 = vmax.f32 %v1431, 0.0
  %v1493 = vmax.f32 %v1433, 0.0
  %v1494 = vmax.f32 %v1436, 0.0
  %v1495 = vmax.f32 %v1438, 0.0
  %v1496 = vmax.f32 %v1441, 0.0
  %v1497 = vmax.f32 %v1443, 0.0
  %v1498 = vmax.f32 %v1446, 0.0
  %v1499 = vmax.f32 %v1448, 0.0
  %v1500 = vmax.f32 %v1451, 0.0
  %v1501 = vmax.f32 %v1453, 0.0
  %v1502 = vmax.f32 %v1456, 0.0
  %v1503 = vmax.f32 %v1458, 0.0
  %v1504 = vmax.f32 %v1461, 0.0
  %v1505 = vmax.f32 %v1463, 0.0
  %v1506 = vmax.f32 %v1466, 0.0
  %v1507 = vmax.f32 %v1468, 0.0
  %v1508 = vmax.f32 %v1471, 0.0
  %v1509 = vmax.f32 %v1473, 0.0
  %v1510 = vmax.f32 %v1476, 0.0
  %v1511 = vmax.f32 %v1478, 0.0
  %v1512 = vpack.c.bf16 %v1481, %v1480
  %v1513 = vpack.c.bf16 %v1483, %v1482
  %v1514 = vpack.c.bf16 %v1485, %v1484
  %v1515 = vpack.c.bf16 %v1487, %v1486
  %v1516 = vpack.c.bf16 %v1489, %v1488
  %v1517 = vpack.c.bf16 %v1491, %v1490
  %v1518 = vpack.c.bf16 %v1493, %v1492
  %v1519 = vpack.c.bf16 %v1495, %v1494
  %v1520 = vpack.c.bf16 %v1497, %v1496
  %v1521 = vpack.c.bf16 %v1499, %v1498
  %v1522 = vpack.c.bf16 %v1501, %v1500
  %v1523 = vpack.c.bf16 %v1503, %v1502
  %v1524 = vpack.c.bf16 %v1505, %v1504
  %v1525 = vpack.c.bf16 %v1507, %v1506
  %v1526 = vpack.c.bf16 %v1509, %v1508
  %v1527 = vpack.c.bf16 %v1511, %v1510
  %v1528 = vld [vmem:[%s29] sm:$0xf]
  %v1529 = vld [vmem:[%s29 + $0x4] sm:$0xf]
  %v1530 = vld [vmem:[%s29 + $0x8] sm:$0xf]
  %v1531 = vld [vmem:[%s29 + $0xc] sm:$0xf]
  %v1532 = vld [vmem:[%s29 + $0x10] sm:$0xf]
  %v1533 = vld [vmem:[%s29 + $0x14] sm:$0xf]
  %v1534 = vld [vmem:[%s29 + $0x18] sm:$0xf]
  %v1535 = vld [vmem:[%s29 + $0x1c] sm:$0xf]
  %v1536 = vld [vmem:[%s31] sm:$0x1]
  %v1538 = vperm.slane %v1536, 0
  %v1548 = vunpack.c.l.b16 %v1528
  %v1549 = vunpack.c.l.b16 %v1529
  %v1550 = vunpack.c.l.b16 %v1530
  %v1551 = vunpack.c.l.b16 %v1531
  %v1552 = vunpack.c.l.b16 %v1532
  %v1553 = vunpack.c.l.b16 %v1533
  %v1554 = vunpack.c.l.b16 %v1534
  %v1555 = vunpack.c.l.b16 %v1535
  %v1556 = vpack.c.b16 %v1549, %v1548
  %v1557 = vpack.c.b16 %v1551, %v1550
  %v1558 = vpack.c.b16 %v1553, %v1552
  %v1559 = vpack.c.b16 %v1555, %v1554
  %v1565 = vsel %vm474, %v1512, 0
  %v1568 = vsel %vm474, %v1513, 0
  %v1571 = vsel %vm474, %v1514, 0
  %v1574 = vsel %vm474, %v1515, 0
  %v1577 = vsel %vm474, %v1516, 0
  %v1580 = vsel %vm474, %v1517, 0
  %v1583 = vsel %vm474, %v1518, 0
  %v1586 = vsel %vm474, %v1519, 0
  %v1589 = vsel %vm474, %v1520, 0
  %v1592 = vsel %vm474, %v1521, 0
  %v1595 = vsel %vm474, %v1522, 0
  %v1598 = vsel %vm474, %v1523, 0
  %v1601 = vsel %vm474, %v1524, 0
  %v1604 = vsel %vm474, %v1525, 0
  %v1607 = vsel %vm474, %v1526, 0
  %v1610 = vsel %vm474, %v1527, 0
  %1612 = vmatpush.bf16.msra.mxu0 0
  %1613 = vmatpush.bf16.msra.mxu0 0
  %1614 = vmatpush.bf16.msra.mxu0 0
  %1615 = vmatpush.bf16.msra.mxu0 0
  %1616 = vmatpush.bf16.msra.mxu0 %v1559
  %1617 = vmatpush.bf16.msra.mxu0 %v1558
  %1618 = vmatpush.bf16.msra.mxu0 %v1557
  %1619 = vmatpush.bf16.msra.mxu0 %v1556
  %1620 = vmatmul.bf16.gmra.mxu0 %v1565
  %v1621 = vpop.f32.mrf.mxu0
  %v1622 = vadd.f32 %v1538, %v1621
  %v1623 = vpop.f32.mrf.mxu0
  %v1624 = vadd.f32 %v1538, %v1623
  %1625 = vmatmul.bf16.gmra.mxu0 %v1568
  %v1626 = vpop.f32.mrf.mxu0
  %v1627 = vadd.f32 %v1538, %v1626
  %v1628 = vpop.f32.mrf.mxu0
  %v1629 = vadd.f32 %v1538, %v1628
  %1630 = vmatmul.bf16.gmra.mxu0 %v1571
  %v1631 = vpop.f32.mrf.mxu0
  %v1632 = vadd.f32 %v1538, %v1631
  %v1633 = vpop.f32.mrf.mxu0
  %v1634 = vadd.f32 %v1538, %v1633
  %1635 = vmatmul.bf16.gmra.mxu0 %v1574
  %v1636 = vpop.f32.mrf.mxu0
  %v1637 = vadd.f32 %v1538, %v1636
  %v1638 = vpop.f32.mrf.mxu0
  %v1639 = vadd.f32 %v1538, %v1638
  %1640 = vmatmul.bf16.gmra.mxu0 %v1577
  %v1641 = vpop.f32.mrf.mxu0
  %v1642 = vadd.f32 %v1538, %v1641
  %v1643 = vpop.f32.mrf.mxu0
  %v1644 = vadd.f32 %v1538, %v1643
  %1645 = vmatmul.bf16.gmra.mxu0 %v1580
  %v1646 = vpop.f32.mrf.mxu0
  %v1647 = vadd.f32 %v1538, %v1646
  %v1648 = vpop.f32.mrf.mxu0
  %v1649 = vadd.f32 %v1538, %v1648
  %1650 = vmatmul.bf16.gmra.mxu0 %v1583
  %v1651 = vpop.f32.mrf.mxu0
  %v1652 = vadd.f32 %v1538, %v1651
  %v1653 = vpop.f32.mrf.mxu0
  %v1654 = vadd.f32 %v1538, %v1653
  %1655 = vmatmul.bf16.gmra.mxu0 %v1586
  %v1656 = vpop.f32.mrf.mxu0
  %v1657 = vadd.f32 %v1538, %v1656
  %v1658 = vpop.f32.mrf.mxu0
  %v1659 = vadd.f32 %v1538, %v1658
  %1660 = vmatmul.bf16.gmra.mxu0 %v1589
  %v1661 = vpop.f32.mrf.mxu0
  %v1662 = vadd.f32 %v1538, %v1661
  %v1663 = vpop.f32.mrf.mxu0
  %v1664 = vadd.f32 %v1538, %v1663
  %1665 = vmatmul.bf16.gmra.mxu0 %v1592
  %v1666 = vpop.f32.mrf.mxu0
  %v1667 = vadd.f32 %v1538, %v1666
  %v1668 = vpop.f32.mrf.mxu0
  %v1669 = vadd.f32 %v1538, %v1668
  %1670 = vmatmul.bf16.gmra.mxu0 %v1595
  %v1671 = vpop.f32.mrf.mxu0
  %v1672 = vadd.f32 %v1538, %v1671
  %v1673 = vpop.f32.mrf.mxu0
  %v1674 = vadd.f32 %v1538, %v1673
  %1675 = vmatmul.bf16.gmra.mxu0 %v1598
  %v1676 = vpop.f32.mrf.mxu0
  %v1677 = vadd.f32 %v1538, %v1676
  %v1678 = vpop.f32.mrf.mxu0
  %v1679 = vadd.f32 %v1538, %v1678
  %1680 = vmatmul.bf16.gmra.mxu0 %v1601
  %v1681 = vpop.f32.mrf.mxu0
  %v1682 = vadd.f32 %v1538, %v1681
  %v1683 = vpop.f32.mrf.mxu0
  %v1684 = vadd.f32 %v1538, %v1683
  %1685 = vmatmul.bf16.gmra.mxu0 %v1604
  %v1686 = vpop.f32.mrf.mxu0
  %v1687 = vadd.f32 %v1538, %v1686
  %v1688 = vpop.f32.mrf.mxu0
  %v1689 = vadd.f32 %v1538, %v1688
  %1690 = vmatmul.bf16.gmra.mxu0 %v1607
  %v1691 = vpop.f32.mrf.mxu0
  %v1692 = vadd.f32 %v1538, %v1691
  %v1693 = vpop.f32.mrf.mxu0
  %v1694 = vadd.f32 %v1538, %v1693
  %1695 = vmatmul.bf16.gmra.mxu0 %v1610
  %v1696 = vpop.f32.mrf.mxu0
  %v1697 = vadd.f32 %v1538, %v1696
  %v1698 = vpop.f32.mrf.mxu0
  %v1699 = vadd.f32 %v1538, %v1698
  %1700 = vdwg.mxu0
  %v1701 = vmax.f32 %v1622, 0.0
  %v1702 = vmax.f32 %v1624, 0.0
  %v1703 = vmax.f32 %v1627, 0.0
  %v1704 = vmax.f32 %v1629, 0.0
  %v1705 = vmax.f32 %v1632, 0.0
  %v1706 = vmax.f32 %v1634, 0.0
  %v1707 = vmax.f32 %v1637, 0.0
  %v1708 = vmax.f32 %v1639, 0.0
  %v1709 = vmax.f32 %v1642, 0.0
  %v1710 = vmax.f32 %v1644, 0.0
  %v1711 = vmax.f32 %v1647, 0.0
  %v1712 = vmax.f32 %v1649, 0.0
  %v1713 = vmax.f32 %v1652, 0.0
  %v1714 = vmax.f32 %v1654, 0.0
  %v1715 = vmax.f32 %v1657, 0.0
  %v1716 = vmax.f32 %v1659, 0.0
  %v1717 = vmax.f32 %v1662, 0.0
  %v1718 = vmax.f32 %v1664, 0.0
  %v1719 = vmax.f32 %v1667, 0.0
  %v1720 = vmax.f32 %v1669, 0.0
  %v1721 = vmax.f32 %v1672, 0.0
  %v1722 = vmax.f32 %v1674, 0.0
  %v1723 = vmax.f32 %v1677, 0.0
  %v1724 = vmax.f32 %v1679, 0.0
  %v1725 = vmax.f32 %v1682, 0.0
  %v1726 = vmax.f32 %v1684, 0.0
  %v1727 = vmax.f32 %v1687, 0.0
  %v1728 = vmax.f32 %v1689, 0.0
  %v1729 = vmax.f32 %v1692, 0.0
  %v1730 = vmax.f32 %v1694, 0.0
  %v1731 = vmax.f32 %v1697, 0.0
  %v1732 = vmax.f32 %v1699, 0.0
  %v1733 = vpack.c.bf16 %v1702, %v1701
  %v1734 = vpack.c.bf16 %v1704, %v1703
  %v1735 = vpack.c.bf16 %v1706, %v1705
  %v1736 = vpack.c.bf16 %v1708, %v1707
  %v1737 = vpack.c.bf16 %v1710, %v1709
  %v1738 = vpack.c.bf16 %v1712, %v1711
  %v1739 = vpack.c.bf16 %v1714, %v1713
  %v1740 = vpack.c.bf16 %v1716, %v1715
  %v1741 = vpack.c.bf16 %v1718, %v1717
  %v1742 = vpack.c.bf16 %v1720, %v1719
  %v1743 = vpack.c.bf16 %v1722, %v1721
  %v1744 = vpack.c.bf16 %v1724, %v1723
  %v1745 = vpack.c.bf16 %v1726, %v1725
  %v1746 = vpack.c.bf16 %v1728, %v1727
  %v1747 = vpack.c.bf16 %v1730, %v1729
  %v1748 = vpack.c.bf16 %v1732, %v1731
  %v1749 = vld [vmem:[%s33] sm:$0xf]
  %v1750 = vld [vmem:[%s33 + $0x4] sm:$0xf]
  %v1751 = vld [vmem:[%s33 + $0x8] sm:$0xf]
  %v1752 = vld [vmem:[%s33 + $0xc] sm:$0xf]
  %v1753 = vld [vmem:[%s33 + $0x10] sm:$0xf]
  %v1754 = vld [vmem:[%s33 + $0x14] sm:$0xf]
  %v1755 = vld [vmem:[%s33 + $0x18] sm:$0xf]
  %v1756 = vld [vmem:[%s33 + $0x1c] sm:$0xf]
  %v1757 = vld [vmem:[%s35] sm:$0x1]
  %v1759 = vperm.slane %v1757, 0
  %v1769 = vunpack.c.l.b16 %v1749
  %v1770 = vunpack.c.l.b16 %v1750
  %v1771 = vunpack.c.l.b16 %v1751
  %v1772 = vunpack.c.l.b16 %v1752
  %v1773 = vunpack.c.l.b16 %v1753
  %v1774 = vunpack.c.l.b16 %v1754
  %v1775 = vunpack.c.l.b16 %v1755
  %v1776 = vunpack.c.l.b16 %v1756
  %v1777 = vpack.c.b16 %v1770, %v1769
  %v1778 = vpack.c.b16 %v1772, %v1771
  %v1779 = vpack.c.b16 %v1774, %v1773
  %v1780 = vpack.c.b16 %v1776, %v1775
  %v1786 = vsel %vm474, %v1733, 0
  %v1789 = vsel %vm474, %v1734, 0
  %v1792 = vsel %vm474, %v1735, 0
  %v1795 = vsel %vm474, %v1736, 0
  %v1798 = vsel %vm474, %v1737, 0
  %v1801 = vsel %vm474, %v1738, 0
  %v1804 = vsel %vm474, %v1739, 0
  %v1807 = vsel %vm474, %v1740, 0
  %v1810 = vsel %vm474, %v1741, 0
  %v1813 = vsel %vm474, %v1742, 0
  %v1816 = vsel %vm474, %v1743, 0
  %v1819 = vsel %vm474, %v1744, 0
  %v1822 = vsel %vm474, %v1745, 0
  %v1825 = vsel %vm474, %v1746, 0
  %v1828 = vsel %vm474, %v1747, 0
  %v1831 = vsel %vm474, %v1748, 0
  %1833 = vmatpush.bf16.msra.mxu0 0
  %1834 = vmatpush.bf16.msra.mxu0 0
  %1835 = vmatpush.bf16.msra.mxu0 0
  %1836 = vmatpush.bf16.msra.mxu0 0
  %1837 = vmatpush.bf16.msra.mxu0 %v1780
  %1838 = vmatpush.bf16.msra.mxu0 %v1779
  %1839 = vmatpush.bf16.msra.mxu0 %v1778
  %1840 = vmatpush.bf16.msra.mxu0 %v1777
  %1841 = vmatmul.bf16.gmra.mxu0 %v1786
  %v1842 = vpop.f32.mrf.mxu0
  %v1843 = vadd.f32 %v1759, %v1842
  %v1844 = vpop.f32.mrf.mxu0
  %v1845 = vadd.f32 %v1759, %v1844
  %1846 = vmatmul.bf16.gmra.mxu0 %v1789
  %v1847 = vpop.f32.mrf.mxu0
  %v1848 = vadd.f32 %v1759, %v1847
  %v1849 = vpop.f32.mrf.mxu0
  %v1850 = vadd.f32 %v1759, %v1849
  %1851 = vmatmul.bf16.gmra.mxu0 %v1792
  %v1852 = vpop.f32.mrf.mxu0
  %v1853 = vadd.f32 %v1759, %v1852
  %v1854 = vpop.f32.mrf.mxu0
  %v1855 = vadd.f32 %v1759, %v1854
  %1856 = vmatmul.bf16.gmra.mxu0 %v1795
  %v1857 = vpop.f32.mrf.mxu0
  %v1858 = vadd.f32 %v1759, %v1857
  %v1859 = vpop.f32.mrf.mxu0
  %v1860 = vadd.f32 %v1759, %v1859
  %1861 = vmatmul.bf16.gmra.mxu0 %v1798
  %v1862 = vpop.f32.mrf.mxu0
  %v1863 = vadd.f32 %v1759, %v1862
  %v1864 = vpop.f32.mrf.mxu0
  %v1865 = vadd.f32 %v1759, %v1864
  %1866 = vmatmul.bf16.gmra.mxu0 %v1801
  %v1867 = vpop.f32.mrf.mxu0
  %v1868 = vadd.f32 %v1759, %v1867
  %v1869 = vpop.f32.mrf.mxu0
  %v1870 = vadd.f32 %v1759, %v1869
  %1871 = vmatmul.bf16.gmra.mxu0 %v1804
  %v1872 = vpop.f32.mrf.mxu0
  %v1873 = vadd.f32 %v1759, %v1872
  %v1874 = vpop.f32.mrf.mxu0
  %v1875 = vadd.f32 %v1759, %v1874
  %1876 = vmatmul.bf16.gmra.mxu0 %v1807
  %v1877 = vpop.f32.mrf.mxu0
  %v1878 = vadd.f32 %v1759, %v1877
  %v1879 = vpop.f32.mrf.mxu0
  %v1880 = vadd.f32 %v1759, %v1879
  %1881 = vmatmul.bf16.gmra.mxu0 %v1810
  %v1882 = vpop.f32.mrf.mxu0
  %v1883 = vadd.f32 %v1759, %v1882
  %v1884 = vpop.f32.mrf.mxu0
  %v1885 = vadd.f32 %v1759, %v1884
  %1886 = vmatmul.bf16.gmra.mxu0 %v1813
  %v1887 = vpop.f32.mrf.mxu0
  %v1888 = vadd.f32 %v1759, %v1887
  %v1889 = vpop.f32.mrf.mxu0
  %v1890 = vadd.f32 %v1759, %v1889
  %1891 = vmatmul.bf16.gmra.mxu0 %v1816
  %v1892 = vpop.f32.mrf.mxu0
  %v1893 = vadd.f32 %v1759, %v1892
  %v1894 = vpop.f32.mrf.mxu0
  %v1895 = vadd.f32 %v1759, %v1894
  %1896 = vmatmul.bf16.gmra.mxu0 %v1819
  %v1897 = vpop.f32.mrf.mxu0
  %v1898 = vadd.f32 %v1759, %v1897
  %v1899 = vpop.f32.mrf.mxu0
  %v1900 = vadd.f32 %v1759, %v1899
  %1901 = vmatmul.bf16.gmra.mxu0 %v1822
  %v1902 = vpop.f32.mrf.mxu0
  %v1903 = vadd.f32 %v1759, %v1902
  %v1904 = vpop.f32.mrf.mxu0
  %v1905 = vadd.f32 %v1759, %v1904
  %1906 = vmatmul.bf16.gmra.mxu0 %v1825
  %v1907 = vpop.f32.mrf.mxu0
  %v1908 = vadd.f32 %v1759, %v1907
  %v1909 = vpop.f32.mrf.mxu0
  %v1910 = vadd.f32 %v1759, %v1909
  %1911 = vmatmul.bf16.gmra.mxu0 %v1828
  %v1912 = vpop.f32.mrf.mxu0
  %v1913 = vadd.f32 %v1759, %v1912
  %v1914 = vpop.f32.mrf.mxu0
  %v1915 = vadd.f32 %v1759, %v1914
  %1916 = vmatmul.bf16.gmra.mxu0 %v1831
  %v1917 = vpop.f32.mrf.mxu0
  %v1918 = vadd.f32 %v1759, %v1917
  %v1919 = vpop.f32.mrf.mxu0
  %v1920 = vadd.f32 %v1759, %v1919
  %1921 = vdwg.mxu0
  %v1922 = vadd.f32 %v184, %v1843
  %v1923 = vadd.f32 %v185, %v1845
  %v1924 = vadd.f32 %v186, %v1848
  %v1925 = vadd.f32 %v187, %v1850
  %v1926 = vadd.f32 %v188, %v1853
  %v1927 = vadd.f32 %v189, %v1855
  %v1928 = vadd.f32 %v190, %v1858
  %v1929 = vadd.f32 %v191, %v1860
  %v1930 = vadd.f32 %v192, %v1863
  %v1931 = vadd.f32 %v193, %v1865
  %v1932 = vadd.f32 %v194, %v1868
  %v1933 = vadd.f32 %v195, %v1870
  %v1934 = vadd.f32 %v196, %v1873
  %v1935 = vadd.f32 %v197, %v1875
  %v1936 = vadd.f32 %v198, %v1878
  %v1937 = vadd.f32 %v199, %v1880
  %v1938 = vadd.f32 %v200, %v1883
  %v1939 = vadd.f32 %v201, %v1885
  %v1940 = vadd.f32 %v202, %v1888
  %v1941 = vadd.f32 %v203, %v1890
  %v1942 = vadd.f32 %v204, %v1893
  %v1943 = vadd.f32 %v205, %v1895
  %v1944 = vadd.f32 %v206, %v1898
  %v1945 = vadd.f32 %v207, %v1900
  %v1946 = vadd.f32 %v208, %v1903
  %v1947 = vadd.f32 %v209, %v1905
  %v1948 = vadd.f32 %v210, %v1908
  %v1949 = vadd.f32 %v211, %v1910
  %v1950 = vadd.f32 %v212, %v1913
  %v1951 = vadd.f32 %v213, %v1915
  %v1952 = vadd.f32 %v214, %v1918
  %v1953 = vadd.f32 %v215, %v1920
  %v1954 = vpack.c.bf16 %v1923, %v1922
  %v1955 = vpack.c.bf16 %v1925, %v1924
  %v1956 = vpack.c.bf16 %v1927, %v1926
  %v1957 = vpack.c.bf16 %v1929, %v1928
  %v1958 = vpack.c.bf16 %v1931, %v1930
  %v1959 = vpack.c.bf16 %v1933, %v1932
  %v1960 = vpack.c.bf16 %v1935, %v1934
  %v1961 = vpack.c.bf16 %v1937, %v1936
  %v1962 = vpack.c.bf16 %v1939, %v1938
  %v1963 = vpack.c.bf16 %v1941, %v1940
  %v1964 = vpack.c.bf16 %v1943, %v1942
  %v1965 = vpack.c.bf16 %v1945, %v1944
  %v1966 = vpack.c.bf16 %v1947, %v1946
  %v1967 = vpack.c.bf16 %v1949, %v1948
  %v1968 = vpack.c.bf16 %v1951, %v1950
  %v1969 = vpack.c.bf16 %v1953, %v1952
  %v1970 = vld [vmem:[%s37] sm:$0xf]
  %v1971 = vld [vmem:[%s37 + $0x4] sm:$0xf]
  %v1972 = vld [vmem:[%s37 + $0x8] sm:$0xf]
  %v1973 = vld [vmem:[%s37 + $0xc] sm:$0xf]
  %v1974 = vld [vmem:[%s39] sm:$0x1]
  %v1976 = vperm.slane %v1974, 0
  %v1982 = vunpack.c.l.b16 %v1970
  %v1983 = vunpack.c.l.b16 %v1971
  %v1984 = vunpack.c.l.b16 %v1972
  %v1985 = vunpack.c.l.b16 %v1973
  %v1986 = vpack.c.b16 %v1983, %v1982
  %v1987 = vpack.c.b16 %v1985, %v1984
  %v1991 = vsel %vm252, %v1954, 0
  %v1994 = vsel %vm252, %v1955, 0
  %v1997 = vsel %vm252, %v1956, 0
  %v2000 = vsel %vm252, %v1957, 0
  %v2003 = vsel %vm252, %v1958, 0
  %v2006 = vsel %vm252, %v1959, 0
  %v2009 = vsel %vm252, %v1960, 0
  %v2012 = vsel %vm252, %v1961, 0
  %v2015 = vsel %vm252, %v1962, 0
  %v2018 = vsel %vm252, %v1963, 0
  %v2021 = vsel %vm252, %v1964, 0
  %v2024 = vsel %vm252, %v1965, 0
  %v2027 = vsel %vm252, %v1966, 0
  %v2030 = vsel %vm252, %v1967, 0
  %v2033 = vsel %vm252, %v1968, 0
  %v2036 = vsel %vm252, %v1969, 0
  %2038 = vmatpush.bf16.msra.mxu0 0
  %2039 = vmatpush.bf16.msra.mxu0 0
  %2040 = vmatpush.bf16.msra.mxu0 0
  %2041 = vmatpush.bf16.msra.mxu0 0
  %2042 = vmatpush.bf16.msra.mxu0 0
  %2043 = vmatpush.bf16.msra.mxu0 0
  %2044 = vmatpush.bf16.msra.mxu0 %v1987
  %2045 = vmatpush.bf16.msra.mxu0 %v1986
  %2046 = vmatmul.bf16.gmra.mxu0 %v1991
  %v2047 = vpop.f32.mrf.mxu0
  %v2048 = vadd.f32 %v1976, %v2047
  %v2049 = vpop.f32.mrf.mxu0
  %v2050 = vadd.f32 %v1976, %v2049
  %2051 = vmatmul.bf16.gmra.mxu0 %v1994
  %v2052 = vpop.f32.mrf.mxu0
  %v2053 = vadd.f32 %v1976, %v2052
  %v2054 = vpop.f32.mrf.mxu0
  %v2055 = vadd.f32 %v1976, %v2054
  %2056 = vmatmul.bf16.gmra.mxu0 %v1997
  %v2057 = vpop.f32.mrf.mxu0
  %v2058 = vadd.f32 %v1976, %v2057
  %v2059 = vpop.f32.mrf.mxu0
  %v2060 = vadd.f32 %v1976, %v2059
  %2061 = vmatmul.bf16.gmra.mxu0 %v2000
  %v2062 = vpop.f32.mrf.mxu0
  %v2063 = vadd.f32 %v1976, %v2062
  %v2064 = vpop.f32.mrf.mxu0
  %v2065 = vadd.f32 %v1976, %v2064
  %2066 = vmatmul.bf16.gmra.mxu0 %v2003
  %v2067 = vpop.f32.mrf.mxu0
  %v2068 = vadd.f32 %v1976, %v2067
  %v2069 = vpop.f32.mrf.mxu0
  %v2070 = vadd.f32 %v1976, %v2069
  %2071 = vmatmul.bf16.gmra.mxu0 %v2006
  %v2072 = vpop.f32.mrf.mxu0
  %v2073 = vadd.f32 %v1976, %v2072
  %v2074 = vpop.f32.mrf.mxu0
  %v2075 = vadd.f32 %v1976, %v2074
  %2076 = vmatmul.bf16.gmra.mxu0 %v2009
  %v2077 = vpop.f32.mrf.mxu0
  %v2078 = vadd.f32 %v1976, %v2077
  %v2079 = vpop.f32.mrf.mxu0
  %v2080 = vadd.f32 %v1976, %v2079
  %2081 = vmatmul.bf16.gmra.mxu0 %v2012
  %v2082 = vpop.f32.mrf.mxu0
  %v2083 = vadd.f32 %v1976, %v2082
  %v2084 = vpop.f32.mrf.mxu0
  %v2085 = vadd.f32 %v1976, %v2084
  %2086 = vmatmul.bf16.gmra.mxu0 %v2015
  %v2087 = vpop.f32.mrf.mxu0
  %v2088 = vadd.f32 %v1976, %v2087
  %v2089 = vpop.f32.mrf.mxu0
  %v2090 = vadd.f32 %v1976, %v2089
  %2091 = vmatmul.bf16.gmra.mxu0 %v2018
  %v2092 = vpop.f32.mrf.mxu0
  %v2093 = vadd.f32 %v1976, %v2092
  %v2094 = vpop.f32.mrf.mxu0
  %v2095 = vadd.f32 %v1976, %v2094
  %2096 = vmatmul.bf16.gmra.mxu0 %v2021
  %v2097 = vpop.f32.mrf.mxu0
  %v2098 = vadd.f32 %v1976, %v2097
  %v2099 = vpop.f32.mrf.mxu0
  %v2100 = vadd.f32 %v1976, %v2099
  %2101 = vmatmul.bf16.gmra.mxu0 %v2024
  %v2102 = vpop.f32.mrf.mxu0
  %v2103 = vadd.f32 %v1976, %v2102
  %v2104 = vpop.f32.mrf.mxu0
  %v2105 = vadd.f32 %v1976, %v2104
  %2106 = vmatmul.bf16.gmra.mxu0 %v2027
  %v2107 = vpop.f32.mrf.mxu0
  %v2108 = vadd.f32 %v1976, %v2107
  %v2109 = vpop.f32.mrf.mxu0
  %v2110 = vadd.f32 %v1976, %v2109
  %2111 = vmatmul.bf16.gmra.mxu0 %v2030
  %v2112 = vpop.f32.mrf.mxu0
  %v2113 = vadd.f32 %v1976, %v2112
  %v2114 = vpop.f32.mrf.mxu0
  %v2115 = vadd.f32 %v1976, %v2114
  %2116 = vmatmul.bf16.gmra.mxu0 %v2033
  %v2117 = vpop.f32.mrf.mxu0
  %v2118 = vadd.f32 %v1976, %v2117
  %v2119 = vpop.f32.mrf.mxu0
  %v2120 = vadd.f32 %v1976, %v2119
  %2121 = vmatmul.bf16.gmra.mxu0 %v2036
  %v2122 = vpop.f32.mrf.mxu0
  %v2123 = vadd.f32 %v1976, %v2122
  %v2124 = vpop.f32.mrf.mxu0
  %v2125 = vadd.f32 %v1976, %v2124
  %2126 = vdwg.mxu0
  %v2127 = vmax.f32 %v2048, 0.0
  %v2128 = vmax.f32 %v2050, 0.0
  %v2129 = vmax.f32 %v2053, 0.0
  %v2130 = vmax.f32 %v2055, 0.0
  %v2131 = vmax.f32 %v2058, 0.0
  %v2132 = vmax.f32 %v2060, 0.0
  %v2133 = vmax.f32 %v2063, 0.0
  %v2134 = vmax.f32 %v2065, 0.0
  %v2135 = vmax.f32 %v2068, 0.0
  %v2136 = vmax.f32 %v2070, 0.0
  %v2137 = vmax.f32 %v2073, 0.0
  %v2138 = vmax.f32 %v2075, 0.0
  %v2139 = vmax.f32 %v2078, 0.0
  %v2140 = vmax.f32 %v2080, 0.0
  %v2141 = vmax.f32 %v2083, 0.0
  %v2142 = vmax.f32 %v2085, 0.0
  %v2143 = vmax.f32 %v2088, 0.0
  %v2144 = vmax.f32 %v2090, 0.0
  %v2145 = vmax.f32 %v2093, 0.0
  %v2146 = vmax.f32 %v2095, 0.0
  %v2147 = vmax.f32 %v2098, 0.0
  %v2148 = vmax.f32 %v2100, 0.0
  %v2149 = vmax.f32 %v2103, 0.0
  %v2150 = vmax.f32 %v2105, 0.0
  %v2151 = vmax.f32 %v2108, 0.0
  %v2152 = vmax.f32 %v2110, 0.0
  %v2153 = vmax.f32 %v2113, 0.0
  %v2154 = vmax.f32 %v2115, 0.0
  %v2155 = vmax.f32 %v2118, 0.0
  %v2156 = vmax.f32 %v2120, 0.0
  %v2157 = vmax.f32 %v2123, 0.0
  %v2158 = vmax.f32 %v2125, 0.0
  %v2159 = vpack.c.bf16 %v2128, %v2127
  %v2160 = vpack.c.bf16 %v2130, %v2129
  %v2161 = vpack.c.bf16 %v2132, %v2131
  %v2162 = vpack.c.bf16 %v2134, %v2133
  %v2163 = vpack.c.bf16 %v2136, %v2135
  %v2164 = vpack.c.bf16 %v2138, %v2137
  %v2165 = vpack.c.bf16 %v2140, %v2139
  %v2166 = vpack.c.bf16 %v2142, %v2141
  %v2167 = vpack.c.bf16 %v2144, %v2143
  %v2168 = vpack.c.bf16 %v2146, %v2145
  %v2169 = vpack.c.bf16 %v2148, %v2147
  %v2170 = vpack.c.bf16 %v2150, %v2149
  %v2171 = vpack.c.bf16 %v2152, %v2151
  %v2172 = vpack.c.bf16 %v2154, %v2153
  %v2173 = vpack.c.bf16 %v2156, %v2155
  %v2174 = vpack.c.bf16 %v2158, %v2157
  %v2175 = vld [vmem:[%s41] sm:$0xf]
  %v2176 = vld [vmem:[%s41 + $0x4] sm:$0xf]
  %v2177 = vld [vmem:[%s41 + $0x8] sm:$0xf]
  %v2178 = vld [vmem:[%s41 + $0xc] sm:$0xf]
  %v2179 = vld [vmem:[%s41 + $0x10] sm:$0xf]
  %v2180 = vld [vmem:[%s41 + $0x14] sm:$0xf]
  %v2181 = vld [vmem:[%s41 + $0x18] sm:$0xf]
  %v2182 = vld [vmem:[%s41 + $0x1c] sm:$0xf]
  %v2183 = vld [vmem:[%s43] sm:$0x1]
  %v2185 = vperm.slane %v2183, 0
  %v2195 = vunpack.c.l.b16 %v2175
  %v2196 = vunpack.c.l.b16 %v2176
  %v2197 = vunpack.c.l.b16 %v2177
  %v2198 = vunpack.c.l.b16 %v2178
  %v2199 = vunpack.c.l.b16 %v2179
  %v2200 = vunpack.c.l.b16 %v2180
  %v2201 = vunpack.c.l.b16 %v2181
  %v2202 = vunpack.c.l.b16 %v2182
  %v2203 = vpack.c.b16 %v2196, %v2195
  %v2204 = vpack.c.b16 %v2198, %v2197
  %v2205 = vpack.c.b16 %v2200, %v2199
  %v2206 = vpack.c.b16 %v2202, %v2201
  %v2212 = vsel %vm474, %v2159, 0
  %v2215 = vsel %vm474, %v2160, 0
  %v2218 = vsel %vm474, %v2161, 0
  %v2221 = vsel %vm474, %v2162, 0
  %v2224 = vsel %vm474, %v2163, 0
  %v2227 = vsel %vm474, %v2164, 0
  %v2230 = vsel %vm474, %v2165, 0
  %v2233 = vsel %vm474, %v2166, 0
  %v2236 = vsel %vm474, %v2167, 0
  %v2239 = vsel %vm474, %v2168, 0
  %v2242 = vsel %vm474, %v2169, 0
  %v2245 = vsel %vm474, %v2170, 0
  %v2248 = vsel %vm474, %v2171, 0
  %v2251 = vsel %vm474, %v2172, 0
  %v2254 = vsel %vm474, %v2173, 0
  %v2257 = vsel %vm474, %v2174, 0
  %2259 = vmatpush.bf16.msra.mxu0 0
  %2260 = vmatpush.bf16.msra.mxu0 0
  %2261 = vmatpush.bf16.msra.mxu0 0
  %2262 = vmatpush.bf16.msra.mxu0 0
  %2263 = vmatpush.bf16.msra.mxu0 %v2206
  %2264 = vmatpush.bf16.msra.mxu0 %v2205
  %2265 = vmatpush.bf16.msra.mxu0 %v2204
  %2266 = vmatpush.bf16.msra.mxu0 %v2203
  %2267 = vmatmul.bf16.gmra.mxu0 %v2212
  %v2268 = vpop.f32.mrf.mxu0
  %v2269 = vadd.f32 %v2185, %v2268
  %v2270 = vpop.f32.mrf.mxu0
  %v2271 = vadd.f32 %v2185, %v2270
  %2272 = vmatmul.bf16.gmra.mxu0 %v2215
  %v2273 = vpop.f32.mrf.mxu0
  %v2274 = vadd.f32 %v2185, %v2273
  %v2275 = vpop.f32.mrf.mxu0
  %v2276 = vadd.f32 %v2185, %v2275
  %2277 = vmatmul.bf16.gmra.mxu0 %v2218
  %v2278 = vpop.f32.mrf.mxu0
  %v2279 = vadd.f32 %v2185, %v2278
  %v2280 = vpop.f32.mrf.mxu0
  %v2281 = vadd.f32 %v2185, %v2280
  %2282 = vmatmul.bf16.gmra.mxu0 %v2221
  %v2283 = vpop.f32.mrf.mxu0
  %v2284 = vadd.f32 %v2185, %v2283
  %v2285 = vpop.f32.mrf.mxu0
  %v2286 = vadd.f32 %v2185, %v2285
  %2287 = vmatmul.bf16.gmra.mxu0 %v2224
  %v2288 = vpop.f32.mrf.mxu0
  %v2289 = vadd.f32 %v2185, %v2288
  %v2290 = vpop.f32.mrf.mxu0
  %v2291 = vadd.f32 %v2185, %v2290
  %2292 = vmatmul.bf16.gmra.mxu0 %v2227
  %v2293 = vpop.f32.mrf.mxu0
  %v2294 = vadd.f32 %v2185, %v2293
  %v2295 = vpop.f32.mrf.mxu0
  %v2296 = vadd.f32 %v2185, %v2295
  %2297 = vmatmul.bf16.gmra.mxu0 %v2230
  %v2298 = vpop.f32.mrf.mxu0
  %v2299 = vadd.f32 %v2185, %v2298
  %v2300 = vpop.f32.mrf.mxu0
  %v2301 = vadd.f32 %v2185, %v2300
  %2302 = vmatmul.bf16.gmra.mxu0 %v2233
  %v2303 = vpop.f32.mrf.mxu0
  %v2304 = vadd.f32 %v2185, %v2303
  %v2305 = vpop.f32.mrf.mxu0
  %v2306 = vadd.f32 %v2185, %v2305
  %2307 = vmatmul.bf16.gmra.mxu0 %v2236
  %v2308 = vpop.f32.mrf.mxu0
  %v2309 = vadd.f32 %v2185, %v2308
  %v2310 = vpop.f32.mrf.mxu0
  %v2311 = vadd.f32 %v2185, %v2310
  %2312 = vmatmul.bf16.gmra.mxu0 %v2239
  %v2313 = vpop.f32.mrf.mxu0
  %v2314 = vadd.f32 %v2185, %v2313
  %v2315 = vpop.f32.mrf.mxu0
  %v2316 = vadd.f32 %v2185, %v2315
  %2317 = vmatmul.bf16.gmra.mxu0 %v2242
  %v2318 = vpop.f32.mrf.mxu0
  %v2319 = vadd.f32 %v2185, %v2318
  %v2320 = vpop.f32.mrf.mxu0
  %v2321 = vadd.f32 %v2185, %v2320
  %2322 = vmatmul.bf16.gmra.mxu0 %v2245
  %v2323 = vpop.f32.mrf.mxu0
  %v2324 = vadd.f32 %v2185, %v2323
  %v2325 = vpop.f32.mrf.mxu0
  %v2326 = vadd.f32 %v2185, %v2325
  %2327 = vmatmul.bf16.gmra.mxu0 %v2248
  %v2328 = vpop.f32.mrf.mxu0
  %v2329 = vadd.f32 %v2185, %v2328
  %v2330 = vpop.f32.mrf.mxu0
  %v2331 = vadd.f32 %v2185, %v2330
  %2332 = vmatmul.bf16.gmra.mxu0 %v2251
  %v2333 = vpop.f32.mrf.mxu0
  %v2334 = vadd.f32 %v2185, %v2333
  %v2335 = vpop.f32.mrf.mxu0
  %v2336 = vadd.f32 %v2185, %v2335
  %2337 = vmatmul.bf16.gmra.mxu0 %v2254
  %v2338 = vpop.f32.mrf.mxu0
  %v2339 = vadd.f32 %v2185, %v2338
  %v2340 = vpop.f32.mrf.mxu0
  %v2341 = vadd.f32 %v2185, %v2340
  %2342 = vmatmul.bf16.gmra.mxu0 %v2257
  %v2343 = vpop.f32.mrf.mxu0
  %v2344 = vadd.f32 %v2185, %v2343
  %v2345 = vpop.f32.mrf.mxu0
  %v2346 = vadd.f32 %v2185, %v2345
  %2347 = vdwg.mxu0
  %v2348 = vmax.f32 %v2269, 0.0
  %v2349 = vmax.f32 %v2271, 0.0
  %v2350 = vmax.f32 %v2274, 0.0
  %v2351 = vmax.f32 %v2276, 0.0
  %v2352 = vmax.f32 %v2279, 0.0
  %v2353 = vmax.f32 %v2281, 0.0
  %v2354 = vmax.f32 %v2284, 0.0
  %v2355 = vmax.f32 %v2286, 0.0
  %v2356 = vmax.f32 %v2289, 0.0
  %v2357 = vmax.f32 %v2291, 0.0
  %v2358 = vmax.f32 %v2294, 0.0
  %v2359 = vmax.f32 %v2296, 0.0
  %v2360 = vmax.f32 %v2299, 0.0
  %v2361 = vmax.f32 %v2301, 0.0
  %v2362 = vmax.f32 %v2304, 0.0
  %v2363 = vmax.f32 %v2306, 0.0
  %v2364 = vmax.f32 %v2309, 0.0
  %v2365 = vmax.f32 %v2311, 0.0
  %v2366 = vmax.f32 %v2314, 0.0
  %v2367 = vmax.f32 %v2316, 0.0
  %v2368 = vmax.f32 %v2319, 0.0
  %v2369 = vmax.f32 %v2321, 0.0
  %v2370 = vmax.f32 %v2324, 0.0
  %v2371 = vmax.f32 %v2326, 0.0
  %v2372 = vmax.f32 %v2329, 0.0
  %v2373 = vmax.f32 %v2331, 0.0
  %v2374 = vmax.f32 %v2334, 0.0
  %v2375 = vmax.f32 %v2336, 0.0
  %v2376 = vmax.f32 %v2339, 0.0
  %v2377 = vmax.f32 %v2341, 0.0
  %v2378 = vmax.f32 %v2344, 0.0
  %v2379 = vmax.f32 %v2346, 0.0
  %v2380 = vpack.c.bf16 %v2349, %v2348
  %v2381 = vpack.c.bf16 %v2351, %v2350
  %v2382 = vpack.c.bf16 %v2353, %v2352
  %v2383 = vpack.c.bf16 %v2355, %v2354
  %v2384 = vpack.c.bf16 %v2357, %v2356
  %v2385 = vpack.c.bf16 %v2359, %v2358
  %v2386 = vpack.c.bf16 %v2361, %v2360
  %v2387 = vpack.c.bf16 %v2363, %v2362
  %v2388 = vpack.c.bf16 %v2365, %v2364
  %v2389 = vpack.c.bf16 %v2367, %v2366
  %v2390 = vpack.c.bf16 %v2369, %v2368
  %v2391 = vpack.c.bf16 %v2371, %v2370
  %v2392 = vpack.c.bf16 %v2373, %v2372
  %v2393 = vpack.c.bf16 %v2375, %v2374
  %v2394 = vpack.c.bf16 %v2377, %v2376
  %v2395 = vpack.c.bf16 %v2379, %v2378
  %v2396 = vld [vmem:[%s45] sm:$0xf]
  %v2397 = vld [vmem:[%s45 + $0x4] sm:$0xf]
  %v2398 = vld [vmem:[%s45 + $0x8] sm:$0xf]
  %v2399 = vld [vmem:[%s45 + $0xc] sm:$0xf]
  %v2400 = vld [vmem:[%s45 + $0x10] sm:$0xf]
  %v2401 = vld [vmem:[%s45 + $0x14] sm:$0xf]
  %v2402 = vld [vmem:[%s45 + $0x18] sm:$0xf]
  %v2403 = vld [vmem:[%s45 + $0x1c] sm:$0xf]
  %v2404 = vld [vmem:[%s47] sm:$0x1]
  %v2406 = vperm.slane %v2404, 0
  %v2416 = vunpack.c.l.b16 %v2396
  %v2417 = vunpack.c.l.b16 %v2397
  %v2418 = vunpack.c.l.b16 %v2398
  %v2419 = vunpack.c.l.b16 %v2399
  %v2420 = vunpack.c.l.b16 %v2400
  %v2421 = vunpack.c.l.b16 %v2401
  %v2422 = vunpack.c.l.b16 %v2402
  %v2423 = vunpack.c.l.b16 %v2403
  %v2424 = vpack.c.b16 %v2417, %v2416
  %v2425 = vpack.c.b16 %v2419, %v2418
  %v2426 = vpack.c.b16 %v2421, %v2420
  %v2427 = vpack.c.b16 %v2423, %v2422
  %v2433 = vsel %vm474, %v2380, 0
  %v2436 = vsel %vm474, %v2381, 0
  %v2439 = vsel %vm474, %v2382, 0
  %v2442 = vsel %vm474, %v2383, 0
  %v2445 = vsel %vm474, %v2384, 0
  %v2448 = vsel %vm474, %v2385, 0
  %v2451 = vsel %vm474, %v2386, 0
  %v2454 = vsel %vm474, %v2387, 0
  %v2457 = vsel %vm474, %v2388, 0
  %v2460 = vsel %vm474, %v2389, 0
  %v2463 = vsel %vm474, %v2390, 0
  %v2466 = vsel %vm474, %v2391, 0
  %v2469 = vsel %vm474, %v2392, 0
  %v2472 = vsel %vm474, %v2393, 0
  %v2475 = vsel %vm474, %v2394, 0
  %v2478 = vsel %vm474, %v2395, 0
  %2480 = vmatpush.bf16.msra.mxu0 0
  %2481 = vmatpush.bf16.msra.mxu0 0
  %2482 = vmatpush.bf16.msra.mxu0 0
  %2483 = vmatpush.bf16.msra.mxu0 0
  %2484 = vmatpush.bf16.msra.mxu0 %v2427
  %2485 = vmatpush.bf16.msra.mxu0 %v2426
  %2486 = vmatpush.bf16.msra.mxu0 %v2425
  %2487 = vmatpush.bf16.msra.mxu0 %v2424
  %2488 = vmatmul.bf16.gmra.mxu0 %v2433
  %v2489 = vpop.f32.mrf.mxu0
  %v2490 = vadd.f32 %v2406, %v2489
  %v2491 = vpop.f32.mrf.mxu0
  %v2492 = vadd.f32 %v2406, %v2491
  %2493 = vmatmul.bf16.gmra.mxu0 %v2436
  %v2494 = vpop.f32.mrf.mxu0
  %v2495 = vadd.f32 %v2406, %v2494
  %v2496 = vpop.f32.mrf.mxu0
  %v2497 = vadd.f32 %v2406, %v2496
  %2498 = vmatmul.bf16.gmra.mxu0 %v2439
  %v2499 = vpop.f32.mrf.mxu0
  %v2500 = vadd.f32 %v2406, %v2499
  %v2501 = vpop.f32.mrf.mxu0
  %v2502 = vadd.f32 %v2406, %v2501
  %2503 = vmatmul.bf16.gmra.mxu0 %v2442
  %v2504 = vpop.f32.mrf.mxu0
  %v2505 = vadd.f32 %v2406, %v2504
  %v2506 = vpop.f32.mrf.mxu0
  %v2507 = vadd.f32 %v2406, %v2506
  %2508 = vmatmul.bf16.gmra.mxu0 %v2445
  %v2509 = vpop.f32.mrf.mxu0
  %v2510 = vadd.f32 %v2406, %v2509
  %v2511 = vpop.f32.mrf.mxu0
  %v2512 = vadd.f32 %v2406, %v2511
  %2513 = vmatmul.bf16.gmra.mxu0 %v2448
  %v2514 = vpop.f32.mrf.mxu0
  %v2515 = vadd.f32 %v2406, %v2514
  %v2516 = vpop.f32.mrf.mxu0
  %v2517 = vadd.f32 %v2406, %v2516
  %2518 = vmatmul.bf16.gmra.mxu0 %v2451
  %v2519 = vpop.f32.mrf.mxu0
  %v2520 = vadd.f32 %v2406, %v2519
  %v2521 = vpop.f32.mrf.mxu0
  %v2522 = vadd.f32 %v2406, %v2521
  %2523 = vmatmul.bf16.gmra.mxu0 %v2454
  %v2524 = vpop.f32.mrf.mxu0
  %v2525 = vadd.f32 %v2406, %v2524
  %v2526 = vpop.f32.mrf.mxu0
  %v2527 = vadd.f32 %v2406, %v2526
  %2528 = vmatmul.bf16.gmra.mxu0 %v2457
  %v2529 = vpop.f32.mrf.mxu0
  %v2530 = vadd.f32 %v2406, %v2529
  %v2531 = vpop.f32.mrf.mxu0
  %v2532 = vadd.f32 %v2406, %v2531
  %2533 = vmatmul.bf16.gmra.mxu0 %v2460
  %v2534 = vpop.f32.mrf.mxu0
  %v2535 = vadd.f32 %v2406, %v2534
  %v2536 = vpop.f32.mrf.mxu0
  %v2537 = vadd.f32 %v2406, %v2536
  %2538 = vmatmul.bf16.gmra.mxu0 %v2463
  %v2539 = vpop.f32.mrf.mxu0
  %v2540 = vadd.f32 %v2406, %v2539
  %v2541 = vpop.f32.mrf.mxu0
  %v2542 = vadd.f32 %v2406, %v2541
  %2543 = vmatmul.bf16.gmra.mxu0 %v2466
  %v2544 = vpop.f32.mrf.mxu0
  %v2545 = vadd.f32 %v2406, %v2544
  %v2546 = vpop.f32.mrf.mxu0
  %v2547 = vadd.f32 %v2406, %v2546
  %2548 = vmatmul.bf16.gmra.mxu0 %v2469
  %v2549 = vpop.f32.mrf.mxu0
  %v2550 = vadd.f32 %v2406, %v2549
  %v2551 = vpop.f32.mrf.mxu0
  %v2552 = vadd.f32 %v2406, %v2551
  %2553 = vmatmul.bf16.gmra.mxu0 %v2472
  %v2554 = vpop.f32.mrf.mxu0
  %v2555 = vadd.f32 %v2406, %v2554
  %v2556 = vpop.f32.mrf.mxu0
  %v2557 = vadd.f32 %v2406, %v2556
  %2558 = vmatmul.bf16.gmra.mxu0 %v2475
  %v2559 = vpop.f32.mrf.mxu0
  %v2560 = vadd.f32 %v2406, %v2559
  %v2561 = vpop.f32.mrf.mxu0
  %v2562 = vadd.f32 %v2406, %v2561
  %2563 = vmatmul.bf16.gmra.mxu0 %v2478
  %v2564 = vpop.f32.mrf.mxu0
  %v2565 = vadd.f32 %v2406, %v2564
  %v2566 = vpop.f32.mrf.mxu0
  %v2567 = vadd.f32 %v2406, %v2566
  %2568 = vdwg.mxu0
  %v2569 = vmax.f32 %v2490, 0.0
  %v2570 = vmax.f32 %v2492, 0.0
  %v2571 = vmax.f32 %v2495, 0.0
  %v2572 = vmax.f32 %v2497, 0.0
  %v2573 = vmax.f32 %v2500, 0.0
  %v2574 = vmax.f32 %v2502, 0.0
  %v2575 = vmax.f32 %v2505, 0.0
  %v2576 = vmax.f32 %v2507, 0.0
  %v2577 = vmax.f32 %v2510, 0.0
  %v2578 = vmax.f32 %v2512, 0.0
  %v2579 = vmax.f32 %v2515, 0.0
  %v2580 = vmax.f32 %v2517, 0.0
  %v2581 = vmax.f32 %v2520, 0.0
  %v2582 = vmax.f32 %v2522, 0.0
  %v2583 = vmax.f32 %v2525, 0.0
  %v2584 = vmax.f32 %v2527, 0.0
  %v2585 = vmax.f32 %v2530, 0.0
  %v2586 = vmax.f32 %v2532, 0.0
  %v2587 = vmax.f32 %v2535, 0.0
  %v2588 = vmax.f32 %v2537, 0.0
  %v2589 = vmax.f32 %v2540, 0.0
  %v2590 = vmax.f32 %v2542, 0.0
  %v2591 = vmax.f32 %v2545, 0.0
  %v2592 = vmax.f32 %v2547, 0.0
  %v2593 = vmax.f32 %v2550, 0.0
  %v2594 = vmax.f32 %v2552, 0.0
  %v2595 = vmax.f32 %v2555, 0.0
  %v2596 = vmax.f32 %v2557, 0.0
  %v2597 = vmax.f32 %v2560, 0.0
  %v2598 = vmax.f32 %v2562, 0.0
  %v2599 = vmax.f32 %v2565, 0.0
  %v2600 = vmax.f32 %v2567, 0.0
  %v2601 = vpack.c.bf16 %v2570, %v2569
  %v2602 = vpack.c.bf16 %v2572, %v2571
  %v2603 = vpack.c.bf16 %v2574, %v2573
  %v2604 = vpack.c.bf16 %v2576, %v2575
  %v2605 = vpack.c.bf16 %v2578, %v2577
  %v2606 = vpack.c.bf16 %v2580, %v2579
  %v2607 = vpack.c.bf16 %v2582, %v2581
  %v2608 = vpack.c.bf16 %v2584, %v2583
  %v2609 = vpack.c.bf16 %v2586, %v2585
  %v2610 = vpack.c.bf16 %v2588, %v2587
  %v2611 = vpack.c.bf16 %v2590, %v2589
  %v2612 = vpack.c.bf16 %v2592, %v2591
  %v2613 = vpack.c.bf16 %v2594, %v2593
  %v2614 = vpack.c.bf16 %v2596, %v2595
  %v2615 = vpack.c.bf16 %v2598, %v2597
  %v2616 = vpack.c.bf16 %v2600, %v2599
  %v2617 = vld [vmem:[%s49] sm:$0xf]
  %v2618 = vld [vmem:[%s49 + $0x4] sm:$0xf]
  %v2619 = vld [vmem:[%s49 + $0x8] sm:$0xf]
  %v2620 = vld [vmem:[%s49 + $0xc] sm:$0xf]
  %v2621 = vld [vmem:[%s49 + $0x10] sm:$0xf]
  %v2622 = vld [vmem:[%s49 + $0x14] sm:$0xf]
  %v2623 = vld [vmem:[%s49 + $0x18] sm:$0xf]
  %v2624 = vld [vmem:[%s49 + $0x1c] sm:$0xf]
  %v2625 = vld [vmem:[%s51] sm:$0x1]
  %v2627 = vperm.slane %v2625, 0
  %v2637 = vunpack.c.l.b16 %v2617
  %v2638 = vunpack.c.l.b16 %v2618
  %v2639 = vunpack.c.l.b16 %v2619
  %v2640 = vunpack.c.l.b16 %v2620
  %v2641 = vunpack.c.l.b16 %v2621
  %v2642 = vunpack.c.l.b16 %v2622
  %v2643 = vunpack.c.l.b16 %v2623
  %v2644 = vunpack.c.l.b16 %v2624
  %v2645 = vpack.c.b16 %v2638, %v2637
  %v2646 = vpack.c.b16 %v2640, %v2639
  %v2647 = vpack.c.b16 %v2642, %v2641
  %v2648 = vpack.c.b16 %v2644, %v2643
  %v2654 = vsel %vm474, %v2601, 0
  %v2657 = vsel %vm474, %v2602, 0
  %v2660 = vsel %vm474, %v2603, 0
  %v2663 = vsel %vm474, %v2604, 0
  %v2666 = vsel %vm474, %v2605, 0
  %v2669 = vsel %vm474, %v2606, 0
  %v2672 = vsel %vm474, %v2607, 0
  %v2675 = vsel %vm474, %v2608, 0
  %v2678 = vsel %vm474, %v2609, 0
  %v2681 = vsel %vm474, %v2610, 0
  %v2684 = vsel %vm474, %v2611, 0
  %v2687 = vsel %vm474, %v2612, 0
  %v2690 = vsel %vm474, %v2613, 0
  %v2693 = vsel %vm474, %v2614, 0
  %v2696 = vsel %vm474, %v2615, 0
  %v2699 = vsel %vm474, %v2616, 0
  %2701 = vmatpush.bf16.msra.mxu0 0
  %2702 = vmatpush.bf16.msra.mxu0 0
  %2703 = vmatpush.bf16.msra.mxu0 0
  %2704 = vmatpush.bf16.msra.mxu0 0
  %2705 = vmatpush.bf16.msra.mxu0 %v2648
  %2706 = vmatpush.bf16.msra.mxu0 %v2647
  %2707 = vmatpush.bf16.msra.mxu0 %v2646
  %2708 = vmatpush.bf16.msra.mxu0 %v2645
  %2709 = vmatmul.bf16.gmra.mxu0 %v2654
  %v2710 = vpop.f32.mrf.mxu0
  %v2711 = vadd.f32 %v2627, %v2710
  %v2712 = vpop.f32.mrf.mxu0
  %v2713 = vadd.f32 %v2627, %v2712
  %2714 = vmatmul.bf16.gmra.mxu0 %v2657
  %v2715 = vpop.f32.mrf.mxu0
  %v2716 = vadd.f32 %v2627, %v2715
  %v2717 = vpop.f32.mrf.mxu0
  %v2718 = vadd.f32 %v2627, %v2717
  %2719 = vmatmul.bf16.gmra.mxu0 %v2660
  %v2720 = vpop.f32.mrf.mxu0
  %v2721 = vadd.f32 %v2627, %v2720
  %v2722 = vpop.f32.mrf.mxu0
  %v2723 = vadd.f32 %v2627, %v2722
  %2724 = vmatmul.bf16.gmra.mxu0 %v2663
  %v2725 = vpop.f32.mrf.mxu0
  %v2726 = vadd.f32 %v2627, %v2725
  %v2727 = vpop.f32.mrf.mxu0
  %v2728 = vadd.f32 %v2627, %v2727
  %2729 = vmatmul.bf16.gmra.mxu0 %v2666
  %v2730 = vpop.f32.mrf.mxu0
  %v2731 = vadd.f32 %v2627, %v2730
  %v2732 = vpop.f32.mrf.mxu0
  %v2733 = vadd.f32 %v2627, %v2732
  %2734 = vmatmul.bf16.gmra.mxu0 %v2669
  %v2735 = vpop.f32.mrf.mxu0
  %v2736 = vadd.f32 %v2627, %v2735
  %v2737 = vpop.f32.mrf.mxu0
  %v2738 = vadd.f32 %v2627, %v2737
  %2739 = vmatmul.bf16.gmra.mxu0 %v2672
  %v2740 = vpop.f32.mrf.mxu0
  %v2741 = vadd.f32 %v2627, %v2740
  %v2742 = vpop.f32.mrf.mxu0
  %v2743 = vadd.f32 %v2627, %v2742
  %2744 = vmatmul.bf16.gmra.mxu0 %v2675
  %v2745 = vpop.f32.mrf.mxu0
  %v2746 = vadd.f32 %v2627, %v2745
  %v2747 = vpop.f32.mrf.mxu0
  %v2748 = vadd.f32 %v2627, %v2747
  %2749 = vmatmul.bf16.gmra.mxu0 %v2678
  %v2750 = vpop.f32.mrf.mxu0
  %v2751 = vadd.f32 %v2627, %v2750
  %v2752 = vpop.f32.mrf.mxu0
  %v2753 = vadd.f32 %v2627, %v2752
  %2754 = vmatmul.bf16.gmra.mxu0 %v2681
  %v2755 = vpop.f32.mrf.mxu0
  %v2756 = vadd.f32 %v2627, %v2755
  %v2757 = vpop.f32.mrf.mxu0
  %v2758 = vadd.f32 %v2627, %v2757
  %2759 = vmatmul.bf16.gmra.mxu0 %v2684
  %v2760 = vpop.f32.mrf.mxu0
  %v2761 = vadd.f32 %v2627, %v2760
  %v2762 = vpop.f32.mrf.mxu0
  %v2763 = vadd.f32 %v2627, %v2762
  %2764 = vmatmul.bf16.gmra.mxu0 %v2687
  %v2765 = vpop.f32.mrf.mxu0
  %v2766 = vadd.f32 %v2627, %v2765
  %v2767 = vpop.f32.mrf.mxu0
  %v2768 = vadd.f32 %v2627, %v2767
  %2769 = vmatmul.bf16.gmra.mxu0 %v2690
  %v2770 = vpop.f32.mrf.mxu0
  %v2771 = vadd.f32 %v2627, %v2770
  %v2772 = vpop.f32.mrf.mxu0
  %v2773 = vadd.f32 %v2627, %v2772
  %2774 = vmatmul.bf16.gmra.mxu0 %v2693
  %v2775 = vpop.f32.mrf.mxu0
  %v2776 = vadd.f32 %v2627, %v2775
  %v2777 = vpop.f32.mrf.mxu0
  %v2778 = vadd.f32 %v2627, %v2777
  %2779 = vmatmul.bf16.gmra.mxu0 %v2696
  %v2780 = vpop.f32.mrf.mxu0
  %v2781 = vadd.f32 %v2627, %v2780
  %v2782 = vpop.f32.mrf.mxu0
  %v2783 = vadd.f32 %v2627, %v2782
  %2784 = vmatmul.bf16.gmra.mxu0 %v2699
  %v2785 = vpop.f32.mrf.mxu0
  %v2786 = vadd.f32 %v2627, %v2785
  %v2787 = vpop.f32.mrf.mxu0
  %v2788 = vadd.f32 %v2627, %v2787
  %2789 = vdwg.mxu0
  %v2790 = vadd.f32 %v1054, %v2711
  %v2791 = vadd.f32 %v1055, %v2713
  %v2792 = vadd.f32 %v1056, %v2716
  %v2793 = vadd.f32 %v1057, %v2718
  %v2794 = vadd.f32 %v1058, %v2721
  %v2795 = vadd.f32 %v1059, %v2723
  %v2796 = vadd.f32 %v1060, %v2726
  %v2797 = vadd.f32 %v1061, %v2728
  %v2798 = vadd.f32 %v1062, %v2731
  %v2799 = vadd.f32 %v1063, %v2733
  %v2800 = vadd.f32 %v1064, %v2736
  %v2801 = vadd.f32 %v1065, %v2738
  %v2802 = vadd.f32 %v1066, %v2741
  %v2803 = vadd.f32 %v1067, %v2743
  %v2804 = vadd.f32 %v1068, %v2746
  %v2805 = vadd.f32 %v1069, %v2748
  %v2806 = vadd.f32 %v1070, %v2751
  %v2807 = vadd.f32 %v1071, %v2753
  %v2808 = vadd.f32 %v1072, %v2756
  %v2809 = vadd.f32 %v1073, %v2758
  %v2810 = vadd.f32 %v1074, %v2761
  %v2811 = vadd.f32 %v1075, %v2763
  %v2812 = vadd.f32 %v1076, %v2766
  %v2813 = vadd.f32 %v1077, %v2768
  %v2814 = vadd.f32 %v1078, %v2771
  %v2815 = vadd.f32 %v1079, %v2773
  %v2816 = vadd.f32 %v1080, %v2776
  %v2817 = vadd.f32 %v1081, %v2778
  %v2818 = vadd.f32 %v1082, %v2781
  %v2819 = vadd.f32 %v1083, %v2783
  %v2820 = vadd.f32 %v1084, %v2786
  %v2821 = vadd.f32 %v1085, %v2788
  %v2822 = vpack.c.bf16 %v2791, %v2790
  %v2823 = vpack.c.bf16 %v2793, %v2792
  %v2824 = vpack.c.bf16 %v2795, %v2794
  %v2825 = vpack.c.bf16 %v2797, %v2796
  %v2826 = vpack.c.bf16 %v2799, %v2798
  %v2827 = vpack.c.bf16 %v2801, %v2800
  %v2828 = vpack.c.bf16 %v2803, %v2802
  %v2829 = vpack.c.bf16 %v2805, %v2804
  %v2830 = vpack.c.bf16 %v2807, %v2806
  %v2831 = vpack.c.bf16 %v2809, %v2808
  %v2832 = vpack.c.bf16 %v2811, %v2810
  %v2833 = vpack.c.bf16 %v2813, %v2812
  %v2834 = vpack.c.bf16 %v2815, %v2814
  %v2835 = vpack.c.bf16 %v2817, %v2816
  %v2836 = vpack.c.bf16 %v2819, %v2818
  %v2837 = vpack.c.bf16 %v2821, %v2820
  %v2838 = vld [vmem:[%s53] sm:$0xf]
  %v2839 = vld [vmem:[%s53 + $0x4] sm:$0xf]
  %v2840 = vld [vmem:[%s53 + $0x8] sm:$0xf]
  %v2841 = vld [vmem:[%s53 + $0xc] sm:$0xf]
  %v2842 = vld [vmem:[%s55] sm:$0x1]
  %v2844 = vperm.slane %v2842, 0
  %v2850 = vunpack.c.l.b16 %v2838
  %v2851 = vunpack.c.l.b16 %v2839
  %v2852 = vunpack.c.l.b16 %v2840
  %v2853 = vunpack.c.l.b16 %v2841
  %v2854 = vpack.c.b16 %v2851, %v2850
  %v2855 = vpack.c.b16 %v2853, %v2852
  %v2859 = vsel %vm252, %v2822, 0
  %v2862 = vsel %vm252, %v2823, 0
  %v2865 = vsel %vm252, %v2824, 0
  %v2868 = vsel %vm252, %v2825, 0
  %v2871 = vsel %vm252, %v2826, 0
  %v2874 = vsel %vm252, %v2827, 0
  %v2877 = vsel %vm252, %v2828, 0
  %v2880 = vsel %vm252, %v2829, 0
  %v2883 = vsel %vm252, %v2830, 0
  %v2886 = vsel %vm252, %v2831, 0
  %v2889 = vsel %vm252, %v2832, 0
  %v2892 = vsel %vm252, %v2833, 0
  %v2895 = vsel %vm252, %v2834, 0
  %v2898 = vsel %vm252, %v2835, 0
  %v2901 = vsel %vm252, %v2836, 0
  %v2904 = vsel %vm252, %v2837, 0
  %2906 = vmatpush.bf16.msra.mxu0 0
  %2907 = vmatpush.bf16.msra.mxu0 0
  %2908 = vmatpush.bf16.msra.mxu0 0
  %2909 = vmatpush.bf16.msra.mxu0 0
  %2910 = vmatpush.bf16.msra.mxu0 0
  %2911 = vmatpush.bf16.msra.mxu0 0
  %2912 = vmatpush.bf16.msra.mxu0 %v2855
  %2913 = vmatpush.bf16.msra.mxu0 %v2854
  %2914 = vmatmul.bf16.gmra.mxu0 %v2859
  %v2915 = vpop.f32.mrf.mxu0
  %v2916 = vadd.f32 %v2844, %v2915
  %v2917 = vpop.f32.mrf.mxu0
  %v2918 = vadd.f32 %v2844, %v2917
  %2919 = vmatmul.bf16.gmra.mxu0 %v2862
  %v2920 = vpop.f32.mrf.mxu0
  %v2921 = vadd.f32 %v2844, %v2920
  %v2922 = vpop.f32.mrf.mxu0
  %v2923 = vadd.f32 %v2844, %v2922
  %2924 = vmatmul.bf16.gmra.mxu0 %v2865
  %v2925 = vpop.f32.mrf.mxu0
  %v2926 = vadd.f32 %v2844, %v2925
  %v2927 = vpop.f32.mrf.mxu0
  %v2928 = vadd.f32 %v2844, %v2927
  %2929 = vmatmul.bf16.gmra.mxu0 %v2868
  %v2930 = vpop.f32.mrf.mxu0
  %v2931 = vadd.f32 %v2844, %v2930
  %v2932 = vpop.f32.mrf.mxu0
  %v2933 = vadd.f32 %v2844, %v2932
  %2934 = vmatmul.bf16.gmra.mxu0 %v2871
  %v2935 = vpop.f32.mrf.mxu0
  %v2936 = vadd.f32 %v2844, %v2935
  %v2937 = vpop.f32.mrf.mxu0
  %v2938 = vadd.f32 %v2844, %v2937
  %2939 = vmatmul.bf16.gmra.mxu0 %v2874
  %v2940 = vpop.f32.mrf.mxu0
  %v2941 = vadd.f32 %v2844, %v2940
  %v2942 = vpop.f32.mrf.mxu0
  %v2943 = vadd.f32 %v2844, %v2942
  %2944 = vmatmul.bf16.gmra.mxu0 %v2877
  %v2945 = vpop.f32.mrf.mxu0
  %v2946 = vadd.f32 %v2844, %v2945
  %v2947 = vpop.f32.mrf.mxu0
  %v2948 = vadd.f32 %v2844, %v2947
  %2949 = vmatmul.bf16.gmra.mxu0 %v2880
  %v2950 = vpop.f32.mrf.mxu0
  %v2951 = vadd.f32 %v2844, %v2950
  %v2952 = vpop.f32.mrf.mxu0
  %v2953 = vadd.f32 %v2844, %v2952
  %2954 = vmatmul.bf16.gmra.mxu0 %v2883
  %v2955 = vpop.f32.mrf.mxu0
  %v2956 = vadd.f32 %v2844, %v2955
  %v2957 = vpop.f32.mrf.mxu0
  %v2958 = vadd.f32 %v2844, %v2957
  %2959 = vmatmul.bf16.gmra.mxu0 %v2886
  %v2960 = vpop.f32.mrf.mxu0
  %v2961 = vadd.f32 %v2844, %v2960
  %v2962 = vpop.f32.mrf.mxu0
  %v2963 = vadd.f32 %v2844, %v2962
  %2964 = vmatmul.bf16.gmra.mxu0 %v2889
  %v2965 = vpop.f32.mrf.mxu0
  %v2966 = vadd.f32 %v2844, %v2965
  %v2967 = vpop.f32.mrf.mxu0
  %v2968 = vadd.f32 %v2844, %v2967
  %2969 = vmatmul.bf16.gmra.mxu0 %v2892
  %v2970 = vpop.f32.mrf.mxu0
  %v2971 = vadd.f32 %v2844, %v2970
  %v2972 = vpop.f32.mrf.mxu0
  %v2973 = vadd.f32 %v2844, %v2972
  %2974 = vmatmul.bf16.gmra.mxu0 %v2895
  %v2975 = vpop.f32.mrf.mxu0
  %v2976 = vadd.f32 %v2844, %v2975
  %v2977 = vpop.f32.mrf.mxu0
  %v2978 = vadd.f32 %v2844, %v2977
  %2979 = vmatmul.bf16.gmra.mxu0 %v2898
  %v2980 = vpop.f32.mrf.mxu0
  %v2981 = vadd.f32 %v2844, %v2980
  %v2982 = vpop.f32.mrf.mxu0
  %v2983 = vadd.f32 %v2844, %v2982
  %2984 = vmatmul.bf16.gmra.mxu0 %v2901
  %v2985 = vpop.f32.mrf.mxu0
  %v2986 = vadd.f32 %v2844, %v2985
  %v2987 = vpop.f32.mrf.mxu0
  %v2988 = vadd.f32 %v2844, %v2987
  %2989 = vmatmul.bf16.gmra.mxu0 %v2904
  %v2990 = vpop.f32.mrf.mxu0
  %v2991 = vadd.f32 %v2844, %v2990
  %v2992 = vpop.f32.mrf.mxu0
  %v2993 = vadd.f32 %v2844, %v2992
  %2994 = vdwg.mxu0
  %v2995 = vmax.f32 %v2916, 0.0
  %v2996 = vmax.f32 %v2918, 0.0
  %v2997 = vmax.f32 %v2921, 0.0
  %v2998 = vmax.f32 %v2923, 0.0
  %v2999 = vmax.f32 %v2926, 0.0
  %v3000 = vmax.f32 %v2928, 0.0
  %v3001 = vmax.f32 %v2931, 0.0
  %v3002 = vmax.f32 %v2933, 0.0
  %v3003 = vmax.f32 %v2936, 0.0
  %v3004 = vmax.f32 %v2938, 0.0
  %v3005 = vmax.f32 %v2941, 0.0
  %v3006 = vmax.f32 %v2943, 0.0
  %v3007 = vmax.f32 %v2946, 0.0
  %v3008 = vmax.f32 %v2948, 0.0
  %v3009 = vmax.f32 %v2951, 0.0
  %v3010 = vmax.f32 %v2953, 0.0
  %v3011 = vmax.f32 %v2956, 0.0
  %v3012 = vmax.f32 %v2958, 0.0
  %v3013 = vmax.f32 %v2961, 0.0
  %v3014 = vmax.f32 %v2963, 0.0
  %v3015 = vmax.f32 %v2966, 0.0
  %v3016 = vmax.f32 %v2968, 0.0
  %v3017 = vmax.f32 %v2971, 0.0
  %v3018 = vmax.f32 %v2973, 0.0
  %v3019 = vmax.f32 %v2976, 0.0
  %v3020 = vmax.f32 %v2978, 0.0
  %v3021 = vmax.f32 %v2981, 0.0
  %v3022 = vmax.f32 %v2983, 0.0
  %v3023 = vmax.f32 %v2986, 0.0
  %v3024 = vmax.f32 %v2988, 0.0
  %v3025 = vmax.f32 %v2991, 0.0
  %v3026 = vmax.f32 %v2993, 0.0
  %v3027 = vpack.c.bf16 %v2996, %v2995
  %v3028 = vpack.c.bf16 %v2998, %v2997
  %v3029 = vpack.c.bf16 %v3000, %v2999
  %v3030 = vpack.c.bf16 %v3002, %v3001
  %v3031 = vpack.c.bf16 %v3004, %v3003
  %v3032 = vpack.c.bf16 %v3006, %v3005
  %v3033 = vpack.c.bf16 %v3008, %v3007
  %v3034 = vpack.c.bf16 %v3010, %v3009
  %v3035 = vpack.c.bf16 %v3012, %v3011
  %v3036 = vpack.c.bf16 %v3014, %v3013
  %v3037 = vpack.c.bf16 %v3016, %v3015
  %v3038 = vpack.c.bf16 %v3018, %v3017
  %v3039 = vpack.c.bf16 %v3020, %v3019
  %v3040 = vpack.c.bf16 %v3022, %v3021
  %v3041 = vpack.c.bf16 %v3024, %v3023
  %v3042 = vpack.c.bf16 %v3026, %v3025
  %v3043 = vld [vmem:[%s57] sm:$0xf]
  %v3044 = vld [vmem:[%s57 + $0x4] sm:$0xf]
  %v3045 = vld [vmem:[%s57 + $0x8] sm:$0xf]
  %v3046 = vld [vmem:[%s57 + $0xc] sm:$0xf]
  %v3047 = vld [vmem:[%s57 + $0x10] sm:$0xf]
  %v3048 = vld [vmem:[%s57 + $0x14] sm:$0xf]
  %v3049 = vld [vmem:[%s57 + $0x18] sm:$0xf]
  %v3050 = vld [vmem:[%s57 + $0x1c] sm:$0xf]
  %v3051 = vld [vmem:[%s59] sm:$0x1]
  %v3053 = vperm.slane %v3051, 0
  %v3063 = vunpack.c.l.b16 %v3043
  %v3064 = vunpack.c.l.b16 %v3044
  %v3065 = vunpack.c.l.b16 %v3045
  %v3066 = vunpack.c.l.b16 %v3046
  %v3067 = vunpack.c.l.b16 %v3047
  %v3068 = vunpack.c.l.b16 %v3048
  %v3069 = vunpack.c.l.b16 %v3049
  %v3070 = vunpack.c.l.b16 %v3050
  %v3071 = vpack.c.b16 %v3064, %v3063
  %v3072 = vpack.c.b16 %v3066, %v3065
  %v3073 = vpack.c.b16 %v3068, %v3067
  %v3074 = vpack.c.b16 %v3070, %v3069
  %v3080 = vsel %vm474, %v3027, 0
  %v3083 = vsel %vm474, %v3028, 0
  %v3086 = vsel %vm474, %v3029, 0
  %v3089 = vsel %vm474, %v3030, 0
  %v3092 = vsel %vm474, %v3031, 0
  %v3095 = vsel %vm474, %v3032, 0
  %v3098 = vsel %vm474, %v3033, 0
  %v3101 = vsel %vm474, %v3034, 0
  %v3104 = vsel %vm474, %v3035, 0
  %v3107 = vsel %vm474, %v3036, 0
  %v3110 = vsel %vm474, %v3037, 0
  %v3113 = vsel %vm474, %v3038, 0
  %v3116 = vsel %vm474, %v3039, 0
  %v3119 = vsel %vm474, %v3040, 0
  %v3122 = vsel %vm474, %v3041, 0
  %v3125 = vsel %vm474, %v3042, 0
  %3127 = vmatpush.bf16.msra.mxu0 0
  %3128 = vmatpush.bf16.msra.mxu0 0
  %3129 = vmatpush.bf16.msra.mxu0 0
  %3130 = vmatpush.bf16.msra.mxu0 0
  %3131 = vmatpush.bf16.msra.mxu0 %v3074
  %3132 = vmatpush.bf16.msra.mxu0 %v3073
  %3133 = vmatpush.bf16.msra.mxu0 %v3072
  %3134 = vmatpush.bf16.msra.mxu0 %v3071
  %3135 = vmatmul.bf16.gmra.mxu0 %v3080
  %v3136 = vpop.f32.mrf.mxu0
  %v3137 = vadd.f32 %v3053, %v3136
  %v3138 = vpop.f32.mrf.mxu0
  %v3139 = vadd.f32 %v3053, %v3138
  %3140 = vmatmul.bf16.gmra.mxu0 %v3083
  %v3141 = vpop.f32.mrf.mxu0
  %v3142 = vadd.f32 %v3053, %v3141
  %v3143 = vpop.f32.mrf.mxu0
  %v3144 = vadd.f32 %v3053, %v3143
  %3145 = vmatmul.bf16.gmra.mxu0 %v3086
  %v3146 = vpop.f32.mrf.mxu0
  %v3147 = vadd.f32 %v3053, %v3146
  %v3148 = vpop.f32.mrf.mxu0
  %v3149 = vadd.f32 %v3053, %v3148
  %3150 = vmatmul.bf16.gmra.mxu0 %v3089
  %v3151 = vpop.f32.mrf.mxu0
  %v3152 = vadd.f32 %v3053, %v3151
  %v3153 = vpop.f32.mrf.mxu0
  %v3154 = vadd.f32 %v3053, %v3153
  %3155 = vmatmul.bf16.gmra.mxu0 %v3092
  %v3156 = vpop.f32.mrf.mxu0
  %v3157 = vadd.f32 %v3053, %v3156
  %v3158 = vpop.f32.mrf.mxu0
  %v3159 = vadd.f32 %v3053, %v3158
  %3160 = vmatmul.bf16.gmra.mxu0 %v3095
  %v3161 = vpop.f32.mrf.mxu0
  %v3162 = vadd.f32 %v3053, %v3161
  %v3163 = vpop.f32.mrf.mxu0
  %v3164 = vadd.f32 %v3053, %v3163
  %3165 = vmatmul.bf16.gmra.mxu0 %v3098
  %v3166 = vpop.f32.mrf.mxu0
  %v3167 = vadd.f32 %v3053, %v3166
  %v3168 = vpop.f32.mrf.mxu0
  %v3169 = vadd.f32 %v3053, %v3168
  %3170 = vmatmul.bf16.gmra.mxu0 %v3101
  %v3171 = vpop.f32.mrf.mxu0
  %v3172 = vadd.f32 %v3053, %v3171
  %v3173 = vpop.f32.mrf.mxu0
  %v3174 = vadd.f32 %v3053, %v3173
  %3175 = vmatmul.bf16.gmra.mxu0 %v3104
  %v3176 = vpop.f32.mrf.mxu0
  %v3177 = vadd.f32 %v3053, %v3176
  %v3178 = vpop.f32.mrf.mxu0
  %v3179 = vadd.f32 %v3053, %v3178
  %3180 = vmatmul.bf16.gmra.mxu0 %v3107
  %v3181 = vpop.f32.mrf.mxu0
  %v3182 = vadd.f32 %v3053, %v3181
  %v3183 = vpop.f32.mrf.mxu0
  %v3184 = vadd.f32 %v3053, %v3183
  %3185 = vmatmul.bf16.gmra.mxu0 %v3110
  %v3186 = vpop.f32.mrf.mxu0
  %v3187 = vadd.f32 %v3053, %v3186
  %v3188 = vpop.f32.mrf.mxu0
  %v3189 = vadd.f32 %v3053, %v3188
  %3190 = vmatmul.bf16.gmra.mxu0 %v3113
  %v3191 = vpop.f32.mrf.mxu0
  %v3192 = vadd.f32 %v3053, %v3191
  %v3193 = vpop.f32.mrf.mxu0
  %v3194 = vadd.f32 %v3053, %v3193
  %3195 = vmatmul.bf16.gmra.mxu0 %v3116
  %v3196 = vpop.f32.mrf.mxu0
  %v3197 = vadd.f32 %v3053, %v3196
  %v3198 = vpop.f32.mrf.mxu0
  %v3199 = vadd.f32 %v3053, %v3198
  %3200 = vmatmul.bf16.gmra.mxu0 %v3119
  %v3201 = vpop.f32.mrf.mxu0
  %v3202 = vadd.f32 %v3053, %v3201
  %v3203 = vpop.f32.mrf.mxu0
  %v3204 = vadd.f32 %v3053, %v3203
  %3205 = vmatmul.bf16.gmra.mxu0 %v3122
  %v3206 = vpop.f32.mrf.mxu0
  %v3207 = vadd.f32 %v3053, %v3206
  %v3208 = vpop.f32.mrf.mxu0
  %v3209 = vadd.f32 %v3053, %v3208
  %3210 = vmatmul.bf16.gmra.mxu0 %v3125
  %v3211 = vpop.f32.mrf.mxu0
  %v3212 = vadd.f32 %v3053, %v3211
  %v3213 = vpop.f32.mrf.mxu0
  %v3214 = vadd.f32 %v3053, %v3213
  %3215 = vdwg.mxu0
  %v3216 = vmax.f32 %v3137, 0.0
  %v3217 = vmax.f32 %v3139, 0.0
  %v3218 = vmax.f32 %v3142, 0.0
  %v3219 = vmax.f32 %v3144, 0.0
  %v3220 = vmax.f32 %v3147, 0.0
  %v3221 = vmax.f32 %v3149, 0.0
  %v3222 = vmax.f32 %v3152, 0.0
  %v3223 = vmax.f32 %v3154, 0.0
  %v3224 = vmax.f32 %v3157, 0.0
  %v3225 = vmax.f32 %v3159, 0.0
  %v3226 = vmax.f32 %v3162, 0.0
  %v3227 = vmax.f32 %v3164, 0.0
  %v3228 = vmax.f32 %v3167, 0.0
  %v3229 = vmax.f32 %v3169, 0.0
  %v3230 = vmax.f32 %v3172, 0.0
  %v3231 = vmax.f32 %v3174, 0.0
  %v3232 = vmax.f32 %v3177, 0.0
  %v3233 = vmax.f32 %v3179, 0.0
  %v3234 = vmax.f32 %v3182, 0.0
  %v3235 = vmax.f32 %v3184, 0.0
  %v3236 = vmax.f32 %v3187, 0.0
  %v3237 = vmax.f32 %v3189, 0.0
  %v3238 = vmax.f32 %v3192, 0.0
  %v3239 = vmax.f32 %v3194, 0.0
  %v3240 = vmax.f32 %v3197, 0.0
  %v3241 = vmax.f32 %v3199, 0.0
  %v3242 = vmax.f32 %v3202, 0.0
  %v3243 = vmax.f32 %v3204, 0.0
  %v3244 = vmax.f32 %v3207, 0.0
  %v3245 = vmax.f32 %v3209, 0.0
  %v3246 = vmax.f32 %v3212, 0.0
  %v3247 = vmax.f32 %v3214, 0.0
  %v3248 = vpack.c.bf16 %v3217, %v3216
  %v3249 = vpack.c.bf16 %v3219, %v3218
  %v3250 = vpack.c.bf16 %v3221, %v3220
  %v3251 = vpack.c.bf16 %v3223, %v3222
  %v3252 = vpack.c.bf16 %v3225, %v3224
  %v3253 = vpack.c.bf16 %v3227, %v3226
  %v3254 = vpack.c.bf16 %v3229, %v3228
  %v3255 = vpack.c.bf16 %v3231, %v3230
  %v3256 = vpack.c.bf16 %v3233, %v3232
  %v3257 = vpack.c.bf16 %v3235, %v3234
  %v3258 = vpack.c.bf16 %v3237, %v3236
  %v3259 = vpack.c.bf16 %v3239, %v3238
  %v3260 = vpack.c.bf16 %v3241, %v3240
  %v3261 = vpack.c.bf16 %v3243, %v3242
  %v3262 = vpack.c.bf16 %v3245, %v3244
  %v3263 = vpack.c.bf16 %v3247, %v3246
  %v3264 = vld [vmem:[%s61] sm:$0xf]
  %v3265 = vld [vmem:[%s61 + $0x4] sm:$0xf]
  %v3266 = vld [vmem:[%s61 + $0x8] sm:$0xf]
  %v3267 = vld [vmem:[%s61 + $0xc] sm:$0xf]
  %v3268 = vld [vmem:[%s61 + $0x10] sm:$0xf]
  %v3269 = vld [vmem:[%s61 + $0x14] sm:$0xf]
  %v3270 = vld [vmem:[%s61 + $0x18] sm:$0xf]
  %v3271 = vld [vmem:[%s61 + $0x1c] sm:$0xf]
  %v3272 = vld [vmem:[%s63] sm:$0x1]
  %v3274 = vperm.slane %v3272, 0
  %v3284 = vunpack.c.l.b16 %v3264
  %v3285 = vunpack.c.l.b16 %v3265
  %v3286 = vunpack.c.l.b16 %v3266
  %v3287 = vunpack.c.l.b16 %v3267
  %v3288 = vunpack.c.l.b16 %v3268
  %v3289 = vunpack.c.l.b16 %v3269
  %v3290 = vunpack.c.l.b16 %v3270
  %v3291 = vunpack.c.l.b16 %v3271
  %v3292 = vpack.c.b16 %v3285, %v3284
  %v3293 = vpack.c.b16 %v3287, %v3286
  %v3294 = vpack.c.b16 %v3289, %v3288
  %v3295 = vpack.c.b16 %v3291, %v3290
  %v3301 = vsel %vm474, %v3248, 0
  %v3304 = vsel %vm474, %v3249, 0
  %v3307 = vsel %vm474, %v3250, 0
  %v3310 = vsel %vm474, %v3251, 0
  %v3313 = vsel %vm474, %v3252, 0
  %v3316 = vsel %vm474, %v3253, 0
  %v3319 = vsel %vm474, %v3254, 0
  %v3322 = vsel %vm474, %v3255, 0
  %v3325 = vsel %vm474, %v3256, 0
  %v3328 = vsel %vm474, %v3257, 0
  %v3331 = vsel %vm474, %v3258, 0
  %v3334 = vsel %vm474, %v3259, 0
  %v3337 = vsel %vm474, %v3260, 0
  %v3340 = vsel %vm474, %v3261, 0
  %v3343 = vsel %vm474, %v3262, 0
  %v3346 = vsel %vm474, %v3263, 0
  %3348 = vmatpush.bf16.msra.mxu0 0
  %3349 = vmatpush.bf16.msra.mxu0 0
  %3350 = vmatpush.bf16.msra.mxu0 0
  %3351 = vmatpush.bf16.msra.mxu0 0
  %3352 = vmatpush.bf16.msra.mxu0 %v3295
  %3353 = vmatpush.bf16.msra.mxu0 %v3294
  %3354 = vmatpush.bf16.msra.mxu0 %v3293
  %3355 = vmatpush.bf16.msra.mxu0 %v3292
  %3356 = vmatmul.bf16.gmra.mxu0 %v3301
  %v3357 = vpop.f32.mrf.mxu0
  %v3358 = vadd.f32 %v3274, %v3357
  %v3359 = vpop.f32.mrf.mxu0
  %v3360 = vadd.f32 %v3274, %v3359
  %3361 = vmatmul.bf16.gmra.mxu0 %v3304
  %v3362 = vpop.f32.mrf.mxu0
  %v3363 = vadd.f32 %v3274, %v3362
  %v3364 = vpop.f32.mrf.mxu0
  %v3365 = vadd.f32 %v3274, %v3364
  %3366 = vmatmul.bf16.gmra.mxu0 %v3307
  %v3367 = vpop.f32.mrf.mxu0
  %v3368 = vadd.f32 %v3274, %v3367
  %v3369 = vpop.f32.mrf.mxu0
  %v3370 = vadd.f32 %v3274, %v3369
  %3371 = vmatmul.bf16.gmra.mxu0 %v3310
  %v3372 = vpop.f32.mrf.mxu0
  %v3373 = vadd.f32 %v3274, %v3372
  %v3374 = vpop.f32.mrf.mxu0
  %v3375 = vadd.f32 %v3274, %v3374
  %3376 = vmatmul.bf16.gmra.mxu0 %v3313
  %v3377 = vpop.f32.mrf.mxu0
  %v3378 = vadd.f32 %v3274, %v3377
  %v3379 = vpop.f32.mrf.mxu0
  %v3380 = vadd.f32 %v3274, %v3379
  %3381 = vmatmul.bf16.gmra.mxu0 %v3316
  %v3382 = vpop.f32.mrf.mxu0
  %v3383 = vadd.f32 %v3274, %v3382
  %v3384 = vpop.f32.mrf.mxu0
  %v3385 = vadd.f32 %v3274, %v3384
  %3386 = vmatmul.bf16.gmra.mxu0 %v3319
  %v3387 = vpop.f32.mrf.mxu0
  %v3388 = vadd.f32 %v3274, %v3387
  %v3389 = vpop.f32.mrf.mxu0
  %v3390 = vadd.f32 %v3274, %v3389
  %3391 = vmatmul.bf16.gmra.mxu0 %v3322
  %v3392 = vpop.f32.mrf.mxu0
  %v3393 = vadd.f32 %v3274, %v3392
  %v3394 = vpop.f32.mrf.mxu0
  %v3395 = vadd.f32 %v3274, %v3394
  %3396 = vmatmul.bf16.gmra.mxu0 %v3325
  %v3397 = vpop.f32.mrf.mxu0
  %v3398 = vadd.f32 %v3274, %v3397
  %v3399 = vpop.f32.mrf.mxu0
  %v3400 = vadd.f32 %v3274, %v3399
  %3401 = vmatmul.bf16.gmra.mxu0 %v3328
  %v3402 = vpop.f32.mrf.mxu0
  %v3403 = vadd.f32 %v3274, %v3402
  %v3404 = vpop.f32.mrf.mxu0
  %v3405 = vadd.f32 %v3274, %v3404
  %3406 = vmatmul.bf16.gmra.mxu0 %v3331
  %v3407 = vpop.f32.mrf.mxu0
  %v3408 = vadd.f32 %v3274, %v3407
  %v3409 = vpop.f32.mrf.mxu0
  %v3410 = vadd.f32 %v3274, %v3409
  %3411 = vmatmul.bf16.gmra.mxu0 %v3334
  %v3412 = vpop.f32.mrf.mxu0
  %v3413 = vadd.f32 %v3274, %v3412
  %v3414 = vpop.f32.mrf.mxu0
  %v3415 = vadd.f32 %v3274, %v3414
  %3416 = vmatmul.bf16.gmra.mxu0 %v3337
  %v3417 = vpop.f32.mrf.mxu0
  %v3418 = vadd.f32 %v3274, %v3417
  %v3419 = vpop.f32.mrf.mxu0
  %v3420 = vadd.f32 %v3274, %v3419
  %3421 = vmatmul.bf16.gmra.mxu0 %v3340
  %v3422 = vpop.f32.mrf.mxu0
  %v3423 = vadd.f32 %v3274, %v3422
  %v3424 = vpop.f32.mrf.mxu0
  %v3425 = vadd.f32 %v3274, %v3424
  %3426 = vmatmul.bf16.gmra.mxu0 %v3343
  %v3427 = vpop.f32.mrf.mxu0
  %v3428 = vadd.f32 %v3274, %v3427
  %v3429 = vpop.f32.mrf.mxu0
  %v3430 = vadd.f32 %v3274, %v3429
  %3431 = vmatmul.bf16.gmra.mxu0 %v3346
  %v3432 = vpop.f32.mrf.mxu0
  %v3433 = vadd.f32 %v3274, %v3432
  %v3434 = vpop.f32.mrf.mxu0
  %v3435 = vadd.f32 %v3274, %v3434
  %3436 = vdwg.mxu0
  %v3437 = vmax.f32 %v3358, 0.0
  %v3438 = vmax.f32 %v3360, 0.0
  %v3439 = vmax.f32 %v3363, 0.0
  %v3440 = vmax.f32 %v3365, 0.0
  %v3441 = vmax.f32 %v3368, 0.0
  %v3442 = vmax.f32 %v3370, 0.0
  %v3443 = vmax.f32 %v3373, 0.0
  %v3444 = vmax.f32 %v3375, 0.0
  %v3445 = vmax.f32 %v3378, 0.0
  %v3446 = vmax.f32 %v3380, 0.0
  %v3447 = vmax.f32 %v3383, 0.0
  %v3448 = vmax.f32 %v3385, 0.0
  %v3449 = vmax.f32 %v3388, 0.0
  %v3450 = vmax.f32 %v3390, 0.0
  %v3451 = vmax.f32 %v3393, 0.0
  %v3452 = vmax.f32 %v3395, 0.0
  %v3453 = vmax.f32 %v3398, 0.0
  %v3454 = vmax.f32 %v3400, 0.0
  %v3455 = vmax.f32 %v3403, 0.0
  %v3456 = vmax.f32 %v3405, 0.0
  %v3457 = vmax.f32 %v3408, 0.0
  %v3458 = vmax.f32 %v3410, 0.0
  %v3459 = vmax.f32 %v3413, 0.0
  %v3460 = vmax.f32 %v3415, 0.0
  %v3461 = vmax.f32 %v3418, 0.0
  %v3462 = vmax.f32 %v3420, 0.0
  %v3463 = vmax.f32 %v3423, 0.0
  %v3464 = vmax.f32 %v3425, 0.0
  %v3465 = vmax.f32 %v3428, 0.0
  %v3466 = vmax.f32 %v3430, 0.0
  %v3467 = vmax.f32 %v3433, 0.0
  %v3468 = vmax.f32 %v3435, 0.0
  %v3469 = vpack.c.bf16 %v3438, %v3437
  %v3470 = vpack.c.bf16 %v3440, %v3439
  %v3471 = vpack.c.bf16 %v3442, %v3441
  %v3472 = vpack.c.bf16 %v3444, %v3443
  %v3473 = vpack.c.bf16 %v3446, %v3445
  %v3474 = vpack.c.bf16 %v3448, %v3447
  %v3475 = vpack.c.bf16 %v3450, %v3449
  %v3476 = vpack.c.bf16 %v3452, %v3451
  %v3477 = vpack.c.bf16 %v3454, %v3453
  %v3478 = vpack.c.bf16 %v3456, %v3455
  %v3479 = vpack.c.bf16 %v3458, %v3457
  %v3480 = vpack.c.bf16 %v3460, %v3459
  %v3481 = vpack.c.bf16 %v3462, %v3461
  %v3482 = vpack.c.bf16 %v3464, %v3463
  %v3483 = vpack.c.bf16 %v3466, %v3465
  %v3484 = vpack.c.bf16 %v3468, %v3467
  %v3485 = vld [vmem:[%s65] sm:$0xf]
  %v3486 = vld [vmem:[%s65 + $0x4] sm:$0xf]
  %v3487 = vld [vmem:[%s65 + $0x8] sm:$0xf]
  %v3488 = vld [vmem:[%s65 + $0xc] sm:$0xf]
  %v3489 = vld [vmem:[%s65 + $0x10] sm:$0xf]
  %v3490 = vld [vmem:[%s65 + $0x14] sm:$0xf]
  %v3491 = vld [vmem:[%s65 + $0x18] sm:$0xf]
  %v3492 = vld [vmem:[%s65 + $0x1c] sm:$0xf]
  %v3493 = vld [vmem:[%s67] sm:$0x1]
  %v3495 = vperm.slane %v3493, 0
  %v3505 = vunpack.c.l.b16 %v3485
  %v3506 = vunpack.c.l.b16 %v3486
  %v3507 = vunpack.c.l.b16 %v3487
  %v3508 = vunpack.c.l.b16 %v3488
  %v3509 = vunpack.c.l.b16 %v3489
  %v3510 = vunpack.c.l.b16 %v3490
  %v3511 = vunpack.c.l.b16 %v3491
  %v3512 = vunpack.c.l.b16 %v3492
  %v3513 = vpack.c.b16 %v3506, %v3505
  %v3514 = vpack.c.b16 %v3508, %v3507
  %v3515 = vpack.c.b16 %v3510, %v3509
  %v3516 = vpack.c.b16 %v3512, %v3511
  %v3522 = vsel %vm474, %v3469, 0
  %v3525 = vsel %vm474, %v3470, 0
  %v3528 = vsel %vm474, %v3471, 0
  %v3531 = vsel %vm474, %v3472, 0
  %v3534 = vsel %vm474, %v3473, 0
  %v3537 = vsel %vm474, %v3474, 0
  %v3540 = vsel %vm474, %v3475, 0
  %v3543 = vsel %vm474, %v3476, 0
  %v3546 = vsel %vm474, %v3477, 0
  %v3549 = vsel %vm474, %v3478, 0
  %v3552 = vsel %vm474, %v3479, 0
  %v3555 = vsel %vm474, %v3480, 0
  %v3558 = vsel %vm474, %v3481, 0
  %v3561 = vsel %vm474, %v3482, 0
  %v3564 = vsel %vm474, %v3483, 0
  %v3567 = vsel %vm474, %v3484, 0
  %3569 = vmatpush.bf16.msra.mxu0 0
  %3570 = vmatpush.bf16.msra.mxu0 0
  %3571 = vmatpush.bf16.msra.mxu0 0
  %3572 = vmatpush.bf16.msra.mxu0 0
  %3573 = vmatpush.bf16.msra.mxu0 %v3516
  %3574 = vmatpush.bf16.msra.mxu0 %v3515
  %3575 = vmatpush.bf16.msra.mxu0 %v3514
  %3576 = vmatpush.bf16.msra.mxu0 %v3513
  %3577 = vmatmul.bf16.gmra.mxu0 %v3522
  %v3578 = vpop.f32.mrf.mxu0
  %v3579 = vadd.f32 %v3495, %v3578
  %v3580 = vpop.f32.mrf.mxu0
  %v3581 = vadd.f32 %v3495, %v3580
  %3582 = vmatmul.bf16.gmra.mxu0 %v3525
  %v3583 = vpop.f32.mrf.mxu0
  %v3584 = vadd.f32 %v3495, %v3583
  %v3585 = vpop.f32.mrf.mxu0
  %v3586 = vadd.f32 %v3495, %v3585
  %3587 = vmatmul.bf16.gmra.mxu0 %v3528
  %v3588 = vpop.f32.mrf.mxu0
  %v3589 = vadd.f32 %v3495, %v3588
  %v3590 = vpop.f32.mrf.mxu0
  %v3591 = vadd.f32 %v3495, %v3590
  %3592 = vmatmul.bf16.gmra.mxu0 %v3531
  %v3593 = vpop.f32.mrf.mxu0
  %v3594 = vadd.f32 %v3495, %v3593
  %v3595 = vpop.f32.mrf.mxu0
  %v3596 = vadd.f32 %v3495, %v3595
  %3597 = vmatmul.bf16.gmra.mxu0 %v3534
  %v3598 = vpop.f32.mrf.mxu0
  %v3599 = vadd.f32 %v3495, %v3598
  %v3600 = vpop.f32.mrf.mxu0
  %v3601 = vadd.f32 %v3495, %v3600
  %3602 = vmatmul.bf16.gmra.mxu0 %v3537
  %v3603 = vpop.f32.mrf.mxu0
  %v3604 = vadd.f32 %v3495, %v3603
  %v3605 = vpop.f32.mrf.mxu0
  %v3606 = vadd.f32 %v3495, %v3605
  %3607 = vmatmul.bf16.gmra.mxu0 %v3540
  %v3608 = vpop.f32.mrf.mxu0
  %v3609 = vadd.f32 %v3495, %v3608
  %v3610 = vpop.f32.mrf.mxu0
  %v3611 = vadd.f32 %v3495, %v3610
  %3612 = vmatmul.bf16.gmra.mxu0 %v3543
  %v3613 = vpop.f32.mrf.mxu0
  %v3614 = vadd.f32 %v3495, %v3613
  %v3615 = vpop.f32.mrf.mxu0
  %v3616 = vadd.f32 %v3495, %v3615
  %3617 = vmatmul.bf16.gmra.mxu0 %v3546
  %v3618 = vpop.f32.mrf.mxu0
  %v3619 = vadd.f32 %v3495, %v3618
  %v3620 = vpop.f32.mrf.mxu0
  %v3621 = vadd.f32 %v3495, %v3620
  %3622 = vmatmul.bf16.gmra.mxu0 %v3549
  %v3623 = vpop.f32.mrf.mxu0
  %v3624 = vadd.f32 %v3495, %v3623
  %v3625 = vpop.f32.mrf.mxu0
  %v3626 = vadd.f32 %v3495, %v3625
  %3627 = vmatmul.bf16.gmra.mxu0 %v3552
  %v3628 = vpop.f32.mrf.mxu0
  %v3629 = vadd.f32 %v3495, %v3628
  %v3630 = vpop.f32.mrf.mxu0
  %v3631 = vadd.f32 %v3495, %v3630
  %3632 = vmatmul.bf16.gmra.mxu0 %v3555
  %v3633 = vpop.f32.mrf.mxu0
  %v3634 = vadd.f32 %v3495, %v3633
  %v3635 = vpop.f32.mrf.mxu0
  %v3636 = vadd.f32 %v3495, %v3635
  %3637 = vmatmul.bf16.gmra.mxu0 %v3558
  %v3638 = vpop.f32.mrf.mxu0
  %v3639 = vadd.f32 %v3495, %v3638
  %v3640 = vpop.f32.mrf.mxu0
  %v3641 = vadd.f32 %v3495, %v3640
  %3642 = vmatmul.bf16.gmra.mxu0 %v3561
  %v3643 = vpop.f32.mrf.mxu0
  %v3644 = vadd.f32 %v3495, %v3643
  %v3645 = vpop.f32.mrf.mxu0
  %v3646 = vadd.f32 %v3495, %v3645
  %3647 = vmatmul.bf16.gmra.mxu0 %v3564
  %v3648 = vpop.f32.mrf.mxu0
  %v3649 = vadd.f32 %v3495, %v3648
  %v3650 = vpop.f32.mrf.mxu0
  %v3651 = vadd.f32 %v3495, %v3650
  %3652 = vmatmul.bf16.gmra.mxu0 %v3567
  %v3653 = vpop.f32.mrf.mxu0
  %v3654 = vadd.f32 %v3495, %v3653
  %v3655 = vpop.f32.mrf.mxu0
  %v3656 = vadd.f32 %v3495, %v3655
  %3657 = vdwg.mxu0
  %v3658 = vadd.f32 %v1922, %v3579
  %v3659 = vadd.f32 %v1923, %v3581
  %v3660 = vadd.f32 %v1924, %v3584
  %v3661 = vadd.f32 %v1925, %v3586
  %v3662 = vadd.f32 %v1926, %v3589
  %v3663 = vadd.f32 %v1927, %v3591
  %v3664 = vadd.f32 %v1928, %v3594
  %v3665 = vadd.f32 %v1929, %v3596
  %v3666 = vadd.f32 %v1930, %v3599
  %v3667 = vadd.f32 %v1931, %v3601
  %v3668 = vadd.f32 %v1932, %v3604
  %v3669 = vadd.f32 %v1933, %v3606
  %v3670 = vadd.f32 %v1934, %v3609
  %v3671 = vadd.f32 %v1935, %v3611
  %v3672 = vadd.f32 %v1936, %v3614
  %v3673 = vadd.f32 %v1937, %v3616
  %v3674 = vadd.f32 %v1938, %v3619
  %v3675 = vadd.f32 %v1939, %v3621
  %v3676 = vadd.f32 %v1940, %v3624
  %v3677 = vadd.f32 %v1941, %v3626
  %v3678 = vadd.f32 %v1942, %v3629
  %v3679 = vadd.f32 %v1943, %v3631
  %v3680 = vadd.f32 %v1944, %v3634
  %v3681 = vadd.f32 %v1945, %v3636
  %v3682 = vadd.f32 %v1946, %v3639
  %v3683 = vadd.f32 %v1947, %v3641
  %v3684 = vadd.f32 %v1948, %v3644
  %v3685 = vadd.f32 %v1949, %v3646
  %v3686 = vadd.f32 %v1950, %v3649
  %v3687 = vadd.f32 %v1951, %v3651
  %v3688 = vadd.f32 %v1952, %v3654
  %v3689 = vadd.f32 %v1953, %v3656
  %3722 = vrot.lane.b32.xlu0 %v3658, 32
  %v3723 = vpop.permute.xlu0 %3722
  %3724 = vrot.lane.b32.xlu0 %v3659, 32
  %v3725 = vpop.permute.xlu0 %3724
  %3726 = vrot.lane.b32.xlu0 %v3660, 32
  %v3727 = vpop.permute.xlu0 %3726
  %3728 = vrot.lane.b32.xlu0 %v3661, 32
  %v3729 = vpop.permute.xlu0 %3728
  %3730 = vrot.lane.b32.xlu0 %v3662, 32
  %v3731 = vpop.permute.xlu0 %3730
  %3732 = vrot.lane.b32.xlu0 %v3663, 32
  %v3733 = vpop.permute.xlu0 %3732
  %3734 = vrot.lane.b32.xlu0 %v3664, 32
  %v3735 = vpop.permute.xlu0 %3734
  %3736 = vrot.lane.b32.xlu0 %v3665, 32
  %v3737 = vpop.permute.xlu0 %3736
  %3738 = vrot.lane.b32.xlu0 %v3666, 32
  %v3739 = vpop.permute.xlu0 %3738
  %3740 = vrot.lane.b32.xlu0 %v3667, 32
  %v3741 = vpop.permute.xlu0 %3740
  %3742 = vrot.lane.b32.xlu0 %v3668, 32
  %v3743 = vpop.permute.xlu0 %3742
  %3744 = vrot.lane.b32.xlu0 %v3669, 32
  %v3745 = vpop.permute.xlu0 %3744
  %3746 = vrot.lane.b32.xlu0 %v3670, 32
  %v3747 = vpop.permute.xlu0 %3746
  %3748 = vrot.lane.b32.xlu0 %v3671, 32
  %v3749 = vpop.permute.xlu0 %3748
  %3750 = vrot.lane.b32.xlu0 %v3672, 32
  %v3751 = vpop.permute.xlu0 %3750
  %3752 = vrot.lane.b32.xlu0 %v3673, 32
  %v3753 = vpop.permute.xlu0 %3752
  %3754 = vrot.lane.b32.xlu0 %v3674, 32
  %v3755 = vpop.permute.xlu0 %3754
  %3756 = vrot.lane.b32.xlu0 %v3675, 32
  %v3757 = vpop.permute.xlu0 %3756
  %3758 = vrot.lane.b32.xlu0 %v3676, 32
  %v3759 = vpop.permute.xlu0 %3758
  %3760 = vrot.lane.b32.xlu0 %v3677, 32
  %v3761 = vpop.permute.xlu0 %3760
  %3762 = vrot.lane.b32.xlu0 %v3678, 32
  %v3763 = vpop.permute.xlu0 %3762
  %3764 = vrot.lane.b32.xlu0 %v3679, 32
  %v3765 = vpop.permute.xlu0 %3764
  %3766 = vrot.lane.b32.xlu0 %v3680, 32
  %v3767 = vpop.permute.xlu0 %3766
  %3768 = vrot.lane.b32.xlu0 %v3681, 32
  %v3769 = vpop.permute.xlu0 %3768
  %3770 = vrot.lane.b32.xlu0 %v3682, 32
  %v3771 = vpop.permute.xlu0 %3770
  %3772 = vrot.lane.b32.xlu0 %v3683, 32
  %v3773 = vpop.permute.xlu0 %3772
  %3774 = vrot.lane.b32.xlu0 %v3684, 32
  %v3775 = vpop.permute.xlu0 %3774
  %3776 = vrot.lane.b32.xlu0 %v3685, 32
  %v3777 = vpop.permute.xlu0 %3776
  %3778 = vrot.lane.b32.xlu0 %v3686, 32
  %v3779 = vpop.permute.xlu0 %3778
  %3780 = vrot.lane.b32.xlu0 %v3687, 32
  %v3781 = vpop.permute.xlu0 %3780
  %3782 = vrot.lane.b32.xlu0 %v3688, 32
  %v3783 = vpop.permute.xlu0 %3782
  %3784 = vrot.lane.b32.xlu0 %v3689, 32
  %v3785 = vpop.permute.xlu0 %3784
  %v3818 = vsel %vm252, %v2790, %v3723
  %v3819 = vsel %vm252, %v2791, %v3725
  %v3820 = vsel %vm252, %v2792, %v3727
  %v3821 = vsel %vm252, %v2793, %v3729
  %v3822 = vsel %vm252, %v2794, %v3731
  %v3823 = vsel %vm252, %v2795, %v3733
  %v3824 = vsel %vm252, %v2796, %v3735
  %v3825 = vsel %vm252, %v2797, %v3737
  %v3826 = vsel %vm252, %v2798, %v3739
  %v3827 = vsel %vm252, %v2799, %v3741
  %v3828 = vsel %vm252, %v2800, %v3743
  %v3829 = vsel %vm252, %v2801, %v3745
  %v3830 = vsel %vm252, %v2802, %v3747
  %v3831 = vsel %vm252, %v2803, %v3749
  %v3832 = vsel %vm252, %v2804, %v3751
  %v3833 = vsel %vm252, %v2805, %v3753
  %v3834 = vsel %vm252, %v2806, %v3755
  %v3835 = vsel %vm252, %v2807, %v3757
  %v3836 = vsel %vm252, %v2808, %v3759
  %v3837 = vsel %vm252, %v2809, %v3761
  %v3838 = vsel %vm252, %v2810, %v3763
  %v3839 = vsel %vm252, %v2811, %v3765
  %v3840 = vsel %vm252, %v2812, %v3767
  %v3841 = vsel %vm252, %v2813, %v3769
  %v3842 = vsel %vm252, %v2814, %v3771
  %v3843 = vsel %vm252, %v2815, %v3773
  %v3844 = vsel %vm252, %v2816, %v3775
  %v3845 = vsel %vm252, %v2817, %v3777
  %v3846 = vsel %vm252, %v2818, %v3779
  %v3847 = vsel %vm252, %v2819, %v3781
  %v3848 = vsel %vm252, %v2820, %v3783
  %v3849 = vsel %vm252, %v2821, %v3785
  %v3850 = vld [vmem:[%s69] sm:$0x1]
  %v3852 = vperm.slane %v3850, 0
  %v3854 = vmul.f32 %v3818, %v3852
  %v3855 = vmul.f32 %v3819, %v3852
  %v3856 = vmul.f32 %v3820, %v3852
  %v3857 = vmul.f32 %v3821, %v3852
  %v3858 = vmul.f32 %v3822, %v3852
  %v3859 = vmul.f32 %v3823, %v3852
  %v3860 = vmul.f32 %v3824, %v3852
  %v3861 = vmul.f32 %v3825, %v3852
  %v3862 = vmul.f32 %v3826, %v3852
  %v3863 = vmul.f32 %v3827, %v3852
  %v3864 = vmul.f32 %v3828, %v3852
  %v3865 = vmul.f32 %v3829, %v3852
  %v3866 = vmul.f32 %v3830, %v3852
  %v3867 = vmul.f32 %v3831, %v3852
  %v3868 = vmul.f32 %v3832, %v3852
  %v3869 = vmul.f32 %v3833, %v3852
  %v3870 = vmul.f32 %v3834, %v3852
  %v3871 = vmul.f32 %v3835, %v3852
  %v3872 = vmul.f32 %v3836, %v3852
  %v3873 = vmul.f32 %v3837, %v3852
  %v3874 = vmul.f32 %v3838, %v3852
  %v3875 = vmul.f32 %v3839, %v3852
  %v3876 = vmul.f32 %v3840, %v3852
  %v3877 = vmul.f32 %v3841, %v3852
  %v3878 = vmul.f32 %v3842, %v3852
  %v3879 = vmul.f32 %v3843, %v3852
  %v3880 = vmul.f32 %v3844, %v3852
  %v3881 = vmul.f32 %v3845, %v3852
  %v3882 = vmul.f32 %v3846, %v3852
  %v3883 = vmul.f32 %v3847, %v3852
  %v3884 = vmul.f32 %v3848, %v3852
  %v3885 = vmul.f32 %v3849, %v3852
  %v3886 = vand.u32 2147483647, %v3854
  %v3887 = vand.u32 2147483647, %v3855
  %v3888 = vand.u32 2147483647, %v3856
  %v3889 = vand.u32 2147483647, %v3857
  %v3890 = vand.u32 2147483647, %v3858
  %v3891 = vand.u32 2147483647, %v3859
  %v3892 = vand.u32 2147483647, %v3860
  %v3893 = vand.u32 2147483647, %v3861
  %v3894 = vand.u32 2147483647, %v3862
  %v3895 = vand.u32 2147483647, %v3863
  %v3896 = vand.u32 2147483647, %v3864
  %v3897 = vand.u32 2147483647, %v3865
  %v3898 = vand.u32 2147483647, %v3866
  %v3899 = vand.u32 2147483647, %v3867
  %v3900 = vand.u32 2147483647, %v3868
  %v3901 = vand.u32 2147483647, %v3869
  %v3902 = vand.u32 2147483647, %v3870
  %v3903 = vand.u32 2147483647, %v3871
  %v3904 = vand.u32 2147483647, %v3872
  %v3905 = vand.u32 2147483647, %v3873
  %v3906 = vand.u32 2147483647, %v3874
  %v3907 = vand.u32 2147483647, %v3875
  %v3908 = vand.u32 2147483647, %v3876
  %v3909 = vand.u32 2147483647, %v3877
  %v3910 = vand.u32 2147483647, %v3878
  %v3911 = vand.u32 2147483647, %v3879
  %v3912 = vand.u32 2147483647, %v3880
  %v3913 = vand.u32 2147483647, %v3881
  %v3914 = vand.u32 2147483647, %v3882
  %v3915 = vand.u32 2147483647, %v3883
  %v3916 = vand.u32 2147483647, %v3884
  %v3917 = vand.u32 2147483647, %v3885
  %v3918 = vsub.f32 0.0, %v3886
  %v3919 = vsub.f32 0.0, %v3887
  %v3920 = vsub.f32 0.0, %v3888
  %v3921 = vsub.f32 0.0, %v3889
  %v3922 = vsub.f32 0.0, %v3890
  %v3923 = vsub.f32 0.0, %v3891
  %v3924 = vsub.f32 0.0, %v3892
  %v3925 = vsub.f32 0.0, %v3893
  %v3926 = vsub.f32 0.0, %v3894
  %v3927 = vsub.f32 0.0, %v3895
  %v3928 = vsub.f32 0.0, %v3896
  %v3929 = vsub.f32 0.0, %v3897
  %v3930 = vsub.f32 0.0, %v3898
  %v3931 = vsub.f32 0.0, %v3899
  %v3932 = vsub.f32 0.0, %v3900
  %v3933 = vsub.f32 0.0, %v3901
  %v3934 = vsub.f32 0.0, %v3902
  %v3935 = vsub.f32 0.0, %v3903
  %v3936 = vsub.f32 0.0, %v3904
  %v3937 = vsub.f32 0.0, %v3905
  %v3938 = vsub.f32 0.0, %v3906
  %v3939 = vsub.f32 0.0, %v3907
  %v3940 = vsub.f32 0.0, %v3908
  %v3941 = vsub.f32 0.0, %v3909
  %v3942 = vsub.f32 0.0, %v3910
  %v3943 = vsub.f32 0.0, %v3911
  %v3944 = vsub.f32 0.0, %v3912
  %v3945 = vsub.f32 0.0, %v3913
  %v3946 = vsub.f32 0.0, %v3914
  %v3947 = vsub.f32 0.0, %v3915
  %v3948 = vsub.f32 0.0, %v3916
  %v3949 = vsub.f32 0.0, %v3917
  %v3950 = vmul.f32 %v3918, 1.442695
  %v3951 = vpow.pop %v3950
  %v3952 = vmul.f32 %v3919, 1.442695
  %v3953 = vpow.pop %v3952
  %v3954 = vmul.f32 %v3920, 1.442695
  %v3955 = vpow.pop %v3954
  %v3956 = vmul.f32 %v3921, 1.442695
  %v3957 = vpow.pop %v3956
  %v3958 = vmul.f32 %v3922, 1.442695
  %v3959 = vpow.pop %v3958
  %v3960 = vmul.f32 %v3923, 1.442695
  %v3961 = vpow.pop %v3960
  %v3962 = vmul.f32 %v3924, 1.442695
  %v3963 = vpow.pop %v3962
  %v3964 = vmul.f32 %v3925, 1.442695
  %v3965 = vpow.pop %v3964
  %v3966 = vmul.f32 %v3926, 1.442695
  %v3967 = vpow.pop %v3966
  %v3968 = vmul.f32 %v3927, 1.442695
  %v3969 = vpow.pop %v3968
  %v3970 = vmul.f32 %v3928, 1.442695
  %v3971 = vpow.pop %v3970
  %v3972 = vmul.f32 %v3929, 1.442695
  %v3973 = vpow.pop %v3972
  %v3974 = vmul.f32 %v3930, 1.442695
  %v3975 = vpow.pop %v3974
  %v3976 = vmul.f32 %v3931, 1.442695
  %v3977 = vpow.pop %v3976
  %v3978 = vmul.f32 %v3932, 1.442695
  %v3979 = vpow.pop %v3978
  %v3980 = vmul.f32 %v3933, 1.442695
  %v3981 = vpow.pop %v3980
  %v3982 = vmul.f32 %v3934, 1.442695
  %v3983 = vpow.pop %v3982
  %v3984 = vmul.f32 %v3935, 1.442695
  %v3985 = vpow.pop %v3984
  %v3986 = vmul.f32 %v3936, 1.442695
  %v3987 = vpow.pop %v3986
  %v3988 = vmul.f32 %v3937, 1.442695
  %v3989 = vpow.pop %v3988
  %v3990 = vmul.f32 %v3938, 1.442695
  %v3991 = vpow.pop %v3990
  %v3992 = vmul.f32 %v3939, 1.442695
  %v3993 = vpow.pop %v3992
  %v3994 = vmul.f32 %v3940, 1.442695
  %v3995 = vpow.pop %v3994
  %v3996 = vmul.f32 %v3941, 1.442695
  %v3997 = vpow.pop %v3996
  %v3998 = vmul.f32 %v3942, 1.442695
  %v3999 = vpow.pop %v3998
  %v4000 = vmul.f32 %v3943, 1.442695
  %v4001 = vpow.pop %v4000
  %v4002 = vmul.f32 %v3944, 1.442695
  %v4003 = vpow.pop %v4002
  %v4004 = vmul.f32 %v3945, 1.442695
  %v4005 = vpow.pop %v4004
  %v4006 = vmul.f32 %v3946, 1.442695
  %v4007 = vpow.pop %v4006
  %v4008 = vmul.f32 %v3947, 1.442695
  %v4009 = vpow.pop %v4008
  %v4010 = vmul.f32 %v3948, 1.442695
  %v4011 = vpow.pop %v4010
  %v4012 = vmul.f32 %v3949, 1.442695
  %v4013 = vpow.pop %v4012
  %v4014 = vadd.f32 %v3951, 1.0
  %v4015 = vlog2.pop %v4014
  %v4016 = vmul.f32 %v4015, 0.6931472
  %v4017 = vmul.f32 -0.5, %v3951
  %v4018 = vadd.f32 %v4017, 1.0
  %v4019 = vmul.f32 %v4018, %v3951
  %v4020 = vand.u32 2147483647, %v3951
  %vm4021 = vcmp.lt.f32.partialorder %v4020, 0.0004427343
  %v4022 = vsel %vm4021, %v4019, %v4016
  %v4023 = vadd.f32 %v3953, 1.0
  %v4024 = vlog2.pop %v4023
  %v4025 = vmul.f32 %v4024, 0.6931472
  %v4026 = vmul.f32 -0.5, %v3953
  %v4027 = vadd.f32 %v4026, 1.0
  %v4028 = vmul.f32 %v4027, %v3953
  %v4029 = vand.u32 2147483647, %v3953
  %vm4030 = vcmp.lt.f32.partialorder %v4029, 0.0004427343
  %v4031 = vsel %vm4030, %v4028, %v4025
  %v4032 = vadd.f32 %v3955, 1.0
  %v4033 = vlog2.pop %v4032
  %v4034 = vmul.f32 %v4033, 0.6931472
  %v4035 = vmul.f32 -0.5, %v3955
  %v4036 = vadd.f32 %v4035, 1.0
  %v4037 = vmul.f32 %v4036, %v3955
  %v4038 = vand.u32 2147483647, %v3955
  %vm4039 = vcmp.lt.f32.partialorder %v4038, 0.0004427343
  %v4040 = vsel %vm4039, %v4037, %v4034
  %v4041 = vadd.f32 %v3957, 1.0
  %v4042 = vlog2.pop %v4041
  %v4043 = vmul.f32 %v4042, 0.6931472
  %v4044 = vmul.f32 -0.5, %v3957
  %v4045 = vadd.f32 %v4044, 1.0
  %v4046 = vmul.f32 %v4045, %v3957
  %v4047 = vand.u32 2147483647, %v3957
  %vm4048 = vcmp.lt.f32.partialorder %v4047, 0.0004427343
  %v4049 = vsel %vm4048, %v4046, %v4043
  %v4050 = vadd.f32 %v3959, 1.0
  %v4051 = vlog2.pop %v4050
  %v4052 = vmul.f32 %v4051, 0.6931472
  %v4053 = vmul.f32 -0.5, %v3959
  %v4054 = vadd.f32 %v4053, 1.0
  %v4055 = vmul.f32 %v4054, %v3959
  %v4056 = vand.u32 2147483647, %v3959
  %vm4057 = vcmp.lt.f32.partialorder %v4056, 0.0004427343
  %v4058 = vsel %vm4057, %v4055, %v4052
  %v4059 = vadd.f32 %v3961, 1.0
  %v4060 = vlog2.pop %v4059
  %v4061 = vmul.f32 %v4060, 0.6931472
  %v4062 = vmul.f32 -0.5, %v3961
  %v4063 = vadd.f32 %v4062, 1.0
  %v4064 = vmul.f32 %v4063, %v3961
  %v4065 = vand.u32 2147483647, %v3961
  %vm4066 = vcmp.lt.f32.partialorder %v4065, 0.0004427343
  %v4067 = vsel %vm4066, %v4064, %v4061
  %v4068 = vadd.f32 %v3963, 1.0
  %v4069 = vlog2.pop %v4068
  %v4070 = vmul.f32 %v4069, 0.6931472
  %v4071 = vmul.f32 -0.5, %v3963
  %v4072 = vadd.f32 %v4071, 1.0
  %v4073 = vmul.f32 %v4072, %v3963
  %v4074 = vand.u32 2147483647, %v3963
  %vm4075 = vcmp.lt.f32.partialorder %v4074, 0.0004427343
  %v4076 = vsel %vm4075, %v4073, %v4070
  %v4077 = vadd.f32 %v3965, 1.0
  %v4078 = vlog2.pop %v4077
  %v4079 = vmul.f32 %v4078, 0.6931472
  %v4080 = vmul.f32 -0.5, %v3965
  %v4081 = vadd.f32 %v4080, 1.0
  %v4082 = vmul.f32 %v4081, %v3965
  %v4083 = vand.u32 2147483647, %v3965
  %vm4084 = vcmp.lt.f32.partialorder %v4083, 0.0004427343
  %v4085 = vsel %vm4084, %v4082, %v4079
  %v4086 = vadd.f32 %v3967, 1.0
  %v4087 = vlog2.pop %v4086
  %v4088 = vmul.f32 %v4087, 0.6931472
  %v4089 = vmul.f32 -0.5, %v3967
  %v4090 = vadd.f32 %v4089, 1.0
  %v4091 = vmul.f32 %v4090, %v3967
  %v4092 = vand.u32 2147483647, %v3967
  %vm4093 = vcmp.lt.f32.partialorder %v4092, 0.0004427343
  %v4094 = vsel %vm4093, %v4091, %v4088
  %v4095 = vadd.f32 %v3969, 1.0
  %v4096 = vlog2.pop %v4095
  %v4097 = vmul.f32 %v4096, 0.6931472
  %v4098 = vmul.f32 -0.5, %v3969
  %v4099 = vadd.f32 %v4098, 1.0
  %v4100 = vmul.f32 %v4099, %v3969
  %v4101 = vand.u32 2147483647, %v3969
  %vm4102 = vcmp.lt.f32.partialorder %v4101, 0.0004427343
  %v4103 = vsel %vm4102, %v4100, %v4097
  %v4104 = vadd.f32 %v3971, 1.0
  %v4105 = vlog2.pop %v4104
  %v4106 = vmul.f32 %v4105, 0.6931472
  %v4107 = vmul.f32 -0.5, %v3971
  %v4108 = vadd.f32 %v4107, 1.0
  %v4109 = vmul.f32 %v4108, %v3971
  %v4110 = vand.u32 2147483647, %v3971
  %vm4111 = vcmp.lt.f32.partialorder %v4110, 0.0004427343
  %v4112 = vsel %vm4111, %v4109, %v4106
  %v4113 = vadd.f32 %v3973, 1.0
  %v4114 = vlog2.pop %v4113
  %v4115 = vmul.f32 %v4114, 0.6931472
  %v4116 = vmul.f32 -0.5, %v3973
  %v4117 = vadd.f32 %v4116, 1.0
  %v4118 = vmul.f32 %v4117, %v3973
  %v4119 = vand.u32 2147483647, %v3973
  %vm4120 = vcmp.lt.f32.partialorder %v4119, 0.0004427343
  %v4121 = vsel %vm4120, %v4118, %v4115
  %v4122 = vadd.f32 %v3975, 1.0
  %v4123 = vlog2.pop %v4122
  %v4124 = vmul.f32 %v4123, 0.6931472
  %v4125 = vmul.f32 -0.5, %v3975
  %v4126 = vadd.f32 %v4125, 1.0
  %v4127 = vmul.f32 %v4126, %v3975
  %v4128 = vand.u32 2147483647, %v3975
  %vm4129 = vcmp.lt.f32.partialorder %v4128, 0.0004427343
  %v4130 = vsel %vm4129, %v4127, %v4124
  %v4131 = vadd.f32 %v3977, 1.0
  %v4132 = vlog2.pop %v4131
  %v4133 = vmul.f32 %v4132, 0.6931472
  %v4134 = vmul.f32 -0.5, %v3977
  %v4135 = vadd.f32 %v4134, 1.0
  %v4136 = vmul.f32 %v4135, %v3977
  %v4137 = vand.u32 2147483647, %v3977
  %vm4138 = vcmp.lt.f32.partialorder %v4137, 0.0004427343
  %v4139 = vsel %vm4138, %v4136, %v4133
  %v4140 = vadd.f32 %v3979, 1.0
  %v4141 = vlog2.pop %v4140
  %v4142 = vmul.f32 %v4141, 0.6931472
  %v4143 = vmul.f32 -0.5, %v3979
  %v4144 = vadd.f32 %v4143, 1.0
  %v4145 = vmul.f32 %v4144, %v3979
  %v4146 = vand.u32 2147483647, %v3979
  %vm4147 = vcmp.lt.f32.partialorder %v4146, 0.0004427343
  %v4148 = vsel %vm4147, %v4145, %v4142
  %v4149 = vadd.f32 %v3981, 1.0
  %v4150 = vlog2.pop %v4149
  %v4151 = vmul.f32 %v4150, 0.6931472
  %v4152 = vmul.f32 -0.5, %v3981
  %v4153 = vadd.f32 %v4152, 1.0
  %v4154 = vmul.f32 %v4153, %v3981
  %v4155 = vand.u32 2147483647, %v3981
  %vm4156 = vcmp.lt.f32.partialorder %v4155, 0.0004427343
  %v4157 = vsel %vm4156, %v4154, %v4151
  %v4158 = vadd.f32 %v3983, 1.0
  %v4159 = vlog2.pop %v4158
  %v4160 = vmul.f32 %v4159, 0.6931472
  %v4161 = vmul.f32 -0.5, %v3983
  %v4162 = vadd.f32 %v4161, 1.0
  %v4163 = vmul.f32 %v4162, %v3983
  %v4164 = vand.u32 2147483647, %v3983
  %vm4165 = vcmp.lt.f32.partialorder %v4164, 0.0004427343
  %v4166 = vsel %vm4165, %v4163, %v4160
  %v4167 = vadd.f32 %v3985, 1.0
  %v4168 = vlog2.pop %v4167
  %v4169 = vmul.f32 %v4168, 0.6931472
  %v4170 = vmul.f32 -0.5, %v3985
  %v4171 = vadd.f32 %v4170, 1.0
  %v4172 = vmul.f32 %v4171, %v3985
  %v4173 = vand.u32 2147483647, %v3985
  %vm4174 = vcmp.lt.f32.partialorder %v4173, 0.0004427343
  %v4175 = vsel %vm4174, %v4172, %v4169
  %v4176 = vadd.f32 %v3987, 1.0
  %v4177 = vlog2.pop %v4176
  %v4178 = vmul.f32 %v4177, 0.6931472
  %v4179 = vmul.f32 -0.5, %v3987
  %v4180 = vadd.f32 %v4179, 1.0
  %v4181 = vmul.f32 %v4180, %v3987
  %v4182 = vand.u32 2147483647, %v3987
  %vm4183 = vcmp.lt.f32.partialorder %v4182, 0.0004427343
  %v4184 = vsel %vm4183, %v4181, %v4178
  %v4185 = vadd.f32 %v3989, 1.0
  %v4186 = vlog2.pop %v4185
  %v4187 = vmul.f32 %v4186, 0.6931472
  %v4188 = vmul.f32 -0.5, %v3989
  %v4189 = vadd.f32 %v4188, 1.0
  %v4190 = vmul.f32 %v4189, %v3989
  %v4191 = vand.u32 2147483647, %v3989
  %vm4192 = vcmp.lt.f32.partialorder %v4191, 0.0004427343
  %v4193 = vsel %vm4192, %v4190, %v4187
  %v4194 = vadd.f32 %v3991, 1.0
  %v4195 = vlog2.pop %v4194
  %v4196 = vmul.f32 %v4195, 0.6931472
  %v4197 = vmul.f32 -0.5, %v3991
  %v4198 = vadd.f32 %v4197, 1.0
  %v4199 = vmul.f32 %v4198, %v3991
  %v4200 = vand.u32 2147483647, %v3991
  %vm4201 = vcmp.lt.f32.partialorder %v4200, 0.0004427343
  %v4202 = vsel %vm4201, %v4199, %v4196
  %v4203 = vadd.f32 %v3993, 1.0
  %v4204 = vlog2.pop %v4203
  %v4205 = vmul.f32 %v4204, 0.6931472
  %v4206 = vmul.f32 -0.5, %v3993
  %v4207 = vadd.f32 %v4206, 1.0
  %v4208 = vmul.f32 %v4207, %v3993
  %v4209 = vand.u32 2147483647, %v3993
  %vm4210 = vcmp.lt.f32.partialorder %v4209, 0.0004427343
  %v4211 = vsel %vm4210, %v4208, %v4205
  %v4212 = vadd.f32 %v3995, 1.0
  %v4213 = vlog2.pop %v4212
  %v4214 = vmul.f32 %v4213, 0.6931472
  %v4215 = vmul.f32 -0.5, %v3995
  %v4216 = vadd.f32 %v4215, 1.0
  %v4217 = vmul.f32 %v4216, %v3995
  %v4218 = vand.u32 2147483647, %v3995
  %vm4219 = vcmp.lt.f32.partialorder %v4218, 0.0004427343
  %v4220 = vsel %vm4219, %v4217, %v4214
  %v4221 = vadd.f32 %v3997, 1.0
  %v4222 = vlog2.pop %v4221
  %v4223 = vmul.f32 %v4222, 0.6931472
  %v4224 = vmul.f32 -0.5, %v3997
  %v4225 = vadd.f32 %v4224, 1.0
  %v4226 = vmul.f32 %v4225, %v3997
  %v4227 = vand.u32 2147483647, %v3997
  %vm4228 = vcmp.lt.f32.partialorder %v4227, 0.0004427343
  %v4229 = vsel %vm4228, %v4226, %v4223
  %v4230 = vadd.f32 %v3999, 1.0
  %v4231 = vlog2.pop %v4230
  %v4232 = vmul.f32 %v4231, 0.6931472
  %v4233 = vmul.f32 -0.5, %v3999
  %v4234 = vadd.f32 %v4233, 1.0
  %v4235 = vmul.f32 %v4234, %v3999
  %v4236 = vand.u32 2147483647, %v3999
  %vm4237 = vcmp.lt.f32.partialorder %v4236, 0.0004427343
  %v4238 = vsel %vm4237, %v4235, %v4232
  %v4239 = vadd.f32 %v4001, 1.0
  %v4240 = vlog2.pop %v4239
  %v4241 = vmul.f32 %v4240, 0.6931472
  %v4242 = vmul.f32 -0.5, %v4001
  %v4243 = vadd.f32 %v4242, 1.0
  %v4244 = vmul.f32 %v4243, %v4001
  %v4245 = vand.u32 2147483647, %v4001
  %vm4246 = vcmp.lt.f32.partialorder %v4245, 0.0004427343
  %v4247 = vsel %vm4246, %v4244, %v4241
  %v4248 = vadd.f32 %v4003, 1.0
  %v4249 = vlog2.pop %v4248
  %v4250 = vmul.f32 %v4249, 0.6931472
  %v4251 = vmul.f32 -0.5, %v4003
  %v4252 = vadd.f32 %v4251, 1.0
  %v4253 = vmul.f32 %v4252, %v4003
  %v4254 = vand.u32 2147483647, %v4003
  %vm4255 = vcmp.lt.f32.partialorder %v4254, 0.0004427343
  %v4256 = vsel %vm4255, %v4253, %v4250
  %v4257 = vadd.f32 %v4005, 1.0
  %v4258 = vlog2.pop %v4257
  %v4259 = vmul.f32 %v4258, 0.6931472
  %v4260 = vmul.f32 -0.5, %v4005
  %v4261 = vadd.f32 %v4260, 1.0
  %v4262 = vmul.f32 %v4261, %v4005
  %v4263 = vand.u32 2147483647, %v4005
  %vm4264 = vcmp.lt.f32.partialorder %v4263, 0.0004427343
  %v4265 = vsel %vm4264, %v4262, %v4259
  %v4266 = vadd.f32 %v4007, 1.0
  %v4267 = vlog2.pop %v4266
  %v4268 = vmul.f32 %v4267, 0.6931472
  %v4269 = vmul.f32 -0.5, %v4007
  %v4270 = vadd.f32 %v4269, 1.0
  %v4271 = vmul.f32 %v4270, %v4007
  %v4272 = vand.u32 2147483647, %v4007
  %vm4273 = vcmp.lt.f32.partialorder %v4272, 0.0004427343
  %v4274 = vsel %vm4273, %v4271, %v4268
  %v4275 = vadd.f32 %v4009, 1.0
  %v4276 = vlog2.pop %v4275
  %v4277 = vmul.f32 %v4276, 0.6931472
  %v4278 = vmul.f32 -0.5, %v4009
  %v4279 = vadd.f32 %v4278, 1.0
  %v4280 = vmul.f32 %v4279, %v4009
  %v4281 = vand.u32 2147483647, %v4009
  %vm4282 = vcmp.lt.f32.partialorder %v4281, 0.0004427343
  %v4283 = vsel %vm4282, %v4280, %v4277
  %v4284 = vadd.f32 %v4011, 1.0
  %v4285 = vlog2.pop %v4284
  %v4286 = vmul.f32 %v4285, 0.6931472
  %v4287 = vmul.f32 -0.5, %v4011
  %v4288 = vadd.f32 %v4287, 1.0
  %v4289 = vmul.f32 %v4288, %v4011
  %v4290 = vand.u32 2147483647, %v4011
  %vm4291 = vcmp.lt.f32.partialorder %v4290, 0.0004427343
  %v4292 = vsel %vm4291, %v4289, %v4286
  %v4293 = vadd.f32 %v4013, 1.0
  %v4294 = vlog2.pop %v4293
  %v4295 = vmul.f32 %v4294, 0.6931472
  %v4296 = vmul.f32 -0.5, %v4013
  %v4297 = vadd.f32 %v4296, 1.0
  %v4298 = vmul.f32 %v4297, %v4013
  %v4299 = vand.u32 2147483647, %v4013
  %vm4300 = vcmp.lt.f32.partialorder %v4299, 0.0004427343
  %v4301 = vsel %vm4300, %v4298, %v4295
  %v4302 = vmul.f32 %v4022, 2.0
  %v4303 = vmul.f32 %v4031, 2.0
  %v4304 = vmul.f32 %v4040, 2.0
  %v4305 = vmul.f32 %v4049, 2.0
  %v4306 = vmul.f32 %v4058, 2.0
  %v4307 = vmul.f32 %v4067, 2.0
  %v4308 = vmul.f32 %v4076, 2.0
  %v4309 = vmul.f32 %v4085, 2.0
  %v4310 = vmul.f32 %v4094, 2.0
  %v4311 = vmul.f32 %v4103, 2.0
  %v4312 = vmul.f32 %v4112, 2.0
  %v4313 = vmul.f32 %v4121, 2.0
  %v4314 = vmul.f32 %v4130, 2.0
  %v4315 = vmul.f32 %v4139, 2.0
  %v4316 = vmul.f32 %v4148, 2.0
  %v4317 = vmul.f32 %v4157, 2.0
  %v4318 = vmul.f32 %v4166, 2.0
  %v4319 = vmul.f32 %v4175, 2.0
  %v4320 = vmul.f32 %v4184, 2.0
  %v4321 = vmul.f32 %v4193, 2.0
  %v4322 = vmul.f32 %v4202, 2.0
  %v4323 = vmul.f32 %v4211, 2.0
  %v4324 = vmul.f32 %v4220, 2.0
  %v4325 = vmul.f32 %v4229, 2.0
  %v4326 = vmul.f32 %v4238, 2.0
  %v4327 = vmul.f32 %v4247, 2.0
  %v4328 = vmul.f32 %v4256, 2.0
  %v4329 = vmul.f32 %v4265, 2.0
  %v4330 = vmul.f32 %v4274, 2.0
  %v4331 = vmul.f32 %v4283, 2.0
  %v4332 = vmul.f32 %v4292, 2.0
  %v4333 = vmul.f32 %v4301, 2.0
  %v4334 = vadd.f32 %v3886, %v4302
  %v4335 = vadd.f32 %v3887, %v4303
  %v4336 = vadd.f32 %v3888, %v4304
  %v4337 = vadd.f32 %v3889, %v4305
  %v4338 = vadd.f32 %v3890, %v4306
  %v4339 = vadd.f32 %v3891, %v4307
  %v4340 = vadd.f32 %v3892, %v4308
  %v4341 = vadd.f32 %v3893, %v4309
  %v4342 = vadd.f32 %v3894, %v4310
  %v4343 = vadd.f32 %v3895, %v4311
  %v4344 = vadd.f32 %v3896, %v4312
  %v4345 = vadd.f32 %v3897, %v4313
  %v4346 = vadd.f32 %v3898, %v4314
  %v4347 = vadd.f32 %v3899, %v4315
  %v4348 = vadd.f32 %v3900, %v4316
  %v4349 = vadd.f32 %v3901, %v4317
  %v4350 = vadd.f32 %v3902, %v4318
  %v4351 = vadd.f32 %v3903, %v4319
  %v4352 = vadd.f32 %v3904, %v4320
  %v4353 = vadd.f32 %v3905, %v4321
  %v4354 = vadd.f32 %v3906, %v4322
  %v4355 = vadd.f32 %v3907, %v4323
  %v4356 = vadd.f32 %v3908, %v4324
  %v4357 = vadd.f32 %v3909, %v4325
  %v4358 = vadd.f32 %v3910, %v4326
  %v4359 = vadd.f32 %v3911, %v4327
  %v4360 = vadd.f32 %v3912, %v4328
  %v4361 = vadd.f32 %v3913, %v4329
  %v4362 = vadd.f32 %v3914, %v4330
  %v4363 = vadd.f32 %v3915, %v4331
  %v4364 = vadd.f32 %v3916, %v4332
  %v4365 = vadd.f32 %v3917, %v4333
  %v4366 = vsub.f32 0.0, %v4334
  %v4367 = vsub.f32 0.0, %v4335
  %v4368 = vsub.f32 0.0, %v4336
  %v4369 = vsub.f32 0.0, %v4337
  %v4370 = vsub.f32 0.0, %v4338
  %v4371 = vsub.f32 0.0, %v4339
  %v4372 = vsub.f32 0.0, %v4340
  %v4373 = vsub.f32 0.0, %v4341
  %v4374 = vsub.f32 0.0, %v4342
  %v4375 = vsub.f32 0.0, %v4343
  %v4376 = vsub.f32 0.0, %v4344
  %v4377 = vsub.f32 0.0, %v4345
  %v4378 = vsub.f32 0.0, %v4346
  %v4379 = vsub.f32 0.0, %v4347
  %v4380 = vsub.f32 0.0, %v4348
  %v4381 = vsub.f32 0.0, %v4349
  %v4382 = vsub.f32 0.0, %v4350
  %v4383 = vsub.f32 0.0, %v4351
  %v4384 = vsub.f32 0.0, %v4352
  %v4385 = vsub.f32 0.0, %v4353
  %v4386 = vsub.f32 0.0, %v4354
  %v4387 = vsub.f32 0.0, %v4355
  %v4388 = vsub.f32 0.0, %v4356
  %v4389 = vsub.f32 0.0, %v4357
  %v4390 = vsub.f32 0.0, %v4358
  %v4391 = vsub.f32 0.0, %v4359
  %v4392 = vsub.f32 0.0, %v4360
  %v4393 = vsub.f32 0.0, %v4361
  %v4394 = vsub.f32 0.0, %v4362
  %v4395 = vsub.f32 0.0, %v4363
  %v4396 = vsub.f32 0.0, %v4364
  %v4397 = vsub.f32 0.0, %v4365
  %v4398 = vsel %vm474, %v4366, 0.0
  %4399 = vadd.xlane.f32.xlu0 %v4398
  %v4400 = vpop.xlane.xlu0 %4399
  %v4401 = vsel %vm474, %v4367, 0.0
  %4402 = vadd.xlane.f32.xlu0 %v4401
  %v4403 = vpop.xlane.xlu0 %4402
  %v4404 = vsel %vm474, %v4368, 0.0
  %4405 = vadd.xlane.f32.xlu0 %v4404
  %v4406 = vpop.xlane.xlu0 %4405
  %v4407 = vsel %vm474, %v4369, 0.0
  %4408 = vadd.xlane.f32.xlu0 %v4407
  %v4409 = vpop.xlane.xlu0 %4408
  %v4410 = vsel %vm474, %v4370, 0.0
  %4411 = vadd.xlane.f32.xlu0 %v4410
  %v4412 = vpop.xlane.xlu0 %4411
  %v4413 = vsel %vm474, %v4371, 0.0
  %4414 = vadd.xlane.f32.xlu0 %v4413
  %v4415 = vpop.xlane.xlu0 %4414
  %v4416 = vsel %vm474, %v4372, 0.0
  %4417 = vadd.xlane.f32.xlu0 %v4416
  %v4418 = vpop.xlane.xlu0 %4417
  %v4419 = vsel %vm474, %v4373, 0.0
  %4420 = vadd.xlane.f32.xlu0 %v4419
  %v4421 = vpop.xlane.xlu0 %4420
  %v4422 = vsel %vm474, %v4374, 0.0
  %4423 = vadd.xlane.f32.xlu0 %v4422
  %v4424 = vpop.xlane.xlu0 %4423
  %v4425 = vsel %vm474, %v4375, 0.0
  %4426 = vadd.xlane.f32.xlu0 %v4425
  %v4427 = vpop.xlane.xlu0 %4426
  %v4428 = vsel %vm474, %v4376, 0.0
  %4429 = vadd.xlane.f32.xlu0 %v4428
  %v4430 = vpop.xlane.xlu0 %4429
  %v4431 = vsel %vm474, %v4377, 0.0
  %4432 = vadd.xlane.f32.xlu0 %v4431
  %v4433 = vpop.xlane.xlu0 %4432
  %v4434 = vsel %vm474, %v4378, 0.0
  %4435 = vadd.xlane.f32.xlu0 %v4434
  %v4436 = vpop.xlane.xlu0 %4435
  %v4437 = vsel %vm474, %v4379, 0.0
  %4438 = vadd.xlane.f32.xlu0 %v4437
  %v4439 = vpop.xlane.xlu0 %4438
  %v4440 = vsel %vm474, %v4380, 0.0
  %4441 = vadd.xlane.f32.xlu0 %v4440
  %v4442 = vpop.xlane.xlu0 %4441
  %v4443 = vsel %vm474, %v4381, 0.0
  %4444 = vadd.xlane.f32.xlu0 %v4443
  %v4445 = vpop.xlane.xlu0 %4444
  %v4446 = vsel %vm474, %v4382, 0.0
  %4447 = vadd.xlane.f32.xlu0 %v4446
  %v4448 = vpop.xlane.xlu0 %4447
  %v4449 = vsel %vm474, %v4383, 0.0
  %4450 = vadd.xlane.f32.xlu0 %v4449
  %v4451 = vpop.xlane.xlu0 %4450
  %v4452 = vsel %vm474, %v4384, 0.0
  %4453 = vadd.xlane.f32.xlu0 %v4452
  %v4454 = vpop.xlane.xlu0 %4453
  %v4455 = vsel %vm474, %v4385, 0.0
  %4456 = vadd.xlane.f32.xlu0 %v4455
  %v4457 = vpop.xlane.xlu0 %4456
  %v4458 = vsel %vm474, %v4386, 0.0
  %4459 = vadd.xlane.f32.xlu0 %v4458
  %v4460 = vpop.xlane.xlu0 %4459
  %v4461 = vsel %vm474, %v4387, 0.0
  %4462 = vadd.xlane.f32.xlu0 %v4461
  %v4463 = vpop.xlane.xlu0 %4462
  %v4464 = vsel %vm474, %v4388, 0.0
  %4465 = vadd.xlane.f32.xlu0 %v4464
  %v4466 = vpop.xlane.xlu0 %4465
  %v4467 = vsel %vm474, %v4389, 0.0
  %4468 = vadd.xlane.f32.xlu0 %v4467
  %v4469 = vpop.xlane.xlu0 %4468
  %v4470 = vsel %vm474, %v4390, 0.0
  %4471 = vadd.xlane.f32.xlu0 %v4470
  %v4472 = vpop.xlane.xlu0 %4471
  %v4473 = vsel %vm474, %v4391, 0.0
  %4474 = vadd.xlane.f32.xlu0 %v4473
  %v4475 = vpop.xlane.xlu0 %4474
  %v4476 = vsel %vm474, %v4392, 0.0
  %4477 = vadd.xlane.f32.xlu0 %v4476
  %v4478 = vpop.xlane.xlu0 %4477
  %v4479 = vsel %vm474, %v4393, 0.0
  %4480 = vadd.xlane.f32.xlu0 %v4479
  %v4481 = vpop.xlane.xlu0 %4480
  %v4482 = vsel %vm474, %v4394, 0.0
  %4483 = vadd.xlane.f32.xlu0 %v4482
  %v4484 = vpop.xlane.xlu0 %4483
  %v4485 = vsel %vm474, %v4395, 0.0
  %4486 = vadd.xlane.f32.xlu0 %v4485
  %v4487 = vpop.xlane.xlu0 %4486
  %v4488 = vsel %vm474, %v4396, 0.0
  %4489 = vadd.xlane.f32.xlu0 %v4488
  %v4490 = vpop.xlane.xlu0 %4489
  %v4491 = vsel %vm474, %v4397, 0.0
  %4492 = vadd.xlane.f32.xlu0 %v4491
  %v4493 = vpop.xlane.xlu0 %4492
  %s4494 = sld [smem:[#allocation2]]
  %v4495 = vstv %s4494
  %v4496 = vadd.f32 %v4400, %v4495
  %v4497 = vadd.f32 %v4403, %v4495
  %v4498 = vadd.f32 %v4406, %v4495
  %v4499 = vadd.f32 %v4409, %v4495
  %v4500 = vadd.f32 %v4412, %v4495
  %v4501 = vadd.f32 %v4415, %v4495
  %v4502 = vadd.f32 %v4418, %v4495
  %v4503 = vadd.f32 %v4421, %v4495
  %v4504 = vadd.f32 %v4424, %v4495
  %v4505 = vadd.f32 %v4427, %v4495
  %v4506 = vadd.f32 %v4430, %v4495
  %v4507 = vadd.f32 %v4433, %v4495
  %v4508 = vadd.f32 %v4436, %v4495
  %v4509 = vadd.f32 %v4439, %v4495
  %v4510 = vadd.f32 %v4442, %v4495
  %v4511 = vadd.f32 %v4445, %v4495
  %v4512 = vadd.f32 %v4448, %v4495
  %v4513 = vadd.f32 %v4451, %v4495
  %v4514 = vadd.f32 %v4454, %v4495
  %v4515 = vadd.f32 %v4457, %v4495
  %v4516 = vadd.f32 %v4460, %v4495
  %v4517 = vadd.f32 %v4463, %v4495
  %v4518 = vadd.f32 %v4466, %v4495
  %v4519 = vadd.f32 %v4469, %v4495
  %v4520 = vadd.f32 %v4472, %v4495
  %v4521 = vadd.f32 %v4475, %v4495
  %v4522 = vadd.f32 %v4478, %v4495
  %v4523 = vadd.f32 %v4481, %v4495
  %v4524 = vadd.f32 %v4484, %v4495
  %v4525 = vadd.f32 %v4487, %v4495
  %v4526 = vadd.f32 %v4490, %v4495
  %v4527 = vadd.f32 %v4493, %v4495
  %vm4528 = vcmask 7168
  %4529 = vst.msk [vmem:[%s73] sm:$0xff] %vm4528, %v4496
  %4530 = vst.msk [vmem:[%s73 + $0x8] sm:$0xff] %vm4528, %v4497
  %4531 = vst.msk [vmem:[%s73 + $0x10] sm:$0xff] %vm4528, %v4498
  %4532 = vst.msk [vmem:[%s73 + $0x18] sm:$0xff] %vm4528, %v4499
  %4533 = vst.msk [vmem:[%s73 + $0x20] sm:$0xff] %vm4528, %v4500
  %4534 = vst.msk [vmem:[%s73 + $0x28] sm:$0xff] %vm4528, %v4501
  %4535 = vst.msk [vmem:[%s73 + $0x30] sm:$0xff] %vm4528, %v4502
  %4536 = vst.msk [vmem:[%s73 + $0x38] sm:$0xff] %vm4528, %v4503
  %4537 = vst.msk [vmem:[%s73 + $0x40] sm:$0xff] %vm4528, %v4504
  %4538 = vst.msk [vmem:[%s73 + $0x48] sm:$0xff] %vm4528, %v4505
  %4539 = vst.msk [vmem:[%s73 + $0x50] sm:$0xff] %vm4528, %v4506
  %4540 = vst.msk [vmem:[%s73 + $0x58] sm:$0xff] %vm4528, %v4507
  %4541 = vst.msk [vmem:[%s73 + $0x60] sm:$0xff] %vm4528, %v4508
  %4542 = vst.msk [vmem:[%s73 + $0x68] sm:$0xff] %vm4528, %v4509
  %4543 = vst.msk [vmem:[%s73 + $0x70] sm:$0xff] %vm4528, %v4510
  %4544 = vst.msk [vmem:[%s73 + $0x78] sm:$0xff] %vm4528, %v4511
  %4545 = vst.msk [vmem:[%s73 + $0x80] sm:$0xff] %vm4528, %v4512
  %4546 = vst.msk [vmem:[%s73 + $0x88] sm:$0xff] %vm4528, %v4513
  %4547 = vst.msk [vmem:[%s73 + $0x90] sm:$0xff] %vm4528, %v4514
  %4548 = vst.msk [vmem:[%s73 + $0x98] sm:$0xff] %vm4528, %v4515
  %4549 = vst.msk [vmem:[%s73 + $0xa0] sm:$0xff] %vm4528, %v4516
  %4550 = vst.msk [vmem:[%s73 + $0xa8] sm:$0xff] %vm4528, %v4517
  %4551 = vst.msk [vmem:[%s73 + $0xb0] sm:$0xff] %vm4528, %v4518
  %4552 = vst.msk [vmem:[%s73 + $0xb8] sm:$0xff] %vm4528, %v4519
  %4553 = vst.msk [vmem:[%s73 + $0xc0] sm:$0xff] %vm4528, %v4520
  %4554 = vst.msk [vmem:[%s73 + $0xc8] sm:$0xff] %vm4528, %v4521
  %4555 = vst.msk [vmem:[%s73 + $0xd0] sm:$0xff] %vm4528, %v4522
  %4556 = vst.msk [vmem:[%s73 + $0xd8] sm:$0xff] %vm4528, %v4523
  %4557 = vst.msk [vmem:[%s73 + $0xe0] sm:$0xff] %vm4528, %v4524
  %4558 = vst.msk [vmem:[%s73 + $0xe8] sm:$0xff] %vm4528, %v4525
  %4559 = vst.msk [vmem:[%s73 + $0xf0] sm:$0xff] %vm4528, %v4526
  %4560 = vst.msk [vmem:[%s73 + $0xf8] sm:$0xff] %vm4528, %v4527
  // Predicated region
  $region146: #{tpu_custom_call.1} parent=0 // pred_check
    _
  $region147: #{tpu_custom_call.1} parent=0 // pred_check_branch
    %4562 = sbr.rel (0) target = $region149
  $region148: #{tpu_custom_call.1} parent=0 // pred_region
    _
  $region149: #{tpu_custom_call.1} parent=0 // pred_fallthru
    _
  // Predicated region
  $region150: #{tpu_custom_call.1} parent=0 // pred_check
    _
  $region151: #{tpu_custom_call.1} parent=0 // pred_check_branch
    %4564 = sbr.rel (0) target = $region153
  $region152: #{tpu_custom_call.1} parent=0 // pred_region
    _
  $region153: #{tpu_custom_call.1} parent=0 // pred_fallthru
    _

</llo_original>
